<compile_context>
chip_gen: v7x
topology: tpu7x:2x2x1
jax: 0.10.0
libtpu: 0.0.40
codegen_flags: <defaults>
</compile_context>

<pallas_src>
import functools
import math

import jax
import jax.numpy as jnp
from jax.experimental import pallas as pl
from jax.experimental.pallas import tpu as pltpu


# ----------------------------------------------------------------------------
# In-kernel helpers.  Everything is a 2-D value (C, Mp) with Mp = (H+2)*(W+2).
# ----------------------------------------------------------------------------

def _shift_lanes(x, delta):
    """out[:, i] = x[:, (i + delta) % Mp].

    The wrap-around only corrupts outputs that sit inside the padding ring
    (|delta| <= Wp + 1), and every conv output is multiplied by the interior
    mask afterwards, so a plain rotate is exact for the interior.
    """
    m = x.shape[-1]
    d = delta % m
    if d == 0:
        return x
    return jnp.concatenate([x[:, d:], x[:, :d]], axis=-1)


def _patches3x3(x, wp):
    """im2col via lane shifts: (C, Mp) -> (9*C, Mp), tap-major / channel-minor."""
    cols = []
    for dy in range(3):
        for dx in range(3):
            cols.append(_shift_lanes(x, (dy - 1) * wp + (dx - 1)))
    return jnp.concatenate(cols, axis=0)


def _mm(w, x):
    return jnp.dot(w, x, preferred_element_type=jnp.float32)


def _sigmoid(x):
    return 1.0 / (1.0 + jnp.exp(-x))


# ----------------------------------------------------------------------------
# Pallas kernels (one image per grid step; batch axis is "parallel")
# ----------------------------------------------------------------------------

def _stage_kernel(xu_ref, ef_ref, wu_ref, bu_ref, w1_ref, b1_ref,
                  w2_ref, b2_ref, ws_ref, bs_ref, m_ref, o_ref, *, wp):
    """Fused decoder stage (n_blocks > 0):
       UpscaleBlock conv + channel concat + full CnnBlock.

    xu: reflection-padded, nearest-x2-upsampled input   (Cin,  Mp)
    ef: zero-padded encoder feature                     (Ce,   Mp)
    """
    xu = xu_ref[0]
    ef = ef_ref[0]
    m = m_ref[...]
    # UpscaleBlock: 3x3 "valid" conv over the reflection-padded input (no act).
    up = (_mm(wu_ref[...], _patches3x3(xu, wp)) + bu_ref[...]) * m
    # torch.cat([up, encoder_feature], dim=1); ring of both parts is zero.
    c = jnp.concatenate([up, ef], axis=0)
    # CnnBlock: conv1 (zero pad) + ReLU
    h = jnp.maximum(_mm(w1_ref[...], _patches3x3(c, wp)) + b1_ref[...], 0.0) * m
    # conv2 + 1x1 skip on the concat + ReLU
    y = _mm(w2_ref[...], _patches3x3(h, wp)) + b2_ref[...]
    y = y + _mm(ws_ref[...], c) + bs_ref[...]
    y = jnp.maximum(y, 0.0) * m
    o_ref[...] = y[None].astype(o_ref.dtype)


def _stage_plain_kernel(xu_ref, ef_ref, wu_ref, bu_ref, wc_ref, bc_ref,
                        m_ref, o_ref, *, wp):
    """Fused decoder stage for n_blocks == 0 (UpscaleBlock conv + cat + bare conv)."""
    xu = xu_ref[0]
    ef = ef_ref[0]
    m = m_ref[...]
    up = (_mm(wu_ref[...], _patches3x3(xu, wp)) + bu_ref[...]) * m
    c = jnp.concatenate([up, ef], axis=0)
    y = _mm(wc_ref[...], _patches3x3(c, wp)) + bc_ref[...]
    o_ref[...] = (y * m)[None].astype(o_ref.dtype)


def _final_cnn_kernel(x_ref, w1_ref, b1_ref, w2_ref, b2_ref, ws_ref, bs_ref,
                      m_ref, o_ref, *, wp):
    """finalBlock = CnnBlock(skip_final_activation=True) fused with sigmoid."""
    x = x_ref[0]
    m = m_ref[...]
    h = jnp.maximum(_mm(w1_ref[...], _patches3x3(x, wp)) + b1_ref[...], 0.0) * m
    y = _mm(w2_ref[...], _patches3x3(h, wp)) + b2_ref[...]
    y = y + _mm(ws_ref[...], x) + bs_ref[...]
    o_ref[...] = (_sigmoid(y) * m)[None].astype(o_ref.dtype)


def _final_plain_kernel(x_ref, w_ref, b_ref, m_ref, o_ref, *, wp):
    """finalBlock = bare 3x3 conv (n_blocks == 0) fused with sigmoid."""
    x = x_ref[0]
    m = m_ref[...]
    y = _mm(w_ref[...], _patches3x3(x, wp)) + b_ref[...]
    o_ref[...] = (_sigmoid(y) * m)[None].astype(o_ref.dtype)


# ----------------------------------------------------------------------------
# pallas_call plumbing
# ----------------------------------------------------------------------------

def _img_spec(shape):
    _, c, m = shape
    return pl.BlockSpec((1, c, m), lambda b: (b, 0, 0))


def _rep_spec(shape):
    zeros = (0,) * len(shape)
    return pl.BlockSpec(shape, lambda b: zeros)


def _pallas_call(kernel, args, n_batched, n, c_out, mp):
    in_specs = [_img_spec(a.shape) for a in args[:n_batched]]
    in_specs += [_rep_spec(a.shape) for a in args[n_batched:]]
    return pl.pallas_call(
        kernel,
        out_shape=jax.ShapeDtypeStruct((n, c_out, mp), jnp.float32),
        grid=(n,),
        in_specs=in_specs,
        out_specs=_img_spec((n, c_out, mp)),
        compiler_params=pltpu.CompilerParams(dimension_semantics=("parallel",)),
    )(*args)


def _fold3x3(w):
    """(3, 3, Cin, Cout) HWIO -> (Cout, 9*Cin), tap-major / channel-minor."""
    kh, kw, cin, cout = w.shape
    return w.reshape(kh * kw, cin, cout).transpose(2, 0, 1).reshape(cout, kh * kw * cin)


def _col(b):
    return b.reshape(-1, 1)


# ----------------------------------------------------------------------------
# Plain-JAX glue: layout prep (upsample / pad / flatten / mask)
# ----------------------------------------------------------------------------

def _upscale_prepare(x):
    """NCHW -> padded-flat (N, C, (2H+2)*(2W+2)); nearest x2 then reflection pad."""
    x = jnp.repeat(jnp.repeat(x, 2, axis=2), 2, axis=3)
    x = jnp.pad(x, ((0, 0), (0, 0), (1, 1), (1, 1)), mode='reflect')
    n, c, hp, wp = x.shape
    return x.reshape(n, c, hp * wp)


def _to_padflat(x):
    """NCHW -> padded-flat with a zero ring."""
    x = jnp.pad(x, ((0, 0), (0, 0), (1, 1), (1, 1)))
    n, c, hp, wp = x.shape
    return x.reshape(n, c, hp * wp)


def _from_padflat(xf, h, w):
    n, c, _ = xf.shape
    return xf.reshape(n, c, h + 2, w + 2)[:, :, 1:-1, 1:-1]


def _interior_mask(h, w):
    m = jnp.zeros((h + 2, w + 2), jnp.float32).at[1:-1, 1:-1].set(1.0)
    return m.reshape(1, (h + 2) * (w + 2))


# ----------------------------------------------------------------------------
# Stage / final runners
# ----------------------------------------------------------------------------

def _run_stage(xu, ef, up_p, blk_p, mask, w_out):
    n, _, mp = xu.shape
    wu, bu = up_p
    w1, b1 = blk_p['conv1']
    w2, b2 = blk_p['conv2']
    ws, bs = blk_p['skip']
    c_out = w1.shape[-1]
    args = (xu, ef,
            _fold3x3(wu), _col(bu),
            _fold3x3(w1), _col(b1),
            _fold3x3(w2), _col(b2),
            ws.T, _col(bs),
            mask)
    kernel = functools.partial(_stage_kernel, wp=w_out + 2)
    return _pallas_call(kernel, args, 2, n, c_out, mp)


def _run_stage_plain(xu, ef, up_p, blk_p, mask, w_out):
    n, _, mp = xu.shape
    wu, bu = up_p
    wc, bc = blk_p['conv']
    c_out = wc.shape[-1]
    args = (xu, ef, _fold3x3(wu), _col(bu), _fold3x3(wc), _col(bc), mask)
    kernel = functools.partial(_stage_plain_kernel, wp=w_out + 2)
    return _pallas_call(kernel, args, 2, n, c_out, mp)


def _run_final(h_flat, final_p, mask, w_out, n_blocks):
    n, _, mp = h_flat.shape
    if n_blocks > 0:
        w1, b1 = final_p['conv1']
        w2, b2 = final_p['conv2']
        ws, bs = final_p['skip']
        c_out = w1.shape[-1]
        args = (h_flat, _fold3x3(w1), _col(b1), _fold3x3(w2), _col(b2),
                ws.T, _col(bs), mask)
        kernel = functools.partial(_final_cnn_kernel, wp=w_out + 2)
    else:
        w, b = final_p['conv']
        c_out = w.shape[-1]
        args = (h_flat, _fold3x3(w), _col(b), mask)
        kernel = functools.partial(_final_plain_kernel, wp=w_out + 2)
    return _pallas_call(kernel, args, 1, n, c_out, mp)


# ----------------------------------------------------------------------------
# Decoder forward (Pallas)
# ----------------------------------------------------------------------------

def decoder_forward(x, encoder_features, params, n_blocks):
    """x: (N, C0, H, W) NCHW; encoder_features[i]: (N, Ci, H*2^(i+1), W*2^(i+1))."""
    h_nchw = x
    h_flat = None
    h_out = w_out = None
    for i, (up_p, blk_p) in enumerate(zip(params['upconvs'], params['blocks'])):
        if i > 0:
            h_nchw = _from_padflat(h_flat, h_out, w_out)
        h_out, w_out = 2 * h_nchw.shape[2], 2 * h_nchw.shape[3]
        xu = _upscale_prepare(h_nchw)                 # reflect ring (UpscaleBlock)
        ef = _to_padflat(encoder_features[i])         # zero ring
        mask = _interior_mask(h_out, w_out)
        if n_blocks > 0:
            h_flat = _run_stage(xu, ef, up_p, blk_p, mask, w_out)
        else:
            h_flat = _run_stage_plain(xu, ef, up_p, blk_p, mask, w_out)
    mask = _interior_mask(h_out, w_out)
    out_flat = _run_final(h_flat, params['final'], mask, w_out, n_blocks)
    return _from_padflat(out_flat, h_out, w_out)


# ----------------------------------------------------------------------------
# Parameter init (matches the PyTorch module's structure)
# ----------------------------------------------------------------------------

def _init_conv(key, kh, kw, cin, cout):
    kw_, kb_ = jax.random.split(key)
    bound = 1.0 / math.sqrt(cin * kh * kw)
    w = jax.random.uniform(kw_, (kh, kw, cin, cout), jnp.float32, -bound, bound)
    b = jax.random.uniform(kb_, (cout,), jnp.float32, -bound, bound)
    return w, b


def _make_cnn_block(key, cin, cout):
    k1, k2, k3 = jax.random.split(key, 3)
    w1, b1 = _init_conv(k1, 3, 3, cin, cout)
    w2, b2 = _init_conv(k2, 3, 3, cout, cout)
    ws, bs = _init_conv(k3, 1, 1, cin, cout)
    return {'conv1': (w1, b1), 'conv2': (w2, b2), 'skip': (ws[0, 0], bs)}


def make_decoder_params(key, nchannels, n_blocks):
    n_stages = len(nchannels) - 1
    keys = jax.random.split(key, 2 * n_stages + 1)
    upconvs = [_init_conv(keys[i], 3, 3, nchannels[i], nchannels[i] // 2)
               for i in range(n_stages)]
    blocks = []
    for i in range(n_stages):
        if n_blocks > 0:
            blocks.append(_make_cnn_block(keys[n_stages + i], nchannels[i], nchannels[i + 1]))
        else:
            blocks.append({'conv': _init_conv(keys[n_stages + i], 3, 3,
                                              nchannels[i], nchannels[i + 1])})
    if n_blocks > 0:
        final = _make_cnn_block(keys[-1], nchannels[-1], 3)
    else:
        final = {'conv': _init_conv(keys[-1], 3, 3, nchannels[-1], 3)}
    return {'upconvs': upconvs, 'blocks': blocks, 'final': final}


# ----------------------------------------------------------------------------
# Pure-JAX reference (correctness check only)
# ----------------------------------------------------------------------------

def _conv2d_ref(x, w_hwio, b, padding):
    y = jax.lax.conv_general_dilated(
        x, w_hwio, (1, 1), padding,
        dimension_numbers=('NCHW', 'HWIO', 'NCHW'),
        precision=jax.lax.Precision.HIGHEST)
    return y + b.reshape(1, -1, 1, 1)


def _upscale_block_ref(x, p):
    w, b = p
    x = jnp.repeat(jnp.repeat(x, 2, axis=2), 2, axis=3)
    x = jnp.pad(x, ((0, 0), (0, 0), (1, 1), (1, 1)), mode='reflect')
    return _conv2d_ref(x, w, b, 'VALID')


def _cnn_block_ref(x, p, skip_final_activation):
    w1, b1 = p['conv1']
    w2, b2 = p['conv2']
    ws, bs = p['skip']
    h = jax.nn.relu(_conv2d_ref(x, w1, b1, ((1, 1), (1, 1))))
    h = _conv2d_ref(h, w2, b2, ((1, 1), (1, 1)))
    h = h + _conv2d_ref(x, ws.reshape(1, 1, *ws.shape), bs, ((0, 0), (0, 0)))
    if not skip_final_activation:
        h = jax.nn.relu(h)
    return h


def decoder_forward_ref(x, encoder_features, params, n_blocks):
    for i, (up_p, blk_p) in enumerate(zip(params['upconvs'], params['blocks'])):
        x = _upscale_block_ref(x, up_p)
        x = jnp.concatenate([x, encoder_features[i]], axis=1)
        if n_blocks > 0:
            x = _cnn_block_ref(x, blk_p, skip_final_activation=False)
        else:
            w, b = blk_p['conv']
            x = _conv2d_ref(x, w, b, ((1, 1), (1, 1)))
    if n_blocks > 0:
        x = _cnn_block_ref(x, params['final'], skip_final_activation=True)
    else:
        w, b = params['final']['conv']
        x = _conv2d_ref(x, w, b, ((1, 1), (1, 1)))
    return jax.nn.sigmoid(x)


# ----------------------------------------------------------------------------
# Main
# ----------------------------------------------------------------------------

if __name__ == "__main__":
    nchannels = [24, 16, 8]
    n_blocks = 1
    scale_power = 2          # Decoder.forward never uses it; kept for parity.
    N, H, W = 2, 8, 8

    key = jax.random.PRNGKey(0)
    kx, ke0, ke1, kp = jax.random.split(key, 4)
    # NCHW input (same layout as the PyTorch module).
    x = jax.random.normal(kx, (N, nchannels[0], H, W), jnp.float32)
    # encoder_features[i] must have nchannels[i] - nchannels[i]//2 channels at
    # spatial size H*2^(i+1) so that the channel concat matches blocks[i].
    encoder_features = [
        jax.random.normal(ke0, (N, nchannels[0] - nchannels[0] // 2, 2 * H, 2 * W), jnp.float32),
        jax.random.normal(ke1, (N, nchannels[1] - nchannels[1] // 2, 4 * H, 4 * W), jnp.float32),
    ]
    params = make_decoder_params(kp, nchannels, n_blocks)

    fwd = jax.jit(functools.partial(decoder_forward, n_blocks=n_blocks))
    out = jax.block_until_ready(fwd(x, encoder_features, params))
    assert out.shape == (N, 3, 4 * H, 4 * W), out.shape

    ref = decoder_forward_ref(x, encoder_features, params, n_blocks)
    err = float(jnp.max(jnp.abs(out - ref)))
    assert err < 1e-2, f"mismatch vs reference: max abs err {err}"

    print("KERNEL_OK")
</pallas_src>

<mosaic_0001>
module attributes {stable_mosaic.version = 11 : i64} {
  func.func @_stage_kernel(%arg0: i32, %arg1: memref<1x24x324xf32, #tpu.memory_space<vmem>>, %arg2: memref<1x12x324xf32, #tpu.memory_space<vmem>>, %arg3: memref<12x216xf32, #tpu.memory_space<vmem>>, %arg4: memref<12x1xf32, #tpu.memory_space<vmem>>, %arg5: memref<16x216xf32, #tpu.memory_space<vmem>>, %arg6: memref<16x1xf32, #tpu.memory_space<vmem>>, %arg7: memref<16x144xf32, #tpu.memory_space<vmem>>, %arg8: memref<16x1xf32, #tpu.memory_space<vmem>>, %arg9: memref<16x24xf32, #tpu.memory_space<vmem>>, %arg10: memref<16x1xf32, #tpu.memory_space<vmem>>, %arg11: memref<1x324xf32, #tpu.memory_space<vmem>>, %arg12: memref<1x16x324xf32, #tpu.memory_space<vmem>>) attributes {dimension_semantics = [#tpu.dimension_semantics<parallel>], iteration_bounds = array<i64: 2>, scalar_prefetch = 0 : i64, scratch_operands = 0 : i64, tpu.core_type = #tpu.core_type<tc>, window_params = [{transform_indices = @transform_0, window_bounds = array<i64: 1, 24, 324>}, {transform_indices = @transform_1, window_bounds = array<i64: 1, 12, 324>}, {pipeline_mode = #tpu.pipeline_mode<synchronous>, transform_indices = @transform_2, window_bounds = array<i64: 12, 216>}, {pipeline_mode = #tpu.pipeline_mode<synchronous>, transform_indices = @transform_3, window_bounds = array<i64: 12, 1>}, {pipeline_mode = #tpu.pipeline_mode<synchronous>, transform_indices = @transform_4, window_bounds = array<i64: 16, 216>}, {pipeline_mode = #tpu.pipeline_mode<synchronous>, transform_indices = @transform_5, window_bounds = array<i64: 16, 1>}, {pipeline_mode = #tpu.pipeline_mode<synchronous>, transform_indices = @transform_6, window_bounds = array<i64: 16, 144>}, {pipeline_mode = #tpu.pipeline_mode<synchronous>, transform_indices = @transform_7, window_bounds = array<i64: 16, 1>}, {pipeline_mode = #tpu.pipeline_mode<synchronous>, transform_indices = @transform_8, window_bounds = array<i64: 16, 24>}, {pipeline_mode = #tpu.pipeline_mode<synchronous>, transform_indices = @transform_9, window_bounds = array<i64: 16, 1>}, {pipeline_mode = #tpu.pipeline_mode<synchronous>, transform_indices = @transform_10, window_bounds = array<i64: 1, 324>}, {transform_indices = @transform_11, window_bounds = array<i64: 1, 16, 324>}]} {
    %c0 = arith.constant 0 : index
    %c0_0 = arith.constant 0 : index
    %c0_1 = arith.constant 0 : index
    %0 = vector.load %arg1[%c0, %c0_0, %c0_1] : memref<1x24x324xf32, #tpu.memory_space<vmem>>, vector<1x24x324xf32>
    %1 = vector.shape_cast %0 : vector<1x24x324xf32> to vector<24x324xf32>
    %c0_2 = arith.constant 0 : index
    %c0_3 = arith.constant 0 : index
    %c0_4 = arith.constant 0 : index
    %2 = vector.load %arg2[%c0_2, %c0_3, %c0_4] : memref<1x12x324xf32, #tpu.memory_space<vmem>>, vector<1x12x324xf32>
    %3 = vector.shape_cast %2 : vector<1x12x324xf32> to vector<12x324xf32>
    %c0_5 = arith.constant 0 : index
    %c0_6 = arith.constant 0 : index
    %4 = vector.load %arg11[%c0_5, %c0_6] : memref<1x324xf32, #tpu.memory_space<vmem>>, vector<1x324xf32>
    %c0_7 = arith.constant 0 : index
    %c0_8 = arith.constant 0 : index
    %5 = vector.load %arg3[%c0_7, %c0_8] : memref<12x216xf32, #tpu.memory_space<vmem>>, vector<12x216xf32>
    %6 = vector.extract_strided_slice %1 {offsets = [0, 305], sizes = [24, 19], strides = [1, 1]} : vector<24x324xf32> to vector<24x19xf32>
    %7 = vector.extract_strided_slice %1 {offsets = [0, 0], sizes = [24, 305], strides = [1, 1]} : vector<24x324xf32> to vector<24x305xf32>
    %8 = tpu.concatenate %6, %7 in 1 : vector<24x19xf32>, vector<24x305xf32> -> vector<24x324xf32>
    %9 = vector.extract_strided_slice %1 {offsets = [0, 306], sizes = [24, 18], strides = [1, 1]} : vector<24x324xf32> to vector<24x18xf32>
    %10 = vector.extract_strided_slice %1 {offsets = [0, 0], sizes = [24, 306], strides = [1, 1]} : vector<24x324xf32> to vector<24x306xf32>
    %11 = tpu.concatenate %9, %10 in 1 : vector<24x18xf32>, vector<24x306xf32> -> vector<24x324xf32>
    %12 = vector.extract_strided_slice %1 {offsets = [0, 307], sizes = [24, 17], strides = [1, 1]} : vector<24x324xf32> to vector<24x17xf32>
    %13 = vector.extract_strided_slice %1 {offsets = [0, 0], sizes = [24, 307], strides = [1, 1]} : vector<24x324xf32> to vector<24x307xf32>
    %14 = tpu.concatenate %12, %13 in 1 : vector<24x17xf32>, vector<24x307xf32> -> vector<24x324xf32>
    %15 = vector.extract_strided_slice %1 {offsets = [0, 323], sizes = [24, 1], strides = [1, 1]} : vector<24x324xf32> to vector<24x1xf32>
    %16 = vector.extract_strided_slice %1 {offsets = [0, 0], sizes = [24, 323], strides = [1, 1]} : vector<24x324xf32> to vector<24x323xf32>
    %17 = tpu.concatenate %15, %16 in 1 : vector<24x1xf32>, vector<24x323xf32> -> vector<24x324xf32>
    %18 = vector.extract_strided_slice %1 {offsets = [0, 1], sizes = [24, 323], strides = [1, 1]} : vector<24x324xf32> to vector<24x323xf32>
    %19 = vector.extract_strided_slice %1 {offsets = [0, 0], sizes = [24, 1], strides = [1, 1]} : vector<24x324xf32> to vector<24x1xf32>
    %20 = tpu.concatenate %18, %19 in 1 : vector<24x323xf32>, vector<24x1xf32> -> vector<24x324xf32>
    %21 = vector.extract_strided_slice %1 {offsets = [0, 17], sizes = [24, 307], strides = [1, 1]} : vector<24x324xf32> to vector<24x307xf32>
    %22 = vector.extract_strided_slice %1 {offsets = [0, 0], sizes = [24, 17], strides = [1, 1]} : vector<24x324xf32> to vector<24x17xf32>
    %23 = tpu.concatenate %21, %22 in 1 : vector<24x307xf32>, vector<24x17xf32> -> vector<24x324xf32>
    %24 = vector.extract_strided_slice %1 {offsets = [0, 18], sizes = [24, 306], strides = [1, 1]} : vector<24x324xf32> to vector<24x306xf32>
    %25 = vector.extract_strided_slice %1 {offsets = [0, 0], sizes = [24, 18], strides = [1, 1]} : vector<24x324xf32> to vector<24x18xf32>
    %26 = tpu.concatenate %24, %25 in 1 : vector<24x306xf32>, vector<24x18xf32> -> vector<24x324xf32>
    %27 = vector.extract_strided_slice %1 {offsets = [0, 19], sizes = [24, 305], strides = [1, 1]} : vector<24x324xf32> to vector<24x305xf32>
    %28 = vector.extract_strided_slice %1 {offsets = [0, 0], sizes = [24, 19], strides = [1, 1]} : vector<24x324xf32> to vector<24x19xf32>
    %29 = tpu.concatenate %27, %28 in 1 : vector<24x305xf32>, vector<24x19xf32> -> vector<24x324xf32>
    %30 = tpu.concatenate %8, %11, %14, %17, %1, %20, %23, %26, %29 in 0 : vector<24x324xf32>, vector<24x324xf32>, vector<24x324xf32>, vector<24x324xf32>, vector<24x324xf32>, vector<24x324xf32>, vector<24x324xf32>, vector<24x324xf32>, vector<24x324xf32> -> vector<216x324xf32>
    %cst = arith.constant dense<0.000000e+00> : vector<12x324xf32>
    %31 = tpu.matmul %5, %30, %cst {dimension_numbers = #tpu.dot_dimension_numbers<[1], [0], [0], [1], [0, 0, 1, 1], [], []>} : vector<12x216xf32>, vector<216x324xf32>, vector<12x324xf32> -> vector<12x324xf32>
    %c0_9 = arith.constant 0 : index
    %c0_10 = arith.constant 0 : index
    %32 = vector.load %arg4[%c0_9, %c0_10] : memref<12x1xf32, #tpu.memory_space<vmem>>, vector<12x1xf32>
    %33 = vector.broadcast %32 : vector<12x1xf32> to vector<12x324xf32>
    %34 = arith.addf %31, %33 : vector<12x324xf32>
    %35 = vector.broadcast %4 : vector<1x324xf32> to vector<12x324xf32>
    %36 = arith.mulf %34, %35 : vector<12x324xf32>
    %37 = tpu.concatenate %36, %3 in 0 : vector<12x324xf32>, vector<12x324xf32> -> vector<24x324xf32>
    %c0_11 = arith.constant 0 : index
    %c0_12 = arith.constant 0 : index
    %38 = vector.load %arg5[%c0_11, %c0_12] : memref<16x216xf32, #tpu.memory_space<vmem>>, vector<16x216xf32>
    %39 = vector.extract_strided_slice %37 {offsets = [0, 305], sizes = [24, 19], strides = [1, 1]} : vector<24x324xf32> to vector<24x19xf32>
    %40 = vector.extract_strided_slice %37 {offsets = [0, 0], sizes = [24, 305], strides = [1, 1]} : vector<24x324xf32> to vector<24x305xf32>
    %41 = tpu.concatenate %39, %40 in 1 : vector<24x19xf32>, vector<24x305xf32> -> vector<24x324xf32>
    %42 = vector.extract_strided_slice %37 {offsets = [0, 306], sizes = [24, 18], strides = [1, 1]} : vector<24x324xf32> to vector<24x18xf32>
    %43 = vector.extract_strided_slice %37 {offsets = [0, 0], sizes = [24, 306], strides = [1, 1]} : vector<24x324xf32> to vector<24x306xf32>
    %44 = tpu.concatenate %42, %43 in 1 : vector<24x18xf32>, vector<24x306xf32> -> vector<24x324xf32>
    %45 = vector.extract_strided_slice %37 {offsets = [0, 307], sizes = [24, 17], strides = [1, 1]} : vector<24x324xf32> to vector<24x17xf32>
    %46 = vector.extract_strided_slice %37 {offsets = [0, 0], sizes = [24, 307], strides = [1, 1]} : vector<24x324xf32> to vector<24x307xf32>
    %47 = tpu.concatenate %45, %46 in 1 : vector<24x17xf32>, vector<24x307xf32> -> vector<24x324xf32>
    %48 = vector.extract_strided_slice %37 {offsets = [0, 323], sizes = [24, 1], strides = [1, 1]} : vector<24x324xf32> to vector<24x1xf32>
    %49 = vector.extract_strided_slice %37 {offsets = [0, 0], sizes = [24, 323], strides = [1, 1]} : vector<24x324xf32> to vector<24x323xf32>
    %50 = tpu.concatenate %48, %49 in 1 : vector<24x1xf32>, vector<24x323xf32> -> vector<24x324xf32>
    %51 = vector.extract_strided_slice %37 {offsets = [0, 1], sizes = [24, 323], strides = [1, 1]} : vector<24x324xf32> to vector<24x323xf32>
    %52 = vector.extract_strided_slice %37 {offsets = [0, 0], sizes = [24, 1], strides = [1, 1]} : vector<24x324xf32> to vector<24x1xf32>
    %53 = tpu.concatenate %51, %52 in 1 : vector<24x323xf32>, vector<24x1xf32> -> vector<24x324xf32>
    %54 = vector.extract_strided_slice %37 {offsets = [0, 17], sizes = [24, 307], strides = [1, 1]} : vector<24x324xf32> to vector<24x307xf32>
    %55 = vector.extract_strided_slice %37 {offsets = [0, 0], sizes = [24, 17], strides = [1, 1]} : vector<24x324xf32> to vector<24x17xf32>
    %56 = tpu.concatenate %54, %55 in 1 : vector<24x307xf32>, vector<24x17xf32> -> vector<24x324xf32>
    %57 = vector.extract_strided_slice %37 {offsets = [0, 18], sizes = [24, 306], strides = [1, 1]} : vector<24x324xf32> to vector<24x306xf32>
    %58 = vector.extract_strided_slice %37 {offsets = [0, 0], sizes = [24, 18], strides = [1, 1]} : vector<24x324xf32> to vector<24x18xf32>
    %59 = tpu.concatenate %57, %58 in 1 : vector<24x306xf32>, vector<24x18xf32> -> vector<24x324xf32>
    %60 = vector.extract_strided_slice %37 {offsets = [0, 19], sizes = [24, 305], strides = [1, 1]} : vector<24x324xf32> to vector<24x305xf32>
    %61 = vector.extract_strided_slice %37 {offsets = [0, 0], sizes = [24, 19], strides = [1, 1]} : vector<24x324xf32> to vector<24x19xf32>
    %62 = tpu.concatenate %60, %61 in 1 : vector<24x305xf32>, vector<24x19xf32> -> vector<24x324xf32>
    %63 = tpu.concatenate %41, %44, %47, %50, %37, %53, %56, %59, %62 in 0 : vector<24x324xf32>, vector<24x324xf32>, vector<24x324xf32>, vector<24x324xf32>, vector<24x324xf32>, vector<24x324xf32>, vector<24x324xf32>, vector<24x324xf32>, vector<24x324xf32> -> vector<216x324xf32>
    %cst_13 = arith.constant dense<0.000000e+00> : vector<16x324xf32>
    %64 = tpu.matmul %38, %63, %cst_13 {dimension_numbers = #tpu.dot_dimension_numbers<[1], [0], [0], [1], [0, 0, 1, 1], [], []>} : vector<16x216xf32>, vector<216x324xf32>, vector<16x324xf32> -> vector<16x324xf32>
    %c0_14 = arith.constant 0 : index
    %c0_15 = arith.constant 0 : index
    %65 = vector.load %arg6[%c0_14, %c0_15] : memref<16x1xf32, #tpu.memory_space<vmem>>, vector<16x1xf32>
    %66 = vector.broadcast %65 : vector<16x1xf32> to vector<16x324xf32>
    %67 = arith.addf %64, %66 : vector<16x324xf32>
    %cst_16 = arith.constant 0.000000e+00 : f32
    %68 = vector.broadcast %cst_16 : f32 to vector<16x324xf32>
    %69 = arith.maximumf %67, %68 : vector<16x324xf32>
    %70 = vector.broadcast %4 : vector<1x324xf32> to vector<16x324xf32>
    %71 = arith.mulf %69, %70 : vector<16x324xf32>
    %c0_17 = arith.constant 0 : index
    %c0_18 = arith.constant 0 : index
    %72 = vector.load %arg7[%c0_17, %c0_18] : memref<16x144xf32, #tpu.memory_space<vmem>>, vector<16x144xf32>
    %73 = vector.extract_strided_slice %71 {offsets = [0, 305], sizes = [16, 19], strides = [1, 1]} : vector<16x324xf32> to vector<16x19xf32>
    %74 = vector.extract_strided_slice %71 {offsets = [0, 0], sizes = [16, 305], strides = [1, 1]} : vector<16x324xf32> to vector<16x305xf32>
    %75 = tpu.concatenate %73, %74 in 1 : vector<16x19xf32>, vector<16x305xf32> -> vector<16x324xf32>
    %76 = vector.extract_strided_slice %71 {offsets = [0, 306], sizes = [16, 18], strides = [1, 1]} : vector<16x324xf32> to vector<16x18xf32>
    %77 = vector.extract_strided_slice %71 {offsets = [0, 0], sizes = [16, 306], strides = [1, 1]} : vector<16x324xf32> to vector<16x306xf32>
    %78 = tpu.concatenate %76, %77 in 1 : vector<16x18xf32>, vector<16x306xf32> -> vector<16x324xf32>
    %79 = vector.extract_strided_slice %71 {offsets = [0, 307], sizes = [16, 17], strides = [1, 1]} : vector<16x324xf32> to vector<16x17xf32>
    %80 = vector.extract_strided_slice %71 {offsets = [0, 0], sizes = [16, 307], strides = [1, 1]} : vector<16x324xf32> to vector<16x307xf32>
    %81 = tpu.concatenate %79, %80 in 1 : vector<16x17xf32>, vector<16x307xf32> -> vector<16x324xf32>
    %82 = vector.extract_strided_slice %71 {offsets = [0, 323], sizes = [16, 1], strides = [1, 1]} : vector<16x324xf32> to vector<16x1xf32>
    %83 = vector.extract_strided_slice %71 {offsets = [0, 0], sizes = [16, 323], strides = [1, 1]} : vector<16x324xf32> to vector<16x323xf32>
    %84 = tpu.concatenate %82, %83 in 1 : vector<16x1xf32>, vector<16x323xf32> -> vector<16x324xf32>
    %85 = vector.extract_strided_slice %71 {offsets = [0, 1], sizes = [16, 323], strides = [1, 1]} : vector<16x324xf32> to vector<16x323xf32>
    %86 = vector.extract_strided_slice %71 {offsets = [0, 0], sizes = [16, 1], strides = [1, 1]} : vector<16x324xf32> to vector<16x1xf32>
    %87 = tpu.concatenate %85, %86 in 1 : vector<16x323xf32>, vector<16x1xf32> -> vector<16x324xf32>
    %88 = vector.extract_strided_slice %71 {offsets = [0, 17], sizes = [16, 307], strides = [1, 1]} : vector<16x324xf32> to vector<16x307xf32>
    %89 = vector.extract_strided_slice %71 {offsets = [0, 0], sizes = [16, 17], strides = [1, 1]} : vector<16x324xf32> to vector<16x17xf32>
    %90 = tpu.concatenate %88, %89 in 1 : vector<16x307xf32>, vector<16x17xf32> -> vector<16x324xf32>
    %91 = vector.extract_strided_slice %71 {offsets = [0, 18], sizes = [16, 306], strides = [1, 1]} : vector<16x324xf32> to vector<16x306xf32>
    %92 = vector.extract_strided_slice %71 {offsets = [0, 0], sizes = [16, 18], strides = [1, 1]} : vector<16x324xf32> to vector<16x18xf32>
    %93 = tpu.concatenate %91, %92 in 1 : vector<16x306xf32>, vector<16x18xf32> -> vector<16x324xf32>
    %94 = vector.extract_strided_slice %71 {offsets = [0, 19], sizes = [16, 305], strides = [1, 1]} : vector<16x324xf32> to vector<16x305xf32>
    %95 = vector.extract_strided_slice %71 {offsets = [0, 0], sizes = [16, 19], strides = [1, 1]} : vector<16x324xf32> to vector<16x19xf32>
    %96 = tpu.concatenate %94, %95 in 1 : vector<16x305xf32>, vector<16x19xf32> -> vector<16x324xf32>
    %97 = tpu.concatenate %75, %78, %81, %84, %71, %87, %90, %93, %96 in 0 : vector<16x324xf32>, vector<16x324xf32>, vector<16x324xf32>, vector<16x324xf32>, vector<16x324xf32>, vector<16x324xf32>, vector<16x324xf32>, vector<16x324xf32>, vector<16x324xf32> -> vector<144x324xf32>
    %cst_19 = arith.constant dense<0.000000e+00> : vector<16x324xf32>
    %98 = tpu.matmul %72, %97, %cst_19 {dimension_numbers = #tpu.dot_dimension_numbers<[1], [0], [0], [1], [0, 0, 1, 1], [], []>} : vector<16x144xf32>, vector<144x324xf32>, vector<16x324xf32> -> vector<16x324xf32>
    %c0_20 = arith.constant 0 : index
    %c0_21 = arith.constant 0 : index
    %99 = vector.load %arg8[%c0_20, %c0_21] : memref<16x1xf32, #tpu.memory_space<vmem>>, vector<16x1xf32>
    %100 = vector.broadcast %99 : vector<16x1xf32> to vector<16x324xf32>
    %101 = arith.addf %98, %100 : vector<16x324xf32>
    %c0_22 = arith.constant 0 : index
    %c0_23 = arith.constant 0 : index
    %102 = vector.load %arg9[%c0_22, %c0_23] : memref<16x24xf32, #tpu.memory_space<vmem>>, vector<16x24xf32>
    %cst_24 = arith.constant dense<0.000000e+00> : vector<16x324xf32>
    %103 = tpu.matmul %102, %37, %cst_24 {dimension_numbers = #tpu.dot_dimension_numbers<[1], [0], [0], [1], [0, 0, 1, 1], [], []>} : vector<16x24xf32>, vector<24x324xf32>, vector<16x324xf32> -> vector<16x324xf32>
    %104 = arith.addf %101, %103 : vector<16x324xf32>
    %c0_25 = arith.constant 0 : index
    %c0_26 = arith.constant 0 : index
    %105 = vector.load %arg10[%c0_25, %c0_26] : memref<16x1xf32, #tpu.memory_space<vmem>>, vector<16x1xf32>
    %106 = vector.broadcast %105 : vector<16x1xf32> to vector<16x324xf32>
    %107 = arith.addf %104, %106 : vector<16x324xf32>
    %cst_27 = arith.constant 0.000000e+00 : f32
    %108 = vector.broadcast %cst_27 : f32 to vector<16x324xf32>
    %109 = arith.maximumf %107, %108 : vector<16x324xf32>
    %110 = vector.broadcast %4 : vector<1x324xf32> to vector<16x324xf32>
    %111 = arith.mulf %109, %110 : vector<16x324xf32>
    %112 = vector.shape_cast %111 : vector<16x324xf32> to vector<1x16x324xf32>
    %c0_28 = arith.constant 0 : index
    %c0_29 = arith.constant 0 : index
    %c0_30 = arith.constant 0 : index
    %113 = vector.load %arg12[%c0_28, %c0_29, %c0_30] : memref<1x16x324xf32, #tpu.memory_space<vmem>>, vector<1x16x324xf32>
    tpu.vector_store %arg12[%c0_28, %c0_29, %c0_30], %112 {strides = array<i32>} : memref<1x16x324xf32, #tpu.memory_space<vmem>>, vector<1x16x324xf32>,
    return
  }
  func.func @transform_0(%arg0: i32) -> (i32, i32, i32) {
    %c0_i32 = arith.constant 0 : i32
    %c0_i32_0 = arith.constant 0 : i32
    %c0_i32_1 = arith.constant 0 : i32
    return %arg0, %c0_i32, %c0_i32_0 : i32, i32, i32
  }
  func.func @transform_1(%arg0: i32) -> (i32, i32, i32) {
    %c0_i32 = arith.constant 0 : i32
    %c0_i32_0 = arith.constant 0 : i32
    %c0_i32_1 = arith.constant 0 : i32
    return %arg0, %c0_i32, %c0_i32_0 : i32, i32, i32
  }
  func.func @transform_2(%arg0: i32) -> (i32, i32) {
    %c0_i32 = arith.constant 0 : i32
    %c0_i32_0 = arith.constant 0 : i32
    %c0_i32_1 = arith.constant 0 : i32
    return %c0_i32, %c0_i32_0 : i32, i32
  }
  func.func @transform_3(%arg0: i32) -> (i32, i32) {
    %c0_i32 = arith.constant 0 : i32
    %c0_i32_0 = arith.constant 0 : i32
    %c0_i32_1 = arith.constant 0 : i32
    return %c0_i32, %c0_i32_0 : i32, i32
  }
  func.func @transform_4(%arg0: i32) -> (i32, i32) {
    %c0_i32 = arith.constant 0 : i32
    %c0_i32_0 = arith.constant 0 : i32
    %c0_i32_1 = arith.constant 0 : i32
    return %c0_i32, %c0_i32_0 : i32, i32
  }
  func.func @transform_5(%arg0: i32) -> (i32, i32) {
    %c0_i32 = arith.constant 0 : i32
    %c0_i32_0 = arith.constant 0 : i32
    %c0_i32_1 = arith.constant 0 : i32
    return %c0_i32, %c0_i32_0 : i32, i32
  }
  func.func @transform_6(%arg0: i32) -> (i32, i32) {
    %c0_i32 = arith.constant 0 : i32
    %c0_i32_0 = arith.constant 0 : i32
    %c0_i32_1 = arith.constant 0 : i32
    return %c0_i32, %c0_i32_0 : i32, i32
  }
  func.func @transform_7(%arg0: i32) -> (i32, i32) {
    %c0_i32 = arith.constant 0 : i32
    %c0_i32_0 = arith.constant 0 : i32
    %c0_i32_1 = arith.constant 0 : i32
    return %c0_i32, %c0_i32_0 : i32, i32
  }
  func.func @transform_8(%arg0: i32) -> (i32, i32) {
    %c0_i32 = arith.constant 0 : i32
    %c0_i32_0 = arith.constant 0 : i32
    %c0_i32_1 = arith.constant 0 : i32
    return %c0_i32, %c0_i32_0 : i32, i32
  }
  func.func @transform_9(%arg0: i32) -> (i32, i32) {
    %c0_i32 = arith.constant 0 : i32
    %c0_i32_0 = arith.constant 0 : i32
    %c0_i32_1 = arith.constant 0 : i32
    return %c0_i32, %c0_i32_0 : i32, i32
  }
  func.func @transform_10(%arg0: i32) -> (i32, i32) {
    %c0_i32 = arith.constant 0 : i32
    %c0_i32_0 = arith.constant 0 : i32
    %c0_i32_1 = arith.constant 0 : i32
    return %c0_i32, %c0_i32_0 : i32, i32
  }
  func.func @transform_11(%arg0: i32) -> (i32, i32, i32) {
    %c0_i32 = arith.constant 0 : i32
    %c0_i32_0 = arith.constant 0 : i32
    %c0_i32_1 = arith.constant 0 : i32
    return %arg0, %c0_i32, %c0_i32_0 : i32, i32, i32
  }
}

module attributes {stable_mosaic.version = 11 : i64} {
  func.func @_stage_kernel(%arg0: i32, %arg1: memref<1x16x1156xf32, #tpu.memory_space<vmem>>, %arg2: memref<1x8x1156xf32, #tpu.memory_space<vmem>>, %arg3: memref<8x144xf32, #tpu.memory_space<vmem>>, %arg4: memref<8x1xf32, #tpu.memory_space<vmem>>, %arg5: memref<8x144xf32, #tpu.memory_space<vmem>>, %arg6: memref<8x1xf32, #tpu.memory_space<vmem>>, %arg7: memref<8x72xf32, #tpu.memory_space<vmem>>, %arg8: memref<8x1xf32, #tpu.memory_space<vmem>>, %arg9: memref<8x16xf32, #tpu.memory_space<vmem>>, %arg10: memref<8x1xf32, #tpu.memory_space<vmem>>, %arg11: memref<1x1156xf32, #tpu.memory_space<vmem>>, %arg12: memref<1x8x1156xf32, #tpu.memory_space<vmem>>) attributes {dimension_semantics = [#tpu.dimension_semantics<parallel>], iteration_bounds = array<i64: 2>, scalar_prefetch = 0 : i64, scratch_operands = 0 : i64, tpu.core_type = #tpu.core_type<tc>, window_params = [{transform_indices = @transform_0, window_bounds = array<i64: 1, 16, 1156>}, {transform_indices = @transform_1, window_bounds = array<i64: 1, 8, 1156>}, {pipeline_mode = #tpu.pipeline_mode<synchronous>, transform_indices = @transform_2, window_bounds = array<i64: 8, 144>}, {pipeline_mode = #tpu.pipeline_mode<synchronous>, transform_indices = @transform_3, window_bounds = array<i64: 8, 1>}, {pipeline_mode = #tpu.pipeline_mode<synchronous>, transform_indices = @transform_4, window_bounds = array<i64: 8, 144>}, {pipeline_mode = #tpu.pipeline_mode<synchronous>, transform_indices = @transform_5, window_bounds = array<i64: 8, 1>}, {pipeline_mode = #tpu.pipeline_mode<synchronous>, transform_indices = @transform_6, window_bounds = array<i64: 8, 72>}, {pipeline_mode = #tpu.pipeline_mode<synchronous>, transform_indices = @transform_7, window_bounds = array<i64: 8, 1>}, {pipeline_mode = #tpu.pipeline_mode<synchronous>, transform_indices = @transform_8, window_bounds = array<i64: 8, 16>}, {pipeline_mode = #tpu.pipeline_mode<synchronous>, transform_indices = @transform_9, window_bounds = array<i64: 8, 1>}, {pipeline_mode = #tpu.pipeline_mode<synchronous>, transform_indices = @transform_10, window_bounds = array<i64: 1, 1156>}, {transform_indices = @transform_11, window_bounds = array<i64: 1, 8, 1156>}]} {
    %c0 = arith.constant 0 : index
    %c0_0 = arith.constant 0 : index
    %c0_1 = arith.constant 0 : index
    %0 = vector.load %arg1[%c0, %c0_0, %c0_1] : memref<1x16x1156xf32, #tpu.memory_space<vmem>>, vector<1x16x1156xf32>
    %1 = vector.shape_cast %0 : vector<1x16x1156xf32> to vector<16x1156xf32>
    %c0_2 = arith.constant 0 : index
    %c0_3 = arith.constant 0 : index
    %c0_4 = arith.constant 0 : index
    %2 = vector.load %arg2[%c0_2, %c0_3, %c0_4] : memref<1x8x1156xf32, #tpu.memory_space<vmem>>, vector<1x8x1156xf32>
    %3 = vector.shape_cast %2 : vector<1x8x1156xf32> to vector<8x1156xf32>
    %c0_5 = arith.constant 0 : index
    %c0_6 = arith.constant 0 : index
    %4 = vector.load %arg11[%c0_5, %c0_6] : memref<1x1156xf32, #tpu.memory_space<vmem>>, vector<1x1156xf32>
    %c0_7 = arith.constant 0 : index
    %c0_8 = arith.constant 0 : index
    %5 = vector.load %arg3[%c0_7, %c0_8] : memref<8x144xf32, #tpu.memory_space<vmem>>, vector<8x144xf32>
    %6 = vector.extract_strided_slice %1 {offsets = [0, 1121], sizes = [16, 35], strides = [1, 1]} : vector<16x1156xf32> to vector<16x35xf32>
    %7 = vector.extract_strided_slice %1 {offsets = [0, 0], sizes = [16, 1121], strides = [1, 1]} : vector<16x1156xf32> to vector<16x1121xf32>
    %8 = tpu.concatenate %6, %7 in 1 : vector<16x35xf32>, vector<16x1121xf32> -> vector<16x1156xf32>
    %9 = vector.extract_strided_slice %1 {offsets = [0, 1122], sizes = [16, 34], strides = [1, 1]} : vector<16x1156xf32> to vector<16x34xf32>
    %10 = vector.extract_strided_slice %1 {offsets = [0, 0], sizes = [16, 1122], strides = [1, 1]} : vector<16x1156xf32> to vector<16x1122xf32>
    %11 = tpu.concatenate %9, %10 in 1 : vector<16x34xf32>, vector<16x1122xf32> -> vector<16x1156xf32>
    %12 = vector.extract_strided_slice %1 {offsets = [0, 1123], sizes = [16, 33], strides = [1, 1]} : vector<16x1156xf32> to vector<16x33xf32>
    %13 = vector.extract_strided_slice %1 {offsets = [0, 0], sizes = [16, 1123], strides = [1, 1]} : vector<16x1156xf32> to vector<16x1123xf32>
    %14 = tpu.concatenate %12, %13 in 1 : vector<16x33xf32>, vector<16x1123xf32> -> vector<16x1156xf32>
    %15 = vector.extract_strided_slice %1 {offsets = [0, 1155], sizes = [16, 1], strides = [1, 1]} : vector<16x1156xf32> to vector<16x1xf32>
    %16 = vector.extract_strided_slice %1 {offsets = [0, 0], sizes = [16, 1155], strides = [1, 1]} : vector<16x1156xf32> to vector<16x1155xf32>
    %17 = tpu.concatenate %15, %16 in 1 : vector<16x1xf32>, vector<16x1155xf32> -> vector<16x1156xf32>
    %18 = vector.extract_strided_slice %1 {offsets = [0, 1], sizes = [16, 1155], strides = [1, 1]} : vector<16x1156xf32> to vector<16x1155xf32>
    %19 = vector.extract_strided_slice %1 {offsets = [0, 0], sizes = [16, 1], strides = [1, 1]} : vector<16x1156xf32> to vector<16x1xf32>
    %20 = tpu.concatenate %18, %19 in 1 : vector<16x1155xf32>, vector<16x1xf32> -> vector<16x1156xf32>
    %21 = vector.extract_strided_slice %1 {offsets = [0, 33], sizes = [16, 1123], strides = [1, 1]} : vector<16x1156xf32> to vector<16x1123xf32>
    %22 = vector.extract_strided_slice %1 {offsets = [0, 0], sizes = [16, 33], strides = [1, 1]} : vector<16x1156xf32> to vector<16x33xf32>
    %23 = tpu.concatenate %21, %22 in 1 : vector<16x1123xf32>, vector<16x33xf32> -> vector<16x1156xf32>
    %24 = vector.extract_strided_slice %1 {offsets = [0, 34], sizes = [16, 1122], strides = [1, 1]} : vector<16x1156xf32> to vector<16x1122xf32>
    %25 = vector.extract_strided_slice %1 {offsets = [0, 0], sizes = [16, 34], strides = [1, 1]} : vector<16x1156xf32> to vector<16x34xf32>
    %26 = tpu.concatenate %24, %25 in 1 : vector<16x1122xf32>, vector<16x34xf32> -> vector<16x1156xf32>
    %27 = vector.extract_strided_slice %1 {offsets = [0, 35], sizes = [16, 1121], strides = [1, 1]} : vector<16x1156xf32> to vector<16x1121xf32>
    %28 = vector.extract_strided_slice %1 {offsets = [0, 0], sizes = [16, 35], strides = [1, 1]} : vector<16x1156xf32> to vector<16x35xf32>
    %29 = tpu.concatenate %27, %28 in 1 : vector<16x1121xf32>, vector<16x35xf32> -> vector<16x1156xf32>
    %30 = tpu.concatenate %8, %11, %14, %17, %1, %20, %23, %26, %29 in 0 : vector<16x1156xf32>, vector<16x1156xf32>, vector<16x1156xf32>, vector<16x1156xf32>, vector<16x1156xf32>, vector<16x1156xf32>, vector<16x1156xf32>, vector<16x1156xf32>, vector<16x1156xf32> -> vector<144x1156xf32>
    %cst = arith.constant dense<0.000000e+00> : vector<8x1156xf32>
    %31 = tpu.matmul %5, %30, %cst {dimension_numbers = #tpu.dot_dimension_numbers<[1], [0], [0], [1], [0, 0, 1, 1], [], []>} : vector<8x144xf32>, vector<144x1156xf32>, vector<8x1156xf32> -> vector<8x1156xf32>
    %c0_9 = arith.constant 0 : index
    %c0_10 = arith.constant 0 : index
    %32 = vector.load %arg4[%c0_9, %c0_10] : memref<8x1xf32, #tpu.memory_space<vmem>>, vector<8x1xf32>
    %33 = vector.broadcast %32 : vector<8x1xf32> to vector<8x1156xf32>
    %34 = arith.addf %31, %33 : vector<8x1156xf32>
    %35 = vector.broadcast %4 : vector<1x1156xf32> to vector<8x1156xf32>
    %36 = arith.mulf %34, %35 : vector<8x1156xf32>
    %37 = tpu.concatenate %36, %3 in 0 : vector<8x1156xf32>, vector<8x1156xf32> -> vector<16x1156xf32>
    %c0_11 = arith.constant 0 : index
    %c0_12 = arith.constant 0 : index
    %38 = vector.load %arg5[%c0_11, %c0_12] : memref<8x144xf32, #tpu.memory_space<vmem>>, vector<8x144xf32>
    %39 = vector.extract_strided_slice %37 {offsets = [0, 1121], sizes = [16, 35], strides = [1, 1]} : vector<16x1156xf32> to vector<16x35xf32>
    %40 = vector.extract_strided_slice %37 {offsets = [0, 0], sizes = [16, 1121], strides = [1, 1]} : vector<16x1156xf32> to vector<16x1121xf32>
    %41 = tpu.concatenate %39, %40 in 1 : vector<16x35xf32>, vector<16x1121xf32> -> vector<16x1156xf32>
    %42 = vector.extract_strided_slice %37 {offsets = [0, 1122], sizes = [16, 34], strides = [1, 1]} : vector<16x1156xf32> to vector<16x34xf32>
    %43 = vector.extract_strided_slice %37 {offsets = [0, 0], sizes = [16, 1122], strides = [1, 1]} : vector<16x1156xf32> to vector<16x1122xf32>
    %44 = tpu.concatenate %42, %43 in 1 : vector<16x34xf32>, vector<16x1122xf32> -> vector<16x1156xf32>
    %45 = vector.extract_strided_slice %37 {offsets = [0, 1123], sizes = [16, 33], strides = [1, 1]} : vector<16x1156xf32> to vector<16x33xf32>
    %46 = vector.extract_strided_slice %37 {offsets = [0, 0], sizes = [16, 1123], strides = [1, 1]} : vector<16x1156xf32> to vector<16x1123xf32>
    %47 = tpu.concatenate %45, %46 in 1 : vector<16x33xf32>, vector<16x1123xf32> -> vector<16x1156xf32>
    %48 = vector.extract_strided_slice %37 {offsets = [0, 1155], sizes = [16, 1], strides = [1, 1]} : vector<16x1156xf32> to vector<16x1xf32>
    %49 = vector.extract_strided_slice %37 {offsets = [0, 0], sizes = [16, 1155], strides = [1, 1]} : vector<16x1156xf32> to vector<16x1155xf32>
    %50 = tpu.concatenate %48, %49 in 1 : vector<16x1xf32>, vector<16x1155xf32> -> vector<16x1156xf32>
    %51 = vector.extract_strided_slice %37 {offsets = [0, 1], sizes = [16, 1155], strides = [1, 1]} : vector<16x1156xf32> to vector<16x1155xf32>
    %52 = vector.extract_strided_slice %37 {offsets = [0, 0], sizes = [16, 1], strides = [1, 1]} : vector<16x1156xf32> to vector<16x1xf32>
    %53 = tpu.concatenate %51, %52 in 1 : vector<16x1155xf32>, vector<16x1xf32> -> vector<16x1156xf32>
    %54 = vector.extract_strided_slice %37 {offsets = [0, 33], sizes = [16, 1123], strides = [1, 1]} : vector<16x1156xf32> to vector<16x1123xf32>
    %55 = vector.extract_strided_slice %37 {offsets = [0, 0], sizes = [16, 33], strides = [1, 1]} : vector<16x1156xf32> to vector<16x33xf32>
    %56 = tpu.concatenate %54, %55 in 1 : vector<16x1123xf32>, vector<16x33xf32> -> vector<16x1156xf32>
    %57 = vector.extract_strided_slice %37 {offsets = [0, 34], sizes = [16, 1122], strides = [1, 1]} : vector<16x1156xf32> to vector<16x1122xf32>
    %58 = vector.extract_strided_slice %37 {offsets = [0, 0], sizes = [16, 34], strides = [1, 1]} : vector<16x1156xf32> to vector<16x34xf32>
    %59 = tpu.concatenate %57, %58 in 1 : vector<16x1122xf32>, vector<16x34xf32> -> vector<16x1156xf32>
    %60 = vector.extract_strided_slice %37 {offsets = [0, 35], sizes = [16, 1121], strides = [1, 1]} : vector<16x1156xf32> to vector<16x1121xf32>
    %61 = vector.extract_strided_slice %37 {offsets = [0, 0], sizes = [16, 35], strides = [1, 1]} : vector<16x1156xf32> to vector<16x35xf32>
    %62 = tpu.concatenate %60, %61 in 1 : vector<16x1121xf32>, vector<16x35xf32> -> vector<16x1156xf32>
    %63 = tpu.concatenate %41, %44, %47, %50, %37, %53, %56, %59, %62 in 0 : vector<16x1156xf32>, vector<16x1156xf32>, vector<16x1156xf32>, vector<16x1156xf32>, vector<16x1156xf32>, vector<16x1156xf32>, vector<16x1156xf32>, vector<16x1156xf32>, vector<16x1156xf32> -> vector<144x1156xf32>
    %cst_13 = arith.constant dense<0.000000e+00> : vector<8x1156xf32>
    %64 = tpu.matmul %38, %63, %cst_13 {dimension_numbers = #tpu.dot_dimension_numbers<[1], [0], [0], [1], [0, 0, 1, 1], [], []>} : vector<8x144xf32>, vector<144x1156xf32>, vector<8x1156xf32> -> vector<8x1156xf32>
    %c0_14 = arith.constant 0 : index
    %c0_15 = arith.constant 0 : index
    %65 = vector.load %arg6[%c0_14, %c0_15] : memref<8x1xf32, #tpu.memory_space<vmem>>, vector<8x1xf32>
    %66 = vector.broadcast %65 : vector<8x1xf32> to vector<8x1156xf32>
    %67 = arith.addf %64, %66 : vector<8x1156xf32>
    %cst_16 = arith.constant 0.000000e+00 : f32
    %68 = vector.broadcast %cst_16 : f32 to vector<8x1156xf32>
    %69 = arith.maximumf %67, %68 : vector<8x1156xf32>
    %70 = vector.broadcast %4 : vector<1x1156xf32> to vector<8x1156xf32>
    %71 = arith.mulf %69, %70 : vector<8x1156xf32>
    %c0_17 = arith.constant 0 : index
    %c0_18 = arith.constant 0 : index
    %72 = vector.load %arg7[%c0_17, %c0_18] : memref<8x72xf32, #tpu.memory_space<vmem>>, vector<8x72xf32>
    %73 = vector.extract_strided_slice %71 {offsets = [0, 1121], sizes = [8, 35], strides = [1, 1]} : vector<8x1156xf32> to vector<8x35xf32>
    %74 = vector.extract_strided_slice %71 {offsets = [0, 0], sizes = [8, 1121], strides = [1, 1]} : vector<8x1156xf32> to vector<8x1121xf32>
    %75 = tpu.concatenate %73, %74 in 1 : vector<8x35xf32>, vector<8x1121xf32> -> vector<8x1156xf32>
    %76 = vector.extract_strided_slice %71 {offsets = [0, 1122], sizes = [8, 34], strides = [1, 1]} : vector<8x1156xf32> to vector<8x34xf32>
    %77 = vector.extract_strided_slice %71 {offsets = [0, 0], sizes = [8, 1122], strides = [1, 1]} : vector<8x1156xf32> to vector<8x1122xf32>
    %78 = tpu.concatenate %76, %77 in 1 : vector<8x34xf32>, vector<8x1122xf32> -> vector<8x1156xf32>
    %79 = vector.extract_strided_slice %71 {offsets = [0, 1123], sizes = [8, 33], strides = [1, 1]} : vector<8x1156xf32> to vector<8x33xf32>
    %80 = vector.extract_strided_slice %71 {offsets = [0, 0], sizes = [8, 1123], strides = [1, 1]} : vector<8x1156xf32> to vector<8x1123xf32>
    %81 = tpu.concatenate %79, %80 in 1 : vector<8x33xf32>, vector<8x1123xf32> -> vector<8x1156xf32>
    %82 = vector.extract_strided_slice %71 {offsets = [0, 1155], sizes = [8, 1], strides = [1, 1]} : vector<8x1156xf32> to vector<8x1xf32>
    %83 = vector.extract_strided_slice %71 {offsets = [0, 0], sizes = [8, 1155], strides = [1, 1]} : vector<8x1156xf32> to vector<8x1155xf32>
    %84 = tpu.concatenate %82, %83 in 1 : vector<8x1xf32>, vector<8x1155xf32> -> vector<8x1156xf32>
    %85 = vector.extract_strided_slice %71 {offsets = [0, 1], sizes = [8, 1155], strides = [1, 1]} : vector<8x1156xf32> to vector<8x1155xf32>
    %86 = vector.extract_strided_slice %71 {offsets = [0, 0], sizes = [8, 1], strides = [1, 1]} : vector<8x1156xf32> to vector<8x1xf32>
    %87 = tpu.concatenate %85, %86 in 1 : vector<8x1155xf32>, vector<8x1xf32> -> vector<8x1156xf32>
    %88 = vector.extract_strided_slice %71 {offsets = [0, 33], sizes = [8, 1123], strides = [1, 1]} : vector<8x1156xf32> to vector<8x1123xf32>
    %89 = vector.extract_strided_slice %71 {offsets = [0, 0], sizes = [8, 33], strides = [1, 1]} : vector<8x1156xf32> to vector<8x33xf32>
    %90 = tpu.concatenate %88, %89 in 1 : vector<8x1123xf32>, vector<8x33xf32> -> vector<8x1156xf32>
    %91 = vector.extract_strided_slice %71 {offsets = [0, 34], sizes = [8, 1122], strides = [1, 1]} : vector<8x1156xf32> to vector<8x1122xf32>
    %92 = vector.extract_strided_slice %71 {offsets = [0, 0], sizes = [8, 34], strides = [1, 1]} : vector<8x1156xf32> to vector<8x34xf32>
    %93 = tpu.concatenate %91, %92 in 1 : vector<8x1122xf32>, vector<8x34xf32> -> vector<8x1156xf32>
    %94 = vector.extract_strided_slice %71 {offsets = [0, 35], sizes = [8, 1121], strides = [1, 1]} : vector<8x1156xf32> to vector<8x1121xf32>
    %95 = vector.extract_strided_slice %71 {offsets = [0, 0], sizes = [8, 35], strides = [1, 1]} : vector<8x1156xf32> to vector<8x35xf32>
    %96 = tpu.concatenate %94, %95 in 1 : vector<8x1121xf32>, vector<8x35xf32> -> vector<8x1156xf32>
    %97 = tpu.concatenate %75, %78, %81, %84, %71, %87, %90, %93, %96 in 0 : vector<8x1156xf32>, vector<8x1156xf32>, vector<8x1156xf32>, vector<8x1156xf32>, vector<8x1156xf32>, vector<8x1156xf32>, vector<8x1156xf32>, vector<8x1156xf32>, vector<8x1156xf32> -> vector<72x1156xf32>
    %cst_19 = arith.constant dense<0.000000e+00> : vector<8x1156xf32>
    %98 = tpu.matmul %72, %97, %cst_19 {dimension_numbers = #tpu.dot_dimension_numbers<[1], [0], [0], [1], [0, 0, 1, 1], [], []>} : vector<8x72xf32>, vector<72x1156xf32>, vector<8x1156xf32> -> vector<8x1156xf32>
    %c0_20 = arith.constant 0 : index
    %c0_21 = arith.constant 0 : index
    %99 = vector.load %arg8[%c0_20, %c0_21] : memref<8x1xf32, #tpu.memory_space<vmem>>, vector<8x1xf32>
    %100 = vector.broadcast %99 : vector<8x1xf32> to vector<8x1156xf32>
    %101 = arith.addf %98, %100 : vector<8x1156xf32>
    %c0_22 = arith.constant 0 : index
    %c0_23 = arith.constant 0 : index
    %102 = vector.load %arg9[%c0_22, %c0_23] : memref<8x16xf32, #tpu.memory_space<vmem>>, vector<8x16xf32>
    %cst_24 = arith.constant dense<0.000000e+00> : vector<8x1156xf32>
    %103 = tpu.matmul %102, %37, %cst_24 {dimension_numbers = #tpu.dot_dimension_numbers<[1], [0], [0], [1], [0, 0, 1, 1], [], []>} : vector<8x16xf32>, vector<16x1156xf32>, vector<8x1156xf32> -> vector<8x1156xf32>
    %104 = arith.addf %101, %103 : vector<8x1156xf32>
    %c0_25 = arith.constant 0 : index
    %c0_26 = arith.constant 0 : index
    %105 = vector.load %arg10[%c0_25, %c0_26] : memref<8x1xf32, #tpu.memory_space<vmem>>, vector<8x1xf32>
    %106 = vector.broadcast %105 : vector<8x1xf32> to vector<8x1156xf32>
    %107 = arith.addf %104, %106 : vector<8x1156xf32>
    %cst_27 = arith.constant 0.000000e+00 : f32
    %108 = vector.broadcast %cst_27 : f32 to vector<8x1156xf32>
    %109 = arith.maximumf %107, %108 : vector<8x1156xf32>
    %110 = vector.broadcast %4 : vector<1x1156xf32> to vector<8x1156xf32>
    %111 = arith.mulf %109, %110 : vector<8x1156xf32>
    %112 = vector.shape_cast %111 : vector<8x1156xf32> to vector<1x8x1156xf32>
    %c0_28 = arith.constant 0 : index
    %c0_29 = arith.constant 0 : index
    %c0_30 = arith.constant 0 : index
    %113 = vector.load %arg12[%c0_28, %c0_29, %c0_30] : memref<1x8x1156xf32, #tpu.memory_space<vmem>>, vector<1x8x1156xf32>
    tpu.vector_store %arg12[%c0_28, %c0_29, %c0_30], %112 {strides = array<i32>} : memref<1x8x1156xf32, #tpu.memory_space<vmem>>, vector<1x8x1156xf32>,
    return
  }
  func.func @transform_0(%arg0: i32) -> (i32, i32, i32) {
    %c0_i32 = arith.constant 0 : i32
    %c0_i32_0 = arith.constant 0 : i32
    %c0_i32_1 = arith.constant 0 : i32
    return %arg0, %c0_i32, %c0_i32_0 : i32, i32, i32
  }
  func.func @transform_1(%arg0: i32) -> (i32, i32, i32) {
    %c0_i32 = arith.constant 0 : i32
    %c0_i32_0 = arith.constant 0 : i32
    %c0_i32_1 = arith.constant 0 : i32
    return %arg0, %c0_i32, %c0_i32_0 : i32, i32, i32
  }
  func.func @transform_2(%arg0: i32) -> (i32, i32) {
    %c0_i32 = arith.constant 0 : i32
    %c0_i32_0 = arith.constant 0 : i32
    %c0_i32_1 = arith.constant 0 : i32
    return %c0_i32, %c0_i32_0 : i32, i32
  }
  func.func @transform_3(%arg0: i32) -> (i32, i32) {
    %c0_i32 = arith.constant 0 : i32
    %c0_i32_0 = arith.constant 0 : i32
    %c0_i32_1 = arith.constant 0 : i32
    return %c0_i32, %c0_i32_0 : i32, i32
  }
  func.func @transform_4(%arg0: i32) -> (i32, i32) {
    %c0_i32 = arith.constant 0 : i32
    %c0_i32_0 = arith.constant 0 : i32
    %c0_i32_1 = arith.constant 0 : i32
    return %c0_i32, %c0_i32_0 : i32, i32
  }
  func.func @transform_5(%arg0: i32) -> (i32, i32) {
    %c0_i32 = arith.constant 0 : i32
    %c0_i32_0 = arith.constant 0 : i32
    %c0_i32_1 = arith.constant 0 : i32
    return %c0_i32, %c0_i32_0 : i32, i32
  }
  func.func @transform_6(%arg0: i32) -> (i32, i32) {
    %c0_i32 = arith.constant 0 : i32
    %c0_i32_0 = arith.constant 0 : i32
    %c0_i32_1 = arith.constant 0 : i32
    return %c0_i32, %c0_i32_0 : i32, i32
  }
  func.func @transform_7(%arg0: i32) -> (i32, i32) {
    %c0_i32 = arith.constant 0 : i32
    %c0_i32_0 = arith.constant 0 : i32
    %c0_i32_1 = arith.constant 0 : i32
    return %c0_i32, %c0_i32_0 : i32, i32
  }
  func.func @transform_8(%arg0: i32) -> (i32, i32) {
    %c0_i32 = arith.constant 0 : i32
    %c0_i32_0 = arith.constant 0 : i32
    %c0_i32_1 = arith.constant 0 : i32
    return %c0_i32, %c0_i32_0 : i32, i32
  }
  func.func @transform_9(%arg0: i32) -> (i32, i32) {
    %c0_i32 = arith.constant 0 : i32
    %c0_i32_0 = arith.constant 0 : i32
    %c0_i32_1 = arith.constant 0 : i32
    return %c0_i32, %c0_i32_0 : i32, i32
  }
  func.func @transform_10(%arg0: i32) -> (i32, i32) {
    %c0_i32 = arith.constant 0 : i32
    %c0_i32_0 = arith.constant 0 : i32
    %c0_i32_1 = arith.constant 0 : i32
    return %c0_i32, %c0_i32_0 : i32, i32
  }
  func.func @transform_11(%arg0: i32) -> (i32, i32, i32) {
    %c0_i32 = arith.constant 0 : i32
    %c0_i32_0 = arith.constant 0 : i32
    %c0_i32_1 = arith.constant 0 : i32
    return %arg0, %c0_i32, %c0_i32_0 : i32, i32, i32
  }
}

module attributes {stable_mosaic.version = 11 : i64} {
  func.func @_final_cnn_kernel(%arg0: i32, %arg1: memref<1x8x1156xf32, #tpu.memory_space<vmem>>, %arg2: memref<3x72xf32, #tpu.memory_space<vmem>>, %arg3: memref<3x1xf32, #tpu.memory_space<vmem>>, %arg4: memref<3x27xf32, #tpu.memory_space<vmem>>, %arg5: memref<3x1xf32, #tpu.memory_space<vmem>>, %arg6: memref<3x8xf32, #tpu.memory_space<vmem>>, %arg7: memref<3x1xf32, #tpu.memory_space<vmem>>, %arg8: memref<1x1156xf32, #tpu.memory_space<vmem>>, %arg9: memref<1x3x1156xf32, #tpu.memory_space<vmem>>) attributes {dimension_semantics = [#tpu.dimension_semantics<parallel>], iteration_bounds = array<i64: 2>, scalar_prefetch = 0 : i64, scratch_operands = 0 : i64, tpu.core_type = #tpu.core_type<tc>, window_params = [{transform_indices = @transform_0, window_bounds = array<i64: 1, 8, 1156>}, {pipeline_mode = #tpu.pipeline_mode<synchronous>, transform_indices = @transform_1, window_bounds = array<i64: 3, 72>}, {pipeline_mode = #tpu.pipeline_mode<synchronous>, transform_indices = @transform_2, window_bounds = array<i64: 3, 1>}, {pipeline_mode = #tpu.pipeline_mode<synchronous>, transform_indices = @transform_3, window_bounds = array<i64: 3, 27>}, {pipeline_mode = #tpu.pipeline_mode<synchronous>, transform_indices = @transform_4, window_bounds = array<i64: 3, 1>}, {pipeline_mode = #tpu.pipeline_mode<synchronous>, transform_indices = @transform_5, window_bounds = array<i64: 3, 8>}, {pipeline_mode = #tpu.pipeline_mode<synchronous>, transform_indices = @transform_6, window_bounds = array<i64: 3, 1>}, {pipeline_mode = #tpu.pipeline_mode<synchronous>, transform_indices = @transform_7, window_bounds = array<i64: 1, 1156>}, {transform_indices = @transform_8, window_bounds = array<i64: 1, 3, 1156>}]} {
    %c0 = arith.constant 0 : index
    %c0_0 = arith.constant 0 : index
    %c0_1 = arith.constant 0 : index
    %0 = vector.load %arg1[%c0, %c0_0, %c0_1] : memref<1x8x1156xf32, #tpu.memory_space<vmem>>, vector<1x8x1156xf32>
    %1 = vector.shape_cast %0 : vector<1x8x1156xf32> to vector<8x1156xf32>
    %c0_2 = arith.constant 0 : index
    %c0_3 = arith.constant 0 : index
    %2 = vector.load %arg8[%c0_2, %c0_3] : memref<1x1156xf32, #tpu.memory_space<vmem>>, vector<1x1156xf32>
    %c0_4 = arith.constant 0 : index
    %c0_5 = arith.constant 0 : index
    %3 = vector.load %arg2[%c0_4, %c0_5] : memref<3x72xf32, #tpu.memory_space<vmem>>, vector<3x72xf32>
    %4 = vector.extract_strided_slice %1 {offsets = [0, 1121], sizes = [8, 35], strides = [1, 1]} : vector<8x1156xf32> to vector<8x35xf32>
    %5 = vector.extract_strided_slice %1 {offsets = [0, 0], sizes = [8, 1121], strides = [1, 1]} : vector<8x1156xf32> to vector<8x1121xf32>
    %6 = tpu.concatenate %4, %5 in 1 : vector<8x35xf32>, vector<8x1121xf32> -> vector<8x1156xf32>
    %7 = vector.extract_strided_slice %1 {offsets = [0, 1122], sizes = [8, 34], strides = [1, 1]} : vector<8x1156xf32> to vector<8x34xf32>
    %8 = vector.extract_strided_slice %1 {offsets = [0, 0], sizes = [8, 1122], strides = [1, 1]} : vector<8x1156xf32> to vector<8x1122xf32>
    %9 = tpu.concatenate %7, %8 in 1 : vector<8x34xf32>, vector<8x1122xf32> -> vector<8x1156xf32>
    %10 = vector.extract_strided_slice %1 {offsets = [0, 1123], sizes = [8, 33], strides = [1, 1]} : vector<8x1156xf32> to vector<8x33xf32>
    %11 = vector.extract_strided_slice %1 {offsets = [0, 0], sizes = [8, 1123], strides = [1, 1]} : vector<8x1156xf32> to vector<8x1123xf32>
    %12 = tpu.concatenate %10, %11 in 1 : vector<8x33xf32>, vector<8x1123xf32> -> vector<8x1156xf32>
    %13 = vector.extract_strided_slice %1 {offsets = [0, 1155], sizes = [8, 1], strides = [1, 1]} : vector<8x1156xf32> to vector<8x1xf32>
    %14 = vector.extract_strided_slice %1 {offsets = [0, 0], sizes = [8, 1155], strides = [1, 1]} : vector<8x1156xf32> to vector<8x1155xf32>
    %15 = tpu.concatenate %13, %14 in 1 : vector<8x1xf32>, vector<8x1155xf32> -> vector<8x1156xf32>
    %16 = vector.extract_strided_slice %1 {offsets = [0, 1], sizes = [8, 1155], strides = [1, 1]} : vector<8x1156xf32> to vector<8x1155xf32>
    %17 = vector.extract_strided_slice %1 {offsets = [0, 0], sizes = [8, 1], strides = [1, 1]} : vector<8x1156xf32> to vector<8x1xf32>
    %18 = tpu.concatenate %16, %17 in 1 : vector<8x1155xf32>, vector<8x1xf32> -> vector<8x1156xf32>
    %19 = vector.extract_strided_slice %1 {offsets = [0, 33], sizes = [8, 1123], strides = [1, 1]} : vector<8x1156xf32> to vector<8x1123xf32>
    %20 = vector.extract_strided_slice %1 {offsets = [0, 0], sizes = [8, 33], strides = [1, 1]} : vector<8x1156xf32> to vector<8x33xf32>
    %21 = tpu.concatenate %19, %20 in 1 : vector<8x1123xf32>, vector<8x33xf32> -> vector<8x1156xf32>
    %22 = vector.extract_strided_slice %1 {offsets = [0, 34], sizes = [8, 1122], strides = [1, 1]} : vector<8x1156xf32> to vector<8x1122xf32>
    %23 = vector.extract_strided_slice %1 {offsets = [0, 0], sizes = [8, 34], strides = [1, 1]} : vector<8x1156xf32> to vector<8x34xf32>
    %24 = tpu.concatenate %22, %23 in 1 : vector<8x1122xf32>, vector<8x34xf32> -> vector<8x1156xf32>
    %25 = vector.extract_strided_slice %1 {offsets = [0, 35], sizes = [8, 1121], strides = [1, 1]} : vector<8x1156xf32> to vector<8x1121xf32>
    %26 = vector.extract_strided_slice %1 {offsets = [0, 0], sizes = [8, 35], strides = [1, 1]} : vector<8x1156xf32> to vector<8x35xf32>
    %27 = tpu.concatenate %25, %26 in 1 : vector<8x1121xf32>, vector<8x35xf32> -> vector<8x1156xf32>
    %28 = tpu.concatenate %6, %9, %12, %15, %1, %18, %21, %24, %27 in 0 : vector<8x1156xf32>, vector<8x1156xf32>, vector<8x1156xf32>, vector<8x1156xf32>, vector<8x1156xf32>, vector<8x1156xf32>, vector<8x1156xf32>, vector<8x1156xf32>, vector<8x1156xf32> -> vector<72x1156xf32>
    %cst = arith.constant dense<0.000000e+00> : vector<3x1156xf32>
    %29 = tpu.matmul %3, %28, %cst {dimension_numbers = #tpu.dot_dimension_numbers<[1], [0], [0], [1], [0, 0, 1, 1], [], []>} : vector<3x72xf32>, vector<72x1156xf32>, vector<3x1156xf32> -> vector<3x1156xf32>
    %c0_6 = arith.constant 0 : index
    %c0_7 = arith.constant 0 : index
    %30 = vector.load %arg3[%c0_6, %c0_7] : memref<3x1xf32, #tpu.memory_space<vmem>>, vector<3x1xf32>
    %31 = vector.broadcast %30 : vector<3x1xf32> to vector<3x1156xf32>
    %32 = arith.addf %29, %31 : vector<3x1156xf32>
    %cst_8 = arith.constant 0.000000e+00 : f32
    %33 = vector.broadcast %cst_8 : f32 to vector<3x1156xf32>
    %34 = arith.maximumf %32, %33 : vector<3x1156xf32>
    %35 = vector.broadcast %2 : vector<1x1156xf32> to vector<3x1156xf32>
    %36 = arith.mulf %34, %35 : vector<3x1156xf32>
    %c0_9 = arith.constant 0 : index
    %c0_10 = arith.constant 0 : index
    %37 = vector.load %arg4[%c0_9, %c0_10] : memref<3x27xf32, #tpu.memory_space<vmem>>, vector<3x27xf32>
    %38 = vector.extract_strided_slice %36 {offsets = [0, 1121], sizes = [3, 35], strides = [1, 1]} : vector<3x1156xf32> to vector<3x35xf32>
    %39 = vector.extract_strided_slice %36 {offsets = [0, 0], sizes = [3, 1121], strides = [1, 1]} : vector<3x1156xf32> to vector<3x1121xf32>
    %40 = tpu.concatenate %38, %39 in 1 : vector<3x35xf32>, vector<3x1121xf32> -> vector<3x1156xf32>
    %41 = vector.extract_strided_slice %36 {offsets = [0, 1122], sizes = [3, 34], strides = [1, 1]} : vector<3x1156xf32> to vector<3x34xf32>
    %42 = vector.extract_strided_slice %36 {offsets = [0, 0], sizes = [3, 1122], strides = [1, 1]} : vector<3x1156xf32> to vector<3x1122xf32>
    %43 = tpu.concatenate %41, %42 in 1 : vector<3x34xf32>, vector<3x1122xf32> -> vector<3x1156xf32>
    %44 = vector.extract_strided_slice %36 {offsets = [0, 1123], sizes = [3, 33], strides = [1, 1]} : vector<3x1156xf32> to vector<3x33xf32>
    %45 = vector.extract_strided_slice %36 {offsets = [0, 0], sizes = [3, 1123], strides = [1, 1]} : vector<3x1156xf32> to vector<3x1123xf32>
    %46 = tpu.concatenate %44, %45 in 1 : vector<3x33xf32>, vector<3x1123xf32> -> vector<3x1156xf32>
    %47 = vector.extract_strided_slice %36 {offsets = [0, 1155], sizes = [3, 1], strides = [1, 1]} : vector<3x1156xf32> to vector<3x1xf32>
    %48 = vector.extract_strided_slice %36 {offsets = [0, 0], sizes = [3, 1155], strides = [1, 1]} : vector<3x1156xf32> to vector<3x1155xf32>
    %49 = tpu.concatenate %47, %48 in 1 : vector<3x1xf32>, vector<3x1155xf32> -> vector<3x1156xf32>
    %50 = vector.extract_strided_slice %36 {offsets = [0, 1], sizes = [3, 1155], strides = [1, 1]} : vector<3x1156xf32> to vector<3x1155xf32>
    %51 = vector.extract_strided_slice %36 {offsets = [0, 0], sizes = [3, 1], strides = [1, 1]} : vector<3x1156xf32> to vector<3x1xf32>
    %52 = tpu.concatenate %50, %51 in 1 : vector<3x1155xf32>, vector<3x1xf32> -> vector<3x1156xf32>
    %53 = vector.extract_strided_slice %36 {offsets = [0, 33], sizes = [3, 1123], strides = [1, 1]} : vector<3x1156xf32> to vector<3x1123xf32>
    %54 = vector.extract_strided_slice %36 {offsets = [0, 0], sizes = [3, 33], strides = [1, 1]} : vector<3x1156xf32> to vector<3x33xf32>
    %55 = tpu.concatenate %53, %54 in 1 : vector<3x1123xf32>, vector<3x33xf32> -> vector<3x1156xf32>
    %56 = vector.extract_strided_slice %36 {offsets = [0, 34], sizes = [3, 1122], strides = [1, 1]} : vector<3x1156xf32> to vector<3x1122xf32>
    %57 = vector.extract_strided_slice %36 {offsets = [0, 0], sizes = [3, 34], strides = [1, 1]} : vector<3x1156xf32> to vector<3x34xf32>
    %58 = tpu.concatenate %56, %57 in 1 : vector<3x1122xf32>, vector<3x34xf32> -> vector<3x1156xf32>
    %59 = vector.extract_strided_slice %36 {offsets = [0, 35], sizes = [3, 1121], strides = [1, 1]} : vector<3x1156xf32> to vector<3x1121xf32>
    %60 = vector.extract_strided_slice %36 {offsets = [0, 0], sizes = [3, 35], strides = [1, 1]} : vector<3x1156xf32> to vector<3x35xf32>
    %61 = tpu.concatenate %59, %60 in 1 : vector<3x1121xf32>, vector<3x35xf32> -> vector<3x1156xf32>
    %62 = tpu.concatenate %40, %43, %46, %49, %36, %52, %55, %58, %61 in 0 : vector<3x1156xf32>, vector<3x1156xf32>, vector<3x1156xf32>, vector<3x1156xf32>, vector<3x1156xf32>, vector<3x1156xf32>, vector<3x1156xf32>, vector<3x1156xf32>, vector<3x1156xf32> -> vector<27x1156xf32>
    %cst_11 = arith.constant dense<0.000000e+00> : vector<3x1156xf32>
    %63 = tpu.matmul %37, %62, %cst_11 {dimension_numbers = #tpu.dot_dimension_numbers<[1], [0], [0], [1], [0, 0, 1, 1], [], []>} : vector<3x27xf32>, vector<27x1156xf32>, vector<3x1156xf32> -> vector<3x1156xf32>
    %c0_12 = arith.constant 0 : index
    %c0_13 = arith.constant 0 : index
    %64 = vector.load %arg5[%c0_12, %c0_13] : memref<3x1xf32, #tpu.memory_space<vmem>>, vector<3x1xf32>
    %65 = vector.broadcast %64 : vector<3x1xf32> to vector<3x1156xf32>
    %66 = arith.addf %63, %65 : vector<3x1156xf32>
    %c0_14 = arith.constant 0 : index
    %c0_15 = arith.constant 0 : index
    %67 = vector.load %arg6[%c0_14, %c0_15] : memref<3x8xf32, #tpu.memory_space<vmem>>, vector<3x8xf32>
    %cst_16 = arith.constant dense<0.000000e+00> : vector<3x1156xf32>
    %68 = tpu.matmul %67, %1, %cst_16 {dimension_numbers = #tpu.dot_dimension_numbers<[1], [0], [0], [1], [0, 0, 1, 1], [], []>} : vector<3x8xf32>, vector<8x1156xf32>, vector<3x1156xf32> -> vector<3x1156xf32>
    %69 = arith.addf %66, %68 : vector<3x1156xf32>
    %c0_17 = arith.constant 0 : index
    %c0_18 = arith.constant 0 : index
    %70 = vector.load %arg7[%c0_17, %c0_18] : memref<3x1xf32, #tpu.memory_space<vmem>>, vector<3x1xf32>
    %71 = vector.broadcast %70 : vector<3x1xf32> to vector<3x1156xf32>
    %72 = arith.addf %69, %71 : vector<3x1156xf32>
    %cst_19 = arith.constant 0.000000e+00 : f32
    %73 = vector.broadcast %cst_19 : f32 to vector<3x1156xf32>
    %74 = arith.subf %73, %72 : vector<3x1156xf32>
    %75 = math.exp %74 : vector<3x1156xf32>
    %cst_20 = arith.constant 1.000000e+00 : f32
    %76 = vector.broadcast %cst_20 : f32 to vector<3x1156xf32>
    %77 = arith.addf %76, %75 : vector<3x1156xf32>
    %cst_21 = arith.constant 1.000000e+00 : f32
    %78 = vector.broadcast %cst_21 : f32 to vector<3x1156xf32>
    %79 = arith.divf %78, %77 : vector<3x1156xf32>
    %80 = vector.broadcast %2 : vector<1x1156xf32> to vector<3x1156xf32>
    %81 = arith.mulf %79, %80 : vector<3x1156xf32>
    %82 = vector.shape_cast %81 : vector<3x1156xf32> to vector<1x3x1156xf32>
    %c0_22 = arith.constant 0 : index
    %c0_23 = arith.constant 0 : index
    %c0_24 = arith.constant 0 : index
    %83 = vector.load %arg9[%c0_22, %c0_23, %c0_24] : memref<1x3x1156xf32, #tpu.memory_space<vmem>>, vector<1x3x1156xf32>
    tpu.vector_store %arg9[%c0_22, %c0_23, %c0_24], %82 {strides = array<i32>} : memref<1x3x1156xf32, #tpu.memory_space<vmem>>, vector<1x3x1156xf32>,
    return
  }
  func.func @transform_0(%arg0: i32) -> (i32, i32, i32) {
    %c0_i32 = arith.constant 0 : i32
    %c0_i32_0 = arith.constant 0 : i32
    %c0_i32_1 = arith.constant 0 : i32
    return %arg0, %c0_i32, %c0_i32_0 : i32, i32, i32
  }
  func.func @transform_1(%arg0: i32) -> (i32, i32) {
    %c0_i32 = arith.constant 0 : i32
    %c0_i32_0 = arith.constant 0 : i32
    %c0_i32_1 = arith.constant 0 : i32
    return %c0_i32, %c0_i32_0 : i32, i32
  }
  func.func @transform_2(%arg0: i32) -> (i32, i32) {
    %c0_i32 = arith.constant 0 : i32
    %c0_i32_0 = arith.constant 0 : i32
    %c0_i32_1 = arith.constant 0 : i32
    return %c0_i32, %c0_i32_0 : i32, i32
  }
  func.func @transform_3(%arg0: i32) -> (i32, i32) {
    %c0_i32 = arith.constant 0 : i32
    %c0_i32_0 = arith.constant 0 : i32
    %c0_i32_1 = arith.constant 0 : i32
    return %c0_i32, %c0_i32_0 : i32, i32
  }
  func.func @transform_4(%arg0: i32) -> (i32, i32) {
    %c0_i32 = arith.constant 0 : i32
    %c0_i32_0 = arith.constant 0 : i32
    %c0_i32_1 = arith.constant 0 : i32
    return %c0_i32, %c0_i32_0 : i32, i32
  }
  func.func @transform_5(%arg0: i32) -> (i32, i32) {
    %c0_i32 = arith.constant 0 : i32
    %c0_i32_0 = arith.constant 0 : i32
    %c0_i32_1 = arith.constant 0 : i32
    return %c0_i32, %c0_i32_0 : i32, i32
  }
  func.func @transform_6(%arg0: i32) -> (i32, i32) {
    %c0_i32 = arith.constant 0 : i32
    %c0_i32_0 = arith.constant 0 : i32
    %c0_i32_1 = arith.constant 0 : i32
    return %c0_i32, %c0_i32_0 : i32, i32
  }
  func.func @transform_7(%arg0: i32) -> (i32, i32) {
    %c0_i32 = arith.constant 0 : i32
    %c0_i32_0 = arith.constant 0 : i32
    %c0_i32_1 = arith.constant 0 : i32
    return %c0_i32, %c0_i32_0 : i32, i32
  }
  func.func @transform_8(%arg0: i32) -> (i32, i32, i32) {
    %c0_i32 = arith.constant 0 : i32
    %c0_i32_0 = arith.constant 0 : i32
    %c0_i32_1 = arith.constant 0 : i32
    return %arg0, %c0_i32, %c0_i32_0 : i32, i32, i32
  }
}

</mosaic_0001>

<llo_original>
// kernel: decoder_forward.3
$region0: #{decoder_forward.3}
  #allocation0 [shape = 'u32[]', space=smem, size = 0x4, offset = 0x4, fixed_abs, tag = 'smem constant byte address 0x4 - core index']
  #allocation1 [shape = 'u32[144,128]{1,0:T(1,128)}', space=vmem, size = 0x12000, scoped, tag = 'internal scratch']
  %s0 = inlined_call_operand.vmem [shape: f32[2,24,324], index: 0, kind: input, shape index: {}]
  %s1 = inlined_call_operand.vmem [shape: f32[2,12,324], index: 1, kind: input, shape index: {}]
  %s2 = inlined_call_operand.vmem [shape: f32[12,216], index: 2, kind: input, shape index: {}]
  %s3 = inlined_call_operand.vmem [shape: f32[12,1], index: 3, kind: input, shape index: {}]
  %s4 = inlined_call_operand.vmem [shape: f32[16,216], index: 4, kind: input, shape index: {}]
  %s5 = inlined_call_operand.vmem [shape: f32[16,1], index: 5, kind: input, shape index: {}]
  %s6 = inlined_call_operand.vmem [shape: f32[16,144], index: 6, kind: input, shape index: {}]
  %s7 = inlined_call_operand.vmem [shape: f32[16,1], index: 7, kind: input, shape index: {}]
  %s8 = inlined_call_operand.vmem [shape: f32[16,24], index: 8, kind: input, shape index: {}]
  %s9 = inlined_call_operand.vmem [shape: f32[16,1], index: 9, kind: input, shape index: {}]
  %s10 = inlined_call_operand.vmem [shape: f32[1,324], index: 10, kind: input, shape index: {}]
  %s11 = inlined_call_operand.vmem [shape: f32[2,16,324], index: 11, kind: output, shape index: {}]
  %s12 = sld [smem:[#allocation0]]
  $region77: #{decoder_forward.3} parent=0
    _
  %s14 = ssub.s32 1, %s12
  %s15 = scalar_select 0, %s14, %s12
  loop: start=0, step=1, limit=4
  $region2: #{decoder_forward.3} parent=0 // loop_pre_header
    _
  $region3: #{decoder_forward.3} parent=0 // loop_header
    %s17 = sphi 0, %s21
    %p18 = scmp.ge.s32.totalorder %s17, 4
    %s27 = sphi 0, %s29
    %s30 = sphi 0, %s27
    %s31 = sphi 0, %s30
    %s47 = sphi 0, %s31
    %s53 = sphi 0, %s55
    %s56 = sphi 0, %s53
    %s57 = sphi 0, %s56
    %s73 = sphi 0, %s57
    %s77 = sphi 0, %s77
    %s79 = sphi 0, %s77
    %s80 = sphi 0, %s79
    %s94 = sphi 0, %s80
    %s98 = sphi 0, %s98
    %s100 = sphi 0, %s98
    %s101 = sphi 0, %s100
    %s115 = sphi 0, %s101
    %s119 = sphi 0, %s119
    %s121 = sphi 0, %s119
    %s122 = sphi 0, %s121
    %s136 = sphi 0, %s122
    %s140 = sphi 0, %s140
    %s142 = sphi 0, %s140
    %s143 = sphi 0, %s142
    %s157 = sphi 0, %s143
    %s161 = sphi 0, %s161
    %s163 = sphi 0, %s161
    %s164 = sphi 0, %s163
    %s178 = sphi 0, %s164
    %s182 = sphi 0, %s182
    %s184 = sphi 0, %s182
    %s185 = sphi 0, %s184
    %s199 = sphi 0, %s185
    %s203 = sphi 0, %s203
    %s205 = sphi 0, %s203
    %s206 = sphi 0, %s205
    %s220 = sphi 0, %s206
    %s224 = sphi 0, %s224
    %s226 = sphi 0, %s224
    %s227 = sphi 0, %s226
    %s241 = sphi 0, %s227
    %s245 = sphi 0, %s245
    %s247 = sphi 0, %s245
    %s248 = sphi 0, %s247
    %s262 = sphi 0, %s248
    %s268 = sphi 0, %s270
    %s271 = sphi 0, %s268
    %s272 = sphi 0, %s271
    %s288 = sphi 0, %s272
  $region4: #{decoder_forward.3} parent=0 // loop_header_branch
    %20 = sbr.rel (%p18) target = $region8
  $region5: #{decoder_forward.3} parent=0 // loop_body
    %s22 = ssub.s32 %s17, 1
    %s23 = ssub.s32 %s17, 2
    %s24 = sadd.s32 %s17, 1
    %s25 = ssub.s32 %s17, %s24
    %p26 = scmp.eq.s32.totalorder %s25, 0
    %s28 = sadd.s32 %s27, 1
    %s29 = scalar_select %p26, %s27, %s28
    %p32 = pneg %p26
    %p33 = scmp.eq.s32.totalorder %s17, 1
    %p34 = por %p32, %p33
    %p35 = scmp.ne.s32.totalorder %s27, %s30
    %p36 = scmp.eq.s32.totalorder %s17, 0
    %p37 = por %p35, %p36
    %p38 = scmp.ne.s32.totalorder %s27, %s30
    %p39 = scmp.eq.s32.totalorder %s22, 1
    %p40 = por %p38, %p39
    %p41 = scmp.ne.s32.totalorder %s30, %s31
    %p42 = scmp.eq.s32.totalorder %s22, 0
    %p43 = por %p41, %p42
    %p44 = scmp.ne.s32.totalorder %s30, %s31
    %p45 = scmp.eq.s32.totalorder %s23, 1
    %p46 = por %p44, %p45
    %p48 = scmp.ne.s32.totalorder %s31, %s47
    %p49 = scmp.eq.s32.totalorder %s23, 0
    %p50 = por %p48, %p49
    %s51 = ssub.s32 %s17, %s24
    %p52 = scmp.eq.s32.totalorder %s51, 0
    %s54 = sadd.s32 %s53, 1
    %s55 = scalar_select %p52, %s53, %s54
    %p58 = pneg %p52
    %p59 = scmp.eq.s32.totalorder %s17, 1
    %p60 = por %p58, %p59
    %p61 = scmp.ne.s32.totalorder %s53, %s56
    %p62 = scmp.eq.s32.totalorder %s17, 0
    %p63 = por %p61, %p62
    %p64 = scmp.ne.s32.totalorder %s53, %s56
    %p65 = scmp.eq.s32.totalorder %s22, 1
    %p66 = por %p64, %p65
    %p67 = scmp.ne.s32.totalorder %s56, %s57
    %p68 = scmp.eq.s32.totalorder %s22, 0
    %p69 = por %p67, %p68
    %p70 = scmp.ne.s32.totalorder %s56, %s57
    %p71 = scmp.eq.s32.totalorder %s23, 1
    %p72 = por %p70, %p71
    %p74 = scmp.ne.s32.totalorder %s57, %s73
    %p75 = scmp.eq.s32.totalorder %s23, 0
    %p76 = por %p74, %p75
    %s78 = sadd.s32 %s77, 1
    %p81 = scmp.eq.s32.totalorder %s17, 1
    %p82 = scmp.ne.s32.totalorder %s77, %s79
    %p83 = scmp.eq.s32.totalorder %s17, 0
    %p84 = por %p82, %p83
    %p85 = scmp.ne.s32.totalorder %s77, %s79
    %p86 = scmp.eq.s32.totalorder %s22, 1
    %p87 = por %p85, %p86
    %p88 = scmp.ne.s32.totalorder %s79, %s80
    %p89 = scmp.eq.s32.totalorder %s22, 0
    %p90 = por %p88, %p89
    %p91 = scmp.ne.s32.totalorder %s79, %s80
    %p92 = scmp.eq.s32.totalorder %s23, 1
    %p93 = por %p91, %p92
    %p95 = scmp.ne.s32.totalorder %s80, %s94
    %p96 = scmp.eq.s32.totalorder %s23, 0
    %p97 = por %p95, %p96
    %s99 = sadd.s32 %s98, 1
    %p102 = scmp.eq.s32.totalorder %s17, 1
    %p103 = scmp.ne.s32.totalorder %s98, %s100
    %p104 = scmp.eq.s32.totalorder %s17, 0
    %p105 = por %p103, %p104
    %p106 = scmp.ne.s32.totalorder %s98, %s100
    %p107 = scmp.eq.s32.totalorder %s22, 1
    %p108 = por %p106, %p107
    %p109 = scmp.ne.s32.totalorder %s100, %s101
    %p110 = scmp.eq.s32.totalorder %s22, 0
    %p111 = por %p109, %p110
    %p112 = scmp.ne.s32.totalorder %s100, %s101
    %p113 = scmp.eq.s32.totalorder %s23, 1
    %p114 = por %p112, %p113
    %p116 = scmp.ne.s32.totalorder %s101, %s115
    %p117 = scmp.eq.s32.totalorder %s23, 0
    %p118 = por %p116, %p117
    %s120 = sadd.s32 %s119, 1
    %p123 = scmp.eq.s32.totalorder %s17, 1
    %p124 = scmp.ne.s32.totalorder %s119, %s121
    %p125 = scmp.eq.s32.totalorder %s17, 0
    %p126 = por %p124, %p125
    %p127 = scmp.ne.s32.totalorder %s119, %s121
    %p128 = scmp.eq.s32.totalorder %s22, 1
    %p129 = por %p127, %p128
    %p130 = scmp.ne.s32.totalorder %s121, %s122
    %p131 = scmp.eq.s32.totalorder %s22, 0
    %p132 = por %p130, %p131
    %p133 = scmp.ne.s32.totalorder %s121, %s122
    %p134 = scmp.eq.s32.totalorder %s23, 1
    %p135 = por %p133, %p134
    %p137 = scmp.ne.s32.totalorder %s122, %s136
    %p138 = scmp.eq.s32.totalorder %s23, 0
    %p139 = por %p137, %p138
    %s141 = sadd.s32 %s140, 1
    %p144 = scmp.eq.s32.totalorder %s17, 1
    %p145 = scmp.ne.s32.totalorder %s140, %s142
    %p146 = scmp.eq.s32.totalorder %s17, 0
    %p147 = por %p145, %p146
    %p148 = scmp.ne.s32.totalorder %s140, %s142
    %p149 = scmp.eq.s32.totalorder %s22, 1
    %p150 = por %p148, %p149
    %p151 = scmp.ne.s32.totalorder %s142, %s143
    %p152 = scmp.eq.s32.totalorder %s22, 0
    %p153 = por %p151, %p152
    %p154 = scmp.ne.s32.totalorder %s142, %s143
    %p155 = scmp.eq.s32.totalorder %s23, 1
    %p156 = por %p154, %p155
    %p158 = scmp.ne.s32.totalorder %s143, %s157
    %p159 = scmp.eq.s32.totalorder %s23, 0
    %p160 = por %p158, %p159
    %s162 = sadd.s32 %s161, 1
    %p165 = scmp.eq.s32.totalorder %s17, 1
    %p166 = scmp.ne.s32.totalorder %s161, %s163
    %p167 = scmp.eq.s32.totalorder %s17, 0
    %p168 = por %p166, %p167
    %p169 = scmp.ne.s32.totalorder %s161, %s163
    %p170 = scmp.eq.s32.totalorder %s22, 1
    %p171 = por %p169, %p170
    %p172 = scmp.ne.s32.totalorder %s163, %s164
    %p173 = scmp.eq.s32.totalorder %s22, 0
    %p174 = por %p172, %p173
    %p175 = scmp.ne.s32.totalorder %s163, %s164
    %p176 = scmp.eq.s32.totalorder %s23, 1
    %p177 = por %p175, %p176
    %p179 = scmp.ne.s32.totalorder %s164, %s178
    %p180 = scmp.eq.s32.totalorder %s23, 0
    %p181 = por %p179, %p180
    %s183 = sadd.s32 %s182, 1
    %p186 = scmp.eq.s32.totalorder %s17, 1
    %p187 = scmp.ne.s32.totalorder %s182, %s184
    %p188 = scmp.eq.s32.totalorder %s17, 0
    %p189 = por %p187, %p188
    %p190 = scmp.ne.s32.totalorder %s182, %s184
    %p191 = scmp.eq.s32.totalorder %s22, 1
    %p192 = por %p190, %p191
    %p193 = scmp.ne.s32.totalorder %s184, %s185
    %p194 = scmp.eq.s32.totalorder %s22, 0
    %p195 = por %p193, %p194
    %p196 = scmp.ne.s32.totalorder %s184, %s185
    %p197 = scmp.eq.s32.totalorder %s23, 1
    %p198 = por %p196, %p197
    %p200 = scmp.ne.s32.totalorder %s185, %s199
    %p201 = scmp.eq.s32.totalorder %s23, 0
    %p202 = por %p200, %p201
    %s204 = sadd.s32 %s203, 1
    %p207 = scmp.eq.s32.totalorder %s17, 1
    %p208 = scmp.ne.s32.totalorder %s203, %s205
    %p209 = scmp.eq.s32.totalorder %s17, 0
    %p210 = por %p208, %p209
    %p211 = scmp.ne.s32.totalorder %s203, %s205
    %p212 = scmp.eq.s32.totalorder %s22, 1
    %p213 = por %p211, %p212
    %p214 = scmp.ne.s32.totalorder %s205, %s206
    %p215 = scmp.eq.s32.totalorder %s22, 0
    %p216 = por %p214, %p215
    %p217 = scmp.ne.s32.totalorder %s205, %s206
    %p218 = scmp.eq.s32.totalorder %s23, 1
    %p219 = por %p217, %p218
    %p221 = scmp.ne.s32.totalorder %s206, %s220
    %p222 = scmp.eq.s32.totalorder %s23, 0
    %p223 = por %p221, %p222
    %s225 = sadd.s32 %s224, 1
    %p228 = scmp.eq.s32.totalorder %s17, 1
    %p229 = scmp.ne.s32.totalorder %s224, %s226
    %p230 = scmp.eq.s32.totalorder %s17, 0
    %p231 = por %p229, %p230
    %p232 = scmp.ne.s32.totalorder %s224, %s226
    %p233 = scmp.eq.s32.totalorder %s22, 1
    %p234 = por %p232, %p233
    %p235 = scmp.ne.s32.totalorder %s226, %s227
    %p236 = scmp.eq.s32.totalorder %s22, 0
    %p237 = por %p235, %p236
    %p238 = scmp.ne.s32.totalorder %s226, %s227
    %p239 = scmp.eq.s32.totalorder %s23, 1
    %p240 = por %p238, %p239
    %p242 = scmp.ne.s32.totalorder %s227, %s241
    %p243 = scmp.eq.s32.totalorder %s23, 0
    %p244 = por %p242, %p243
    %s246 = sadd.s32 %s245, 1
    %p249 = scmp.eq.s32.totalorder %s17, 1
    %p250 = scmp.ne.s32.totalorder %s245, %s247
    %p251 = scmp.eq.s32.totalorder %s17, 0
    %p252 = por %p250, %p251
    %p253 = scmp.ne.s32.totalorder %s245, %s247
    %p254 = scmp.eq.s32.totalorder %s22, 1
    %p255 = por %p253, %p254
    %p256 = scmp.ne.s32.totalorder %s247, %s248
    %p257 = scmp.eq.s32.totalorder %s22, 0
    %p258 = por %p256, %p257
    %p259 = scmp.ne.s32.totalorder %s247, %s248
    %p260 = scmp.eq.s32.totalorder %s23, 1
    %p261 = por %p259, %p260
    %p263 = scmp.ne.s32.totalorder %s248, %s262
    %p264 = scmp.eq.s32.totalorder %s23, 0
    %p265 = por %p263, %p264
    %s266 = ssub.s32 %s17, %s24
    %p267 = scmp.eq.s32.totalorder %s266, 0
    %s269 = sadd.s32 %s268, 1
    %s270 = scalar_select %p267, %s268, %s269
    %p273 = pneg %p267
    %p274 = scmp.eq.s32.totalorder %s17, 1
    %p275 = por %p273, %p274
    %p276 = scmp.ne.s32.totalorder %s268, %s271
    %p277 = scmp.eq.s32.totalorder %s17, 0
    %p278 = por %p276, %p277
    %p279 = scmp.ne.s32.totalorder %s268, %s271
    %p280 = scmp.eq.s32.totalorder %s22, 1
    %p281 = por %p279, %p280
    %p282 = scmp.ne.s32.totalorder %s271, %s272
    %p283 = scmp.eq.s32.totalorder %s22, 0
    %p284 = por %p282, %p283
    %p285 = scmp.ne.s32.totalorder %s271, %s272
    %p286 = scmp.eq.s32.totalorder %s23, 1
    %p287 = por %p285, %p286
    %p289 = scmp.ne.s32.totalorder %s272, %s288
    %p290 = scmp.eq.s32.totalorder %s23, 0
    %p291 = por %p289, %p290
    %p292 = scmp.le.s32.totalorder 1, %s17
    %p293 = scmp.lt.s32.totalorder %s17, 3
    %p294 = pnand %p292, %p293
    %p295 = pneg %p294
    // Predicated region
    $region9: #{decoder_forward.3} parent=5 // pred_check
      _
    $region10: #{decoder_forward.3} parent=5 // pred_check_branch
      %297 = sbr.rel (%p294) target = $region12
    $region11: #{decoder_forward.3} parent=5 // pred_region
      %s298 = ssub.s32 %s17, 1
      // Predicated region
      $region13: #{decoder_forward.3} parent=11 // pred_check
        %p299 = pneg %p90
      $region14: #{decoder_forward.3} parent=11 // pred_check_branch
        %301 = sbr.rel (%p299) target = $region16
      $region15: #{decoder_forward.3} parent=11 // pred_region
        _
      $region16: #{decoder_forward.3} parent=11 // pred_fallthru
        _
      // Predicated region
      $region17: #{decoder_forward.3} parent=11 // pred_check
        %p302 = pneg %p111
      $region18: #{decoder_forward.3} parent=11 // pred_check_branch
        %304 = sbr.rel (%p302) target = $region20
      $region19: #{decoder_forward.3} parent=11 // pred_region
        _
      $region20: #{decoder_forward.3} parent=11 // pred_fallthru
        _
      // Predicated region
      $region21: #{decoder_forward.3} parent=11 // pred_check
        %p305 = pneg %p132
      $region22: #{decoder_forward.3} parent=11 // pred_check_branch
        %307 = sbr.rel (%p305) target = $region24
      $region23: #{decoder_forward.3} parent=11 // pred_region
        _
      $region24: #{decoder_forward.3} parent=11 // pred_fallthru
        _
      // Predicated region
      $region25: #{decoder_forward.3} parent=11 // pred_check
        %p308 = pneg %p153
      $region26: #{decoder_forward.3} parent=11 // pred_check_branch
        %310 = sbr.rel (%p308) target = $region28
      $region27: #{decoder_forward.3} parent=11 // pred_region
        _
      $region28: #{decoder_forward.3} parent=11 // pred_fallthru
        _
      // Predicated region
      $region29: #{decoder_forward.3} parent=11 // pred_check
        %p311 = pneg %p174
      $region30: #{decoder_forward.3} parent=11 // pred_check_branch
        %313 = sbr.rel (%p311) target = $region32
      $region31: #{decoder_forward.3} parent=11 // pred_region
        _
      $region32: #{decoder_forward.3} parent=11 // pred_fallthru
        _
      // Predicated region
      $region33: #{decoder_forward.3} parent=11 // pred_check
        %p314 = pneg %p195
      $region34: #{decoder_forward.3} parent=11 // pred_check_branch
        %316 = sbr.rel (%p314) target = $region36
      $region35: #{decoder_forward.3} parent=11 // pred_region
        _
      $region36: #{decoder_forward.3} parent=11 // pred_fallthru
        _
      // Predicated region
      $region37: #{decoder_forward.3} parent=11 // pred_check
        %p317 = pneg %p216
      $region38: #{decoder_forward.3} parent=11 // pred_check_branch
        %319 = sbr.rel (%p317) target = $region40
      $region39: #{decoder_forward.3} parent=11 // pred_region
        _
      $region40: #{decoder_forward.3} parent=11 // pred_fallthru
        _
      // Predicated region
      $region41: #{decoder_forward.3} parent=11 // pred_check
        %p320 = pneg %p237
      $region42: #{decoder_forward.3} parent=11 // pred_check_branch
        %322 = sbr.rel (%p320) target = $region44
      $region43: #{decoder_forward.3} parent=11 // pred_region
        _
      $region44: #{decoder_forward.3} parent=11 // pred_fallthru
        _
      // Predicated region
      $region45: #{decoder_forward.3} parent=11 // pred_check
        %p323 = pneg %p258
      $region46: #{decoder_forward.3} parent=11 // pred_check_branch
        %325 = sbr.rel (%p323) target = $region48
      $region47: #{decoder_forward.3} parent=11 // pred_region
        _
      $region48: #{decoder_forward.3} parent=11 // pred_fallthru
        _
    $region12: #{decoder_forward.3} parent=5 // pred_fallthru
      _
    %p326 = scmp.lt.s32.totalorder %s17, 2
    // Predicated region
    $region49: #{decoder_forward.3} parent=5 // pred_check
      %p327 = pneg %p326
    $region50: #{decoder_forward.3} parent=5 // pred_check_branch
      %329 = sbr.rel (%p327) target = $region52
    $region51: #{decoder_forward.3} parent=5 // pred_region
      // Predicated region
      $region53: #{decoder_forward.3} parent=51 // pred_check
        %p330 = pneg %p37
      $region54: #{decoder_forward.3} parent=51 // pred_check_branch
        %332 = sbr.rel (%p330) target = $region56
      $region55: #{decoder_forward.3} parent=51 // pred_region
        %p333 = scmp.lt.s32.totalorder %s17, 1
        %s334 = scalar_select %p333, %s17, 1
        %s335 = smul.addr %s334, 9
        %s336 = smul.addr %s335, 8
        %s337 = scalar_lea.vmem %s0, %s336
      $region56: #{decoder_forward.3} parent=51 // pred_fallthru
        _
      // Predicated region
      $region57: #{decoder_forward.3} parent=51 // pred_check
        %p338 = pneg %p63
      $region58: #{decoder_forward.3} parent=51 // pred_check_branch
        %340 = sbr.rel (%p338) target = $region60
      $region59: #{decoder_forward.3} parent=51 // pred_region
        %p341 = scmp.lt.s32.totalorder %s17, 1
        %s342 = scalar_select %p341, %s17, 1
        %s343 = smul.addr %s342, 6
        %s344 = smul.addr %s343, 8
        %s345 = scalar_lea.vmem %s1, %s344
      $region60: #{decoder_forward.3} parent=51 // pred_fallthru
        _
    $region52: #{decoder_forward.3} parent=5 // pred_fallthru
      _
    %p346 = scmp.le.s32.totalorder 1, %s17
    %p347 = scmp.lt.s32.totalorder %s17, 3
    %p348 = pnand %p346, %p347
    %p349 = pneg %p348
    // Predicated region
    $region61: #{decoder_forward.3} parent=5 // pred_check
      _
    $region62: #{decoder_forward.3} parent=5 // pred_check_branch
      %351 = sbr.rel (%p348) target = $region64
    $region63: #{decoder_forward.3} parent=5 // pred_region
      %s352 = ssub.s32 %s17, 1
      %p353 = scmp.lt.s32.totalorder %s22, 1
      %s354 = scalar_select %p353, %s22, 1
      %s355 = smul.addr %s354, 9
      %s356 = smul.addr %s355, 8
      %s357 = scalar_lea.vmem %s0, %s356
      %p358 = pneg %p43
      %p359 = pneg %p40
      %p360 = scmp.lt.s32.totalorder %s22, 1
      %s361 = scalar_select %p360, %s22, 1
      %s362 = smul.addr %s361, 6
      %s363 = smul.addr %s362, 8
      %s364 = scalar_lea.vmem %s1, %s363
      %p365 = pneg %p69
      %p366 = pneg %p66
      %p367 = pneg %p90
      %p368 = pneg %p87
      %p369 = pneg %p111
      %p370 = pneg %p108
      %p371 = pneg %p132
      %p372 = pneg %p129
      %p373 = pneg %p153
      %p374 = pneg %p150
      %p375 = pneg %p174
      %p376 = pneg %p171
      %p377 = pneg %p195
      %p378 = pneg %p192
      %p379 = pneg %p216
      %p380 = pneg %p213
      %p381 = pneg %p237
      %p382 = pneg %p234
      %p383 = pneg %p258
      %p384 = pneg %p255
      %p385 = pneg %p284
      %p386 = pneg %p281
      %p387 = scmp.lt.s32.totalorder %s22, 1
      %s388 = scalar_select %p387, %s22, 1
      %s389 = smul.addr %s388, 6
      %s390 = smul.addr %s389, 8
      %s391 = scalar_lea.vmem %s11, %s390
      %p392 = scmp.lt.s32.totalorder %s22, 1
      %s393 = scalar_select %p392, %s22, 1
      %s394 = smul.addr %s393, 9
      %s395 = smul.addr %s394, 8
      %s396 = scalar_lea.vmem %s0, %s395
      %p397 = scmp.lt.s32.totalorder %s22, 1
      %s398 = scalar_select %p397, %s22, 1
      %s399 = smul.addr %s398, 6
      %s400 = smul.addr %s399, 8
      %s401 = scalar_lea.vmem %s1, %s400
      %p402 = scmp.lt.s32.totalorder %s22, 1
      %s403 = scalar_select %p402, %s22, 1
      %s404 = smul.addr %s403, 6
      %s405 = smul.addr %s404, 8
      %s406 = scalar_lea.vmem %s11, %s405
      %v407 = vld [vmem:[%s396] sm:$0xff]
      %v408 = vld [vmem:[%s396 + $0x8] sm:$0xff]
      %v409 = vld [vmem:[%s396 + $0x10] sm:$0xff]
      %v410 = vld [vmem:[%s396 + $0x18] sm:$0xff]
      %v411 = vld [vmem:[%s396 + $0x20] sm:$0xff]
      %v412 = vld [vmem:[%s396 + $0x28] sm:$0xff]
      %v413 = vld [vmem:[%s396 + $0x30] sm:$0xff]
      %v414 = vld [vmem:[%s396 + $0x38] sm:$0xff]
      %v415 = vld [vmem:[%s396 + $0x40] sm:$0xff]
      %v416 = vld [vmem:[%s401] sm:$0xff]
      %v417 = vld [vmem:[%s401 + $0x8] sm:$0xff]
      %v418 = vld [vmem:[%s401 + $0x10] sm:$0xff]
      %v419 = vld [vmem:[%s401 + $0x18] sm:$0xf]
      %v420 = vld [vmem:[%s401 + $0x20] sm:$0xf]
      %v421 = vld [vmem:[%s401 + $0x28] sm:$0xf]
      %v422 = vld [vmem:[%s10] sm:$0x7]
      %v423 = vld [vmem:[%s2] sm:$0xff]
      %v424 = vld [vmem:[%s2 + $0x8] sm:$0xff]
      %v425 = vld [vmem:[%s2 + $0x10] sm:$0xf]
      %v426 = vld [vmem:[%s2 + $0x18] sm:$0xf]
      %430 = vrot.lane.b32.xlu0 %v409, 79
      %v431 = vpop.permute.xlu0 %430
      %432 = vrot.lane.b32.xlu0 %v412, 79
      %v433 = vpop.permute.xlu0 %432
      %434 = vrot.lane.b32.xlu0 %v415, 79
      %v435 = vpop.permute.xlu0 %434
      %445 = vrot.lane.b32.xlu0 %v407, 19
      %v446 = vpop.permute.xlu0 %445
      %447 = vrot.lane.b32.xlu0 %v408, 19
      %v448 = vpop.permute.xlu0 %447
      %449 = vrot.lane.b32.xlu0 %v409, 19
      %v450 = vpop.permute.xlu0 %449
      %451 = vrot.lane.b32.xlu0 %v410, 19
      %v452 = vpop.permute.xlu0 %451
      %453 = vrot.lane.b32.xlu0 %v411, 19
      %v454 = vpop.permute.xlu0 %453
      %455 = vrot.lane.b32.xlu0 %v412, 19
      %v456 = vpop.permute.xlu0 %455
      %457 = vrot.lane.b32.xlu0 %v413, 19
      %v458 = vpop.permute.xlu0 %457
      %459 = vrot.lane.b32.xlu0 %v414, 19
      %v460 = vpop.permute.xlu0 %459
      %461 = vrot.lane.b32.xlu0 %v415, 19
      %v462 = vpop.permute.xlu0 %461
      %vm463 = vcmask 154624
      %v464 = vsel %vm463, %v446, %v448
      %v465 = vsel %vm463, %v448, %v450
      %v466 = vsel %vm463, %v452, %v454
      %v467 = vsel %vm463, %v454, %v456
      %v468 = vsel %vm463, %v458, %v460
      %v469 = vsel %vm463, %v460, %v462
      %v479 = vsel %vm463, %v431, %v446
      %v480 = vsel %vm463, %v433, %v452
      %v481 = vsel %vm463, %v435, %v458
      %482 = vrot.lane.b32.xlu0 %v409, 78
      %v483 = vpop.permute.xlu0 %482
      %484 = vrot.lane.b32.xlu0 %v412, 78
      %v485 = vpop.permute.xlu0 %484
      %486 = vrot.lane.b32.xlu0 %v415, 78
      %v487 = vpop.permute.xlu0 %486
      %491 = vrot.lane.b32.xlu0 %v407, 18
      %v492 = vpop.permute.xlu0 %491
      %493 = vrot.lane.b32.xlu0 %v408, 18
      %v494 = vpop.permute.xlu0 %493
      %495 = vrot.lane.b32.xlu0 %v409, 18
      %v496 = vpop.permute.xlu0 %495
      %497 = vrot.lane.b32.xlu0 %v410, 18
      %v498 = vpop.permute.xlu0 %497
      %499 = vrot.lane.b32.xlu0 %v411, 18
      %v500 = vpop.permute.xlu0 %499
      %501 = vrot.lane.b32.xlu0 %v412, 18
      %v502 = vpop.permute.xlu0 %501
      %503 = vrot.lane.b32.xlu0 %v413, 18
      %v504 = vpop.permute.xlu0 %503
      %505 = vrot.lane.b32.xlu0 %v414, 18
      %v506 = vpop.permute.xlu0 %505
      %507 = vrot.lane.b32.xlu0 %v415, 18
      %v508 = vpop.permute.xlu0 %507
      %vm509 = vcmask 146432
      %v510 = vsel %vm509, %v492, %v494
      %v511 = vsel %vm509, %v494, %v496
      %v512 = vsel %vm509, %v498, %v500
      %v513 = vsel %vm509, %v500, %v502
      %v514 = vsel %vm509, %v504, %v506
      %v515 = vsel %vm509, %v506, %v508
      %v525 = vsel %vm509, %v483, %v492
      %v526 = vsel %vm509, %v485, %v498
      %v527 = vsel %vm509, %v487, %v504
      %528 = vrot.lane.b32.xlu0 %v409, 77
      %v529 = vpop.permute.xlu0 %528
      %530 = vrot.lane.b32.xlu0 %v412, 77
      %v531 = vpop.permute.xlu0 %530
      %532 = vrot.lane.b32.xlu0 %v415, 77
      %v533 = vpop.permute.xlu0 %532
      %537 = vrot.lane.b32.xlu0 %v407, 17
      %v538 = vpop.permute.xlu0 %537
      %539 = vrot.lane.b32.xlu0 %v408, 17
      %v540 = vpop.permute.xlu0 %539
      %541 = vrot.lane.b32.xlu0 %v409, 17
      %v542 = vpop.permute.xlu0 %541
      %543 = vrot.lane.b32.xlu0 %v410, 17
      %v544 = vpop.permute.xlu0 %543
      %545 = vrot.lane.b32.xlu0 %v411, 17
      %v546 = vpop.permute.xlu0 %545
      %547 = vrot.lane.b32.xlu0 %v412, 17
      %v548 = vpop.permute.xlu0 %547
      %549 = vrot.lane.b32.xlu0 %v413, 17
      %v550 = vpop.permute.xlu0 %549
      %551 = vrot.lane.b32.xlu0 %v414, 17
      %v552 = vpop.permute.xlu0 %551
      %553 = vrot.lane.b32.xlu0 %v415, 17
      %v554 = vpop.permute.xlu0 %553
      %vm555 = vcmask 138240
      %v556 = vsel %vm555, %v538, %v540
      %v557 = vsel %vm555, %v540, %v542
      %v558 = vsel %vm555, %v544, %v546
      %v559 = vsel %vm555, %v546, %v548
      %v560 = vsel %vm555, %v550, %v552
      %v561 = vsel %vm555, %v552, %v554
      %v571 = vsel %vm555, %v529, %v538
      %v572 = vsel %vm555, %v531, %v544
      %v573 = vsel %vm555, %v533, %v550
      %574 = vrot.lane.b32.xlu0 %v409, 61
      %v575 = vpop.permute.xlu0 %574
      %576 = vrot.lane.b32.xlu0 %v412, 61
      %v577 = vpop.permute.xlu0 %576
      %578 = vrot.lane.b32.xlu0 %v415, 61
      %v579 = vpop.permute.xlu0 %578
      %583 = vrot.lane.b32.xlu0 %v407, 1
      %v584 = vpop.permute.xlu0 %583
      %585 = vrot.lane.b32.xlu0 %v408, 1
      %v586 = vpop.permute.xlu0 %585
      %587 = vrot.lane.b32.xlu0 %v409, 1
      %v588 = vpop.permute.xlu0 %587
      %589 = vrot.lane.b32.xlu0 %v410, 1
      %v590 = vpop.permute.xlu0 %589
      %591 = vrot.lane.b32.xlu0 %v411, 1
      %v592 = vpop.permute.xlu0 %591
      %593 = vrot.lane.b32.xlu0 %v412, 1
      %v594 = vpop.permute.xlu0 %593
      %595 = vrot.lane.b32.xlu0 %v413, 1
      %v596 = vpop.permute.xlu0 %595
      %597 = vrot.lane.b32.xlu0 %v414, 1
      %v598 = vpop.permute.xlu0 %597
      %599 = vrot.lane.b32.xlu0 %v415, 1
      %v600 = vpop.permute.xlu0 %599
      %vm601 = vcmask 7168
      %v602 = vsel %vm601, %v584, %v586
      %v603 = vsel %vm601, %v586, %v588
      %v604 = vsel %vm601, %v590, %v592
      %v605 = vsel %vm601, %v592, %v594
      %v606 = vsel %vm601, %v596, %v598
      %v607 = vsel %vm601, %v598, %v600
      %v617 = vsel %vm601, %v575, %v584
      %v618 = vsel %vm601, %v577, %v590
      %v619 = vsel %vm601, %v579, %v596
      %620 = vrot.lane.b32.xlu0 %v407, 127
      %v621 = vpop.permute.xlu0 %620
      %622 = vrot.lane.b32.xlu0 %v408, 127
      %v623 = vpop.permute.xlu0 %622
      %624 = vrot.lane.b32.xlu0 %v409, 127
      %v625 = vpop.permute.xlu0 %624
      %626 = vrot.lane.b32.xlu0 %v410, 127
      %v627 = vpop.permute.xlu0 %626
      %628 = vrot.lane.b32.xlu0 %v411, 127
      %v629 = vpop.permute.xlu0 %628
      %630 = vrot.lane.b32.xlu0 %v412, 127
      %v631 = vpop.permute.xlu0 %630
      %632 = vrot.lane.b32.xlu0 %v413, 127
      %v633 = vpop.permute.xlu0 %632
      %634 = vrot.lane.b32.xlu0 %v414, 127
      %v635 = vpop.permute.xlu0 %634
      %636 = vrot.lane.b32.xlu0 %v415, 127
      %v637 = vpop.permute.xlu0 %636
      %vm638 = vcmask 1039360
      %v639 = vsel %vm638, %v621, %v623
      %v640 = vsel %vm638, %v623, %v625
      %v641 = vsel %vm638, %v627, %v629
      %v642 = vsel %vm638, %v629, %v631
      %v643 = vsel %vm638, %v633, %v635
      %v644 = vsel %vm638, %v635, %v637
      %654 = vrot.lane.b32.xlu0 %v407, 67
      %v655 = vpop.permute.xlu0 %654
      %656 = vrot.lane.b32.xlu0 %v410, 67
      %v657 = vpop.permute.xlu0 %656
      %658 = vrot.lane.b32.xlu0 %v413, 67
      %v659 = vpop.permute.xlu0 %658
      %vm663 = vcmask 547840
      %v664 = vsel %vm663, %v625, %v655
      %v665 = vsel %vm663, %v631, %v657
      %v666 = vsel %vm663, %v637, %v659
      %667 = vrot.lane.b32.xlu0 %v407, 111
      %v668 = vpop.permute.xlu0 %667
      %669 = vrot.lane.b32.xlu0 %v408, 111
      %v670 = vpop.permute.xlu0 %669
      %671 = vrot.lane.b32.xlu0 %v409, 111
      %v672 = vpop.permute.xlu0 %671
      %673 = vrot.lane.b32.xlu0 %v410, 111
      %v674 = vpop.permute.xlu0 %673
      %675 = vrot.lane.b32.xlu0 %v411, 111
      %v676 = vpop.permute.xlu0 %675
      %677 = vrot.lane.b32.xlu0 %v412, 111
      %v678 = vpop.permute.xlu0 %677
      %679 = vrot.lane.b32.xlu0 %v413, 111
      %v680 = vpop.permute.xlu0 %679
      %681 = vrot.lane.b32.xlu0 %v414, 111
      %v682 = vpop.permute.xlu0 %681
      %683 = vrot.lane.b32.xlu0 %v415, 111
      %v684 = vpop.permute.xlu0 %683
      %vm685 = vcmask 908288
      %v686 = vsel %vm685, %v668, %v670
      %v687 = vsel %vm685, %v670, %v672
      %v688 = vsel %vm685, %v674, %v676
      %v689 = vsel %vm685, %v676, %v678
      %v690 = vsel %vm685, %v680, %v682
      %v691 = vsel %vm685, %v682, %v684
      %701 = vrot.lane.b32.xlu0 %v407, 51
      %v702 = vpop.permute.xlu0 %701
      %703 = vrot.lane.b32.xlu0 %v410, 51
      %v704 = vpop.permute.xlu0 %703
      %705 = vrot.lane.b32.xlu0 %v413, 51
      %v706 = vpop.permute.xlu0 %705
      %vm710 = vcmask 416768
      %v711 = vsel %vm710, %v672, %v702
      %v712 = vsel %vm710, %v678, %v704
      %v713 = vsel %vm710, %v684, %v706
      %714 = vrot.lane.b32.xlu0 %v407, 110
      %v715 = vpop.permute.xlu0 %714
      %716 = vrot.lane.b32.xlu0 %v408, 110
      %v717 = vpop.permute.xlu0 %716
      %718 = vrot.lane.b32.xlu0 %v409, 110
      %v719 = vpop.permute.xlu0 %718
      %720 = vrot.lane.b32.xlu0 %v410, 110
      %v721 = vpop.permute.xlu0 %720
      %722 = vrot.lane.b32.xlu0 %v411, 110
      %v723 = vpop.permute.xlu0 %722
      %724 = vrot.lane.b32.xlu0 %v412, 110
      %v725 = vpop.permute.xlu0 %724
      %726 = vrot.lane.b32.xlu0 %v413, 110
      %v727 = vpop.permute.xlu0 %726
      %728 = vrot.lane.b32.xlu0 %v414, 110
      %v729 = vpop.permute.xlu0 %728
      %730 = vrot.lane.b32.xlu0 %v415, 110
      %v731 = vpop.permute.xlu0 %730
      %vm732 = vcmask 900096
      %v733 = vsel %vm732, %v715, %v717
      %v734 = vsel %vm732, %v717, %v719
      %v735 = vsel %vm732, %v721, %v723
      %v736 = vsel %vm732, %v723, %v725
      %v737 = vsel %vm732, %v727, %v729
      %v738 = vsel %vm732, %v729, %v731
      %748 = vrot.lane.b32.xlu0 %v407, 50
      %v749 = vpop.permute.xlu0 %748
      %750 = vrot.lane.b32.xlu0 %v410, 50
      %v751 = vpop.permute.xlu0 %750
      %752 = vrot.lane.b32.xlu0 %v413, 50
      %v753 = vpop.permute.xlu0 %752
      %vm757 = vcmask 408576
      %v758 = vsel %vm757, %v719, %v749
      %v759 = vsel %vm757, %v725, %v751
      %v760 = vsel %vm757, %v731, %v753
      %761 = vrot.lane.b32.xlu0 %v407, 109
      %v762 = vpop.permute.xlu0 %761
      %763 = vrot.lane.b32.xlu0 %v408, 109
      %v764 = vpop.permute.xlu0 %763
      %765 = vrot.lane.b32.xlu0 %v409, 109
      %v766 = vpop.permute.xlu0 %765
      %767 = vrot.lane.b32.xlu0 %v410, 109
      %v768 = vpop.permute.xlu0 %767
      %769 = vrot.lane.b32.xlu0 %v411, 109
      %v770 = vpop.permute.xlu0 %769
      %771 = vrot.lane.b32.xlu0 %v412, 109
      %v772 = vpop.permute.xlu0 %771
      %773 = vrot.lane.b32.xlu0 %v413, 109
      %v774 = vpop.permute.xlu0 %773
      %775 = vrot.lane.b32.xlu0 %v414, 109
      %v776 = vpop.permute.xlu0 %775
      %777 = vrot.lane.b32.xlu0 %v415, 109
      %v778 = vpop.permute.xlu0 %777
      %vm779 = vcmask 891904
      %v780 = vsel %vm779, %v762, %v764
      %v781 = vsel %vm779, %v764, %v766
      %v782 = vsel %vm779, %v768, %v770
      %v783 = vsel %vm779, %v770, %v772
      %v784 = vsel %vm779, %v774, %v776
      %v785 = vsel %vm779, %v776, %v778
      %795 = vrot.lane.b32.xlu0 %v407, 49
      %v796 = vpop.permute.xlu0 %795
      %797 = vrot.lane.b32.xlu0 %v410, 49
      %v798 = vpop.permute.xlu0 %797
      %799 = vrot.lane.b32.xlu0 %v413, 49
      %v800 = vpop.permute.xlu0 %799
      %vm804 = vcmask 400384
      %v805 = vsel %vm804, %v766, %v796
      %v806 = vsel %vm804, %v772, %v798
      %v807 = vsel %vm804, %v778, %v800
      %v808 = vld [vmem:[%s3] sm:$0xff]
      %v809 = vld [vmem:[%s3 + $0x8] sm:$0xf]
      %811 = vset.pattern.permute.xlu0 0
      %812 = vperm.xlu0 %811, %v808
      %v813 = vpop.permute.xlu0 %812
      %816 = vset.pattern.permute.xlu0 0
      %817 = vperm.xlu0 %816, %v809
      %v818 = vpop.permute.xlu0 %817
      %vm820 = vcmask 719872
      %v822 = vsel %vm820, %v424, 0
      %v825 = vsel %vm820, %v426, 0
      %827 = vmatprep.subr.mxu0 %v464
      %828 = vmatpush1.msra.mxu0 %v479
      %829 = vmatprep.subr.mxu0 %v466
      %830 = vmatpush1.msra.mxu0 %v480
      %831 = vmatprep.subr.mxu0 %v468
      %832 = vmatpush1.msra.mxu0 %v481
      %833 = vmatprep.subr.mxu0 %v510
      %834 = vmatpush1.msra.mxu0 %v525
      %835 = vmatprep.subr.mxu0 %v512
      %836 = vmatpush1.msra.mxu0 %v526
      %837 = vmatprep.subr.mxu0 %v514
      %838 = vmatpush1.msra.mxu0 %v527
      %839 = vmatprep.subr.mxu0 %v556
      %840 = vmatpush1.msra.mxu0 %v571
      %841 = vmatprep.subr.mxu0 %v558
      %842 = vmatpush1.msra.mxu0 %v572
      %843 = vmatprep.subr.mxu0 %v560
      %844 = vmatpush1.msra.mxu0 %v573
      %845 = vmatprep.subr.mxu0 %v602
      %846 = vmatpush1.msra.mxu0 %v617
      %847 = vmatprep.subr.mxu0 %v604
      %848 = vmatpush1.msra.mxu0 %v618
      %849 = vmatprep.subr.mxu0 %v606
      %850 = vmatpush1.msra.mxu0 %v619
      %851 = vmatprep.subr.mxu0 %v408
      %852 = vmatpush1.msra.mxu0 %v407
      %853 = vmatprep.subr.mxu0 %v411
      %854 = vmatpush1.msra.mxu0 %v410
      %855 = vmatprep.subr.mxu0 %v414
      %856 = vmatpush1.msra.mxu0 %v413
      %857 = vmatprep.subr.mxu0 %v640
      %858 = vmatpush1.msra.mxu0 %v639
      %859 = vmatprep.subr.mxu0 %v642
      %860 = vmatpush1.msra.mxu0 %v641
      %861 = vmatprep.subr.mxu0 %v644
      %862 = vmatpush1.msra.mxu0 %v643
      %863 = vmatprep.subr.mxu0 %v687
      %864 = vmatpush1.msra.mxu0 %v686
      %865 = vmatprep.subr.mxu0 %v689
      %866 = vmatpush1.msra.mxu0 %v688
      %867 = vmatprep.subr.mxu0 %v691
      %868 = vmatpush1.msra.mxu0 %v690
      %869 = vmatprep.subr.mxu0 %v734
      %870 = vmatpush1.msra.mxu0 %v733
      %871 = vmatprep.subr.mxu0 %v736
      %872 = vmatpush1.msra.mxu0 %v735
      %873 = vmatprep.subr.mxu0 %v738
      %874 = vmatpush1.msra.mxu0 %v737
      %875 = vmatprep.subr.mxu0 %v781
      %876 = vmatpush1.msra.mxu0 %v780
      %877 = vmatprep.subr.mxu0 %v783
      %878 = vmatpush1.msra.mxu0 %v782
      %879 = vmatprep.subr.mxu0 %v785
      %880 = vmatpush1.msra.mxu0 %v784
      %881 = vmatprep.subr.mxu0 0.0
      %882 = vmatpush1.msra.mxu0 0.0
      %883 = vmatprep.subr.mxu0 0.0
      %884 = vmatpush1.msra.mxu0 0.0
      %885 = vmatprep.subr.mxu0 0.0
      %886 = vmatpush1.msra.mxu0 0.0
      %887 = vmatprep.subr.mxu0 0.0
      %888 = vmatpush1.msra.mxu0 0.0
      %889 = vmatprep.subr.mxu0 0.0
      %890 = vmatpush1.msra.mxu0 0.0
      %891 = vmatprep.mubr.f32.mxu0 %v822
      %892 = vmatmul.mubr.f32.gmra.mrb[0].mxu0 %v423
      %v893 = vpop.f32.mrb[0].mxu0
      %v894 = vadd.f32 %v813, %v893
      %v895 = vpop.f32.mrb[0].mxu0
      %v896 = vadd.f32 %v813, %v895
      %897 = vmatprep.mubr.f32.mxu0 %v825
      %898 = vmatmul.mubr.f32.gmra.mrb[0].mxu0 %v425
      %v899 = vpop.f32.mrb[0].mxu0
      %v900 = vadd.f32 %v818, %v899
      %v901 = vpop.f32.mrb[0].mxu0
      %v902 = vadd.f32 %v818, %v901
      %903 = vdwg.mxu0
      %904 = vmatprep.subr.mxu0 0.0
      %905 = vmatpush1.msra.mxu0 %v465
      %906 = vmatprep.subr.mxu0 0.0
      %907 = vmatpush1.msra.mxu0 %v467
      %908 = vmatprep.subr.mxu0 0.0
      %909 = vmatpush1.msra.mxu0 %v469
      %910 = vmatprep.subr.mxu0 0.0
      %911 = vmatpush1.msra.mxu0 %v511
      %912 = vmatprep.subr.mxu0 0.0
      %913 = vmatpush1.msra.mxu0 %v513
      %914 = vmatprep.subr.mxu0 0.0
      %915 = vmatpush1.msra.mxu0 %v515
      %916 = vmatprep.subr.mxu0 0.0
      %917 = vmatpush1.msra.mxu0 %v557
      %918 = vmatprep.subr.mxu0 0.0
      %919 = vmatpush1.msra.mxu0 %v559
      %920 = vmatprep.subr.mxu0 0.0
      %921 = vmatpush1.msra.mxu0 %v561
      %922 = vmatprep.subr.mxu0 0.0
      %923 = vmatpush1.msra.mxu0 %v603
      %924 = vmatprep.subr.mxu0 0.0
      %925 = vmatpush1.msra.mxu0 %v605
      %926 = vmatprep.subr.mxu0 0.0
      %927 = vmatpush1.msra.mxu0 %v607
      %928 = vmatprep.subr.mxu0 0.0
      %929 = vmatpush1.msra.mxu0 %v409
      %930 = vmatprep.subr.mxu0 0.0
      %931 = vmatpush1.msra.mxu0 %v412
      %932 = vmatprep.subr.mxu0 0.0
      %933 = vmatpush1.msra.mxu0 %v415
      %934 = vmatprep.subr.mxu0 0.0
      %935 = vmatpush1.msra.mxu0 %v664
      %936 = vmatprep.subr.mxu0 0.0
      %937 = vmatpush1.msra.mxu0 %v665
      %938 = vmatprep.subr.mxu0 0.0
      %939 = vmatpush1.msra.mxu0 %v666
      %940 = vmatprep.subr.mxu0 0.0
      %941 = vmatpush1.msra.mxu0 %v711
      %942 = vmatprep.subr.mxu0 0.0
      %943 = vmatpush1.msra.mxu0 %v712
      %944 = vmatprep.subr.mxu0 0.0
      %945 = vmatpush1.msra.mxu0 %v713
      %946 = vmatprep.subr.mxu0 0.0
      %947 = vmatpush1.msra.mxu0 %v758
      %948 = vmatprep.subr.mxu0 0.0
      %949 = vmatpush1.msra.mxu0 %v759
      %950 = vmatprep.subr.mxu0 0.0
      %951 = vmatpush1.msra.mxu0 %v760
      %952 = vmatprep.subr.mxu0 0.0
      %953 = vmatpush1.msra.mxu0 %v805
      %954 = vmatprep.subr.mxu0 0.0
      %955 = vmatpush1.msra.mxu0 %v806
      %956 = vmatprep.subr.mxu0 0.0
      %957 = vmatpush1.msra.mxu0 %v807
      %958 = vmatprep.subr.mxu0 0.0
      %959 = vmatpush1.msra.mxu0 0.0
      %960 = vmatprep.subr.mxu0 0.0
      %961 = vmatpush1.msra.mxu0 0.0
      %962 = vmatprep.subr.mxu0 0.0
      %963 = vmatpush1.msra.mxu0 0.0
      %964 = vmatprep.subr.mxu0 0.0
      %965 = vmatpush1.msra.mxu0 0.0
      %966 = vmatprep.subr.mxu0 0.0
      %967 = vmatpush1.msra.mxu0 0.0
      %968 = vmatprep.mubr.f32.mxu0 %v822
      %969 = vmatmul.mubr.f32.gmra.mrb[0].mxu0 %v423
      %v970 = vpop.f32.mrb[0].mxu0
      %v971 = vadd.f32 %v813, %v970
      %v972 = vpop.f32.mrb[0].mxu0
      %973 = vmatprep.mubr.f32.mxu0 %v825
      %974 = vmatmul.mubr.f32.gmra.mrb[0].mxu0 %v425
      %v975 = vpop.f32.mrb[0].mxu0
      %v976 = vadd.f32 %v818, %v975
      %v977 = vpop.f32.mrb[0].mxu0
      %978 = vdwg.mxu0
      %v980 = vlaneseq
      %v981 = vshrl.u32 %v980, 7
      %v982 = vsub.s32 0, %v981
      %v983 = vrot.slane %v422, %v982
      %v984 = vlaneseq
      %v985 = vshrl.u32 %v984, 7
      %v986 = vsub.s32 1, %v985
      %v987 = vrot.slane %v422, %v986
      %v988 = vlaneseq
      %v989 = vshrl.u32 %v988, 7
      %v990 = vsub.s32 2, %v989
      %v991 = vrot.slane %v422, %v990
      %v995 = vmul.f32 %v894, %v983
      %v996 = vmul.f32 %v896, %v987
      %v997 = vmul.f32 %v971, %v991
      %v998 = vmul.f32 %v900, %v983
      %v999 = vmul.f32 %v902, %v987
      %v1000 = vmul.f32 %v976, %v991
      %vm1007 = vcmask 1043456
      %v1008 = vrot.slane %v416, 4
      %v1009 = vrot.slane %v417, 4
      %v1010 = vrot.slane %v418, 4
      %v1011 = vrot.slane %v419, 4
      %v1012 = vsel %vm1007, %v1008, %v1011
      %v1013 = vrot.slane %v420, 4
      %v1014 = vsel %vm1007, %v1009, %v1013
      %v1015 = vrot.slane %v421, 4
      %v1016 = vsel %vm1007, %v1010, %v1015
      %v1023 = vsel %vm1007, %v998, %v1008
      %v1024 = vsel %vm1007, %v999, %v1009
      %v1025 = vsel %vm1007, %v1000, %v1010
      %v1026 = vld [vmem:[%s4] sm:$0xff]
      %v1027 = vld [vmem:[%s4 + $0x8] sm:$0xff]
      %v1028 = vld [vmem:[%s4 + $0x10] sm:$0xff]
      %v1029 = vld [vmem:[%s4 + $0x18] sm:$0xff]
      %1032 = vrot.lane.b32.xlu0 %v997, 79
      %v1033 = vpop.permute.xlu0 %1032
      %1034 = vrot.lane.b32.xlu0 %v1025, 79
      %v1035 = vpop.permute.xlu0 %1034
      %1036 = vrot.lane.b32.xlu0 %v1016, 79
      %v1037 = vpop.permute.xlu0 %1036
      %1045 = vrot.lane.b32.xlu0 %v995, 19
      %v1046 = vpop.permute.xlu0 %1045
      %1047 = vrot.lane.b32.xlu0 %v996, 19
      %v1048 = vpop.permute.xlu0 %1047
      %1049 = vrot.lane.b32.xlu0 %v997, 19
      %v1050 = vpop.permute.xlu0 %1049
      %1051 = vrot.lane.b32.xlu0 %v1023, 19
      %v1052 = vpop.permute.xlu0 %1051
      %1053 = vrot.lane.b32.xlu0 %v1024, 19
      %v1054 = vpop.permute.xlu0 %1053
      %1055 = vrot.lane.b32.xlu0 %v1025, 19
      %v1056 = vpop.permute.xlu0 %1055
      %1057 = vrot.lane.b32.xlu0 %v1012, 19
      %v1058 = vpop.permute.xlu0 %1057
      %1059 = vrot.lane.b32.xlu0 %v1014, 19
      %v1060 = vpop.permute.xlu0 %1059
      %1061 = vrot.lane.b32.xlu0 %v1016, 19
      %v1062 = vpop.permute.xlu0 %1061
      %v1063 = vsel %vm463, %v1046, %v1048
      %v1064 = vsel %vm463, %v1048, %v1050
      %v1065 = vsel %vm463, %v1052, %v1054
      %v1066 = vsel %vm463, %v1054, %v1056
      %v1067 = vsel %vm463, %v1058, %v1060
      %v1068 = vsel %vm463, %v1060, %v1062
      %v1078 = vsel %vm463, %v1033, %v1046
      %v1079 = vsel %vm463, %v1035, %v1052
      %v1080 = vsel %vm463, %v1037, %v1058
      %1081 = vrot.lane.b32.xlu0 %v997, 78
      %v1082 = vpop.permute.xlu0 %1081
      %1083 = vrot.lane.b32.xlu0 %v1025, 78
      %v1084 = vpop.permute.xlu0 %1083
      %1085 = vrot.lane.b32.xlu0 %v1016, 78
      %v1086 = vpop.permute.xlu0 %1085
      %1090 = vrot.lane.b32.xlu0 %v995, 18
      %v1091 = vpop.permute.xlu0 %1090
      %1092 = vrot.lane.b32.xlu0 %v996, 18
      %v1093 = vpop.permute.xlu0 %1092
      %1094 = vrot.lane.b32.xlu0 %v997, 18
      %v1095 = vpop.permute.xlu0 %1094
      %1096 = vrot.lane.b32.xlu0 %v1023, 18
      %v1097 = vpop.permute.xlu0 %1096
      %1098 = vrot.lane.b32.xlu0 %v1024, 18
      %v1099 = vpop.permute.xlu0 %1098
      %1100 = vrot.lane.b32.xlu0 %v1025, 18
      %v1101 = vpop.permute.xlu0 %1100
      %1102 = vrot.lane.b32.xlu0 %v1012, 18
      %v1103 = vpop.permute.xlu0 %1102
      %1104 = vrot.lane.b32.xlu0 %v1014, 18
      %v1105 = vpop.permute.xlu0 %1104
      %1106 = vrot.lane.b32.xlu0 %v1016, 18
      %v1107 = vpop.permute.xlu0 %1106
      %v1108 = vsel %vm509, %v1091, %v1093
      %v1109 = vsel %vm509, %v1093, %v1095
      %v1110 = vsel %vm509, %v1097, %v1099
      %v1111 = vsel %vm509, %v1099, %v1101
      %v1112 = vsel %vm509, %v1103, %v1105
      %v1113 = vsel %vm509, %v1105, %v1107
      %v1123 = vsel %vm509, %v1082, %v1091
      %v1124 = vsel %vm509, %v1084, %v1097
      %v1125 = vsel %vm509, %v1086, %v1103
      %1126 = vrot.lane.b32.xlu0 %v997, 77
      %v1127 = vpop.permute.xlu0 %1126
      %1128 = vrot.lane.b32.xlu0 %v1025, 77
      %v1129 = vpop.permute.xlu0 %1128
      %1130 = vrot.lane.b32.xlu0 %v1016, 77
      %v1131 = vpop.permute.xlu0 %1130
      %1135 = vrot.lane.b32.xlu0 %v995, 17
      %v1136 = vpop.permute.xlu0 %1135
      %1137 = vrot.lane.b32.xlu0 %v996, 17
      %v1138 = vpop.permute.xlu0 %1137
      %1139 = vrot.lane.b32.xlu0 %v997, 17
      %v1140 = vpop.permute.xlu0 %1139
      %1141 = vrot.lane.b32.xlu0 %v1023, 17
      %v1142 = vpop.permute.xlu0 %1141
      %1143 = vrot.lane.b32.xlu0 %v1024, 17
      %v1144 = vpop.permute.xlu0 %1143
      %1145 = vrot.lane.b32.xlu0 %v1025, 17
      %v1146 = vpop.permute.xlu0 %1145
      %1147 = vrot.lane.b32.xlu0 %v1012, 17
      %v1148 = vpop.permute.xlu0 %1147
      %1149 = vrot.lane.b32.xlu0 %v1014, 17
      %v1150 = vpop.permute.xlu0 %1149
      %1151 = vrot.lane.b32.xlu0 %v1016, 17
      %v1152 = vpop.permute.xlu0 %1151
      %v1153 = vsel %vm555, %v1136, %v1138
      %v1154 = vsel %vm555, %v1138, %v1140
      %v1155 = vsel %vm555, %v1142, %v1144
      %v1156 = vsel %vm555, %v1144, %v1146
      %v1157 = vsel %vm555, %v1148, %v1150
      %v1158 = vsel %vm555, %v1150, %v1152
      %v1168 = vsel %vm555, %v1127, %v1136
      %v1169 = vsel %vm555, %v1129, %v1142
      %v1170 = vsel %vm555, %v1131, %v1148
      %1171 = vrot.lane.b32.xlu0 %v997, 61
      %v1172 = vpop.permute.xlu0 %1171
      %1173 = vrot.lane.b32.xlu0 %v1025, 61
      %v1174 = vpop.permute.xlu0 %1173
      %1175 = vrot.lane.b32.xlu0 %v1016, 61
      %v1176 = vpop.permute.xlu0 %1175
      %1180 = vrot.lane.b32.xlu0 %v995, 1
      %v1181 = vpop.permute.xlu0 %1180
      %1182 = vrot.lane.b32.xlu0 %v996, 1
      %v1183 = vpop.permute.xlu0 %1182
      %1184 = vrot.lane.b32.xlu0 %v997, 1
      %v1185 = vpop.permute.xlu0 %1184
      %1186 = vrot.lane.b32.xlu0 %v1023, 1
      %v1187 = vpop.permute.xlu0 %1186
      %1188 = vrot.lane.b32.xlu0 %v1024, 1
      %v1189 = vpop.permute.xlu0 %1188
      %1190 = vrot.lane.b32.xlu0 %v1025, 1
      %v1191 = vpop.permute.xlu0 %1190
      %1192 = vrot.lane.b32.xlu0 %v1012, 1
      %v1193 = vpop.permute.xlu0 %1192
      %1194 = vrot.lane.b32.xlu0 %v1014, 1
      %v1195 = vpop.permute.xlu0 %1194
      %1196 = vrot.lane.b32.xlu0 %v1016, 1
      %v1197 = vpop.permute.xlu0 %1196
      %v1198 = vsel %vm601, %v1181, %v1183
      %v1199 = vsel %vm601, %v1183, %v1185
      %v1200 = vsel %vm601, %v1187, %v1189
      %v1201 = vsel %vm601, %v1189, %v1191
      %v1202 = vsel %vm601, %v1193, %v1195
      %v1203 = vsel %vm601, %v1195, %v1197
      %v1213 = vsel %vm601, %v1172, %v1181
      %v1214 = vsel %vm601, %v1174, %v1187
      %v1215 = vsel %vm601, %v1176, %v1193
      %1216 = vrot.lane.b32.xlu0 %v995, 127
      %v1217 = vpop.permute.xlu0 %1216
      %1218 = vrot.lane.b32.xlu0 %v996, 127
      %v1219 = vpop.permute.xlu0 %1218
      %1220 = vrot.lane.b32.xlu0 %v997, 127
      %v1221 = vpop.permute.xlu0 %1220
      %1222 = vrot.lane.b32.xlu0 %v1023, 127
      %v1223 = vpop.permute.xlu0 %1222
      %1224 = vrot.lane.b32.xlu0 %v1024, 127
      %v1225 = vpop.permute.xlu0 %1224
      %1226 = vrot.lane.b32.xlu0 %v1025, 127
      %v1227 = vpop.permute.xlu0 %1226
      %1228 = vrot.lane.b32.xlu0 %v1012, 127
      %v1229 = vpop.permute.xlu0 %1228
      %1230 = vrot.lane.b32.xlu0 %v1014, 127
      %v1231 = vpop.permute.xlu0 %1230
      %1232 = vrot.lane.b32.xlu0 %v1016, 127
      %v1233 = vpop.permute.xlu0 %1232
      %v1234 = vsel %vm638, %v1217, %v1219
      %v1235 = vsel %vm638, %v1219, %v1221
      %v1236 = vsel %vm638, %v1223, %v1225
      %v1237 = vsel %vm638, %v1225, %v1227
      %v1238 = vsel %vm638, %v1229, %v1231
      %v1239 = vsel %vm638, %v1231, %v1233
      %1249 = vrot.lane.b32.xlu0 %v995, 67
      %v1250 = vpop.permute.xlu0 %1249
      %1251 = vrot.lane.b32.xlu0 %v1023, 67
      %v1252 = vpop.permute.xlu0 %1251
      %1253 = vrot.lane.b32.xlu0 %v1012, 67
      %v1254 = vpop.permute.xlu0 %1253
      %v1258 = vsel %vm663, %v1221, %v1250
      %v1259 = vsel %vm663, %v1227, %v1252
      %v1260 = vsel %vm663, %v1233, %v1254
      %1261 = vrot.lane.b32.xlu0 %v995, 111
      %v1262 = vpop.permute.xlu0 %1261
      %1263 = vrot.lane.b32.xlu0 %v996, 111
      %v1264 = vpop.permute.xlu0 %1263
      %1265 = vrot.lane.b32.xlu0 %v997, 111
      %v1266 = vpop.permute.xlu0 %1265
      %1267 = vrot.lane.b32.xlu0 %v1023, 111
      %v1268 = vpop.permute.xlu0 %1267
      %1269 = vrot.lane.b32.xlu0 %v1024, 111
      %v1270 = vpop.permute.xlu0 %1269
      %1271 = vrot.lane.b32.xlu0 %v1025, 111
      %v1272 = vpop.permute.xlu0 %1271
      %1273 = vrot.lane.b32.xlu0 %v1012, 111
      %v1274 = vpop.permute.xlu0 %1273
      %1275 = vrot.lane.b32.xlu0 %v1014, 111
      %v1276 = vpop.permute.xlu0 %1275
      %1277 = vrot.lane.b32.xlu0 %v1016, 111
      %v1278 = vpop.permute.xlu0 %1277
      %v1279 = vsel %vm685, %v1262, %v1264
      %v1280 = vsel %vm685, %v1264, %v1266
      %v1281 = vsel %vm685, %v1268, %v1270
      %v1282 = vsel %vm685, %v1270, %v1272
      %v1283 = vsel %vm685, %v1274, %v1276
      %v1284 = vsel %vm685, %v1276, %v1278
      %1294 = vrot.lane.b32.xlu0 %v995, 51
      %v1295 = vpop.permute.xlu0 %1294
      %1296 = vrot.lane.b32.xlu0 %v1023, 51
      %v1297 = vpop.permute.xlu0 %1296
      %1298 = vrot.lane.b32.xlu0 %v1012, 51
      %v1299 = vpop.permute.xlu0 %1298
      %v1303 = vsel %vm710, %v1266, %v1295
      %v1304 = vsel %vm710, %v1272, %v1297
      %v1305 = vsel %vm710, %v1278, %v1299
      %1306 = vrot.lane.b32.xlu0 %v995, 110
      %v1307 = vpop.permute.xlu0 %1306
      %1308 = vrot.lane.b32.xlu0 %v996, 110
      %v1309 = vpop.permute.xlu0 %1308
      %1310 = vrot.lane.b32.xlu0 %v997, 110
      %v1311 = vpop.permute.xlu0 %1310
      %1312 = vrot.lane.b32.xlu0 %v1023, 110
      %v1313 = vpop.permute.xlu0 %1312
      %1314 = vrot.lane.b32.xlu0 %v1024, 110
      %v1315 = vpop.permute.xlu0 %1314
      %1316 = vrot.lane.b32.xlu0 %v1025, 110
      %v1317 = vpop.permute.xlu0 %1316
      %1318 = vrot.lane.b32.xlu0 %v1012, 110
      %v1319 = vpop.permute.xlu0 %1318
      %1320 = vrot.lane.b32.xlu0 %v1014, 110
      %v1321 = vpop.permute.xlu0 %1320
      %1322 = vrot.lane.b32.xlu0 %v1016, 110
      %v1323 = vpop.permute.xlu0 %1322
      %v1324 = vsel %vm732, %v1307, %v1309
      %v1325 = vsel %vm732, %v1309, %v1311
      %v1326 = vsel %vm732, %v1313, %v1315
      %v1327 = vsel %vm732, %v1315, %v1317
      %v1328 = vsel %vm732, %v1319, %v1321
      %v1329 = vsel %vm732, %v1321, %v1323
      %1339 = vrot.lane.b32.xlu0 %v995, 50
      %v1340 = vpop.permute.xlu0 %1339
      %1341 = vrot.lane.b32.xlu0 %v1023, 50
      %v1342 = vpop.permute.xlu0 %1341
      %1343 = vrot.lane.b32.xlu0 %v1012, 50
      %v1344 = vpop.permute.xlu0 %1343
      %v1348 = vsel %vm757, %v1311, %v1340
      %v1349 = vsel %vm757, %v1317, %v1342
      %v1350 = vsel %vm757, %v1323, %v1344
      %1351 = vrot.lane.b32.xlu0 %v995, 109
      %v1352 = vpop.permute.xlu0 %1351
      %1353 = vrot.lane.b32.xlu0 %v996, 109
      %v1354 = vpop.permute.xlu0 %1353
      %1355 = vrot.lane.b32.xlu0 %v997, 109
      %v1356 = vpop.permute.xlu0 %1355
      %1357 = vrot.lane.b32.xlu0 %v1023, 109
      %v1358 = vpop.permute.xlu0 %1357
      %1359 = vrot.lane.b32.xlu0 %v1024, 109
      %v1360 = vpop.permute.xlu0 %1359
      %1361 = vrot.lane.b32.xlu0 %v1025, 109
      %v1362 = vpop.permute.xlu0 %1361
      %1363 = vrot.lane.b32.xlu0 %v1012, 109
      %v1364 = vpop.permute.xlu0 %1363
      %1365 = vrot.lane.b32.xlu0 %v1014, 109
      %v1366 = vpop.permute.xlu0 %1365
      %1367 = vrot.lane.b32.xlu0 %v1016, 109
      %v1368 = vpop.permute.xlu0 %1367
      %v1369 = vsel %vm779, %v1352, %v1354
      %v1370 = vsel %vm779, %v1354, %v1356
      %v1371 = vsel %vm779, %v1358, %v1360
      %v1372 = vsel %vm779, %v1360, %v1362
      %v1373 = vsel %vm779, %v1364, %v1366
      %v1374 = vsel %vm779, %v1366, %v1368
      %1384 = vrot.lane.b32.xlu0 %v995, 49
      %v1385 = vpop.permute.xlu0 %1384
      %1386 = vrot.lane.b32.xlu0 %v1023, 49
      %v1387 = vpop.permute.xlu0 %1386
      %1388 = vrot.lane.b32.xlu0 %v1012, 49
      %v1389 = vpop.permute.xlu0 %1388
      %v1393 = vsel %vm804, %v1356, %v1385
      %v1394 = vsel %vm804, %v1362, %v1387
      %v1395 = vsel %vm804, %v1368, %v1389
      %v1396 = vld [vmem:[%s5] sm:$0xff]
      %v1397 = vld [vmem:[%s5 + $0x8] sm:$0xff]
      %1399 = vset.pattern.permute.xlu0 0
      %1400 = vperm.xlu0 %1399, %v1396
      %v1401 = vpop.permute.xlu0 %1400
      %1404 = vset.pattern.permute.xlu0 0
      %1405 = vperm.xlu0 %1404, %v1397
      %v1406 = vpop.permute.xlu0 %1405
      %v1409 = vsel %vm820, %v1027, 0
      %v1412 = vsel %vm820, %v1029, 0
      %1414 = vmatprep.subr.mxu0 %v1063
      %1415 = vmatpush1.msra.mxu0 %v1078
      %1416 = vmatprep.subr.mxu0 %v1065
      %1417 = vmatpush1.msra.mxu0 %v1079
      %1418 = vmatprep.subr.mxu0 %v1067
      %1419 = vmatpush1.msra.mxu0 %v1080
      %1420 = vmatprep.subr.mxu0 %v1108
      %1421 = vmatpush1.msra.mxu0 %v1123
      %1422 = vmatprep.subr.mxu0 %v1110
      %1423 = vmatpush1.msra.mxu0 %v1124
      %1424 = vmatprep.subr.mxu0 %v1112
      %1425 = vmatpush1.msra.mxu0 %v1125
      %1426 = vmatprep.subr.mxu0 %v1153
      %1427 = vmatpush1.msra.mxu0 %v1168
      %1428 = vmatprep.subr.mxu0 %v1155
      %1429 = vmatpush1.msra.mxu0 %v1169
      %1430 = vmatprep.subr.mxu0 %v1157
      %1431 = vmatpush1.msra.mxu0 %v1170
      %1432 = vmatprep.subr.mxu0 %v1198
      %1433 = vmatpush1.msra.mxu0 %v1213
      %1434 = vmatprep.subr.mxu0 %v1200
      %1435 = vmatpush1.msra.mxu0 %v1214
      %1436 = vmatprep.subr.mxu0 %v1202
      %1437 = vmatpush1.msra.mxu0 %v1215
      %1438 = vmatprep.subr.mxu0 %v996
      %1439 = vmatpush1.msra.mxu0 %v995
      %1440 = vmatprep.subr.mxu0 %v1024
      %1441 = vmatpush1.msra.mxu0 %v1023
      %1442 = vmatprep.subr.mxu0 %v1014
      %1443 = vmatpush1.msra.mxu0 %v1012
      %1444 = vmatprep.subr.mxu0 %v1235
      %1445 = vmatpush1.msra.mxu0 %v1234
      %1446 = vmatprep.subr.mxu0 %v1237
      %1447 = vmatpush1.msra.mxu0 %v1236
      %1448 = vmatprep.subr.mxu0 %v1239
      %1449 = vmatpush1.msra.mxu0 %v1238
      %1450 = vmatprep.subr.mxu0 %v1280
      %1451 = vmatpush1.msra.mxu0 %v1279
      %1452 = vmatprep.subr.mxu0 %v1282
      %1453 = vmatpush1.msra.mxu0 %v1281
      %1454 = vmatprep.subr.mxu0 %v1284
      %1455 = vmatpush1.msra.mxu0 %v1283
      %1456 = vmatprep.subr.mxu0 %v1325
      %1457 = vmatpush1.msra.mxu0 %v1324
      %1458 = vmatprep.subr.mxu0 %v1327
      %1459 = vmatpush1.msra.mxu0 %v1326
      %1460 = vmatprep.subr.mxu0 %v1329
      %1461 = vmatpush1.msra.mxu0 %v1328
      %1462 = vmatprep.subr.mxu0 %v1370
      %1463 = vmatpush1.msra.mxu0 %v1369
      %1464 = vmatprep.subr.mxu0 %v1372
      %1465 = vmatpush1.msra.mxu0 %v1371
      %1466 = vmatprep.subr.mxu0 %v1374
      %1467 = vmatpush1.msra.mxu0 %v1373
      %1468 = vmatprep.subr.mxu0 0.0
      %1469 = vmatpush1.msra.mxu0 0.0
      %1470 = vmatprep.subr.mxu0 0.0
      %1471 = vmatpush1.msra.mxu0 0.0
      %1472 = vmatprep.subr.mxu0 0.0
      %1473 = vmatpush1.msra.mxu0 0.0
      %1474 = vmatprep.subr.mxu0 0.0
      %1475 = vmatpush1.msra.mxu0 0.0
      %1476 = vmatprep.subr.mxu0 0.0
      %1477 = vmatpush1.msra.mxu0 0.0
      %1478 = vmatprep.mubr.f32.mxu0 %v1409
      %1479 = vmatmul.mubr.f32.gmra.mrb[0].mxu0 %v1026
      %v1480 = vpop.f32.mrb[0].mxu0
      %v1481 = vadd.f32 %v1401, %v1480
      %v1482 = vpop.f32.mrb[0].mxu0
      %v1483 = vadd.f32 %v1401, %v1482
      %1484 = vmatprep.mubr.f32.mxu0 %v1412
      %1485 = vmatmul.mubr.f32.gmra.mrb[0].mxu0 %v1028
      %v1486 = vpop.f32.mrb[0].mxu0
      %v1487 = vadd.f32 %v1406, %v1486
      %v1488 = vpop.f32.mrb[0].mxu0
      %v1489 = vadd.f32 %v1406, %v1488
      %1490 = vdwg.mxu0
      %1491 = vmatprep.subr.mxu0 0.0
      %1492 = vmatpush1.msra.mxu0 %v1064
      %1493 = vmatprep.subr.mxu0 0.0
      %1494 = vmatpush1.msra.mxu0 %v1066
      %1495 = vmatprep.subr.mxu0 0.0
      %1496 = vmatpush1.msra.mxu0 %v1068
      %1497 = vmatprep.subr.mxu0 0.0
      %1498 = vmatpush1.msra.mxu0 %v1109
      %1499 = vmatprep.subr.mxu0 0.0
      %1500 = vmatpush1.msra.mxu0 %v1111
      %1501 = vmatprep.subr.mxu0 0.0
      %1502 = vmatpush1.msra.mxu0 %v1113
      %1503 = vmatprep.subr.mxu0 0.0
      %1504 = vmatpush1.msra.mxu0 %v1154
      %1505 = vmatprep.subr.mxu0 0.0
      %1506 = vmatpush1.msra.mxu0 %v1156
      %1507 = vmatprep.subr.mxu0 0.0
      %1508 = vmatpush1.msra.mxu0 %v1158
      %1509 = vmatprep.subr.mxu0 0.0
      %1510 = vmatpush1.msra.mxu0 %v1199
      %1511 = vmatprep.subr.mxu0 0.0
      %1512 = vmatpush1.msra.mxu0 %v1201
      %1513 = vmatprep.subr.mxu0 0.0
      %1514 = vmatpush1.msra.mxu0 %v1203
      %1515 = vmatprep.subr.mxu0 0.0
      %1516 = vmatpush1.msra.mxu0 %v997
      %1517 = vmatprep.subr.mxu0 0.0
      %1518 = vmatpush1.msra.mxu0 %v1025
      %1519 = vmatprep.subr.mxu0 0.0
      %1520 = vmatpush1.msra.mxu0 %v1016
      %1521 = vmatprep.subr.mxu0 0.0
      %1522 = vmatpush1.msra.mxu0 %v1258
      %1523 = vmatprep.subr.mxu0 0.0
      %1524 = vmatpush1.msra.mxu0 %v1259
      %1525 = vmatprep.subr.mxu0 0.0
      %1526 = vmatpush1.msra.mxu0 %v1260
      %1527 = vmatprep.subr.mxu0 0.0
      %1528 = vmatpush1.msra.mxu0 %v1303
      %1529 = vmatprep.subr.mxu0 0.0
      %1530 = vmatpush1.msra.mxu0 %v1304
      %1531 = vmatprep.subr.mxu0 0.0
      %1532 = vmatpush1.msra.mxu0 %v1305
      %1533 = vmatprep.subr.mxu0 0.0
      %1534 = vmatpush1.msra.mxu0 %v1348
      %1535 = vmatprep.subr.mxu0 0.0
      %1536 = vmatpush1.msra.mxu0 %v1349
      %1537 = vmatprep.subr.mxu0 0.0
      %1538 = vmatpush1.msra.mxu0 %v1350
      %1539 = vmatprep.subr.mxu0 0.0
      %1540 = vmatpush1.msra.mxu0 %v1393
      %1541 = vmatprep.subr.mxu0 0.0
      %1542 = vmatpush1.msra.mxu0 %v1394
      %1543 = vmatprep.subr.mxu0 0.0
      %1544 = vmatpush1.msra.mxu0 %v1395
      %1545 = vmatprep.subr.mxu0 0.0
      %1546 = vmatpush1.msra.mxu0 0.0
      %1547 = vmatprep.subr.mxu0 0.0
      %1548 = vmatpush1.msra.mxu0 0.0
      %1549 = vmatprep.subr.mxu0 0.0
      %1550 = vmatpush1.msra.mxu0 0.0
      %1551 = vmatprep.subr.mxu0 0.0
      %1552 = vmatpush1.msra.mxu0 0.0
      %1553 = vmatprep.subr.mxu0 0.0
      %1554 = vmatpush1.msra.mxu0 0.0
      %1555 = vmatprep.mubr.f32.mxu0 %v1409
      %1556 = vmatmul.mubr.f32.gmra.mrb[0].mxu0 %v1026
      %v1557 = vpop.f32.mrb[0].mxu0
      %v1558 = vadd.f32 %v1401, %v1557
      %v1559 = vpop.f32.mrb[0].mxu0
      %1560 = vmatprep.mubr.f32.mxu0 %v1412
      %1561 = vmatmul.mubr.f32.gmra.mrb[0].mxu0 %v1028
      %v1562 = vpop.f32.mrb[0].mxu0
      %v1563 = vadd.f32 %v1406, %v1562
      %v1564 = vpop.f32.mrb[0].mxu0
      %1565 = vdwg.mxu0
      %v1566 = vmax.f32 %v1481, 0.0
      %v1567 = vmax.f32 %v1483, 0.0
      %v1568 = vmax.f32 %v1558, 0.0
      %v1569 = vmax.f32 %v1487, 0.0
      %v1570 = vmax.f32 %v1489, 0.0
      %v1571 = vmax.f32 %v1563, 0.0
      %v1572 = vmul.f32 %v1566, %v983
      %v1573 = vmul.f32 %v1567, %v987
      %v1574 = vmul.f32 %v1568, %v991
      %v1575 = vmul.f32 %v1569, %v983
      %v1576 = vmul.f32 %v1570, %v987
      %v1577 = vmul.f32 %v1571, %v991
      %v1578 = vld [vmem:[%s6] sm:$0xff]
      %v1579 = vld [vmem:[%s6 + $0x8] sm:$0xff]
      %v1580 = vld [vmem:[%s6 + $0x10] sm:$0xff]
      %v1581 = vld [vmem:[%s6 + $0x18] sm:$0xff]
      %1584 = vrot.lane.b32.xlu0 %v1574, 79
      %v1585 = vpop.permute.xlu0 %1584
      %1586 = vrot.lane.b32.xlu0 %v1577, 79
      %v1587 = vpop.permute.xlu0 %1586
      %1594 = vrot.lane.b32.xlu0 %v1572, 19
      %v1595 = vpop.permute.xlu0 %1594
      %1596 = vrot.lane.b32.xlu0 %v1573, 19
      %v1597 = vpop.permute.xlu0 %1596
      %1598 = vrot.lane.b32.xlu0 %v1574, 19
      %v1599 = vpop.permute.xlu0 %1598
      %1600 = vrot.lane.b32.xlu0 %v1575, 19
      %v1601 = vpop.permute.xlu0 %1600
      %1602 = vrot.lane.b32.xlu0 %v1576, 19
      %v1603 = vpop.permute.xlu0 %1602
      %1604 = vrot.lane.b32.xlu0 %v1577, 19
      %v1605 = vpop.permute.xlu0 %1604
      %v1606 = vsel %vm463, %v1595, %v1597
      %v1607 = vsel %vm463, %v1597, %v1599
      %v1608 = vsel %vm463, %v1601, %v1603
      %v1609 = vsel %vm463, %v1603, %v1605
      %v1616 = vsel %vm463, %v1585, %v1595
      %v1617 = vsel %vm463, %v1587, %v1601
      %1618 = vrot.lane.b32.xlu0 %v1574, 78
      %v1619 = vpop.permute.xlu0 %1618
      %1620 = vrot.lane.b32.xlu0 %v1577, 78
      %v1621 = vpop.permute.xlu0 %1620
      %1624 = vrot.lane.b32.xlu0 %v1572, 18
      %v1625 = vpop.permute.xlu0 %1624
      %1626 = vrot.lane.b32.xlu0 %v1573, 18
      %v1627 = vpop.permute.xlu0 %1626
      %1628 = vrot.lane.b32.xlu0 %v1574, 18
      %v1629 = vpop.permute.xlu0 %1628
      %1630 = vrot.lane.b32.xlu0 %v1575, 18
      %v1631 = vpop.permute.xlu0 %1630
      %1632 = vrot.lane.b32.xlu0 %v1576, 18
      %v1633 = vpop.permute.xlu0 %1632
      %1634 = vrot.lane.b32.xlu0 %v1577, 18
      %v1635 = vpop.permute.xlu0 %1634
      %v1636 = vsel %vm509, %v1625, %v1627
      %v1637 = vsel %vm509, %v1627, %v1629
      %v1638 = vsel %vm509, %v1631, %v1633
      %v1639 = vsel %vm509, %v1633, %v1635
      %v1646 = vsel %vm509, %v1619, %v1625
      %v1647 = vsel %vm509, %v1621, %v1631
      %1648 = vrot.lane.b32.xlu0 %v1574, 77
      %v1649 = vpop.permute.xlu0 %1648
      %1650 = vrot.lane.b32.xlu0 %v1577, 77
      %v1651 = vpop.permute.xlu0 %1650
      %1654 = vrot.lane.b32.xlu0 %v1572, 17
      %v1655 = vpop.permute.xlu0 %1654
      %1656 = vrot.lane.b32.xlu0 %v1573, 17
      %v1657 = vpop.permute.xlu0 %1656
      %1658 = vrot.lane.b32.xlu0 %v1574, 17
      %v1659 = vpop.permute.xlu0 %1658
      %1660 = vrot.lane.b32.xlu0 %v1575, 17
      %v1661 = vpop.permute.xlu0 %1660
      %1662 = vrot.lane.b32.xlu0 %v1576, 17
      %v1663 = vpop.permute.xlu0 %1662
      %1664 = vrot.lane.b32.xlu0 %v1577, 17
      %v1665 = vpop.permute.xlu0 %1664
      %v1666 = vsel %vm555, %v1655, %v1657
      %v1667 = vsel %vm555, %v1657, %v1659
      %v1668 = vsel %vm555, %v1661, %v1663
      %v1669 = vsel %vm555, %v1663, %v1665
      %v1676 = vsel %vm555, %v1649, %v1655
      %v1677 = vsel %vm555, %v1651, %v1661
      %1678 = vrot.lane.b32.xlu0 %v1574, 61
      %v1679 = vpop.permute.xlu0 %1678
      %1680 = vrot.lane.b32.xlu0 %v1577, 61
      %v1681 = vpop.permute.xlu0 %1680
      %1684 = vrot.lane.b32.xlu0 %v1572, 1
      %v1685 = vpop.permute.xlu0 %1684
      %1686 = vrot.lane.b32.xlu0 %v1573, 1
      %v1687 = vpop.permute.xlu0 %1686
      %1688 = vrot.lane.b32.xlu0 %v1574, 1
      %v1689 = vpop.permute.xlu0 %1688
      %1690 = vrot.lane.b32.xlu0 %v1575, 1
      %v1691 = vpop.permute.xlu0 %1690
      %1692 = vrot.lane.b32.xlu0 %v1576, 1
      %v1693 = vpop.permute.xlu0 %1692
      %1694 = vrot.lane.b32.xlu0 %v1577, 1
      %v1695 = vpop.permute.xlu0 %1694
      %v1696 = vsel %vm601, %v1685, %v1687
      %v1697 = vsel %vm601, %v1687, %v1689
      %v1698 = vsel %vm601, %v1691, %v1693
      %v1699 = vsel %vm601, %v1693, %v1695
      %v1706 = vsel %vm601, %v1679, %v1685
      %v1707 = vsel %vm601, %v1681, %v1691
      %1708 = vrot.lane.b32.xlu0 %v1572, 127
      %v1709 = vpop.permute.xlu0 %1708
      %1710 = vrot.lane.b32.xlu0 %v1573, 127
      %v1711 = vpop.permute.xlu0 %1710
      %1712 = vrot.lane.b32.xlu0 %v1574, 127
      %v1713 = vpop.permute.xlu0 %1712
      %1714 = vrot.lane.b32.xlu0 %v1575, 127
      %v1715 = vpop.permute.xlu0 %1714
      %1716 = vrot.lane.b32.xlu0 %v1576, 127
      %v1717 = vpop.permute.xlu0 %1716
      %1718 = vrot.lane.b32.xlu0 %v1577, 127
      %v1719 = vpop.permute.xlu0 %1718
      %v1720 = vsel %vm638, %v1709, %v1711
      %v1721 = vsel %vm638, %v1711, %v1713
      %v1722 = vsel %vm638, %v1715, %v1717
      %v1723 = vsel %vm638, %v1717, %v1719
      %1730 = vrot.lane.b32.xlu0 %v1572, 67
      %v1731 = vpop.permute.xlu0 %1730
      %1732 = vrot.lane.b32.xlu0 %v1575, 67
      %v1733 = vpop.permute.xlu0 %1732
      %v1736 = vsel %vm663, %v1713, %v1731
      %v1737 = vsel %vm663, %v1719, %v1733
      %1738 = vrot.lane.b32.xlu0 %v1572, 111
      %v1739 = vpop.permute.xlu0 %1738
      %1740 = vrot.lane.b32.xlu0 %v1573, 111
      %v1741 = vpop.permute.xlu0 %1740
      %1742 = vrot.lane.b32.xlu0 %v1574, 111
      %v1743 = vpop.permute.xlu0 %1742
      %1744 = vrot.lane.b32.xlu0 %v1575, 111
      %v1745 = vpop.permute.xlu0 %1744
      %1746 = vrot.lane.b32.xlu0 %v1576, 111
      %v1747 = vpop.permute.xlu0 %1746
      %1748 = vrot.lane.b32.xlu0 %v1577, 111
      %v1749 = vpop.permute.xlu0 %1748
      %v1750 = vsel %vm685, %v1739, %v1741
      %v1751 = vsel %vm685, %v1741, %v1743
      %v1752 = vsel %vm685, %v1745, %v1747
      %v1753 = vsel %vm685, %v1747, %v1749
      %1760 = vrot.lane.b32.xlu0 %v1572, 51
      %v1761 = vpop.permute.xlu0 %1760
      %1762 = vrot.lane.b32.xlu0 %v1575, 51
      %v1763 = vpop.permute.xlu0 %1762
      %v1766 = vsel %vm710, %v1743, %v1761
      %v1767 = vsel %vm710, %v1749, %v1763
      %1768 = vrot.lane.b32.xlu0 %v1572, 110
      %v1769 = vpop.permute.xlu0 %1768
      %1770 = vrot.lane.b32.xlu0 %v1573, 110
      %v1771 = vpop.permute.xlu0 %1770
      %1772 = vrot.lane.b32.xlu0 %v1574, 110
      %v1773 = vpop.permute.xlu0 %1772
      %1774 = vrot.lane.b32.xlu0 %v1575, 110
      %v1775 = vpop.permute.xlu0 %1774
      %1776 = vrot.lane.b32.xlu0 %v1576, 110
      %v1777 = vpop.permute.xlu0 %1776
      %1778 = vrot.lane.b32.xlu0 %v1577, 110
      %v1779 = vpop.permute.xlu0 %1778
      %v1780 = vsel %vm732, %v1769, %v1771
      %v1781 = vsel %vm732, %v1771, %v1773
      %v1782 = vsel %vm732, %v1775, %v1777
      %v1783 = vsel %vm732, %v1777, %v1779
      %1790 = vrot.lane.b32.xlu0 %v1572, 50
      %v1791 = vpop.permute.xlu0 %1790
      %1792 = vrot.lane.b32.xlu0 %v1575, 50
      %v1793 = vpop.permute.xlu0 %1792
      %v1796 = vsel %vm757, %v1773, %v1791
      %v1797 = vsel %vm757, %v1779, %v1793
      %1798 = vrot.lane.b32.xlu0 %v1572, 109
      %v1799 = vpop.permute.xlu0 %1798
      %1800 = vrot.lane.b32.xlu0 %v1573, 109
      %v1801 = vpop.permute.xlu0 %1800
      %1802 = vrot.lane.b32.xlu0 %v1574, 109
      %v1803 = vpop.permute.xlu0 %1802
      %1804 = vrot.lane.b32.xlu0 %v1575, 109
      %v1805 = vpop.permute.xlu0 %1804
      %1806 = vrot.lane.b32.xlu0 %v1576, 109
      %v1807 = vpop.permute.xlu0 %1806
      %1808 = vrot.lane.b32.xlu0 %v1577, 109
      %v1809 = vpop.permute.xlu0 %1808
      %v1810 = vsel %vm779, %v1799, %v1801
      %v1811 = vsel %vm779, %v1801, %v1803
      %v1812 = vsel %vm779, %v1805, %v1807
      %v1813 = vsel %vm779, %v1807, %v1809
      %1820 = vrot.lane.b32.xlu0 %v1572, 49
      %v1821 = vpop.permute.xlu0 %1820
      %1822 = vrot.lane.b32.xlu0 %v1575, 49
      %v1823 = vpop.permute.xlu0 %1822
      %v1826 = vsel %vm804, %v1803, %v1821
      %v1827 = vsel %vm804, %v1809, %v1823
      %v1828 = vld [vmem:[%s7] sm:$0xff]
      %v1829 = vld [vmem:[%s7 + $0x8] sm:$0xff]
      %1831 = vset.pattern.permute.xlu0 0
      %1832 = vperm.xlu0 %1831, %v1828
      %v1833 = vpop.permute.xlu0 %1832
      %1836 = vset.pattern.permute.xlu0 0
      %1837 = vperm.xlu0 %1836, %v1829
      %v1838 = vpop.permute.xlu0 %1837
      %vm1840 = vcmask 130048
      %v1842 = vsel %vm1840, %v1579, 0
      %v1845 = vsel %vm1840, %v1581, 0
      %1847 = vmatprep.subr.mxu0 %v1606
      %1848 = vmatpush1.msra.mxu0 %v1616
      %1849 = vmatprep.subr.mxu0 %v1608
      %1850 = vmatpush1.msra.mxu0 %v1617
      %1851 = vmatprep.subr.mxu0 %v1636
      %1852 = vmatpush1.msra.mxu0 %v1646
      %1853 = vmatprep.subr.mxu0 %v1638
      %1854 = vmatpush1.msra.mxu0 %v1647
      %1855 = vmatprep.subr.mxu0 %v1666
      %1856 = vmatpush1.msra.mxu0 %v1676
      %1857 = vmatprep.subr.mxu0 %v1668
      %1858 = vmatpush1.msra.mxu0 %v1677
      %1859 = vmatprep.subr.mxu0 %v1696
      %1860 = vmatpush1.msra.mxu0 %v1706
      %1861 = vmatprep.subr.mxu0 %v1698
      %1862 = vmatpush1.msra.mxu0 %v1707
      %1863 = vmatprep.subr.mxu0 %v1573
      %1864 = vmatpush1.msra.mxu0 %v1572
      %1865 = vmatprep.subr.mxu0 %v1576
      %1866 = vmatpush1.msra.mxu0 %v1575
      %1867 = vmatprep.subr.mxu0 %v1721
      %1868 = vmatpush1.msra.mxu0 %v1720
      %1869 = vmatprep.subr.mxu0 %v1723
      %1870 = vmatpush1.msra.mxu0 %v1722
      %1871 = vmatprep.subr.mxu0 %v1751
      %1872 = vmatpush1.msra.mxu0 %v1750
      %1873 = vmatprep.subr.mxu0 %v1753
      %1874 = vmatpush1.msra.mxu0 %v1752
      %1875 = vmatprep.subr.mxu0 %v1781
      %1876 = vmatpush1.msra.mxu0 %v1780
      %1877 = vmatprep.subr.mxu0 %v1783
      %1878 = vmatpush1.msra.mxu0 %v1782
      %1879 = vmatprep.subr.mxu0 %v1811
      %1880 = vmatpush1.msra.mxu0 %v1810
      %1881 = vmatprep.subr.mxu0 %v1813
      %1882 = vmatpush1.msra.mxu0 %v1812
      %1883 = vmatprep.subr.mxu0 0.0
      %1884 = vmatpush1.msra.mxu0 0.0
      %1885 = vmatprep.subr.mxu0 0.0
      %1886 = vmatpush1.msra.mxu0 0.0
      %1887 = vmatprep.subr.mxu0 0.0
      %1888 = vmatpush1.msra.mxu0 0.0
      %1889 = vmatprep.subr.mxu0 0.0
      %1890 = vmatpush1.msra.mxu0 0.0
      %1891 = vmatprep.subr.mxu0 0.0
      %1892 = vmatpush1.msra.mxu0 0.0
      %1893 = vmatprep.subr.mxu0 0.0
      %1894 = vmatpush1.msra.mxu0 0.0
      %1895 = vmatprep.subr.mxu0 0.0
      %1896 = vmatpush1.msra.mxu0 0.0
      %1897 = vmatprep.subr.mxu0 0.0
      %1898 = vmatpush1.msra.mxu0 0.0
      %1899 = vmatprep.subr.mxu0 0.0
      %1900 = vmatpush1.msra.mxu0 0.0
      %1901 = vmatprep.subr.mxu0 0.0
      %1902 = vmatpush1.msra.mxu0 0.0
      %1903 = vmatprep.subr.mxu0 0.0
      %1904 = vmatpush1.msra.mxu0 0.0
      %1905 = vmatprep.subr.mxu0 0.0
      %1906 = vmatpush1.msra.mxu0 0.0
      %1907 = vmatprep.subr.mxu0 0.0
      %1908 = vmatpush1.msra.mxu0 0.0
      %1909 = vmatprep.subr.mxu0 0.0
      %1910 = vmatpush1.msra.mxu0 0.0
      %1911 = vmatprep.mubr.f32.mxu0 %v1842
      %1912 = vmatmul.mubr.f32.gmra.mrb[0].mxu0 %v1578
      %v1913 = vpop.f32.mrb[0].mxu0
      %v1914 = vadd.f32 %v1833, %v1913
      %v1915 = vpop.f32.mrb[0].mxu0
      %v1916 = vadd.f32 %v1833, %v1915
      %1917 = vmatprep.mubr.f32.mxu0 %v1845
      %1918 = vmatmul.mubr.f32.gmra.mrb[0].mxu0 %v1580
      %v1919 = vpop.f32.mrb[0].mxu0
      %v1920 = vadd.f32 %v1838, %v1919
      %v1921 = vpop.f32.mrb[0].mxu0
      %v1922 = vadd.f32 %v1838, %v1921
      %1923 = vdwg.mxu0
      %1924 = vmatprep.subr.mxu0 0.0
      %1925 = vmatpush1.msra.mxu0 %v1607
      %1926 = vmatprep.subr.mxu0 0.0
      %1927 = vmatpush1.msra.mxu0 %v1609
      %1928 = vmatprep.subr.mxu0 0.0
      %1929 = vmatpush1.msra.mxu0 %v1637
      %1930 = vmatprep.subr.mxu0 0.0
      %1931 = vmatpush1.msra.mxu0 %v1639
      %1932 = vmatprep.subr.mxu0 0.0
      %1933 = vmatpush1.msra.mxu0 %v1667
      %1934 = vmatprep.subr.mxu0 0.0
      %1935 = vmatpush1.msra.mxu0 %v1669
      %1936 = vmatprep.subr.mxu0 0.0
      %1937 = vmatpush1.msra.mxu0 %v1697
      %1938 = vmatprep.subr.mxu0 0.0
      %1939 = vmatpush1.msra.mxu0 %v1699
      %1940 = vmatprep.subr.mxu0 0.0
      %1941 = vmatpush1.msra.mxu0 %v1574
      %1942 = vmatprep.subr.mxu0 0.0
      %1943 = vmatpush1.msra.mxu0 %v1577
      %1944 = vmatprep.subr.mxu0 0.0
      %1945 = vmatpush1.msra.mxu0 %v1736
      %1946 = vmatprep.subr.mxu0 0.0
      %1947 = vmatpush1.msra.mxu0 %v1737
      %1948 = vmatprep.subr.mxu0 0.0
      %1949 = vmatpush1.msra.mxu0 %v1766
      %1950 = vmatprep.subr.mxu0 0.0
      %1951 = vmatpush1.msra.mxu0 %v1767
      %1952 = vmatprep.subr.mxu0 0.0
      %1953 = vmatpush1.msra.mxu0 %v1796
      %1954 = vmatprep.subr.mxu0 0.0
      %1955 = vmatpush1.msra.mxu0 %v1797
      %1956 = vmatprep.subr.mxu0 0.0
      %1957 = vmatpush1.msra.mxu0 %v1826
      %1958 = vmatprep.subr.mxu0 0.0
      %1959 = vmatpush1.msra.mxu0 %v1827
      %1960 = vmatprep.subr.mxu0 0.0
      %1961 = vmatpush1.msra.mxu0 0.0
      %1962 = vmatprep.subr.mxu0 0.0
      %1963 = vmatpush1.msra.mxu0 0.0
      %1964 = vmatprep.subr.mxu0 0.0
      %1965 = vmatpush1.msra.mxu0 0.0
      %1966 = vmatprep.subr.mxu0 0.0
      %1967 = vmatpush1.msra.mxu0 0.0
      %1968 = vmatprep.subr.mxu0 0.0
      %1969 = vmatpush1.msra.mxu0 0.0
      %1970 = vmatprep.subr.mxu0 0.0
      %1971 = vmatpush1.msra.mxu0 0.0
      %1972 = vmatprep.subr.mxu0 0.0
      %1973 = vmatpush1.msra.mxu0 0.0
      %1974 = vmatprep.subr.mxu0 0.0
      %1975 = vmatpush1.msra.mxu0 0.0
      %1976 = vmatprep.subr.mxu0 0.0
      %1977 = vmatpush1.msra.mxu0 0.0
      %1978 = vmatprep.subr.mxu0 0.0
      %1979 = vmatpush1.msra.mxu0 0.0
      %1980 = vmatprep.subr.mxu0 0.0
      %1981 = vmatpush1.msra.mxu0 0.0
      %1982 = vmatprep.subr.mxu0 0.0
      %1983 = vmatpush1.msra.mxu0 0.0
      %1984 = vmatprep.subr.mxu0 0.0
      %1985 = vmatpush1.msra.mxu0 0.0
      %1986 = vmatprep.subr.mxu0 0.0
      %1987 = vmatpush1.msra.mxu0 0.0
      %1988 = vmatprep.mubr.f32.mxu0 %v1842
      %1989 = vmatmul.mubr.f32.gmra.mrb[0].mxu0 %v1578
      %v1990 = vpop.f32.mrb[0].mxu0
      %v1991 = vadd.f32 %v1833, %v1990
      %v1992 = vpop.f32.mrb[0].mxu0
      %1993 = vmatprep.mubr.f32.mxu0 %v1845
      %1994 = vmatmul.mubr.f32.gmra.mrb[0].mxu0 %v1580
      %v1995 = vpop.f32.mrb[0].mxu0
      %v1996 = vadd.f32 %v1838, %v1995
      %v1997 = vpop.f32.mrb[0].mxu0
      %1998 = vdwg.mxu0
      %v1999 = vld [vmem:[%s8] sm:$0xff]
      %v2000 = vld [vmem:[%s8 + $0x8] sm:$0xff]
      %vm2001 = vcmask 195584
      %v2003 = vsel %vm2001, %v1999, 0
      %v2006 = vsel %vm2001, %v2000, 0
      %2008 = vmatprep.subr.mxu0 %v996
      %2009 = vmatpush1.msra.mxu0 %v995
      %2010 = vmatprep.subr.mxu0 %v1024
      %2011 = vmatpush1.msra.mxu0 %v1023
      %2012 = vmatprep.subr.mxu0 %v1014
      %2013 = vmatpush1.msra.mxu0 %v1012
      %2014 = vmatprep.subr.mxu0 0.0
      %2015 = vmatpush1.msra.mxu0 0.0
      %2016 = vmatprep.subr.mxu0 0.0
      %2017 = vmatpush1.msra.mxu0 0.0
      %2018 = vmatprep.subr.mxu0 0.0
      %2019 = vmatpush1.msra.mxu0 0.0
      %2020 = vmatprep.subr.mxu0 0.0
      %2021 = vmatpush1.msra.mxu0 0.0
      %2022 = vmatprep.subr.mxu0 0.0
      %2023 = vmatpush1.msra.mxu0 0.0
      %2024 = vmatprep.subr.mxu0 0.0
      %2025 = vmatpush1.msra.mxu0 0.0
      %2026 = vmatprep.subr.mxu0 0.0
      %2027 = vmatpush1.msra.mxu0 0.0
      %2028 = vmatprep.subr.mxu0 0.0
      %2029 = vmatpush1.msra.mxu0 0.0
      %2030 = vmatprep.subr.mxu0 0.0
      %2031 = vmatpush1.msra.mxu0 0.0
      %2032 = vmatprep.subr.mxu0 0.0
      %2033 = vmatpush1.msra.mxu0 0.0
      %2034 = vmatprep.subr.mxu0 0.0
      %2035 = vmatpush1.msra.mxu0 0.0
      %2036 = vmatprep.subr.mxu0 0.0
      %2037 = vmatpush1.msra.mxu0 0.0
      %2038 = vmatprep.subr.mxu0 0.0
      %2039 = vmatpush1.msra.mxu0 0.0
      %2040 = vmatprep.subr.mxu0 0.0
      %2041 = vmatpush1.msra.mxu0 0.0
      %2042 = vmatprep.subr.mxu0 0.0
      %2043 = vmatpush1.msra.mxu0 0.0
      %2044 = vmatprep.subr.mxu0 0.0
      %2045 = vmatpush1.msra.mxu0 0.0
      %2046 = vmatprep.subr.mxu0 0.0
      %2047 = vmatpush1.msra.mxu0 0.0
      %2048 = vmatprep.subr.mxu0 0.0
      %2049 = vmatpush1.msra.mxu0 0.0
      %2050 = vmatprep.subr.mxu0 0.0
      %2051 = vmatpush1.msra.mxu0 0.0
      %2052 = vmatprep.subr.mxu0 0.0
      %2053 = vmatpush1.msra.mxu0 0.0
      %2054 = vmatprep.subr.mxu0 0.0
      %2055 = vmatpush1.msra.mxu0 0.0
      %2056 = vmatprep.subr.mxu0 0.0
      %2057 = vmatpush1.msra.mxu0 0.0
      %2058 = vmatprep.subr.mxu0 0.0
      %2059 = vmatpush1.msra.mxu0 0.0
      %2060 = vmatprep.subr.mxu0 0.0
      %2061 = vmatpush1.msra.mxu0 0.0
      %2062 = vmatprep.subr.mxu0 0.0
      %2063 = vmatpush1.msra.mxu0 0.0
      %2064 = vmatprep.subr.mxu0 0.0
      %2065 = vmatpush1.msra.mxu0 0.0
      %2066 = vmatprep.subr.mxu0 0.0
      %2067 = vmatpush1.msra.mxu0 0.0
      %2068 = vmatprep.subr.mxu0 0.0
      %2069 = vmatpush1.msra.mxu0 0.0
      %2070 = vmatprep.subr.mxu0 0.0
      %2071 = vmatpush1.msra.mxu0 0.0
      %2072 = vmatprep.mubr.f32.mxu0 0.0
      %2073 = vmatmul.mubr.f32.gmra.mrb[0].mxu0 %v2003
      %v2074 = vpop.f32.mrb[0].mxu0
      %v2075 = vadd.f32 0.0, %v2074
      %v2076 = vpop.f32.mrb[0].mxu0
      %v2077 = vadd.f32 0.0, %v2076
      %2078 = vmatprep.mubr.f32.mxu0 0.0
      %2079 = vmatmul.mubr.f32.gmra.mrb[0].mxu0 %v2006
      %v2080 = vpop.f32.mrb[0].mxu0
      %v2081 = vadd.f32 0.0, %v2080
      %v2082 = vpop.f32.mrb[0].mxu0
      %v2083 = vadd.f32 0.0, %v2082
      %2084 = vdwg.mxu0
      %2085 = vmatprep.subr.mxu0 0.0
      %2086 = vmatpush1.msra.mxu0 %v997
      %2087 = vmatprep.subr.mxu0 0.0
      %2088 = vmatpush1.msra.mxu0 %v1025
      %2089 = vmatprep.subr.mxu0 0.0
      %2090 = vmatpush1.msra.mxu0 %v1016
      %2091 = vmatprep.subr.mxu0 0.0
      %2092 = vmatpush1.msra.mxu0 0.0
      %2093 = vmatprep.subr.mxu0 0.0
      %2094 = vmatpush1.msra.mxu0 0.0
      %2095 = vmatprep.subr.mxu0 0.0
      %2096 = vmatpush1.msra.mxu0 0.0
      %2097 = vmatprep.subr.mxu0 0.0
      %2098 = vmatpush1.msra.mxu0 0.0
      %2099 = vmatprep.subr.mxu0 0.0
      %2100 = vmatpush1.msra.mxu0 0.0
      %2101 = vmatprep.subr.mxu0 0.0
      %2102 = vmatpush1.msra.mxu0 0.0
      %2103 = vmatprep.subr.mxu0 0.0
      %2104 = vmatpush1.msra.mxu0 0.0
      %2105 = vmatprep.subr.mxu0 0.0
      %2106 = vmatpush1.msra.mxu0 0.0
      %2107 = vmatprep.subr.mxu0 0.0
      %2108 = vmatpush1.msra.mxu0 0.0
      %2109 = vmatprep.subr.mxu0 0.0
      %2110 = vmatpush1.msra.mxu0 0.0
      %2111 = vmatprep.subr.mxu0 0.0
      %2112 = vmatpush1.msra.mxu0 0.0
      %2113 = vmatprep.subr.mxu0 0.0
      %2114 = vmatpush1.msra.mxu0 0.0
      %2115 = vmatprep.subr.mxu0 0.0
      %2116 = vmatpush1.msra.mxu0 0.0
      %2117 = vmatprep.subr.mxu0 0.0
      %2118 = vmatpush1.msra.mxu0 0.0
      %2119 = vmatprep.subr.mxu0 0.0
      %2120 = vmatpush1.msra.mxu0 0.0
      %2121 = vmatprep.subr.mxu0 0.0
      %2122 = vmatpush1.msra.mxu0 0.0
      %2123 = vmatprep.subr.mxu0 0.0
      %2124 = vmatpush1.msra.mxu0 0.0
      %2125 = vmatprep.subr.mxu0 0.0
      %2126 = vmatpush1.msra.mxu0 0.0
      %2127 = vmatprep.subr.mxu0 0.0
      %2128 = vmatpush1.msra.mxu0 0.0
      %2129 = vmatprep.subr.mxu0 0.0
      %2130 = vmatpush1.msra.mxu0 0.0
      %2131 = vmatprep.subr.mxu0 0.0
      %2132 = vmatpush1.msra.mxu0 0.0
      %2133 = vmatprep.subr.mxu0 0.0
      %2134 = vmatpush1.msra.mxu0 0.0
      %2135 = vmatprep.subr.mxu0 0.0
      %2136 = vmatpush1.msra.mxu0 0.0
      %2137 = vmatprep.subr.mxu0 0.0
      %2138 = vmatpush1.msra.mxu0 0.0
      %2139 = vmatprep.subr.mxu0 0.0
      %2140 = vmatpush1.msra.mxu0 0.0
      %2141 = vmatprep.subr.mxu0 0.0
      %2142 = vmatpush1.msra.mxu0 0.0
      %2143 = vmatprep.subr.mxu0 0.0
      %2144 = vmatpush1.msra.mxu0 0.0
      %2145 = vmatprep.subr.mxu0 0.0
      %2146 = vmatpush1.msra.mxu0 0.0
      %2147 = vmatprep.subr.mxu0 0.0
      %2148 = vmatpush1.msra.mxu0 0.0
      %2149 = vmatprep.mubr.f32.mxu0 0.0
      %2150 = vmatmul.mubr.f32.gmra.mrb[0].mxu0 %v2003
      %v2151 = vpop.f32.mrb[0].mxu0
      %v2152 = vadd.f32 0.0, %v2151
      %v2153 = vpop.f32.mrb[0].mxu0
      %2154 = vmatprep.mubr.f32.mxu0 0.0
      %2155 = vmatmul.mubr.f32.gmra.mrb[0].mxu0 %v2006
      %v2156 = vpop.f32.mrb[0].mxu0
      %v2157 = vadd.f32 0.0, %v2156
      %v2158 = vpop.f32.mrb[0].mxu0
      %2159 = vdwg.mxu0
      %v2160 = vadd.f32 %v1914, %v2075
      %v2161 = vadd.f32 %v1916, %v2077
      %v2162 = vadd.f32 %v1991, %v2152
      %v2163 = vadd.f32 %v1920, %v2081
      %v2164 = vadd.f32 %v1922, %v2083
      %v2165 = vadd.f32 %v1996, %v2157
      %v2166 = vld [vmem:[%s9] sm:$0xff]
      %v2167 = vld [vmem:[%s9 + $0x8] sm:$0xff]
      %2169 = vset.pattern.permute.xlu0 0
      %2170 = vperm.xlu0 %2169, %v2166
      %v2171 = vpop.permute.xlu0 %2170
      %2174 = vset.pattern.permute.xlu0 0
      %2175 = vperm.xlu0 %2174, %v2167
      %v2176 = vpop.permute.xlu0 %2175
      %v2178 = vadd.f32 %v2160, %v2171
      %v2179 = vadd.f32 %v2161, %v2171
      %v2180 = vadd.f32 %v2162, %v2171
      %v2181 = vadd.f32 %v2163, %v2176
      %v2182 = vadd.f32 %v2164, %v2176
      %v2183 = vadd.f32 %v2165, %v2176
      %v2184 = vmax.f32 %v2178, 0.0
      %v2185 = vmax.f32 %v2179, 0.0
      %v2186 = vmax.f32 %v2180, 0.0
      %v2187 = vmax.f32 %v2181, 0.0
      %v2188 = vmax.f32 %v2182, 0.0
      %v2189 = vmax.f32 %v2183, 0.0
      %v2190 = vmul.f32 %v2184, %v983
      %v2191 = vmul.f32 %v2185, %v987
      %v2192 = vmul.f32 %v2186, %v991
      %v2193 = vmul.f32 %v2187, %v983
      %v2194 = vmul.f32 %v2188, %v987
      %v2195 = vmul.f32 %v2189, %v991
      %2196 = vst [vmem:[%s406] sm:$0xff] %v2190
      %2197 = vst [vmem:[%s406 + $0x8] sm:$0xff] %v2191
      %vm2198 = vcmask 556032
      %2199 = vst.msk [vmem:[%s406 + $0x10] sm:$0xff] %vm2198, %v2192
      %2200 = vst [vmem:[%s406 + $0x18] sm:$0xff] %v2193
      %2201 = vst [vmem:[%s406 + $0x20] sm:$0xff] %v2194
      %2202 = vst.msk [vmem:[%s406 + $0x28] sm:$0xff] %vm2198, %v2195
      %p2203 = scmp.lt.s32.totalorder %s22, 1
      %s2204 = scalar_select %p2203, %s22, 1
      %s2205 = smul.addr %s2204, 6
      %s2206 = smul.addr %s2205, 8
      %s2207 = scalar_lea.vmem %s11, %s2206
      // Predicated region
      $region65: #{decoder_forward.3} parent=63 // pred_check
        %p2208 = pneg %p281
      $region66: #{decoder_forward.3} parent=63 // pred_check_branch
        %2210 = sbr.rel (%p2208) target = $region68
      $region67: #{decoder_forward.3} parent=63 // pred_region
        _
      $region68: #{decoder_forward.3} parent=63 // pred_fallthru
        _
    $region64: #{decoder_forward.3} parent=5 // pred_fallthru
      _
    %p2211 = scmp.le.s32.totalorder 2, %s17
    // Predicated region
    $region69: #{decoder_forward.3} parent=5 // pred_check
      %p2212 = pneg %p2211
    $region70: #{decoder_forward.3} parent=5 // pred_check_branch
      %2214 = sbr.rel (%p2212) target = $region72
    $region71: #{decoder_forward.3} parent=5 // pred_region
      %s2215 = ssub.s32 %s17, 2
      // Predicated region
      $region73: #{decoder_forward.3} parent=71 // pred_check
        %p2216 = pneg %p287
      $region74: #{decoder_forward.3} parent=71 // pred_check_branch
        %2218 = sbr.rel (%p2216) target = $region76
      $region75: #{decoder_forward.3} parent=71 // pred_region
        %p2219 = scmp.lt.s32.totalorder %s23, 1
        %s2220 = scalar_select %p2219, %s23, 1
        %s2221 = smul.addr %s2220, 6
        %s2222 = smul.addr %s2221, 8
        %s2223 = scalar_lea.vmem %s11, %s2222
      $region76: #{decoder_forward.3} parent=71 // pred_fallthru
        _
    $region72: #{decoder_forward.3} parent=5 // pred_fallthru
      _
  $region6: #{decoder_forward.3} parent=0 // loop_footer
    %s21 = sadd.s32 1, %s17
  $region7: #{decoder_forward.3} parent=0 // loop_footer_branch
    %16 = sbr.rel target = $region3
  $region8: #{decoder_forward.3} parent=0 // loop_exit
    _

// kernel: decoder_forward.4
$region0: #{decoder_forward.4}
  #allocation0 [shape = 'u32[]', space=smem, size = 0x4, offset = 0x4, fixed_abs, tag = 'smem constant byte address 0x4 - core index']
  #allocation1 [shape = 'u32[144,128]{1,0:T(1,128)}', space=vmem, size = 0x12000, scoped, tag = 'internal scratch']
  %s0 = inlined_call_operand.vmem [shape: f32[2,16,1156], index: 0, kind: input, shape index: {}]
  %s1 = inlined_call_operand.vmem [shape: f32[2,8,1156], index: 1, kind: input, shape index: {}]
  %s2 = inlined_call_operand.vmem [shape: f32[8,144], index: 2, kind: input, shape index: {}]
  %s3 = inlined_call_operand.vmem [shape: f32[8,1], index: 3, kind: input, shape index: {}]
  %s4 = inlined_call_operand.vmem [shape: f32[8,144], index: 4, kind: input, shape index: {}]
  %s5 = inlined_call_operand.vmem [shape: f32[8,1], index: 5, kind: input, shape index: {}]
  %s6 = inlined_call_operand.vmem [shape: f32[8,72], index: 6, kind: input, shape index: {}]
  %s7 = inlined_call_operand.vmem [shape: f32[8,1], index: 7, kind: input, shape index: {}]
  %s8 = inlined_call_operand.vmem [shape: f32[8,16], index: 8, kind: input, shape index: {}]
  %s9 = inlined_call_operand.vmem [shape: f32[8,1], index: 9, kind: input, shape index: {}]
  %s10 = inlined_call_operand.vmem [shape: f32[1,1156], index: 10, kind: input, shape index: {}]
  %s11 = inlined_call_operand.vmem [shape: f32[2,8,1156], index: 11, kind: output, shape index: {}]
  %s12 = sld [smem:[#allocation0]]
  $region77: #{decoder_forward.4} parent=0
    _
  %s14 = ssub.s32 1, %s12
  %s15 = scalar_select 0, %s14, %s12
  loop: start=0, step=1, limit=4
  $region2: #{decoder_forward.4} parent=0 // loop_pre_header
    _
  $region3: #{decoder_forward.4} parent=0 // loop_header
    %s17 = sphi 0, %s21
    %p18 = scmp.ge.s32.totalorder %s17, 4
    %s27 = sphi 0, %s29
    %s30 = sphi 0, %s27
    %s31 = sphi 0, %s30
    %s47 = sphi 0, %s31
    %s53 = sphi 0, %s55
    %s56 = sphi 0, %s53
    %s57 = sphi 0, %s56
    %s73 = sphi 0, %s57
    %s77 = sphi 0, %s77
    %s79 = sphi 0, %s77
    %s80 = sphi 0, %s79
    %s94 = sphi 0, %s80
    %s98 = sphi 0, %s98
    %s100 = sphi 0, %s98
    %s101 = sphi 0, %s100
    %s115 = sphi 0, %s101
    %s119 = sphi 0, %s119
    %s121 = sphi 0, %s119
    %s122 = sphi 0, %s121
    %s136 = sphi 0, %s122
    %s140 = sphi 0, %s140
    %s142 = sphi 0, %s140
    %s143 = sphi 0, %s142
    %s157 = sphi 0, %s143
    %s161 = sphi 0, %s161
    %s163 = sphi 0, %s161
    %s164 = sphi 0, %s163
    %s178 = sphi 0, %s164
    %s182 = sphi 0, %s182
    %s184 = sphi 0, %s182
    %s185 = sphi 0, %s184
    %s199 = sphi 0, %s185
    %s203 = sphi 0, %s203
    %s205 = sphi 0, %s203
    %s206 = sphi 0, %s205
    %s220 = sphi 0, %s206
    %s224 = sphi 0, %s224
    %s226 = sphi 0, %s224
    %s227 = sphi 0, %s226
    %s241 = sphi 0, %s227
    %s245 = sphi 0, %s245
    %s247 = sphi 0, %s245
    %s248 = sphi 0, %s247
    %s262 = sphi 0, %s248
    %s268 = sphi 0, %s270
    %s271 = sphi 0, %s268
    %s272 = sphi 0, %s271
    %s288 = sphi 0, %s272
  $region4: #{decoder_forward.4} parent=0 // loop_header_branch
    %20 = sbr.rel (%p18) target = $region8
  $region5: #{decoder_forward.4} parent=0 // loop_body
    %s22 = ssub.s32 %s17, 1
    %s23 = ssub.s32 %s17, 2
    %s24 = sadd.s32 %s17, 1
    %s25 = ssub.s32 %s17, %s24
    %p26 = scmp.eq.s32.totalorder %s25, 0
    %s28 = sadd.s32 %s27, 1
    %s29 = scalar_select %p26, %s27, %s28
    %p32 = pneg %p26
    %p33 = scmp.eq.s32.totalorder %s17, 1
    %p34 = por %p32, %p33
    %p35 = scmp.ne.s32.totalorder %s27, %s30
    %p36 = scmp.eq.s32.totalorder %s17, 0
    %p37 = por %p35, %p36
    %p38 = scmp.ne.s32.totalorder %s27, %s30
    %p39 = scmp.eq.s32.totalorder %s22, 1
    %p40 = por %p38, %p39
    %p41 = scmp.ne.s32.totalorder %s30, %s31
    %p42 = scmp.eq.s32.totalorder %s22, 0
    %p43 = por %p41, %p42
    %p44 = scmp.ne.s32.totalorder %s30, %s31
    %p45 = scmp.eq.s32.totalorder %s23, 1
    %p46 = por %p44, %p45
    %p48 = scmp.ne.s32.totalorder %s31, %s47
    %p49 = scmp.eq.s32.totalorder %s23, 0
    %p50 = por %p48, %p49
    %s51 = ssub.s32 %s17, %s24
    %p52 = scmp.eq.s32.totalorder %s51, 0
    %s54 = sadd.s32 %s53, 1
    %s55 = scalar_select %p52, %s53, %s54
    %p58 = pneg %p52
    %p59 = scmp.eq.s32.totalorder %s17, 1
    %p60 = por %p58, %p59
    %p61 = scmp.ne.s32.totalorder %s53, %s56
    %p62 = scmp.eq.s32.totalorder %s17, 0
    %p63 = por %p61, %p62
    %p64 = scmp.ne.s32.totalorder %s53, %s56
    %p65 = scmp.eq.s32.totalorder %s22, 1
    %p66 = por %p64, %p65
    %p67 = scmp.ne.s32.totalorder %s56, %s57
    %p68 = scmp.eq.s32.totalorder %s22, 0
    %p69 = por %p67, %p68
    %p70 = scmp.ne.s32.totalorder %s56, %s57
    %p71 = scmp.eq.s32.totalorder %s23, 1
    %p72 = por %p70, %p71
    %p74 = scmp.ne.s32.totalorder %s57, %s73
    %p75 = scmp.eq.s32.totalorder %s23, 0
    %p76 = por %p74, %p75
    %s78 = sadd.s32 %s77, 1
    %p81 = scmp.eq.s32.totalorder %s17, 1
    %p82 = scmp.ne.s32.totalorder %s77, %s79
    %p83 = scmp.eq.s32.totalorder %s17, 0
    %p84 = por %p82, %p83
    %p85 = scmp.ne.s32.totalorder %s77, %s79
    %p86 = scmp.eq.s32.totalorder %s22, 1
    %p87 = por %p85, %p86
    %p88 = scmp.ne.s32.totalorder %s79, %s80
    %p89 = scmp.eq.s32.totalorder %s22, 0
    %p90 = por %p88, %p89
    %p91 = scmp.ne.s32.totalorder %s79, %s80
    %p92 = scmp.eq.s32.totalorder %s23, 1
    %p93 = por %p91, %p92
    %p95 = scmp.ne.s32.totalorder %s80, %s94
    %p96 = scmp.eq.s32.totalorder %s23, 0
    %p97 = por %p95, %p96
    %s99 = sadd.s32 %s98, 1
    %p102 = scmp.eq.s32.totalorder %s17, 1
    %p103 = scmp.ne.s32.totalorder %s98, %s100
    %p104 = scmp.eq.s32.totalorder %s17, 0
    %p105 = por %p103, %p104
    %p106 = scmp.ne.s32.totalorder %s98, %s100
    %p107 = scmp.eq.s32.totalorder %s22, 1
    %p108 = por %p106, %p107
    %p109 = scmp.ne.s32.totalorder %s100, %s101
    %p110 = scmp.eq.s32.totalorder %s22, 0
    %p111 = por %p109, %p110
    %p112 = scmp.ne.s32.totalorder %s100, %s101
    %p113 = scmp.eq.s32.totalorder %s23, 1
    %p114 = por %p112, %p113
    %p116 = scmp.ne.s32.totalorder %s101, %s115
    %p117 = scmp.eq.s32.totalorder %s23, 0
    %p118 = por %p116, %p117
    %s120 = sadd.s32 %s119, 1
    %p123 = scmp.eq.s32.totalorder %s17, 1
    %p124 = scmp.ne.s32.totalorder %s119, %s121
    %p125 = scmp.eq.s32.totalorder %s17, 0
    %p126 = por %p124, %p125
    %p127 = scmp.ne.s32.totalorder %s119, %s121
    %p128 = scmp.eq.s32.totalorder %s22, 1
    %p129 = por %p127, %p128
    %p130 = scmp.ne.s32.totalorder %s121, %s122
    %p131 = scmp.eq.s32.totalorder %s22, 0
    %p132 = por %p130, %p131
    %p133 = scmp.ne.s32.totalorder %s121, %s122
    %p134 = scmp.eq.s32.totalorder %s23, 1
    %p135 = por %p133, %p134
    %p137 = scmp.ne.s32.totalorder %s122, %s136
    %p138 = scmp.eq.s32.totalorder %s23, 0
    %p139 = por %p137, %p138
    %s141 = sadd.s32 %s140, 1
    %p144 = scmp.eq.s32.totalorder %s17, 1
    %p145 = scmp.ne.s32.totalorder %s140, %s142
    %p146 = scmp.eq.s32.totalorder %s17, 0
    %p147 = por %p145, %p146
    %p148 = scmp.ne.s32.totalorder %s140, %s142
    %p149 = scmp.eq.s32.totalorder %s22, 1
    %p150 = por %p148, %p149
    %p151 = scmp.ne.s32.totalorder %s142, %s143
    %p152 = scmp.eq.s32.totalorder %s22, 0
    %p153 = por %p151, %p152
    %p154 = scmp.ne.s32.totalorder %s142, %s143
    %p155 = scmp.eq.s32.totalorder %s23, 1
    %p156 = por %p154, %p155
    %p158 = scmp.ne.s32.totalorder %s143, %s157
    %p159 = scmp.eq.s32.totalorder %s23, 0
    %p160 = por %p158, %p159
    %s162 = sadd.s32 %s161, 1
    %p165 = scmp.eq.s32.totalorder %s17, 1
    %p166 = scmp.ne.s32.totalorder %s161, %s163
    %p167 = scmp.eq.s32.totalorder %s17, 0
    %p168 = por %p166, %p167
    %p169 = scmp.ne.s32.totalorder %s161, %s163
    %p170 = scmp.eq.s32.totalorder %s22, 1
    %p171 = por %p169, %p170
    %p172 = scmp.ne.s32.totalorder %s163, %s164
    %p173 = scmp.eq.s32.totalorder %s22, 0
    %p174 = por %p172, %p173
    %p175 = scmp.ne.s32.totalorder %s163, %s164
    %p176 = scmp.eq.s32.totalorder %s23, 1
    %p177 = por %p175, %p176
    %p179 = scmp.ne.s32.totalorder %s164, %s178
    %p180 = scmp.eq.s32.totalorder %s23, 0
    %p181 = por %p179, %p180
    %s183 = sadd.s32 %s182, 1
    %p186 = scmp.eq.s32.totalorder %s17, 1
    %p187 = scmp.ne.s32.totalorder %s182, %s184
    %p188 = scmp.eq.s32.totalorder %s17, 0
    %p189 = por %p187, %p188
    %p190 = scmp.ne.s32.totalorder %s182, %s184
    %p191 = scmp.eq.s32.totalorder %s22, 1
    %p192 = por %p190, %p191
    %p193 = scmp.ne.s32.totalorder %s184, %s185
    %p194 = scmp.eq.s32.totalorder %s22, 0
    %p195 = por %p193, %p194
    %p196 = scmp.ne.s32.totalorder %s184, %s185
    %p197 = scmp.eq.s32.totalorder %s23, 1
    %p198 = por %p196, %p197
    %p200 = scmp.ne.s32.totalorder %s185, %s199
    %p201 = scmp.eq.s32.totalorder %s23, 0
    %p202 = por %p200, %p201
    %s204 = sadd.s32 %s203, 1
    %p207 = scmp.eq.s32.totalorder %s17, 1
    %p208 = scmp.ne.s32.totalorder %s203, %s205
    %p209 = scmp.eq.s32.totalorder %s17, 0
    %p210 = por %p208, %p209
    %p211 = scmp.ne.s32.totalorder %s203, %s205
    %p212 = scmp.eq.s32.totalorder %s22, 1
    %p213 = por %p211, %p212
    %p214 = scmp.ne.s32.totalorder %s205, %s206
    %p215 = scmp.eq.s32.totalorder %s22, 0
    %p216 = por %p214, %p215
    %p217 = scmp.ne.s32.totalorder %s205, %s206
    %p218 = scmp.eq.s32.totalorder %s23, 1
    %p219 = por %p217, %p218
    %p221 = scmp.ne.s32.totalorder %s206, %s220
    %p222 = scmp.eq.s32.totalorder %s23, 0
    %p223 = por %p221, %p222
    %s225 = sadd.s32 %s224, 1
    %p228 = scmp.eq.s32.totalorder %s17, 1
    %p229 = scmp.ne.s32.totalorder %s224, %s226
    %p230 = scmp.eq.s32.totalorder %s17, 0
    %p231 = por %p229, %p230
    %p232 = scmp.ne.s32.totalorder %s224, %s226
    %p233 = scmp.eq.s32.totalorder %s22, 1
    %p234 = por %p232, %p233
    %p235 = scmp.ne.s32.totalorder %s226, %s227
    %p236 = scmp.eq.s32.totalorder %s22, 0
    %p237 = por %p235, %p236
    %p238 = scmp.ne.s32.totalorder %s226, %s227
    %p239 = scmp.eq.s32.totalorder %s23, 1
    %p240 = por %p238, %p239
    %p242 = scmp.ne.s32.totalorder %s227, %s241
    %p243 = scmp.eq.s32.totalorder %s23, 0
    %p244 = por %p242, %p243
    %s246 = sadd.s32 %s245, 1
    %p249 = scmp.eq.s32.totalorder %s17, 1
    %p250 = scmp.ne.s32.totalorder %s245, %s247
    %p251 = scmp.eq.s32.totalorder %s17, 0
    %p252 = por %p250, %p251
    %p253 = scmp.ne.s32.totalorder %s245, %s247
    %p254 = scmp.eq.s32.totalorder %s22, 1
    %p255 = por %p253, %p254
    %p256 = scmp.ne.s32.totalorder %s247, %s248
    %p257 = scmp.eq.s32.totalorder %s22, 0
    %p258 = por %p256, %p257
    %p259 = scmp.ne.s32.totalorder %s247, %s248
    %p260 = scmp.eq.s32.totalorder %s23, 1
    %p261 = por %p259, %p260
    %p263 = scmp.ne.s32.totalorder %s248, %s262
    %p264 = scmp.eq.s32.totalorder %s23, 0
    %p265 = por %p263, %p264
    %s266 = ssub.s32 %s17, %s24
    %p267 = scmp.eq.s32.totalorder %s266, 0
    %s269 = sadd.s32 %s268, 1
    %s270 = scalar_select %p267, %s268, %s269
    %p273 = pneg %p267
    %p274 = scmp.eq.s32.totalorder %s17, 1
    %p275 = por %p273, %p274
    %p276 = scmp.ne.s32.totalorder %s268, %s271
    %p277 = scmp.eq.s32.totalorder %s17, 0
    %p278 = por %p276, %p277
    %p279 = scmp.ne.s32.totalorder %s268, %s271
    %p280 = scmp.eq.s32.totalorder %s22, 1
    %p281 = por %p279, %p280
    %p282 = scmp.ne.s32.totalorder %s271, %s272
    %p283 = scmp.eq.s32.totalorder %s22, 0
    %p284 = por %p282, %p283
    %p285 = scmp.ne.s32.totalorder %s271, %s272
    %p286 = scmp.eq.s32.totalorder %s23, 1
    %p287 = por %p285, %p286
    %p289 = scmp.ne.s32.totalorder %s272, %s288
    %p290 = scmp.eq.s32.totalorder %s23, 0
    %p291 = por %p289, %p290
    %p292 = scmp.le.s32.totalorder 1, %s17
    %p293 = scmp.lt.s32.totalorder %s17, 3
    %p294 = pnand %p292, %p293
    %p295 = pneg %p294
    // Predicated region
    $region9: #{decoder_forward.4} parent=5 // pred_check
      _
    $region10: #{decoder_forward.4} parent=5 // pred_check_branch
      %297 = sbr.rel (%p294) target = $region12
    $region11: #{decoder_forward.4} parent=5 // pred_region
      %s298 = ssub.s32 %s17, 1
      // Predicated region
      $region13: #{decoder_forward.4} parent=11 // pred_check
        %p299 = pneg %p90
      $region14: #{decoder_forward.4} parent=11 // pred_check_branch
        %301 = sbr.rel (%p299) target = $region16
      $region15: #{decoder_forward.4} parent=11 // pred_region
        _
      $region16: #{decoder_forward.4} parent=11 // pred_fallthru
        _
      // Predicated region
      $region17: #{decoder_forward.4} parent=11 // pred_check
        %p302 = pneg %p111
      $region18: #{decoder_forward.4} parent=11 // pred_check_branch
        %304 = sbr.rel (%p302) target = $region20
      $region19: #{decoder_forward.4} parent=11 // pred_region
        _
      $region20: #{decoder_forward.4} parent=11 // pred_fallthru
        _
      // Predicated region
      $region21: #{decoder_forward.4} parent=11 // pred_check
        %p305 = pneg %p132
      $region22: #{decoder_forward.4} parent=11 // pred_check_branch
        %307 = sbr.rel (%p305) target = $region24
      $region23: #{decoder_forward.4} parent=11 // pred_region
        _
      $region24: #{decoder_forward.4} parent=11 // pred_fallthru
        _
      // Predicated region
      $region25: #{decoder_forward.4} parent=11 // pred_check
        %p308 = pneg %p153
      $region26: #{decoder_forward.4} parent=11 // pred_check_branch
        %310 = sbr.rel (%p308) target = $region28
      $region27: #{decoder_forward.4} parent=11 // pred_region
        _
      $region28: #{decoder_forward.4} parent=11 // pred_fallthru
        _
      // Predicated region
      $region29: #{decoder_forward.4} parent=11 // pred_check
        %p311 = pneg %p174
      $region30: #{decoder_forward.4} parent=11 // pred_check_branch
        %313 = sbr.rel (%p311) target = $region32
      $region31: #{decoder_forward.4} parent=11 // pred_region
        _
      $region32: #{decoder_forward.4} parent=11 // pred_fallthru
        _
      // Predicated region
      $region33: #{decoder_forward.4} parent=11 // pred_check
        %p314 = pneg %p195
      $region34: #{decoder_forward.4} parent=11 // pred_check_branch
        %316 = sbr.rel (%p314) target = $region36
      $region35: #{decoder_forward.4} parent=11 // pred_region
        _
      $region36: #{decoder_forward.4} parent=11 // pred_fallthru
        _
      // Predicated region
      $region37: #{decoder_forward.4} parent=11 // pred_check
        %p317 = pneg %p216
      $region38: #{decoder_forward.4} parent=11 // pred_check_branch
        %319 = sbr.rel (%p317) target = $region40
      $region39: #{decoder_forward.4} parent=11 // pred_region
        _
      $region40: #{decoder_forward.4} parent=11 // pred_fallthru
        _
      // Predicated region
      $region41: #{decoder_forward.4} parent=11 // pred_check
        %p320 = pneg %p237
      $region42: #{decoder_forward.4} parent=11 // pred_check_branch
        %322 = sbr.rel (%p320) target = $region44
      $region43: #{decoder_forward.4} parent=11 // pred_region
        _
      $region44: #{decoder_forward.4} parent=11 // pred_fallthru
        _
      // Predicated region
      $region45: #{decoder_forward.4} parent=11 // pred_check
        %p323 = pneg %p258
      $region46: #{decoder_forward.4} parent=11 // pred_check_branch
        %325 = sbr.rel (%p323) target = $region48
      $region47: #{decoder_forward.4} parent=11 // pred_region
        _
      $region48: #{decoder_forward.4} parent=11 // pred_fallthru
        _
    $region12: #{decoder_forward.4} parent=5 // pred_fallthru
      _
    %p326 = scmp.lt.s32.totalorder %s17, 2
    // Predicated region
    $region49: #{decoder_forward.4} parent=5 // pred_check
      %p327 = pneg %p326
    $region50: #{decoder_forward.4} parent=5 // pred_check_branch
      %329 = sbr.rel (%p327) target = $region52
    $region51: #{decoder_forward.4} parent=5 // pred_region
      // Predicated region
      $region53: #{decoder_forward.4} parent=51 // pred_check
        %p330 = pneg %p37
      $region54: #{decoder_forward.4} parent=51 // pred_check_branch
        %332 = sbr.rel (%p330) target = $region56
      $region55: #{decoder_forward.4} parent=51 // pred_region
        %p333 = scmp.lt.s32.totalorder %s17, 1
        %s334 = scalar_select %p333, %s17, 1
        %s335 = smul.addr %s334, 20
        %s336 = smul.addr %s335, 8
        %s337 = scalar_lea.vmem %s0, %s336
      $region56: #{decoder_forward.4} parent=51 // pred_fallthru
        _
      // Predicated region
      $region57: #{decoder_forward.4} parent=51 // pred_check
        %p338 = pneg %p63
      $region58: #{decoder_forward.4} parent=51 // pred_check_branch
        %340 = sbr.rel (%p338) target = $region60
      $region59: #{decoder_forward.4} parent=51 // pred_region
        %p341 = scmp.lt.s32.totalorder %s17, 1
        %s342 = scalar_select %p341, %s17, 1
        %s343 = smul.addr %s342, 10
        %s344 = smul.addr %s343, 8
        %s345 = scalar_lea.vmem %s1, %s344
      $region60: #{decoder_forward.4} parent=51 // pred_fallthru
        _
    $region52: #{decoder_forward.4} parent=5 // pred_fallthru
      _
    %p346 = scmp.le.s32.totalorder 1, %s17
    %p347 = scmp.lt.s32.totalorder %s17, 3
    %p348 = pnand %p346, %p347
    %p349 = pneg %p348
    // Predicated region
    $region61: #{decoder_forward.4} parent=5 // pred_check
      _
    $region62: #{decoder_forward.4} parent=5 // pred_check_branch
      %351 = sbr.rel (%p348) target = $region64
    $region63: #{decoder_forward.4} parent=5 // pred_region
      %s352 = ssub.s32 %s17, 1
      %p353 = scmp.lt.s32.totalorder %s22, 1
      %s354 = scalar_select %p353, %s22, 1
      %s355 = smul.addr %s354, 20
      %s356 = smul.addr %s355, 8
      %s357 = scalar_lea.vmem %s0, %s356
      %p358 = pneg %p43
      %p359 = pneg %p40
      %p360 = scmp.lt.s32.totalorder %s22, 1
      %s361 = scalar_select %p360, %s22, 1
      %s362 = smul.addr %s361, 10
      %s363 = smul.addr %s362, 8
      %s364 = scalar_lea.vmem %s1, %s363
      %p365 = pneg %p69
      %p366 = pneg %p66
      %p367 = pneg %p90
      %p368 = pneg %p87
      %p369 = pneg %p111
      %p370 = pneg %p108
      %p371 = pneg %p132
      %p372 = pneg %p129
      %p373 = pneg %p153
      %p374 = pneg %p150
      %p375 = pneg %p174
      %p376 = pneg %p171
      %p377 = pneg %p195
      %p378 = pneg %p192
      %p379 = pneg %p216
      %p380 = pneg %p213
      %p381 = pneg %p237
      %p382 = pneg %p234
      %p383 = pneg %p258
      %p384 = pneg %p255
      %p385 = pneg %p284
      %p386 = pneg %p281
      %p387 = scmp.lt.s32.totalorder %s22, 1
      %s388 = scalar_select %p387, %s22, 1
      %s389 = smul.addr %s388, 10
      %s390 = smul.addr %s389, 8
      %s391 = scalar_lea.vmem %s11, %s390
      %p392 = scmp.lt.s32.totalorder %s22, 1
      %s393 = scalar_select %p392, %s22, 1
      %s394 = smul.addr %s393, 20
      %s395 = smul.addr %s394, 8
      %s396 = scalar_lea.vmem %s0, %s395
      %p397 = scmp.lt.s32.totalorder %s22, 1
      %s398 = scalar_select %p397, %s22, 1
      %s399 = smul.addr %s398, 10
      %s400 = smul.addr %s399, 8
      %s401 = scalar_lea.vmem %s1, %s400
      %p402 = scmp.lt.s32.totalorder %s22, 1
      %s403 = scalar_select %p402, %s22, 1
      %s404 = smul.addr %s403, 10
      %s405 = smul.addr %s404, 8
      %s406 = scalar_lea.vmem %s11, %s405
      %v407 = vld [vmem:[%s396] sm:$0xff]
      %v408 = vld [vmem:[%s396 + $0x8] sm:$0xff]
      %v409 = vld [vmem:[%s396 + $0x10] sm:$0xff]
      %v410 = vld [vmem:[%s396 + $0x18] sm:$0xff]
      %v411 = vld [vmem:[%s396 + $0x20] sm:$0xff]
      %v412 = vld [vmem:[%s396 + $0x28] sm:$0xff]
      %v413 = vld [vmem:[%s396 + $0x30] sm:$0xff]
      %v414 = vld [vmem:[%s396 + $0x38] sm:$0xff]
      %v415 = vld [vmem:[%s396 + $0x40] sm:$0xff]
      %v416 = vld [vmem:[%s396 + $0x48] sm:$0xff]
      %v417 = vld [vmem:[%s396 + $0x50] sm:$0xff]
      %v418 = vld [vmem:[%s396 + $0x58] sm:$0xff]
      %v419 = vld [vmem:[%s396 + $0x60] sm:$0xff]
      %v420 = vld [vmem:[%s396 + $0x68] sm:$0xff]
      %v421 = vld [vmem:[%s396 + $0x70] sm:$0xff]
      %v422 = vld [vmem:[%s396 + $0x78] sm:$0xff]
      %v423 = vld [vmem:[%s396 + $0x80] sm:$0xff]
      %v424 = vld [vmem:[%s396 + $0x88] sm:$0xff]
      %v425 = vld [vmem:[%s396 + $0x90] sm:$0xff]
      %v426 = vld [vmem:[%s396 + $0x98] sm:$0xff]
      %v427 = vld [vmem:[%s401] sm:$0xff]
      %v428 = vld [vmem:[%s401 + $0x8] sm:$0xff]
      %v429 = vld [vmem:[%s401 + $0x10] sm:$0xff]
      %v430 = vld [vmem:[%s401 + $0x18] sm:$0xff]
      %v431 = vld [vmem:[%s401 + $0x20] sm:$0xff]
      %v432 = vld [vmem:[%s401 + $0x28] sm:$0xff]
      %v433 = vld [vmem:[%s401 + $0x30] sm:$0xff]
      %v434 = vld [vmem:[%s401 + $0x38] sm:$0xff]
      %v435 = vld [vmem:[%s401 + $0x40] sm:$0xff]
      %v436 = vld [vmem:[%s401 + $0x48] sm:$0xff]
      %v437 = vld [vmem:[%s10] sm:$0xff]
      %v438 = vld [vmem:[%s10 + $0x8] sm:$0x3]
      %v439 = vld [vmem:[%s2] sm:$0xff]
      %v440 = vld [vmem:[%s2 + $0x8] sm:$0xff]
      %445 = vrot.lane.b32.xlu0 %v415, 31
      %v446 = vpop.permute.xlu0 %445
      %447 = vrot.lane.b32.xlu0 %v416, 31
      %v448 = vpop.permute.xlu0 %447
      %449 = vrot.lane.b32.xlu0 %v425, 31
      %v450 = vpop.permute.xlu0 %449
      %451 = vrot.lane.b32.xlu0 %v426, 31
      %v452 = vpop.permute.xlu0 %451
      %vm453 = vcmask 252928
      %v454 = vsel %vm453, %v446, %v448
      %v455 = vsel %vm453, %v450, %v452
      %474 = vrot.lane.b32.xlu0 %v407, 35
      %v475 = vpop.permute.xlu0 %474
      %476 = vrot.lane.b32.xlu0 %v408, 35
      %v477 = vpop.permute.xlu0 %476
      %478 = vrot.lane.b32.xlu0 %v409, 35
      %v479 = vpop.permute.xlu0 %478
      %480 = vrot.lane.b32.xlu0 %v410, 35
      %v481 = vpop.permute.xlu0 %480
      %482 = vrot.lane.b32.xlu0 %v411, 35
      %v483 = vpop.permute.xlu0 %482
      %484 = vrot.lane.b32.xlu0 %v412, 35
      %v485 = vpop.permute.xlu0 %484
      %486 = vrot.lane.b32.xlu0 %v413, 35
      %v487 = vpop.permute.xlu0 %486
      %488 = vrot.lane.b32.xlu0 %v414, 35
      %v489 = vpop.permute.xlu0 %488
      %490 = vrot.lane.b32.xlu0 %v415, 35
      %v491 = vpop.permute.xlu0 %490
      %492 = vrot.lane.b32.xlu0 %v417, 35
      %v493 = vpop.permute.xlu0 %492
      %494 = vrot.lane.b32.xlu0 %v418, 35
      %v495 = vpop.permute.xlu0 %494
      %496 = vrot.lane.b32.xlu0 %v419, 35
      %v497 = vpop.permute.xlu0 %496
      %498 = vrot.lane.b32.xlu0 %v420, 35
      %v499 = vpop.permute.xlu0 %498
      %500 = vrot.lane.b32.xlu0 %v421, 35
      %v501 = vpop.permute.xlu0 %500
      %502 = vrot.lane.b32.xlu0 %v422, 35
      %v503 = vpop.permute.xlu0 %502
      %504 = vrot.lane.b32.xlu0 %v423, 35
      %v505 = vpop.permute.xlu0 %504
      %506 = vrot.lane.b32.xlu0 %v424, 35
      %v507 = vpop.permute.xlu0 %506
      %508 = vrot.lane.b32.xlu0 %v425, 35
      %v509 = vpop.permute.xlu0 %508
      %vm510 = vcmask 285696
      %v511 = vsel %vm510, %v475, %v477
      %v512 = vsel %vm510, %v477, %v479
      %v513 = vsel %vm510, %v479, %v481
      %v514 = vsel %vm510, %v481, %v483
      %v515 = vsel %vm510, %v483, %v485
      %v516 = vsel %vm510, %v485, %v487
      %v517 = vsel %vm510, %v487, %v489
      %v518 = vsel %vm510, %v489, %v491
      %v519 = vsel %vm510, %v493, %v495
      %v520 = vsel %vm510, %v495, %v497
      %v521 = vsel %vm510, %v497, %v499
      %v522 = vsel %vm510, %v499, %v501
      %v523 = vsel %vm510, %v501, %v503
      %v524 = vsel %vm510, %v503, %v505
      %v525 = vsel %vm510, %v505, %v507
      %v526 = vsel %vm510, %v507, %v509
      %v547 = vsel %vm510, %v454, %v475
      %v548 = vsel %vm510, %v455, %v493
      %549 = vrot.lane.b32.xlu0 %v415, 30
      %v550 = vpop.permute.xlu0 %549
      %551 = vrot.lane.b32.xlu0 %v416, 30
      %v552 = vpop.permute.xlu0 %551
      %553 = vrot.lane.b32.xlu0 %v425, 30
      %v554 = vpop.permute.xlu0 %553
      %555 = vrot.lane.b32.xlu0 %v426, 30
      %v556 = vpop.permute.xlu0 %555
      %vm557 = vcmask 244736
      %v558 = vsel %vm557, %v550, %v552
      %v559 = vsel %vm557, %v554, %v556
      %562 = vrot.lane.b32.xlu0 %v407, 34
      %v563 = vpop.permute.xlu0 %562
      %564 = vrot.lane.b32.xlu0 %v408, 34
      %v565 = vpop.permute.xlu0 %564
      %566 = vrot.lane.b32.xlu0 %v409, 34
      %v567 = vpop.permute.xlu0 %566
      %568 = vrot.lane.b32.xlu0 %v410, 34
      %v569 = vpop.permute.xlu0 %568
      %570 = vrot.lane.b32.xlu0 %v411, 34
      %v571 = vpop.permute.xlu0 %570
      %572 = vrot.lane.b32.xlu0 %v412, 34
      %v573 = vpop.permute.xlu0 %572
      %574 = vrot.lane.b32.xlu0 %v413, 34
      %v575 = vpop.permute.xlu0 %574
      %576 = vrot.lane.b32.xlu0 %v414, 34
      %v577 = vpop.permute.xlu0 %576
      %578 = vrot.lane.b32.xlu0 %v415, 34
      %v579 = vpop.permute.xlu0 %578
      %580 = vrot.lane.b32.xlu0 %v417, 34
      %v581 = vpop.permute.xlu0 %580
      %582 = vrot.lane.b32.xlu0 %v418, 34
      %v583 = vpop.permute.xlu0 %582
      %584 = vrot.lane.b32.xlu0 %v419, 34
      %v585 = vpop.permute.xlu0 %584
      %586 = vrot.lane.b32.xlu0 %v420, 34
      %v587 = vpop.permute.xlu0 %586
      %588 = vrot.lane.b32.xlu0 %v421, 34
      %v589 = vpop.permute.xlu0 %588
      %590 = vrot.lane.b32.xlu0 %v422, 34
      %v591 = vpop.permute.xlu0 %590
      %592 = vrot.lane.b32.xlu0 %v423, 34
      %v593 = vpop.permute.xlu0 %592
      %594 = vrot.lane.b32.xlu0 %v424, 34
      %v595 = vpop.permute.xlu0 %594
      %596 = vrot.lane.b32.xlu0 %v425, 34
      %v597 = vpop.permute.xlu0 %596
      %vm598 = vcmask 277504
      %v599 = vsel %vm598, %v563, %v565
      %v600 = vsel %vm598, %v565, %v567
      %v601 = vsel %vm598, %v567, %v569
      %v602 = vsel %vm598, %v569, %v571
      %v603 = vsel %vm598, %v571, %v573
      %v604 = vsel %vm598, %v573, %v575
      %v605 = vsel %vm598, %v575, %v577
      %v606 = vsel %vm598, %v577, %v579
      %v607 = vsel %vm598, %v581, %v583
      %v608 = vsel %vm598, %v583, %v585
      %v609 = vsel %vm598, %v585, %v587
      %v610 = vsel %vm598, %v587, %v589
      %v611 = vsel %vm598, %v589, %v591
      %v612 = vsel %vm598, %v591, %v593
      %v613 = vsel %vm598, %v593, %v595
      %v614 = vsel %vm598, %v595, %v597
      %v635 = vsel %vm598, %v558, %v563
      %v636 = vsel %vm598, %v559, %v581
      %637 = vrot.lane.b32.xlu0 %v415, 29
      %v638 = vpop.permute.xlu0 %637
      %639 = vrot.lane.b32.xlu0 %v416, 29
      %v640 = vpop.permute.xlu0 %639
      %641 = vrot.lane.b32.xlu0 %v425, 29
      %v642 = vpop.permute.xlu0 %641
      %643 = vrot.lane.b32.xlu0 %v426, 29
      %v644 = vpop.permute.xlu0 %643
      %vm645 = vcmask 236544
      %v646 = vsel %vm645, %v638, %v640
      %v647 = vsel %vm645, %v642, %v644
      %650 = vrot.lane.b32.xlu0 %v407, 33
      %v651 = vpop.permute.xlu0 %650
      %652 = vrot.lane.b32.xlu0 %v408, 33
      %v653 = vpop.permute.xlu0 %652
      %654 = vrot.lane.b32.xlu0 %v409, 33
      %v655 = vpop.permute.xlu0 %654
      %656 = vrot.lane.b32.xlu0 %v410, 33
      %v657 = vpop.permute.xlu0 %656
      %658 = vrot.lane.b32.xlu0 %v411, 33
      %v659 = vpop.permute.xlu0 %658
      %660 = vrot.lane.b32.xlu0 %v412, 33
      %v661 = vpop.permute.xlu0 %660
      %662 = vrot.lane.b32.xlu0 %v413, 33
      %v663 = vpop.permute.xlu0 %662
      %664 = vrot.lane.b32.xlu0 %v414, 33
      %v665 = vpop.permute.xlu0 %664
      %666 = vrot.lane.b32.xlu0 %v415, 33
      %v667 = vpop.permute.xlu0 %666
      %668 = vrot.lane.b32.xlu0 %v417, 33
      %v669 = vpop.permute.xlu0 %668
      %670 = vrot.lane.b32.xlu0 %v418, 33
      %v671 = vpop.permute.xlu0 %670
      %672 = vrot.lane.b32.xlu0 %v419, 33
      %v673 = vpop.permute.xlu0 %672
      %674 = vrot.lane.b32.xlu0 %v420, 33
      %v675 = vpop.permute.xlu0 %674
      %676 = vrot.lane.b32.xlu0 %v421, 33
      %v677 = vpop.permute.xlu0 %676
      %678 = vrot.lane.b32.xlu0 %v422, 33
      %v679 = vpop.permute.xlu0 %678
      %680 = vrot.lane.b32.xlu0 %v423, 33
      %v681 = vpop.permute.xlu0 %680
      %682 = vrot.lane.b32.xlu0 %v424, 33
      %v683 = vpop.permute.xlu0 %682
      %684 = vrot.lane.b32.xlu0 %v425, 33
      %v685 = vpop.permute.xlu0 %684
      %vm686 = vcmask 269312
      %v687 = vsel %vm686, %v651, %v653
      %v688 = vsel %vm686, %v653, %v655
      %v689 = vsel %vm686, %v655, %v657
      %v690 = vsel %vm686, %v657, %v659
      %v691 = vsel %vm686, %v659, %v661
      %v692 = vsel %vm686, %v661, %v663
      %v693 = vsel %vm686, %v663, %v665
      %v694 = vsel %vm686, %v665, %v667
      %v695 = vsel %vm686, %v669, %v671
      %v696 = vsel %vm686, %v671, %v673
      %v697 = vsel %vm686, %v673, %v675
      %v698 = vsel %vm686, %v675, %v677
      %v699 = vsel %vm686, %v677, %v679
      %v700 = vsel %vm686, %v679, %v681
      %v701 = vsel %vm686, %v681, %v683
      %v702 = vsel %vm686, %v683, %v685
      %v723 = vsel %vm686, %v646, %v651
      %v724 = vsel %vm686, %v647, %v669
      %725 = vrot.lane.b32.xlu0 %v416, 125
      %v726 = vpop.permute.xlu0 %725
      %727 = vrot.lane.b32.xlu0 %v426, 125
      %v728 = vpop.permute.xlu0 %727
      %731 = vrot.lane.b32.xlu0 %v407, 1
      %v732 = vpop.permute.xlu0 %731
      %733 = vrot.lane.b32.xlu0 %v408, 1
      %v734 = vpop.permute.xlu0 %733
      %735 = vrot.lane.b32.xlu0 %v409, 1
      %v736 = vpop.permute.xlu0 %735
      %737 = vrot.lane.b32.xlu0 %v410, 1
      %v738 = vpop.permute.xlu0 %737
      %739 = vrot.lane.b32.xlu0 %v411, 1
      %v740 = vpop.permute.xlu0 %739
      %741 = vrot.lane.b32.xlu0 %v412, 1
      %v742 = vpop.permute.xlu0 %741
      %743 = vrot.lane.b32.xlu0 %v413, 1
      %v744 = vpop.permute.xlu0 %743
      %745 = vrot.lane.b32.xlu0 %v414, 1
      %v746 = vpop.permute.xlu0 %745
      %747 = vrot.lane.b32.xlu0 %v415, 1
      %v748 = vpop.permute.xlu0 %747
      %749 = vrot.lane.b32.xlu0 %v416, 1
      %v750 = vpop.permute.xlu0 %749
      %751 = vrot.lane.b32.xlu0 %v417, 1
      %v752 = vpop.permute.xlu0 %751
      %753 = vrot.lane.b32.xlu0 %v418, 1
      %v754 = vpop.permute.xlu0 %753
      %755 = vrot.lane.b32.xlu0 %v419, 1
      %v756 = vpop.permute.xlu0 %755
      %757 = vrot.lane.b32.xlu0 %v420, 1
      %v758 = vpop.permute.xlu0 %757
      %759 = vrot.lane.b32.xlu0 %v421, 1
      %v760 = vpop.permute.xlu0 %759
      %761 = vrot.lane.b32.xlu0 %v422, 1
      %v762 = vpop.permute.xlu0 %761
      %763 = vrot.lane.b32.xlu0 %v423, 1
      %v764 = vpop.permute.xlu0 %763
      %765 = vrot.lane.b32.xlu0 %v424, 1
      %v766 = vpop.permute.xlu0 %765
      %767 = vrot.lane.b32.xlu0 %v425, 1
      %v768 = vpop.permute.xlu0 %767
      %769 = vrot.lane.b32.xlu0 %v426, 1
      %v770 = vpop.permute.xlu0 %769
      %vm771 = vcmask 7168
      %v772 = vsel %vm771, %v732, %v734
      %v773 = vsel %vm771, %v734, %v736
      %v774 = vsel %vm771, %v736, %v738
      %v775 = vsel %vm771, %v738, %v740
      %v776 = vsel %vm771, %v740, %v742
      %v777 = vsel %vm771, %v742, %v744
      %v778 = vsel %vm771, %v744, %v746
      %v779 = vsel %vm771, %v746, %v748
      %v780 = vsel %vm771, %v748, %v750
      %v781 = vsel %vm771, %v752, %v754
      %v782 = vsel %vm771, %v754, %v756
      %v783 = vsel %vm771, %v756, %v758
      %v784 = vsel %vm771, %v758, %v760
      %v785 = vsel %vm771, %v760, %v762
      %v786 = vsel %vm771, %v762, %v764
      %v787 = vsel %vm771, %v764, %v766
      %v788 = vsel %vm771, %v766, %v768
      %v789 = vsel %vm771, %v768, %v770
      %v810 = vsel %vm771, %v726, %v732
      %v811 = vsel %vm771, %v728, %v752
      %812 = vrot.lane.b32.xlu0 %v407, 127
      %v813 = vpop.permute.xlu0 %812
      %814 = vrot.lane.b32.xlu0 %v408, 127
      %v815 = vpop.permute.xlu0 %814
      %816 = vrot.lane.b32.xlu0 %v409, 127
      %v817 = vpop.permute.xlu0 %816
      %818 = vrot.lane.b32.xlu0 %v410, 127
      %v819 = vpop.permute.xlu0 %818
      %820 = vrot.lane.b32.xlu0 %v411, 127
      %v821 = vpop.permute.xlu0 %820
      %822 = vrot.lane.b32.xlu0 %v412, 127
      %v823 = vpop.permute.xlu0 %822
      %824 = vrot.lane.b32.xlu0 %v413, 127
      %v825 = vpop.permute.xlu0 %824
      %826 = vrot.lane.b32.xlu0 %v414, 127
      %v827 = vpop.permute.xlu0 %826
      %828 = vrot.lane.b32.xlu0 %v415, 127
      %v829 = vpop.permute.xlu0 %828
      %830 = vrot.lane.b32.xlu0 %v416, 127
      %v831 = vpop.permute.xlu0 %830
      %832 = vrot.lane.b32.xlu0 %v417, 127
      %v833 = vpop.permute.xlu0 %832
      %834 = vrot.lane.b32.xlu0 %v418, 127
      %v835 = vpop.permute.xlu0 %834
      %836 = vrot.lane.b32.xlu0 %v419, 127
      %v837 = vpop.permute.xlu0 %836
      %838 = vrot.lane.b32.xlu0 %v420, 127
      %v839 = vpop.permute.xlu0 %838
      %840 = vrot.lane.b32.xlu0 %v421, 127
      %v841 = vpop.permute.xlu0 %840
      %842 = vrot.lane.b32.xlu0 %v422, 127
      %v843 = vpop.permute.xlu0 %842
      %844 = vrot.lane.b32.xlu0 %v423, 127
      %v845 = vpop.permute.xlu0 %844
      %846 = vrot.lane.b32.xlu0 %v424, 127
      %v847 = vpop.permute.xlu0 %846
      %848 = vrot.lane.b32.xlu0 %v425, 127
      %v849 = vpop.permute.xlu0 %848
      %850 = vrot.lane.b32.xlu0 %v426, 127
      %v851 = vpop.permute.xlu0 %850
      %vm852 = vcmask 1039360
      %v853 = vsel %vm852, %v813, %v815
      %v854 = vsel %vm852, %v815, %v817
      %v855 = vsel %vm852, %v817, %v819
      %v856 = vsel %vm852, %v819, %v821
      %v857 = vsel %vm852, %v821, %v823
      %v858 = vsel %vm852, %v823, %v825
      %v859 = vsel %vm852, %v825, %v827
      %v860 = vsel %vm852, %v827, %v829
      %v861 = vsel %vm852, %v829, %v831
      %v862 = vsel %vm852, %v833, %v835
      %v863 = vsel %vm852, %v835, %v837
      %v864 = vsel %vm852, %v837, %v839
      %v865 = vsel %vm852, %v839, %v841
      %v866 = vsel %vm852, %v841, %v843
      %v867 = vsel %vm852, %v843, %v845
      %v868 = vsel %vm852, %v845, %v847
      %v869 = vsel %vm852, %v847, %v849
      %v870 = vsel %vm852, %v849, %v851
      %891 = vrot.lane.b32.xlu0 %v407, 3
      %v892 = vpop.permute.xlu0 %891
      %893 = vrot.lane.b32.xlu0 %v417, 3
      %v894 = vpop.permute.xlu0 %893
      %vm897 = vcmask 23552
      %v898 = vsel %vm897, %v831, %v892
      %v899 = vsel %vm897, %v851, %v894
      %900 = vrot.lane.b32.xlu0 %v407, 95
      %v901 = vpop.permute.xlu0 %900
      %902 = vrot.lane.b32.xlu0 %v408, 95
      %v903 = vpop.permute.xlu0 %902
      %904 = vrot.lane.b32.xlu0 %v409, 95
      %v905 = vpop.permute.xlu0 %904
      %906 = vrot.lane.b32.xlu0 %v410, 95
      %v907 = vpop.permute.xlu0 %906
      %908 = vrot.lane.b32.xlu0 %v411, 95
      %v909 = vpop.permute.xlu0 %908
      %910 = vrot.lane.b32.xlu0 %v412, 95
      %v911 = vpop.permute.xlu0 %910
      %912 = vrot.lane.b32.xlu0 %v413, 95
      %v913 = vpop.permute.xlu0 %912
      %914 = vrot.lane.b32.xlu0 %v414, 95
      %v915 = vpop.permute.xlu0 %914
      %916 = vrot.lane.b32.xlu0 %v415, 95
      %v917 = vpop.permute.xlu0 %916
      %918 = vrot.lane.b32.xlu0 %v416, 95
      %v919 = vpop.permute.xlu0 %918
      %920 = vrot.lane.b32.xlu0 %v417, 95
      %v921 = vpop.permute.xlu0 %920
      %922 = vrot.lane.b32.xlu0 %v418, 95
      %v923 = vpop.permute.xlu0 %922
      %924 = vrot.lane.b32.xlu0 %v419, 95
      %v925 = vpop.permute.xlu0 %924
      %926 = vrot.lane.b32.xlu0 %v420, 95
      %v927 = vpop.permute.xlu0 %926
      %928 = vrot.lane.b32.xlu0 %v421, 95
      %v929 = vpop.permute.xlu0 %928
      %930 = vrot.lane.b32.xlu0 %v422, 95
      %v931 = vpop.permute.xlu0 %930
      %932 = vrot.lane.b32.xlu0 %v423, 95
      %v933 = vpop.permute.xlu0 %932
      %934 = vrot.lane.b32.xlu0 %v424, 95
      %v935 = vpop.permute.xlu0 %934
      %936 = vrot.lane.b32.xlu0 %v425, 95
      %v937 = vpop.permute.xlu0 %936
      %938 = vrot.lane.b32.xlu0 %v426, 95
      %v939 = vpop.permute.xlu0 %938
      %vm940 = vcmask 777216
      %v941 = vsel %vm940, %v901, %v903
      %v942 = vsel %vm940, %v903, %v905
      %v943 = vsel %vm940, %v905, %v907
      %v944 = vsel %vm940, %v907, %v909
      %v945 = vsel %vm940, %v909, %v911
      %v946 = vsel %vm940, %v911, %v913
      %v947 = vsel %vm940, %v913, %v915
      %v948 = vsel %vm940, %v915, %v917
      %v949 = vsel %vm940, %v917, %v919
      %v950 = vsel %vm940, %v921, %v923
      %v951 = vsel %vm940, %v923, %v925
      %v952 = vsel %vm940, %v925, %v927
      %v953 = vsel %vm940, %v927, %v929
      %v954 = vsel %vm940, %v929, %v931
      %v955 = vsel %vm940, %v931, %v933
      %v956 = vsel %vm940, %v933, %v935
      %v957 = vsel %vm940, %v935, %v937
      %v958 = vsel %vm940, %v937, %v939
      %977 = vrot.lane.b32.xlu0 %v407, 99
      %v978 = vpop.permute.xlu0 %977
      %979 = vrot.lane.b32.xlu0 %v417, 99
      %v980 = vpop.permute.xlu0 %979
      %vm983 = vcmask 809984
      %v984 = vsel %vm983, %v949, %v978
      %v985 = vsel %vm983, %v958, %v980
      %986 = vrot.lane.b32.xlu0 %v407, 94
      %v987 = vpop.permute.xlu0 %986
      %988 = vrot.lane.b32.xlu0 %v408, 94
      %v989 = vpop.permute.xlu0 %988
      %990 = vrot.lane.b32.xlu0 %v409, 94
      %v991 = vpop.permute.xlu0 %990
      %992 = vrot.lane.b32.xlu0 %v410, 94
      %v993 = vpop.permute.xlu0 %992
      %994 = vrot.lane.b32.xlu0 %v411, 94
      %v995 = vpop.permute.xlu0 %994
      %996 = vrot.lane.b32.xlu0 %v412, 94
      %v997 = vpop.permute.xlu0 %996
      %998 = vrot.lane.b32.xlu0 %v413, 94
      %v999 = vpop.permute.xlu0 %998
      %1000 = vrot.lane.b32.xlu0 %v414, 94
      %v1001 = vpop.permute.xlu0 %1000
      %1002 = vrot.lane.b32.xlu0 %v415, 94
      %v1003 = vpop.permute.xlu0 %1002
      %1004 = vrot.lane.b32.xlu0 %v416, 94
      %v1005 = vpop.permute.xlu0 %1004
      %1006 = vrot.lane.b32.xlu0 %v417, 94
      %v1007 = vpop.permute.xlu0 %1006
      %1008 = vrot.lane.b32.xlu0 %v418, 94
      %v1009 = vpop.permute.xlu0 %1008
      %1010 = vrot.lane.b32.xlu0 %v419, 94
      %v1011 = vpop.permute.xlu0 %1010
      %1012 = vrot.lane.b32.xlu0 %v420, 94
      %v1013 = vpop.permute.xlu0 %1012
      %1014 = vrot.lane.b32.xlu0 %v421, 94
      %v1015 = vpop.permute.xlu0 %1014
      %1016 = vrot.lane.b32.xlu0 %v422, 94
      %v1017 = vpop.permute.xlu0 %1016
      %1018 = vrot.lane.b32.xlu0 %v423, 94
      %v1019 = vpop.permute.xlu0 %1018
      %1020 = vrot.lane.b32.xlu0 %v424, 94
      %v1021 = vpop.permute.xlu0 %1020
      %1022 = vrot.lane.b32.xlu0 %v425, 94
      %v1023 = vpop.permute.xlu0 %1022
      %1024 = vrot.lane.b32.xlu0 %v426, 94
      %v1025 = vpop.permute.xlu0 %1024
      %vm1026 = vcmask 769024
      %v1027 = vsel %vm1026, %v987, %v989
      %v1028 = vsel %vm1026, %v989, %v991
      %v1029 = vsel %vm1026, %v991, %v993
      %v1030 = vsel %vm1026, %v993, %v995
      %v1031 = vsel %vm1026, %v995, %v997
      %v1032 = vsel %vm1026, %v997, %v999
      %v1033 = vsel %vm1026, %v999, %v1001
      %v1034 = vsel %vm1026, %v1001, %v1003
      %v1035 = vsel %vm1026, %v1003, %v1005
      %v1036 = vsel %vm1026, %v1007, %v1009
      %v1037 = vsel %vm1026, %v1009, %v1011
      %v1038 = vsel %vm1026, %v1011, %v1013
      %v1039 = vsel %vm1026, %v1013, %v1015
      %v1040 = vsel %vm1026, %v1015, %v1017
      %v1041 = vsel %vm1026, %v1017, %v1019
      %v1042 = vsel %vm1026, %v1019, %v1021
      %v1043 = vsel %vm1026, %v1021, %v1023
      %v1044 = vsel %vm1026, %v1023, %v1025
      %1063 = vrot.lane.b32.xlu0 %v407, 98
      %v1064 = vpop.permute.xlu0 %1063
      %1065 = vrot.lane.b32.xlu0 %v417, 98
      %v1066 = vpop.permute.xlu0 %1065
      %vm1069 = vcmask 801792
      %v1070 = vsel %vm1069, %v1035, %v1064
      %v1071 = vsel %vm1069, %v1044, %v1066
      %1072 = vrot.lane.b32.xlu0 %v407, 93
      %v1073 = vpop.permute.xlu0 %1072
      %1074 = vrot.lane.b32.xlu0 %v408, 93
      %v1075 = vpop.permute.xlu0 %1074
      %1076 = vrot.lane.b32.xlu0 %v409, 93
      %v1077 = vpop.permute.xlu0 %1076
      %1078 = vrot.lane.b32.xlu0 %v410, 93
      %v1079 = vpop.permute.xlu0 %1078
      %1080 = vrot.lane.b32.xlu0 %v411, 93
      %v1081 = vpop.permute.xlu0 %1080
      %1082 = vrot.lane.b32.xlu0 %v412, 93
      %v1083 = vpop.permute.xlu0 %1082
      %1084 = vrot.lane.b32.xlu0 %v413, 93
      %v1085 = vpop.permute.xlu0 %1084
      %1086 = vrot.lane.b32.xlu0 %v414, 93
      %v1087 = vpop.permute.xlu0 %1086
      %1088 = vrot.lane.b32.xlu0 %v415, 93
      %v1089 = vpop.permute.xlu0 %1088
      %1090 = vrot.lane.b32.xlu0 %v416, 93
      %v1091 = vpop.permute.xlu0 %1090
      %1092 = vrot.lane.b32.xlu0 %v417, 93
      %v1093 = vpop.permute.xlu0 %1092
      %1094 = vrot.lane.b32.xlu0 %v418, 93
      %v1095 = vpop.permute.xlu0 %1094
      %1096 = vrot.lane.b32.xlu0 %v419, 93
      %v1097 = vpop.permute.xlu0 %1096
      %1098 = vrot.lane.b32.xlu0 %v420, 93
      %v1099 = vpop.permute.xlu0 %1098
      %1100 = vrot.lane.b32.xlu0 %v421, 93
      %v1101 = vpop.permute.xlu0 %1100
      %1102 = vrot.lane.b32.xlu0 %v422, 93
      %v1103 = vpop.permute.xlu0 %1102
      %1104 = vrot.lane.b32.xlu0 %v423, 93
      %v1105 = vpop.permute.xlu0 %1104
      %1106 = vrot.lane.b32.xlu0 %v424, 93
      %v1107 = vpop.permute.xlu0 %1106
      %1108 = vrot.lane.b32.xlu0 %v425, 93
      %v1109 = vpop.permute.xlu0 %1108
      %1110 = vrot.lane.b32.xlu0 %v426, 93
      %v1111 = vpop.permute.xlu0 %1110
      %vm1112 = vcmask 760832
      %v1113 = vsel %vm1112, %v1073, %v1075
      %v1114 = vsel %vm1112, %v1075, %v1077
      %v1115 = vsel %vm1112, %v1077, %v1079
      %v1116 = vsel %vm1112, %v1079, %v1081
      %v1117 = vsel %vm1112, %v1081, %v1083
      %v1118 = vsel %vm1112, %v1083, %v1085
      %v1119 = vsel %vm1112, %v1085, %v1087
      %v1120 = vsel %vm1112, %v1087, %v1089
      %v1121 = vsel %vm1112, %v1089, %v1091
      %v1122 = vsel %vm1112, %v1093, %v1095
      %v1123 = vsel %vm1112, %v1095, %v1097
      %v1124 = vsel %vm1112, %v1097, %v1099
      %v1125 = vsel %vm1112, %v1099, %v1101
      %v1126 = vsel %vm1112, %v1101, %v1103
      %v1127 = vsel %vm1112, %v1103, %v1105
      %v1128 = vsel %vm1112, %v1105, %v1107
      %v1129 = vsel %vm1112, %v1107, %v1109
      %v1130 = vsel %vm1112, %v1109, %v1111
      %1149 = vrot.lane.b32.xlu0 %v407, 97
      %v1150 = vpop.permute.xlu0 %1149
      %1151 = vrot.lane.b32.xlu0 %v417, 97
      %v1152 = vpop.permute.xlu0 %1151
      %vm1155 = vcmask 793600
      %v1156 = vsel %vm1155, %v1121, %v1150
      %v1157 = vsel %vm1155, %v1130, %v1152
      %v1158 = vld [vmem:[%s3] sm:$0xff]
      %1160 = vset.pattern.permute.xlu0 0
      %1161 = vperm.xlu0 %1160, %v1158
      %v1162 = vpop.permute.xlu0 %1161
      %vm1164 = vcmask 130048
      %v1166 = vsel %vm1164, %v440, 0
      %1168 = vmatprep.subr.mxu0 %v511
      %1169 = vmatpush1.msra.mxu0 %v547
      %1170 = vmatprep.subr.mxu0 %v519
      %1171 = vmatpush1.msra.mxu0 %v548
      %1172 = vmatprep.subr.mxu0 %v599
      %1173 = vmatpush1.msra.mxu0 %v635
      %1174 = vmatprep.subr.mxu0 %v607
      %1175 = vmatpush1.msra.mxu0 %v636
      %1176 = vmatprep.subr.mxu0 %v687
      %1177 = vmatpush1.msra.mxu0 %v723
      %1178 = vmatprep.subr.mxu0 %v695
      %1179 = vmatpush1.msra.mxu0 %v724
      %1180 = vmatprep.subr.mxu0 %v772
      %1181 = vmatpush1.msra.mxu0 %v810
      %1182 = vmatprep.subr.mxu0 %v781
      %1183 = vmatpush1.msra.mxu0 %v811
      %1184 = vmatprep.subr.mxu0 %v408
      %1185 = vmatpush1.msra.mxu0 %v407
      %1186 = vmatprep.subr.mxu0 %v418
      %1187 = vmatpush1.msra.mxu0 %v417
      %1188 = vmatprep.subr.mxu0 %v854
      %1189 = vmatpush1.msra.mxu0 %v853
      %1190 = vmatprep.subr.mxu0 %v863
      %1191 = vmatpush1.msra.mxu0 %v862
      %1192 = vmatprep.subr.mxu0 %v942
      %1193 = vmatpush1.msra.mxu0 %v941
      %1194 = vmatprep.subr.mxu0 %v951
      %1195 = vmatpush1.msra.mxu0 %v950
      %1196 = vmatprep.subr.mxu0 %v1028
      %1197 = vmatpush1.msra.mxu0 %v1027
      %1198 = vmatprep.subr.mxu0 %v1037
      %1199 = vmatpush1.msra.mxu0 %v1036
      %1200 = vmatprep.subr.mxu0 %v1114
      %1201 = vmatpush1.msra.mxu0 %v1113
      %1202 = vmatprep.subr.mxu0 %v1123
      %1203 = vmatpush1.msra.mxu0 %v1122
      %1204 = vmatprep.subr.mxu0 0.0
      %1205 = vmatpush1.msra.mxu0 0.0
      %1206 = vmatprep.subr.mxu0 0.0
      %1207 = vmatpush1.msra.mxu0 0.0
      %1208 = vmatprep.subr.mxu0 0.0
      %1209 = vmatpush1.msra.mxu0 0.0
      %1210 = vmatprep.subr.mxu0 0.0
      %1211 = vmatpush1.msra.mxu0 0.0
      %1212 = vmatprep.subr.mxu0 0.0
      %1213 = vmatpush1.msra.mxu0 0.0
      %1214 = vmatprep.subr.mxu0 0.0
      %1215 = vmatpush1.msra.mxu0 0.0
      %1216 = vmatprep.subr.mxu0 0.0
      %1217 = vmatpush1.msra.mxu0 0.0
      %1218 = vmatprep.subr.mxu0 0.0
      %1219 = vmatpush1.msra.mxu0 0.0
      %1220 = vmatprep.subr.mxu0 0.0
      %1221 = vmatpush1.msra.mxu0 0.0
      %1222 = vmatprep.subr.mxu0 0.0
      %1223 = vmatpush1.msra.mxu0 0.0
      %1224 = vmatprep.subr.mxu0 0.0
      %1225 = vmatpush1.msra.mxu0 0.0
      %1226 = vmatprep.subr.mxu0 0.0
      %1227 = vmatpush1.msra.mxu0 0.0
      %1228 = vmatprep.subr.mxu0 0.0
      %1229 = vmatpush1.msra.mxu0 0.0
      %1230 = vmatprep.subr.mxu0 0.0
      %1231 = vmatpush1.msra.mxu0 0.0
      %1232 = vmatprep.mubr.f32.mxu0 %v1166
      %1233 = vmatmul.mubr.f32.gmra.mrb[0].mxu0 %v439
      %v1234 = vpop.f32.mrb[0].mxu0
      %v1235 = vadd.f32 %v1162, %v1234
      %v1236 = vpop.f32.mrb[0].mxu0
      %v1237 = vadd.f32 %v1162, %v1236
      %1238 = vdwg.mxu0
      %1239 = vmatprep.subr.mxu0 %v513
      %1240 = vmatpush1.msra.mxu0 %v512
      %1241 = vmatprep.subr.mxu0 %v521
      %1242 = vmatpush1.msra.mxu0 %v520
      %1243 = vmatprep.subr.mxu0 %v601
      %1244 = vmatpush1.msra.mxu0 %v600
      %1245 = vmatprep.subr.mxu0 %v609
      %1246 = vmatpush1.msra.mxu0 %v608
      %1247 = vmatprep.subr.mxu0 %v689
      %1248 = vmatpush1.msra.mxu0 %v688
      %1249 = vmatprep.subr.mxu0 %v697
      %1250 = vmatpush1.msra.mxu0 %v696
      %1251 = vmatprep.subr.mxu0 %v774
      %1252 = vmatpush1.msra.mxu0 %v773
      %1253 = vmatprep.subr.mxu0 %v783
      %1254 = vmatpush1.msra.mxu0 %v782
      %1255 = vmatprep.subr.mxu0 %v410
      %1256 = vmatpush1.msra.mxu0 %v409
      %1257 = vmatprep.subr.mxu0 %v420
      %1258 = vmatpush1.msra.mxu0 %v419
      %1259 = vmatprep.subr.mxu0 %v856
      %1260 = vmatpush1.msra.mxu0 %v855
      %1261 = vmatprep.subr.mxu0 %v865
      %1262 = vmatpush1.msra.mxu0 %v864
      %1263 = vmatprep.subr.mxu0 %v944
      %1264 = vmatpush1.msra.mxu0 %v943
      %1265 = vmatprep.subr.mxu0 %v953
      %1266 = vmatpush1.msra.mxu0 %v952
      %1267 = vmatprep.subr.mxu0 %v1030
      %1268 = vmatpush1.msra.mxu0 %v1029
      %1269 = vmatprep.subr.mxu0 %v1039
      %1270 = vmatpush1.msra.mxu0 %v1038
      %1271 = vmatprep.subr.mxu0 %v1116
      %1272 = vmatpush1.msra.mxu0 %v1115
      %1273 = vmatprep.subr.mxu0 %v1125
      %1274 = vmatpush1.msra.mxu0 %v1124
      %1275 = vmatprep.subr.mxu0 0.0
      %1276 = vmatpush1.msra.mxu0 0.0
      %1277 = vmatprep.subr.mxu0 0.0
      %1278 = vmatpush1.msra.mxu0 0.0
      %1279 = vmatprep.subr.mxu0 0.0
      %1280 = vmatpush1.msra.mxu0 0.0
      %1281 = vmatprep.subr.mxu0 0.0
      %1282 = vmatpush1.msra.mxu0 0.0
      %1283 = vmatprep.subr.mxu0 0.0
      %1284 = vmatpush1.msra.mxu0 0.0
      %1285 = vmatprep.subr.mxu0 0.0
      %1286 = vmatpush1.msra.mxu0 0.0
      %1287 = vmatprep.subr.mxu0 0.0
      %1288 = vmatpush1.msra.mxu0 0.0
      %1289 = vmatprep.subr.mxu0 0.0
      %1290 = vmatpush1.msra.mxu0 0.0
      %1291 = vmatprep.subr.mxu0 0.0
      %1292 = vmatpush1.msra.mxu0 0.0
      %1293 = vmatprep.subr.mxu0 0.0
      %1294 = vmatpush1.msra.mxu0 0.0
      %1295 = vmatprep.subr.mxu0 0.0
      %1296 = vmatpush1.msra.mxu0 0.0
      %1297 = vmatprep.subr.mxu0 0.0
      %1298 = vmatpush1.msra.mxu0 0.0
      %1299 = vmatprep.subr.mxu0 0.0
      %1300 = vmatpush1.msra.mxu0 0.0
      %1301 = vmatprep.subr.mxu0 0.0
      %1302 = vmatpush1.msra.mxu0 0.0
      %1303 = vmatprep.mubr.f32.mxu0 %v1166
      %1304 = vmatmul.mubr.f32.gmra.mrb[0].mxu0 %v439
      %v1305 = vpop.f32.mrb[0].mxu0
      %v1306 = vadd.f32 %v1162, %v1305
      %v1307 = vpop.f32.mrb[0].mxu0
      %v1308 = vadd.f32 %v1162, %v1307
      %1309 = vdwg.mxu0
      %1310 = vmatprep.subr.mxu0 %v515
      %1311 = vmatpush1.msra.mxu0 %v514
      %1312 = vmatprep.subr.mxu0 %v523
      %1313 = vmatpush1.msra.mxu0 %v522
      %1314 = vmatprep.subr.mxu0 %v603
      %1315 = vmatpush1.msra.mxu0 %v602
      %1316 = vmatprep.subr.mxu0 %v611
      %1317 = vmatpush1.msra.mxu0 %v610
      %1318 = vmatprep.subr.mxu0 %v691
      %1319 = vmatpush1.msra.mxu0 %v690
      %1320 = vmatprep.subr.mxu0 %v699
      %1321 = vmatpush1.msra.mxu0 %v698
      %1322 = vmatprep.subr.mxu0 %v776
      %1323 = vmatpush1.msra.mxu0 %v775
      %1324 = vmatprep.subr.mxu0 %v785
      %1325 = vmatpush1.msra.mxu0 %v784
      %1326 = vmatprep.subr.mxu0 %v412
      %1327 = vmatpush1.msra.mxu0 %v411
      %1328 = vmatprep.subr.mxu0 %v422
      %1329 = vmatpush1.msra.mxu0 %v421
      %1330 = vmatprep.subr.mxu0 %v858
      %1331 = vmatpush1.msra.mxu0 %v857
      %1332 = vmatprep.subr.mxu0 %v867
      %1333 = vmatpush1.msra.mxu0 %v866
      %1334 = vmatprep.subr.mxu0 %v946
      %1335 = vmatpush1.msra.mxu0 %v945
      %1336 = vmatprep.subr.mxu0 %v955
      %1337 = vmatpush1.msra.mxu0 %v954
      %1338 = vmatprep.subr.mxu0 %v1032
      %1339 = vmatpush1.msra.mxu0 %v1031
      %1340 = vmatprep.subr.mxu0 %v1041
      %1341 = vmatpush1.msra.mxu0 %v1040
      %1342 = vmatprep.subr.mxu0 %v1118
      %1343 = vmatpush1.msra.mxu0 %v1117
      %1344 = vmatprep.subr.mxu0 %v1127
      %1345 = vmatpush1.msra.mxu0 %v1126
      %1346 = vmatprep.subr.mxu0 0.0
      %1347 = vmatpush1.msra.mxu0 0.0
      %1348 = vmatprep.subr.mxu0 0.0
      %1349 = vmatpush1.msra.mxu0 0.0
      %1350 = vmatprep.subr.mxu0 0.0
      %1351 = vmatpush1.msra.mxu0 0.0
      %1352 = vmatprep.subr.mxu0 0.0
      %1353 = vmatpush1.msra.mxu0 0.0
      %1354 = vmatprep.subr.mxu0 0.0
      %1355 = vmatpush1.msra.mxu0 0.0
      %1356 = vmatprep.subr.mxu0 0.0
      %1357 = vmatpush1.msra.mxu0 0.0
      %1358 = vmatprep.subr.mxu0 0.0
      %1359 = vmatpush1.msra.mxu0 0.0
      %1360 = vmatprep.subr.mxu0 0.0
      %1361 = vmatpush1.msra.mxu0 0.0
      %1362 = vmatprep.subr.mxu0 0.0
      %1363 = vmatpush1.msra.mxu0 0.0
      %1364 = vmatprep.subr.mxu0 0.0
      %1365 = vmatpush1.msra.mxu0 0.0
      %1366 = vmatprep.subr.mxu0 0.0
      %1367 = vmatpush1.msra.mxu0 0.0
      %1368 = vmatprep.subr.mxu0 0.0
      %1369 = vmatpush1.msra.mxu0 0.0
      %1370 = vmatprep.subr.mxu0 0.0
      %1371 = vmatpush1.msra.mxu0 0.0
      %1372 = vmatprep.subr.mxu0 0.0
      %1373 = vmatpush1.msra.mxu0 0.0
      %1374 = vmatprep.mubr.f32.mxu0 %v1166
      %1375 = vmatmul.mubr.f32.gmra.mrb[0].mxu0 %v439
      %v1376 = vpop.f32.mrb[0].mxu0
      %v1377 = vadd.f32 %v1162, %v1376
      %v1378 = vpop.f32.mrb[0].mxu0
      %v1379 = vadd.f32 %v1162, %v1378
      %1380 = vdwg.mxu0
      %1381 = vmatprep.subr.mxu0 %v517
      %1382 = vmatpush1.msra.mxu0 %v516
      %1383 = vmatprep.subr.mxu0 %v525
      %1384 = vmatpush1.msra.mxu0 %v524
      %1385 = vmatprep.subr.mxu0 %v605
      %1386 = vmatpush1.msra.mxu0 %v604
      %1387 = vmatprep.subr.mxu0 %v613
      %1388 = vmatpush1.msra.mxu0 %v612
      %1389 = vmatprep.subr.mxu0 %v693
      %1390 = vmatpush1.msra.mxu0 %v692
      %1391 = vmatprep.subr.mxu0 %v701
      %1392 = vmatpush1.msra.mxu0 %v700
      %1393 = vmatprep.subr.mxu0 %v778
      %1394 = vmatpush1.msra.mxu0 %v777
      %1395 = vmatprep.subr.mxu0 %v787
      %1396 = vmatpush1.msra.mxu0 %v786
      %1397 = vmatprep.subr.mxu0 %v414
      %1398 = vmatpush1.msra.mxu0 %v413
      %1399 = vmatprep.subr.mxu0 %v424
      %1400 = vmatpush1.msra.mxu0 %v423
      %1401 = vmatprep.subr.mxu0 %v860
      %1402 = vmatpush1.msra.mxu0 %v859
      %1403 = vmatprep.subr.mxu0 %v869
      %1404 = vmatpush1.msra.mxu0 %v868
      %1405 = vmatprep.subr.mxu0 %v948
      %1406 = vmatpush1.msra.mxu0 %v947
      %1407 = vmatprep.subr.mxu0 %v957
      %1408 = vmatpush1.msra.mxu0 %v956
      %1409 = vmatprep.subr.mxu0 %v1034
      %1410 = vmatpush1.msra.mxu0 %v1033
      %1411 = vmatprep.subr.mxu0 %v1043
      %1412 = vmatpush1.msra.mxu0 %v1042
      %1413 = vmatprep.subr.mxu0 %v1120
      %1414 = vmatpush1.msra.mxu0 %v1119
      %1415 = vmatprep.subr.mxu0 %v1129
      %1416 = vmatpush1.msra.mxu0 %v1128
      %1417 = vmatprep.subr.mxu0 0.0
      %1418 = vmatpush1.msra.mxu0 0.0
      %1419 = vmatprep.subr.mxu0 0.0
      %1420 = vmatpush1.msra.mxu0 0.0
      %1421 = vmatprep.subr.mxu0 0.0
      %1422 = vmatpush1.msra.mxu0 0.0
      %1423 = vmatprep.subr.mxu0 0.0
      %1424 = vmatpush1.msra.mxu0 0.0
      %1425 = vmatprep.subr.mxu0 0.0
      %1426 = vmatpush1.msra.mxu0 0.0
      %1427 = vmatprep.subr.mxu0 0.0
      %1428 = vmatpush1.msra.mxu0 0.0
      %1429 = vmatprep.subr.mxu0 0.0
      %1430 = vmatpush1.msra.mxu0 0.0
      %1431 = vmatprep.subr.mxu0 0.0
      %1432 = vmatpush1.msra.mxu0 0.0
      %1433 = vmatprep.subr.mxu0 0.0
      %1434 = vmatpush1.msra.mxu0 0.0
      %1435 = vmatprep.subr.mxu0 0.0
      %1436 = vmatpush1.msra.mxu0 0.0
      %1437 = vmatprep.subr.mxu0 0.0
      %1438 = vmatpush1.msra.mxu0 0.0
      %1439 = vmatprep.subr.mxu0 0.0
      %1440 = vmatpush1.msra.mxu0 0.0
      %1441 = vmatprep.subr.mxu0 0.0
      %1442 = vmatpush1.msra.mxu0 0.0
      %1443 = vmatprep.subr.mxu0 0.0
      %1444 = vmatpush1.msra.mxu0 0.0
      %1445 = vmatprep.mubr.f32.mxu0 %v1166
      %1446 = vmatmul.mubr.f32.gmra.mrb[0].mxu0 %v439
      %v1447 = vpop.f32.mrb[0].mxu0
      %v1448 = vadd.f32 %v1162, %v1447
      %v1449 = vpop.f32.mrb[0].mxu0
      %v1450 = vadd.f32 %v1162, %v1449
      %1451 = vdwg.mxu0
      %1452 = vmatprep.subr.mxu0 %v491
      %1453 = vmatpush1.msra.mxu0 %v518
      %1454 = vmatprep.subr.mxu0 %v509
      %1455 = vmatpush1.msra.mxu0 %v526
      %1456 = vmatprep.subr.mxu0 %v579
      %1457 = vmatpush1.msra.mxu0 %v606
      %1458 = vmatprep.subr.mxu0 %v597
      %1459 = vmatpush1.msra.mxu0 %v614
      %1460 = vmatprep.subr.mxu0 %v667
      %1461 = vmatpush1.msra.mxu0 %v694
      %1462 = vmatprep.subr.mxu0 %v685
      %1463 = vmatpush1.msra.mxu0 %v702
      %1464 = vmatprep.subr.mxu0 %v780
      %1465 = vmatpush1.msra.mxu0 %v779
      %1466 = vmatprep.subr.mxu0 %v789
      %1467 = vmatpush1.msra.mxu0 %v788
      %1468 = vmatprep.subr.mxu0 %v416
      %1469 = vmatpush1.msra.mxu0 %v415
      %1470 = vmatprep.subr.mxu0 %v426
      %1471 = vmatpush1.msra.mxu0 %v425
      %1472 = vmatprep.subr.mxu0 %v898
      %1473 = vmatpush1.msra.mxu0 %v861
      %1474 = vmatprep.subr.mxu0 %v899
      %1475 = vmatpush1.msra.mxu0 %v870
      %1476 = vmatprep.subr.mxu0 %v978
      %1477 = vmatpush1.msra.mxu0 %v984
      %1478 = vmatprep.subr.mxu0 %v980
      %1479 = vmatpush1.msra.mxu0 %v985
      %1480 = vmatprep.subr.mxu0 %v1064
      %1481 = vmatpush1.msra.mxu0 %v1070
      %1482 = vmatprep.subr.mxu0 %v1066
      %1483 = vmatpush1.msra.mxu0 %v1071
      %1484 = vmatprep.subr.mxu0 %v1150
      %1485 = vmatpush1.msra.mxu0 %v1156
      %1486 = vmatprep.subr.mxu0 %v1152
      %1487 = vmatpush1.msra.mxu0 %v1157
      %1488 = vmatprep.subr.mxu0 0.0
      %1489 = vmatpush1.msra.mxu0 0.0
      %1490 = vmatprep.subr.mxu0 0.0
      %1491 = vmatpush1.msra.mxu0 0.0
      %1492 = vmatprep.subr.mxu0 0.0
      %1493 = vmatpush1.msra.mxu0 0.0
      %1494 = vmatprep.subr.mxu0 0.0
      %1495 = vmatpush1.msra.mxu0 0.0
      %1496 = vmatprep.subr.mxu0 0.0
      %1497 = vmatpush1.msra.mxu0 0.0
      %1498 = vmatprep.subr.mxu0 0.0
      %1499 = vmatpush1.msra.mxu0 0.0
      %1500 = vmatprep.subr.mxu0 0.0
      %1501 = vmatpush1.msra.mxu0 0.0
      %1502 = vmatprep.subr.mxu0 0.0
      %1503 = vmatpush1.msra.mxu0 0.0
      %1504 = vmatprep.subr.mxu0 0.0
      %1505 = vmatpush1.msra.mxu0 0.0
      %1506 = vmatprep.subr.mxu0 0.0
      %1507 = vmatpush1.msra.mxu0 0.0
      %1508 = vmatprep.subr.mxu0 0.0
      %1509 = vmatpush1.msra.mxu0 0.0
      %1510 = vmatprep.subr.mxu0 0.0
      %1511 = vmatpush1.msra.mxu0 0.0
      %1512 = vmatprep.subr.mxu0 0.0
      %1513 = vmatpush1.msra.mxu0 0.0
      %1514 = vmatprep.subr.mxu0 0.0
      %1515 = vmatpush1.msra.mxu0 0.0
      %1516 = vmatprep.mubr.f32.mxu0 %v1166
      %1517 = vmatmul.mubr.f32.gmra.mrb[0].mxu0 %v439
      %v1518 = vpop.f32.mrb[0].mxu0
      %v1519 = vadd.f32 %v1162, %v1518
      %v1520 = vpop.f32.mrb[0].mxu0
      %v1521 = vadd.f32 %v1162, %v1520
      %1522 = vdwg.mxu0
      %v1525 = vlaneseq
      %v1526 = vshrl.u32 %v1525, 7
      %v1527 = vsub.s32 0, %v1526
      %v1528 = vrot.slane %v437, %v1527
      %v1529 = vlaneseq
      %v1530 = vshrl.u32 %v1529, 7
      %v1531 = vsub.s32 1, %v1530
      %v1532 = vrot.slane %v437, %v1531
      %v1533 = vlaneseq
      %v1534 = vshrl.u32 %v1533, 7
      %v1535 = vsub.s32 2, %v1534
      %v1536 = vrot.slane %v437, %v1535
      %v1537 = vlaneseq
      %v1538 = vshrl.u32 %v1537, 7
      %v1539 = vsub.s32 3, %v1538
      %v1540 = vrot.slane %v437, %v1539
      %v1541 = vlaneseq
      %v1542 = vshrl.u32 %v1541, 7
      %v1543 = vsub.s32 4, %v1542
      %v1544 = vrot.slane %v437, %v1543
      %v1545 = vlaneseq
      %v1546 = vshrl.u32 %v1545, 7
      %v1547 = vsub.s32 5, %v1546
      %v1548 = vrot.slane %v437, %v1547
      %v1549 = vlaneseq
      %v1550 = vshrl.u32 %v1549, 7
      %v1551 = vsub.s32 6, %v1550
      %v1552 = vrot.slane %v437, %v1551
      %v1553 = vlaneseq
      %v1554 = vshrl.u32 %v1553, 7
      %v1555 = vsub.s32 7, %v1554
      %v1556 = vrot.slane %v437, %v1555
      %v1557 = vlaneseq
      %v1558 = vshrl.u32 %v1557, 7
      %v1559 = vsub.s32 0, %v1558
      %v1560 = vrot.slane %v438, %v1559
      %v1561 = vlaneseq
      %v1562 = vshrl.u32 %v1561, 7
      %v1563 = vsub.s32 1, %v1562
      %v1564 = vrot.slane %v438, %v1563
      %v1575 = vmul.f32 %v1235, %v1528
      %v1576 = vmul.f32 %v1237, %v1532
      %v1577 = vmul.f32 %v1306, %v1536
      %v1578 = vmul.f32 %v1308, %v1540
      %v1579 = vmul.f32 %v1377, %v1544
      %v1580 = vmul.f32 %v1379, %v1548
      %v1581 = vmul.f32 %v1448, %v1552
      %v1582 = vmul.f32 %v1450, %v1556
      %v1583 = vmul.f32 %v1519, %v1560
      %v1584 = vmul.f32 %v1521, %v1564
      %v1585 = vld [vmem:[%s4] sm:$0xff]
      %v1586 = vld [vmem:[%s4 + $0x8] sm:$0xff]
      %1591 = vrot.lane.b32.xlu0 %v1583, 31
      %v1592 = vpop.permute.xlu0 %1591
      %1593 = vrot.lane.b32.xlu0 %v1584, 31
      %v1594 = vpop.permute.xlu0 %1593
      %1595 = vrot.lane.b32.xlu0 %v435, 31
      %v1596 = vpop.permute.xlu0 %1595
      %1597 = vrot.lane.b32.xlu0 %v436, 31
      %v1598 = vpop.permute.xlu0 %1597
      %v1599 = vsel %vm453, %v1592, %v1594
      %v1600 = vsel %vm453, %v1596, %v1598
      %1619 = vrot.lane.b32.xlu0 %v1575, 35
      %v1620 = vpop.permute.xlu0 %1619
      %1621 = vrot.lane.b32.xlu0 %v1576, 35
      %v1622 = vpop.permute.xlu0 %1621
      %1623 = vrot.lane.b32.xlu0 %v1577, 35
      %v1624 = vpop.permute.xlu0 %1623
      %1625 = vrot.lane.b32.xlu0 %v1578, 35
      %v1626 = vpop.permute.xlu0 %1625
      %1627 = vrot.lane.b32.xlu0 %v1579, 35
      %v1628 = vpop.permute.xlu0 %1627
      %1629 = vrot.lane.b32.xlu0 %v1580, 35
      %v1630 = vpop.permute.xlu0 %1629
      %1631 = vrot.lane.b32.xlu0 %v1581, 35
      %v1632 = vpop.permute.xlu0 %1631
      %1633 = vrot.lane.b32.xlu0 %v1582, 35
      %v1634 = vpop.permute.xlu0 %1633
      %1635 = vrot.lane.b32.xlu0 %v1583, 35
      %v1636 = vpop.permute.xlu0 %1635
      %1637 = vrot.lane.b32.xlu0 %v427, 35
      %v1638 = vpop.permute.xlu0 %1637
      %1639 = vrot.lane.b32.xlu0 %v428, 35
      %v1640 = vpop.permute.xlu0 %1639
      %1641 = vrot.lane.b32.xlu0 %v429, 35
      %v1642 = vpop.permute.xlu0 %1641
      %1643 = vrot.lane.b32.xlu0 %v430, 35
      %v1644 = vpop.permute.xlu0 %1643
      %1645 = vrot.lane.b32.xlu0 %v431, 35
      %v1646 = vpop.permute.xlu0 %1645
      %1647 = vrot.lane.b32.xlu0 %v432, 35
      %v1648 = vpop.permute.xlu0 %1647
      %1649 = vrot.lane.b32.xlu0 %v433, 35
      %v1650 = vpop.permute.xlu0 %1649
      %1651 = vrot.lane.b32.xlu0 %v434, 35
      %v1652 = vpop.permute.xlu0 %1651
      %1653 = vrot.lane.b32.xlu0 %v435, 35
      %v1654 = vpop.permute.xlu0 %1653
      %v1655 = vsel %vm510, %v1620, %v1622
      %v1656 = vsel %vm510, %v1622, %v1624
      %v1657 = vsel %vm510, %v1624, %v1626
      %v1658 = vsel %vm510, %v1626, %v1628
      %v1659 = vsel %vm510, %v1628, %v1630
      %v1660 = vsel %vm510, %v1630, %v1632
      %v1661 = vsel %vm510, %v1632, %v1634
      %v1662 = vsel %vm510, %v1634, %v1636
      %v1663 = vsel %vm510, %v1638, %v1640
      %v1664 = vsel %vm510, %v1640, %v1642
      %v1665 = vsel %vm510, %v1642, %v1644
      %v1666 = vsel %vm510, %v1644, %v1646
      %v1667 = vsel %vm510, %v1646, %v1648
      %v1668 = vsel %vm510, %v1648, %v1650
      %v1669 = vsel %vm510, %v1650, %v1652
      %v1670 = vsel %vm510, %v1652, %v1654
      %v1691 = vsel %vm510, %v1599, %v1620
      %v1692 = vsel %vm510, %v1600, %v1638
      %1693 = vrot.lane.b32.xlu0 %v1583, 30
      %v1694 = vpop.permute.xlu0 %1693
      %1695 = vrot.lane.b32.xlu0 %v1584, 30
      %v1696 = vpop.permute.xlu0 %1695
      %1697 = vrot.lane.b32.xlu0 %v435, 30
      %v1698 = vpop.permute.xlu0 %1697
      %1699 = vrot.lane.b32.xlu0 %v436, 30
      %v1700 = vpop.permute.xlu0 %1699
      %v1701 = vsel %vm557, %v1694, %v1696
      %v1702 = vsel %vm557, %v1698, %v1700
      %1705 = vrot.lane.b32.xlu0 %v1575, 34
      %v1706 = vpop.permute.xlu0 %1705
      %1707 = vrot.lane.b32.xlu0 %v1576, 34
      %v1708 = vpop.permute.xlu0 %1707
      %1709 = vrot.lane.b32.xlu0 %v1577, 34
      %v1710 = vpop.permute.xlu0 %1709
      %1711 = vrot.lane.b32.xlu0 %v1578, 34
      %v1712 = vpop.permute.xlu0 %1711
      %1713 = vrot.lane.b32.xlu0 %v1579, 34
      %v1714 = vpop.permute.xlu0 %1713
      %1715 = vrot.lane.b32.xlu0 %v1580, 34
      %v1716 = vpop.permute.xlu0 %1715
      %1717 = vrot.lane.b32.xlu0 %v1581, 34
      %v1718 = vpop.permute.xlu0 %1717
      %1719 = vrot.lane.b32.xlu0 %v1582, 34
      %v1720 = vpop.permute.xlu0 %1719
      %1721 = vrot.lane.b32.xlu0 %v1583, 34
      %v1722 = vpop.permute.xlu0 %1721
      %1723 = vrot.lane.b32.xlu0 %v427, 34
      %v1724 = vpop.permute.xlu0 %1723
      %1725 = vrot.lane.b32.xlu0 %v428, 34
      %v1726 = vpop.permute.xlu0 %1725
      %1727 = vrot.lane.b32.xlu0 %v429, 34
      %v1728 = vpop.permute.xlu0 %1727
      %1729 = vrot.lane.b32.xlu0 %v430, 34
      %v1730 = vpop.permute.xlu0 %1729
      %1731 = vrot.lane.b32.xlu0 %v431, 34
      %v1732 = vpop.permute.xlu0 %1731
      %1733 = vrot.lane.b32.xlu0 %v432, 34
      %v1734 = vpop.permute.xlu0 %1733
      %1735 = vrot.lane.b32.xlu0 %v433, 34
      %v1736 = vpop.permute.xlu0 %1735
      %1737 = vrot.lane.b32.xlu0 %v434, 34
      %v1738 = vpop.permute.xlu0 %1737
      %1739 = vrot.lane.b32.xlu0 %v435, 34
      %v1740 = vpop.permute.xlu0 %1739
      %v1741 = vsel %vm598, %v1706, %v1708
      %v1742 = vsel %vm598, %v1708, %v1710
      %v1743 = vsel %vm598, %v1710, %v1712
      %v1744 = vsel %vm598, %v1712, %v1714
      %v1745 = vsel %vm598, %v1714, %v1716
      %v1746 = vsel %vm598, %v1716, %v1718
      %v1747 = vsel %vm598, %v1718, %v1720
      %v1748 = vsel %vm598, %v1720, %v1722
      %v1749 = vsel %vm598, %v1724, %v1726
      %v1750 = vsel %vm598, %v1726, %v1728
      %v1751 = vsel %vm598, %v1728, %v1730
      %v1752 = vsel %vm598, %v1730, %v1732
      %v1753 = vsel %vm598, %v1732, %v1734
      %v1754 = vsel %vm598, %v1734, %v1736
      %v1755 = vsel %vm598, %v1736, %v1738
      %v1756 = vsel %vm598, %v1738, %v1740
      %v1777 = vsel %vm598, %v1701, %v1706
      %v1778 = vsel %vm598, %v1702, %v1724
      %1779 = vrot.lane.b32.xlu0 %v1583, 29
      %v1780 = vpop.permute.xlu0 %1779
      %1781 = vrot.lane.b32.xlu0 %v1584, 29
      %v1782 = vpop.permute.xlu0 %1781
      %1783 = vrot.lane.b32.xlu0 %v435, 29
      %v1784 = vpop.permute.xlu0 %1783
      %1785 = vrot.lane.b32.xlu0 %v436, 29
      %v1786 = vpop.permute.xlu0 %1785
      %v1787 = vsel %vm645, %v1780, %v1782
      %v1788 = vsel %vm645, %v1784, %v1786
      %1791 = vrot.lane.b32.xlu0 %v1575, 33
      %v1792 = vpop.permute.xlu0 %1791
      %1793 = vrot.lane.b32.xlu0 %v1576, 33
      %v1794 = vpop.permute.xlu0 %1793
      %1795 = vrot.lane.b32.xlu0 %v1577, 33
      %v1796 = vpop.permute.xlu0 %1795
      %1797 = vrot.lane.b32.xlu0 %v1578, 33
      %v1798 = vpop.permute.xlu0 %1797
      %1799 = vrot.lane.b32.xlu0 %v1579, 33
      %v1800 = vpop.permute.xlu0 %1799
      %1801 = vrot.lane.b32.xlu0 %v1580, 33
      %v1802 = vpop.permute.xlu0 %1801
      %1803 = vrot.lane.b32.xlu0 %v1581, 33
      %v1804 = vpop.permute.xlu0 %1803
      %1805 = vrot.lane.b32.xlu0 %v1582, 33
      %v1806 = vpop.permute.xlu0 %1805
      %1807 = vrot.lane.b32.xlu0 %v1583, 33
      %v1808 = vpop.permute.xlu0 %1807
      %1809 = vrot.lane.b32.xlu0 %v427, 33
      %v1810 = vpop.permute.xlu0 %1809
      %1811 = vrot.lane.b32.xlu0 %v428, 33
      %v1812 = vpop.permute.xlu0 %1811
      %1813 = vrot.lane.b32.xlu0 %v429, 33
      %v1814 = vpop.permute.xlu0 %1813
      %1815 = vrot.lane.b32.xlu0 %v430, 33
      %v1816 = vpop.permute.xlu0 %1815
      %1817 = vrot.lane.b32.xlu0 %v431, 33
      %v1818 = vpop.permute.xlu0 %1817
      %1819 = vrot.lane.b32.xlu0 %v432, 33
      %v1820 = vpop.permute.xlu0 %1819
      %1821 = vrot.lane.b32.xlu0 %v433, 33
      %v1822 = vpop.permute.xlu0 %1821
      %1823 = vrot.lane.b32.xlu0 %v434, 33
      %v1824 = vpop.permute.xlu0 %1823
      %1825 = vrot.lane.b32.xlu0 %v435, 33
      %v1826 = vpop.permute.xlu0 %1825
      %v1827 = vsel %vm686, %v1792, %v1794
      %v1828 = vsel %vm686, %v1794, %v1796
      %v1829 = vsel %vm686, %v1796, %v1798
      %v1830 = vsel %vm686, %v1798, %v1800
      %v1831 = vsel %vm686, %v1800, %v1802
      %v1832 = vsel %vm686, %v1802, %v1804
      %v1833 = vsel %vm686, %v1804, %v1806
      %v1834 = vsel %vm686, %v1806, %v1808
      %v1835 = vsel %vm686, %v1810, %v1812
      %v1836 = vsel %vm686, %v1812, %v1814
      %v1837 = vsel %vm686, %v1814, %v1816
      %v1838 = vsel %vm686, %v1816, %v1818
      %v1839 = vsel %vm686, %v1818, %v1820
      %v1840 = vsel %vm686, %v1820, %v1822
      %v1841 = vsel %vm686, %v1822, %v1824
      %v1842 = vsel %vm686, %v1824, %v1826
      %v1863 = vsel %vm686, %v1787, %v1792
      %v1864 = vsel %vm686, %v1788, %v1810
      %1865 = vrot.lane.b32.xlu0 %v1584, 125
      %v1866 = vpop.permute.xlu0 %1865
      %1867 = vrot.lane.b32.xlu0 %v436, 125
      %v1868 = vpop.permute.xlu0 %1867
      %1871 = vrot.lane.b32.xlu0 %v1575, 1
      %v1872 = vpop.permute.xlu0 %1871
      %1873 = vrot.lane.b32.xlu0 %v1576, 1
      %v1874 = vpop.permute.xlu0 %1873
      %1875 = vrot.lane.b32.xlu0 %v1577, 1
      %v1876 = vpop.permute.xlu0 %1875
      %1877 = vrot.lane.b32.xlu0 %v1578, 1
      %v1878 = vpop.permute.xlu0 %1877
      %1879 = vrot.lane.b32.xlu0 %v1579, 1
      %v1880 = vpop.permute.xlu0 %1879
      %1881 = vrot.lane.b32.xlu0 %v1580, 1
      %v1882 = vpop.permute.xlu0 %1881
      %1883 = vrot.lane.b32.xlu0 %v1581, 1
      %v1884 = vpop.permute.xlu0 %1883
      %1885 = vrot.lane.b32.xlu0 %v1582, 1
      %v1886 = vpop.permute.xlu0 %1885
      %1887 = vrot.lane.b32.xlu0 %v1583, 1
      %v1888 = vpop.permute.xlu0 %1887
      %1889 = vrot.lane.b32.xlu0 %v1584, 1
      %v1890 = vpop.permute.xlu0 %1889
      %1891 = vrot.lane.b32.xlu0 %v427, 1
      %v1892 = vpop.permute.xlu0 %1891
      %1893 = vrot.lane.b32.xlu0 %v428, 1
      %v1894 = vpop.permute.xlu0 %1893
      %1895 = vrot.lane.b32.xlu0 %v429, 1
      %v1896 = vpop.permute.xlu0 %1895
      %1897 = vrot.lane.b32.xlu0 %v430, 1
      %v1898 = vpop.permute.xlu0 %1897
      %1899 = vrot.lane.b32.xlu0 %v431, 1
      %v1900 = vpop.permute.xlu0 %1899
      %1901 = vrot.lane.b32.xlu0 %v432, 1
      %v1902 = vpop.permute.xlu0 %1901
      %1903 = vrot.lane.b32.xlu0 %v433, 1
      %v1904 = vpop.permute.xlu0 %1903
      %1905 = vrot.lane.b32.xlu0 %v434, 1
      %v1906 = vpop.permute.xlu0 %1905
      %1907 = vrot.lane.b32.xlu0 %v435, 1
      %v1908 = vpop.permute.xlu0 %1907
      %1909 = vrot.lane.b32.xlu0 %v436, 1
      %v1910 = vpop.permute.xlu0 %1909
      %v1911 = vsel %vm771, %v1872, %v1874
      %v1912 = vsel %vm771, %v1874, %v1876
      %v1913 = vsel %vm771, %v1876, %v1878
      %v1914 = vsel %vm771, %v1878, %v1880
      %v1915 = vsel %vm771, %v1880, %v1882
      %v1916 = vsel %vm771, %v1882, %v1884
      %v1917 = vsel %vm771, %v1884, %v1886
      %v1918 = vsel %vm771, %v1886, %v1888
      %v1919 = vsel %vm771, %v1888, %v1890
      %v1920 = vsel %vm771, %v1892, %v1894
      %v1921 = vsel %vm771, %v1894, %v1896
      %v1922 = vsel %vm771, %v1896, %v1898
      %v1923 = vsel %vm771, %v1898, %v1900
      %v1924 = vsel %vm771, %v1900, %v1902
      %v1925 = vsel %vm771, %v1902, %v1904
      %v1926 = vsel %vm771, %v1904, %v1906
      %v1927 = vsel %vm771, %v1906, %v1908
      %v1928 = vsel %vm771, %v1908, %v1910
      %v1949 = vsel %vm771, %v1866, %v1872
      %v1950 = vsel %vm771, %v1868, %v1892
      %1951 = vrot.lane.b32.xlu0 %v1575, 127
      %v1952 = vpop.permute.xlu0 %1951
      %1953 = vrot.lane.b32.xlu0 %v1576, 127
      %v1954 = vpop.permute.xlu0 %1953
      %1955 = vrot.lane.b32.xlu0 %v1577, 127
      %v1956 = vpop.permute.xlu0 %1955
      %1957 = vrot.lane.b32.xlu0 %v1578, 127
      %v1958 = vpop.permute.xlu0 %1957
      %1959 = vrot.lane.b32.xlu0 %v1579, 127
      %v1960 = vpop.permute.xlu0 %1959
      %1961 = vrot.lane.b32.xlu0 %v1580, 127
      %v1962 = vpop.permute.xlu0 %1961
      %1963 = vrot.lane.b32.xlu0 %v1581, 127
      %v1964 = vpop.permute.xlu0 %1963
      %1965 = vrot.lane.b32.xlu0 %v1582, 127
      %v1966 = vpop.permute.xlu0 %1965
      %1967 = vrot.lane.b32.xlu0 %v1583, 127
      %v1968 = vpop.permute.xlu0 %1967
      %1969 = vrot.lane.b32.xlu0 %v1584, 127
      %v1970 = vpop.permute.xlu0 %1969
      %1971 = vrot.lane.b32.xlu0 %v427, 127
      %v1972 = vpop.permute.xlu0 %1971
      %1973 = vrot.lane.b32.xlu0 %v428, 127
      %v1974 = vpop.permute.xlu0 %1973
      %1975 = vrot.lane.b32.xlu0 %v429, 127
      %v1976 = vpop.permute.xlu0 %1975
      %1977 = vrot.lane.b32.xlu0 %v430, 127
      %v1978 = vpop.permute.xlu0 %1977
      %1979 = vrot.lane.b32.xlu0 %v431, 127
      %v1980 = vpop.permute.xlu0 %1979
      %1981 = vrot.lane.b32.xlu0 %v432, 127
      %v1982 = vpop.permute.xlu0 %1981
      %1983 = vrot.lane.b32.xlu0 %v433, 127
      %v1984 = vpop.permute.xlu0 %1983
      %1985 = vrot.lane.b32.xlu0 %v434, 127
      %v1986 = vpop.permute.xlu0 %1985
      %1987 = vrot.lane.b32.xlu0 %v435, 127
      %v1988 = vpop.permute.xlu0 %1987
      %1989 = vrot.lane.b32.xlu0 %v436, 127
      %v1990 = vpop.permute.xlu0 %1989
      %v1991 = vsel %vm852, %v1952, %v1954
      %v1992 = vsel %vm852, %v1954, %v1956
      %v1993 = vsel %vm852, %v1956, %v1958
      %v1994 = vsel %vm852, %v1958, %v1960
      %v1995 = vsel %vm852, %v1960, %v1962
      %v1996 = vsel %vm852, %v1962, %v1964
      %v1997 = vsel %vm852, %v1964, %v1966
      %v1998 = vsel %vm852, %v1966, %v1968
      %v1999 = vsel %vm852, %v1968, %v1970
      %v2000 = vsel %vm852, %v1972, %v1974
      %v2001 = vsel %vm852, %v1974, %v1976
      %v2002 = vsel %vm852, %v1976, %v1978
      %v2003 = vsel %vm852, %v1978, %v1980
      %v2004 = vsel %vm852, %v1980, %v1982
      %v2005 = vsel %vm852, %v1982, %v1984
      %v2006 = vsel %vm852, %v1984, %v1986
      %v2007 = vsel %vm852, %v1986, %v1988
      %v2008 = vsel %vm852, %v1988, %v1990
      %2029 = vrot.lane.b32.xlu0 %v1575, 3
      %v2030 = vpop.permute.xlu0 %2029
      %2031 = vrot.lane.b32.xlu0 %v427, 3
      %v2032 = vpop.permute.xlu0 %2031
      %v2035 = vsel %vm897, %v1970, %v2030
      %v2036 = vsel %vm897, %v1990, %v2032
      %2037 = vrot.lane.b32.xlu0 %v1575, 95
      %v2038 = vpop.permute.xlu0 %2037
      %2039 = vrot.lane.b32.xlu0 %v1576, 95
      %v2040 = vpop.permute.xlu0 %2039
      %2041 = vrot.lane.b32.xlu0 %v1577, 95
      %v2042 = vpop.permute.xlu0 %2041
      %2043 = vrot.lane.b32.xlu0 %v1578, 95
      %v2044 = vpop.permute.xlu0 %2043
      %2045 = vrot.lane.b32.xlu0 %v1579, 95
      %v2046 = vpop.permute.xlu0 %2045
      %2047 = vrot.lane.b32.xlu0 %v1580, 95
      %v2048 = vpop.permute.xlu0 %2047
      %2049 = vrot.lane.b32.xlu0 %v1581, 95
      %v2050 = vpop.permute.xlu0 %2049
      %2051 = vrot.lane.b32.xlu0 %v1582, 95
      %v2052 = vpop.permute.xlu0 %2051
      %2053 = vrot.lane.b32.xlu0 %v1583, 95
      %v2054 = vpop.permute.xlu0 %2053
      %2055 = vrot.lane.b32.xlu0 %v1584, 95
      %v2056 = vpop.permute.xlu0 %2055
      %2057 = vrot.lane.b32.xlu0 %v427, 95
      %v2058 = vpop.permute.xlu0 %2057
      %2059 = vrot.lane.b32.xlu0 %v428, 95
      %v2060 = vpop.permute.xlu0 %2059
      %2061 = vrot.lane.b32.xlu0 %v429, 95
      %v2062 = vpop.permute.xlu0 %2061
      %2063 = vrot.lane.b32.xlu0 %v430, 95
      %v2064 = vpop.permute.xlu0 %2063
      %2065 = vrot.lane.b32.xlu0 %v431, 95
      %v2066 = vpop.permute.xlu0 %2065
      %2067 = vrot.lane.b32.xlu0 %v432, 95
      %v2068 = vpop.permute.xlu0 %2067
      %2069 = vrot.lane.b32.xlu0 %v433, 95
      %v2070 = vpop.permute.xlu0 %2069
      %2071 = vrot.lane.b32.xlu0 %v434, 95
      %v2072 = vpop.permute.xlu0 %2071
      %2073 = vrot.lane.b32.xlu0 %v435, 95
      %v2074 = vpop.permute.xlu0 %2073
      %2075 = vrot.lane.b32.xlu0 %v436, 95
      %v2076 = vpop.permute.xlu0 %2075
      %v2077 = vsel %vm940, %v2038, %v2040
      %v2078 = vsel %vm940, %v2040, %v2042
      %v2079 = vsel %vm940, %v2042, %v2044
      %v2080 = vsel %vm940, %v2044, %v2046
      %v2081 = vsel %vm940, %v2046, %v2048
      %v2082 = vsel %vm940, %v2048, %v2050
      %v2083 = vsel %vm940, %v2050, %v2052
      %v2084 = vsel %vm940, %v2052, %v2054
      %v2085 = vsel %vm940, %v2054, %v2056
      %v2086 = vsel %vm940, %v2058, %v2060
      %v2087 = vsel %vm940, %v2060, %v2062
      %v2088 = vsel %vm940, %v2062, %v2064
      %v2089 = vsel %vm940, %v2064, %v2066
      %v2090 = vsel %vm940, %v2066, %v2068
      %v2091 = vsel %vm940, %v2068, %v2070
      %v2092 = vsel %vm940, %v2070, %v2072
      %v2093 = vsel %vm940, %v2072, %v2074
      %v2094 = vsel %vm940, %v2074, %v2076
      %2113 = vrot.lane.b32.xlu0 %v1575, 99
      %v2114 = vpop.permute.xlu0 %2113
      %2115 = vrot.lane.b32.xlu0 %v427, 99
      %v2116 = vpop.permute.xlu0 %2115
      %v2119 = vsel %vm983, %v2085, %v2114
      %v2120 = vsel %vm983, %v2094, %v2116
      %2121 = vrot.lane.b32.xlu0 %v1575, 94
      %v2122 = vpop.permute.xlu0 %2121
      %2123 = vrot.lane.b32.xlu0 %v1576, 94
      %v2124 = vpop.permute.xlu0 %2123
      %2125 = vrot.lane.b32.xlu0 %v1577, 94
      %v2126 = vpop.permute.xlu0 %2125
      %2127 = vrot.lane.b32.xlu0 %v1578, 94
      %v2128 = vpop.permute.xlu0 %2127
      %2129 = vrot.lane.b32.xlu0 %v1579, 94
      %v2130 = vpop.permute.xlu0 %2129
      %2131 = vrot.lane.b32.xlu0 %v1580, 94
      %v2132 = vpop.permute.xlu0 %2131
      %2133 = vrot.lane.b32.xlu0 %v1581, 94
      %v2134 = vpop.permute.xlu0 %2133
      %2135 = vrot.lane.b32.xlu0 %v1582, 94
      %v2136 = vpop.permute.xlu0 %2135
      %2137 = vrot.lane.b32.xlu0 %v1583, 94
      %v2138 = vpop.permute.xlu0 %2137
      %2139 = vrot.lane.b32.xlu0 %v1584, 94
      %v2140 = vpop.permute.xlu0 %2139
      %2141 = vrot.lane.b32.xlu0 %v427, 94
      %v2142 = vpop.permute.xlu0 %2141
      %2143 = vrot.lane.b32.xlu0 %v428, 94
      %v2144 = vpop.permute.xlu0 %2143
      %2145 = vrot.lane.b32.xlu0 %v429, 94
      %v2146 = vpop.permute.xlu0 %2145
      %2147 = vrot.lane.b32.xlu0 %v430, 94
      %v2148 = vpop.permute.xlu0 %2147
      %2149 = vrot.lane.b32.xlu0 %v431, 94
      %v2150 = vpop.permute.xlu0 %2149
      %2151 = vrot.lane.b32.xlu0 %v432, 94
      %v2152 = vpop.permute.xlu0 %2151
      %2153 = vrot.lane.b32.xlu0 %v433, 94
      %v2154 = vpop.permute.xlu0 %2153
      %2155 = vrot.lane.b32.xlu0 %v434, 94
      %v2156 = vpop.permute.xlu0 %2155
      %2157 = vrot.lane.b32.xlu0 %v435, 94
      %v2158 = vpop.permute.xlu0 %2157
      %2159 = vrot.lane.b32.xlu0 %v436, 94
      %v2160 = vpop.permute.xlu0 %2159
      %v2161 = vsel %vm1026, %v2122, %v2124
      %v2162 = vsel %vm1026, %v2124, %v2126
      %v2163 = vsel %vm1026, %v2126, %v2128
      %v2164 = vsel %vm1026, %v2128, %v2130
      %v2165 = vsel %vm1026, %v2130, %v2132
      %v2166 = vsel %vm1026, %v2132, %v2134
      %v2167 = vsel %vm1026, %v2134, %v2136
      %v2168 = vsel %vm1026, %v2136, %v2138
      %v2169 = vsel %vm1026, %v2138, %v2140
      %v2170 = vsel %vm1026, %v2142, %v2144
      %v2171 = vsel %vm1026, %v2144, %v2146
      %v2172 = vsel %vm1026, %v2146, %v2148
      %v2173 = vsel %vm1026, %v2148, %v2150
      %v2174 = vsel %vm1026, %v2150, %v2152
      %v2175 = vsel %vm1026, %v2152, %v2154
      %v2176 = vsel %vm1026, %v2154, %v2156
      %v2177 = vsel %vm1026, %v2156, %v2158
      %v2178 = vsel %vm1026, %v2158, %v2160
      %2197 = vrot.lane.b32.xlu0 %v1575, 98
      %v2198 = vpop.permute.xlu0 %2197
      %2199 = vrot.lane.b32.xlu0 %v427, 98
      %v2200 = vpop.permute.xlu0 %2199
      %v2203 = vsel %vm1069, %v2169, %v2198
      %v2204 = vsel %vm1069, %v2178, %v2200
      %2205 = vrot.lane.b32.xlu0 %v1575, 93
      %v2206 = vpop.permute.xlu0 %2205
      %2207 = vrot.lane.b32.xlu0 %v1576, 93
      %v2208 = vpop.permute.xlu0 %2207
      %2209 = vrot.lane.b32.xlu0 %v1577, 93
      %v2210 = vpop.permute.xlu0 %2209
      %2211 = vrot.lane.b32.xlu0 %v1578, 93
      %v2212 = vpop.permute.xlu0 %2211
      %2213 = vrot.lane.b32.xlu0 %v1579, 93
      %v2214 = vpop.permute.xlu0 %2213
      %2215 = vrot.lane.b32.xlu0 %v1580, 93
      %v2216 = vpop.permute.xlu0 %2215
      %2217 = vrot.lane.b32.xlu0 %v1581, 93
      %v2218 = vpop.permute.xlu0 %2217
      %2219 = vrot.lane.b32.xlu0 %v1582, 93
      %v2220 = vpop.permute.xlu0 %2219
      %2221 = vrot.lane.b32.xlu0 %v1583, 93
      %v2222 = vpop.permute.xlu0 %2221
      %2223 = vrot.lane.b32.xlu0 %v1584, 93
      %v2224 = vpop.permute.xlu0 %2223
      %2225 = vrot.lane.b32.xlu0 %v427, 93
      %v2226 = vpop.permute.xlu0 %2225
      %2227 = vrot.lane.b32.xlu0 %v428, 93
      %v2228 = vpop.permute.xlu0 %2227
      %2229 = vrot.lane.b32.xlu0 %v429, 93
      %v2230 = vpop.permute.xlu0 %2229
      %2231 = vrot.lane.b32.xlu0 %v430, 93
      %v2232 = vpop.permute.xlu0 %2231
      %2233 = vrot.lane.b32.xlu0 %v431, 93
      %v2234 = vpop.permute.xlu0 %2233
      %2235 = vrot.lane.b32.xlu0 %v432, 93
      %v2236 = vpop.permute.xlu0 %2235
      %2237 = vrot.lane.b32.xlu0 %v433, 93
      %v2238 = vpop.permute.xlu0 %2237
      %2239 = vrot.lane.b32.xlu0 %v434, 93
      %v2240 = vpop.permute.xlu0 %2239
      %2241 = vrot.lane.b32.xlu0 %v435, 93
      %v2242 = vpop.permute.xlu0 %2241
      %2243 = vrot.lane.b32.xlu0 %v436, 93
      %v2244 = vpop.permute.xlu0 %2243
      %v2245 = vsel %vm1112, %v2206, %v2208
      %v2246 = vsel %vm1112, %v2208, %v2210
      %v2247 = vsel %vm1112, %v2210, %v2212
      %v2248 = vsel %vm1112, %v2212, %v2214
      %v2249 = vsel %vm1112, %v2214, %v2216
      %v2250 = vsel %vm1112, %v2216, %v2218
      %v2251 = vsel %vm1112, %v2218, %v2220
      %v2252 = vsel %vm1112, %v2220, %v2222
      %v2253 = vsel %vm1112, %v2222, %v2224
      %v2254 = vsel %vm1112, %v2226, %v2228
      %v2255 = vsel %vm1112, %v2228, %v2230
      %v2256 = vsel %vm1112, %v2230, %v2232
      %v2257 = vsel %vm1112, %v2232, %v2234
      %v2258 = vsel %vm1112, %v2234, %v2236
      %v2259 = vsel %vm1112, %v2236, %v2238
      %v2260 = vsel %vm1112, %v2238, %v2240
      %v2261 = vsel %vm1112, %v2240, %v2242
      %v2262 = vsel %vm1112, %v2242, %v2244
      %2281 = vrot.lane.b32.xlu0 %v1575, 97
      %v2282 = vpop.permute.xlu0 %2281
      %2283 = vrot.lane.b32.xlu0 %v427, 97
      %v2284 = vpop.permute.xlu0 %2283
      %v2287 = vsel %vm1155, %v2253, %v2282
      %v2288 = vsel %vm1155, %v2262, %v2284
      %v2289 = vld [vmem:[%s5] sm:$0xff]
      %2291 = vset.pattern.permute.xlu0 0
      %2292 = vperm.xlu0 %2291, %v2289
      %v2293 = vpop.permute.xlu0 %2292
      %v2296 = vsel %vm1164, %v1586, 0
      %2298 = vmatprep.subr.mxu0 %v1655
      %2299 = vmatpush1.msra.mxu0 %v1691
      %2300 = vmatprep.subr.mxu0 %v1663
      %2301 = vmatpush1.msra.mxu0 %v1692
      %2302 = vmatprep.subr.mxu0 %v1741
      %2303 = vmatpush1.msra.mxu0 %v1777
      %2304 = vmatprep.subr.mxu0 %v1749
      %2305 = vmatpush1.msra.mxu0 %v1778
      %2306 = vmatprep.subr.mxu0 %v1827
      %2307 = vmatpush1.msra.mxu0 %v1863
      %2308 = vmatprep.subr.mxu0 %v1835
      %2309 = vmatpush1.msra.mxu0 %v1864
      %2310 = vmatprep.subr.mxu0 %v1911
      %2311 = vmatpush1.msra.mxu0 %v1949
      %2312 = vmatprep.subr.mxu0 %v1920
      %2313 = vmatpush1.msra.mxu0 %v1950
      %2314 = vmatprep.subr.mxu0 %v1576
      %2315 = vmatpush1.msra.mxu0 %v1575
      %2316 = vmatprep.subr.mxu0 %v428
      %2317 = vmatpush1.msra.mxu0 %v427
      %2318 = vmatprep.subr.mxu0 %v1992
      %2319 = vmatpush1.msra.mxu0 %v1991
      %2320 = vmatprep.subr.mxu0 %v2001
      %2321 = vmatpush1.msra.mxu0 %v2000
      %2322 = vmatprep.subr.mxu0 %v2078
      %2323 = vmatpush1.msra.mxu0 %v2077
      %2324 = vmatprep.subr.mxu0 %v2087
      %2325 = vmatpush1.msra.mxu0 %v2086
      %2326 = vmatprep.subr.mxu0 %v2162
      %2327 = vmatpush1.msra.mxu0 %v2161
      %2328 = vmatprep.subr.mxu0 %v2171
      %2329 = vmatpush1.msra.mxu0 %v2170
      %2330 = vmatprep.subr.mxu0 %v2246
      %2331 = vmatpush1.msra.mxu0 %v2245
      %2332 = vmatprep.subr.mxu0 %v2255
      %2333 = vmatpush1.msra.mxu0 %v2254
      %2334 = vmatprep.subr.mxu0 0.0
      %2335 = vmatpush1.msra.mxu0 0.0
      %2336 = vmatprep.subr.mxu0 0.0
      %2337 = vmatpush1.msra.mxu0 0.0
      %2338 = vmatprep.subr.mxu0 0.0
      %2339 = vmatpush1.msra.mxu0 0.0
      %2340 = vmatprep.subr.mxu0 0.0
      %2341 = vmatpush1.msra.mxu0 0.0
      %2342 = vmatprep.subr.mxu0 0.0
      %2343 = vmatpush1.msra.mxu0 0.0
      %2344 = vmatprep.subr.mxu0 0.0
      %2345 = vmatpush1.msra.mxu0 0.0
      %2346 = vmatprep.subr.mxu0 0.0
      %2347 = vmatpush1.msra.mxu0 0.0
      %2348 = vmatprep.subr.mxu0 0.0
      %2349 = vmatpush1.msra.mxu0 0.0
      %2350 = vmatprep.subr.mxu0 0.0
      %2351 = vmatpush1.msra.mxu0 0.0
      %2352 = vmatprep.subr.mxu0 0.0
      %2353 = vmatpush1.msra.mxu0 0.0
      %2354 = vmatprep.subr.mxu0 0.0
      %2355 = vmatpush1.msra.mxu0 0.0
      %2356 = vmatprep.subr.mxu0 0.0
      %2357 = vmatpush1.msra.mxu0 0.0
      %2358 = vmatprep.subr.mxu0 0.0
      %2359 = vmatpush1.msra.mxu0 0.0
      %2360 = vmatprep.subr.mxu0 0.0
      %2361 = vmatpush1.msra.mxu0 0.0
      %2362 = vmatprep.mubr.f32.mxu0 %v2296
      %2363 = vmatmul.mubr.f32.gmra.mrb[0].mxu0 %v1585
      %v2364 = vpop.f32.mrb[0].mxu0
      %v2365 = vadd.f32 %v2293, %v2364
      %v2366 = vpop.f32.mrb[0].mxu0
      %v2367 = vadd.f32 %v2293, %v2366
      %2368 = vdwg.mxu0
      %2369 = vmatprep.subr.mxu0 %v1657
      %2370 = vmatpush1.msra.mxu0 %v1656
      %2371 = vmatprep.subr.mxu0 %v1665
      %2372 = vmatpush1.msra.mxu0 %v1664
      %2373 = vmatprep.subr.mxu0 %v1743
      %2374 = vmatpush1.msra.mxu0 %v1742
      %2375 = vmatprep.subr.mxu0 %v1751
      %2376 = vmatpush1.msra.mxu0 %v1750
      %2377 = vmatprep.subr.mxu0 %v1829
      %2378 = vmatpush1.msra.mxu0 %v1828
      %2379 = vmatprep.subr.mxu0 %v1837
      %2380 = vmatpush1.msra.mxu0 %v1836
      %2381 = vmatprep.subr.mxu0 %v1913
      %2382 = vmatpush1.msra.mxu0 %v1912
      %2383 = vmatprep.subr.mxu0 %v1922
      %2384 = vmatpush1.msra.mxu0 %v1921
      %2385 = vmatprep.subr.mxu0 %v1578
      %2386 = vmatpush1.msra.mxu0 %v1577
      %2387 = vmatprep.subr.mxu0 %v430
      %2388 = vmatpush1.msra.mxu0 %v429
      %2389 = vmatprep.subr.mxu0 %v1994
      %2390 = vmatpush1.msra.mxu0 %v1993
      %2391 = vmatprep.subr.mxu0 %v2003
      %2392 = vmatpush1.msra.mxu0 %v2002
      %2393 = vmatprep.subr.mxu0 %v2080
      %2394 = vmatpush1.msra.mxu0 %v2079
      %2395 = vmatprep.subr.mxu0 %v2089
      %2396 = vmatpush1.msra.mxu0 %v2088
      %2397 = vmatprep.subr.mxu0 %v2164
      %2398 = vmatpush1.msra.mxu0 %v2163
      %2399 = vmatprep.subr.mxu0 %v2173
      %2400 = vmatpush1.msra.mxu0 %v2172
      %2401 = vmatprep.subr.mxu0 %v2248
      %2402 = vmatpush1.msra.mxu0 %v2247
      %2403 = vmatprep.subr.mxu0 %v2257
      %2404 = vmatpush1.msra.mxu0 %v2256
      %2405 = vmatprep.subr.mxu0 0.0
      %2406 = vmatpush1.msra.mxu0 0.0
      %2407 = vmatprep.subr.mxu0 0.0
      %2408 = vmatpush1.msra.mxu0 0.0
      %2409 = vmatprep.subr.mxu0 0.0
      %2410 = vmatpush1.msra.mxu0 0.0
      %2411 = vmatprep.subr.mxu0 0.0
      %2412 = vmatpush1.msra.mxu0 0.0
      %2413 = vmatprep.subr.mxu0 0.0
      %2414 = vmatpush1.msra.mxu0 0.0
      %2415 = vmatprep.subr.mxu0 0.0
      %2416 = vmatpush1.msra.mxu0 0.0
      %2417 = vmatprep.subr.mxu0 0.0
      %2418 = vmatpush1.msra.mxu0 0.0
      %2419 = vmatprep.subr.mxu0 0.0
      %2420 = vmatpush1.msra.mxu0 0.0
      %2421 = vmatprep.subr.mxu0 0.0
      %2422 = vmatpush1.msra.mxu0 0.0
      %2423 = vmatprep.subr.mxu0 0.0
      %2424 = vmatpush1.msra.mxu0 0.0
      %2425 = vmatprep.subr.mxu0 0.0
      %2426 = vmatpush1.msra.mxu0 0.0
      %2427 = vmatprep.subr.mxu0 0.0
      %2428 = vmatpush1.msra.mxu0 0.0
      %2429 = vmatprep.subr.mxu0 0.0
      %2430 = vmatpush1.msra.mxu0 0.0
      %2431 = vmatprep.subr.mxu0 0.0
      %2432 = vmatpush1.msra.mxu0 0.0
      %2433 = vmatprep.mubr.f32.mxu0 %v2296
      %2434 = vmatmul.mubr.f32.gmra.mrb[0].mxu0 %v1585
      %v2435 = vpop.f32.mrb[0].mxu0
      %v2436 = vadd.f32 %v2293, %v2435
      %v2437 = vpop.f32.mrb[0].mxu0
      %v2438 = vadd.f32 %v2293, %v2437
      %2439 = vdwg.mxu0
      %2440 = vmatprep.subr.mxu0 %v1659
      %2441 = vmatpush1.msra.mxu0 %v1658
      %2442 = vmatprep.subr.mxu0 %v1667
      %2443 = vmatpush1.msra.mxu0 %v1666
      %2444 = vmatprep.subr.mxu0 %v1745
      %2445 = vmatpush1.msra.mxu0 %v1744
      %2446 = vmatprep.subr.mxu0 %v1753
      %2447 = vmatpush1.msra.mxu0 %v1752
      %2448 = vmatprep.subr.mxu0 %v1831
      %2449 = vmatpush1.msra.mxu0 %v1830
      %2450 = vmatprep.subr.mxu0 %v1839
      %2451 = vmatpush1.msra.mxu0 %v1838
      %2452 = vmatprep.subr.mxu0 %v1915
      %2453 = vmatpush1.msra.mxu0 %v1914
      %2454 = vmatprep.subr.mxu0 %v1924
      %2455 = vmatpush1.msra.mxu0 %v1923
      %2456 = vmatprep.subr.mxu0 %v1580
      %2457 = vmatpush1.msra.mxu0 %v1579
      %2458 = vmatprep.subr.mxu0 %v432
      %2459 = vmatpush1.msra.mxu0 %v431
      %2460 = vmatprep.subr.mxu0 %v1996
      %2461 = vmatpush1.msra.mxu0 %v1995
      %2462 = vmatprep.subr.mxu0 %v2005
      %2463 = vmatpush1.msra.mxu0 %v2004
      %2464 = vmatprep.subr.mxu0 %v2082
      %2465 = vmatpush1.msra.mxu0 %v2081
      %2466 = vmatprep.subr.mxu0 %v2091
      %2467 = vmatpush1.msra.mxu0 %v2090
      %2468 = vmatprep.subr.mxu0 %v2166
      %2469 = vmatpush1.msra.mxu0 %v2165
      %2470 = vmatprep.subr.mxu0 %v2175
      %2471 = vmatpush1.msra.mxu0 %v2174
      %2472 = vmatprep.subr.mxu0 %v2250
      %2473 = vmatpush1.msra.mxu0 %v2249
      %2474 = vmatprep.subr.mxu0 %v2259
      %2475 = vmatpush1.msra.mxu0 %v2258
      %2476 = vmatprep.subr.mxu0 0.0
      %2477 = vmatpush1.msra.mxu0 0.0
      %2478 = vmatprep.subr.mxu0 0.0
      %2479 = vmatpush1.msra.mxu0 0.0
      %2480 = vmatprep.subr.mxu0 0.0
      %2481 = vmatpush1.msra.mxu0 0.0
      %2482 = vmatprep.subr.mxu0 0.0
      %2483 = vmatpush1.msra.mxu0 0.0
      %2484 = vmatprep.subr.mxu0 0.0
      %2485 = vmatpush1.msra.mxu0 0.0
      %2486 = vmatprep.subr.mxu0 0.0
      %2487 = vmatpush1.msra.mxu0 0.0
      %2488 = vmatprep.subr.mxu0 0.0
      %2489 = vmatpush1.msra.mxu0 0.0
      %2490 = vmatprep.subr.mxu0 0.0
      %2491 = vmatpush1.msra.mxu0 0.0
      %2492 = vmatprep.subr.mxu0 0.0
      %2493 = vmatpush1.msra.mxu0 0.0
      %2494 = vmatprep.subr.mxu0 0.0
      %2495 = vmatpush1.msra.mxu0 0.0
      %2496 = vmatprep.subr.mxu0 0.0
      %2497 = vmatpush1.msra.mxu0 0.0
      %2498 = vmatprep.subr.mxu0 0.0
      %2499 = vmatpush1.msra.mxu0 0.0
      %2500 = vmatprep.subr.mxu0 0.0
      %2501 = vmatpush1.msra.mxu0 0.0
      %2502 = vmatprep.subr.mxu0 0.0
      %2503 = vmatpush1.msra.mxu0 0.0
      %2504 = vmatprep.mubr.f32.mxu0 %v2296
      %2505 = vmatmul.mubr.f32.gmra.mrb[0].mxu0 %v1585
      %v2506 = vpop.f32.mrb[0].mxu0
      %v2507 = vadd.f32 %v2293, %v2506
      %v2508 = vpop.f32.mrb[0].mxu0
      %v2509 = vadd.f32 %v2293, %v2508
      %2510 = vdwg.mxu0
      %2511 = vmatprep.subr.mxu0 %v1661
      %2512 = vmatpush1.msra.mxu0 %v1660
      %2513 = vmatprep.subr.mxu0 %v1669
      %2514 = vmatpush1.msra.mxu0 %v1668
      %2515 = vmatprep.subr.mxu0 %v1747
      %2516 = vmatpush1.msra.mxu0 %v1746
      %2517 = vmatprep.subr.mxu0 %v1755
      %2518 = vmatpush1.msra.mxu0 %v1754
      %2519 = vmatprep.subr.mxu0 %v1833
      %2520 = vmatpush1.msra.mxu0 %v1832
      %2521 = vmatprep.subr.mxu0 %v1841
      %2522 = vmatpush1.msra.mxu0 %v1840
      %2523 = vmatprep.subr.mxu0 %v1917
      %2524 = vmatpush1.msra.mxu0 %v1916
      %2525 = vmatprep.subr.mxu0 %v1926
      %2526 = vmatpush1.msra.mxu0 %v1925
      %2527 = vmatprep.subr.mxu0 %v1582
      %2528 = vmatpush1.msra.mxu0 %v1581
      %2529 = vmatprep.subr.mxu0 %v434
      %2530 = vmatpush1.msra.mxu0 %v433
      %2531 = vmatprep.subr.mxu0 %v1998
      %2532 = vmatpush1.msra.mxu0 %v1997
      %2533 = vmatprep.subr.mxu0 %v2007
      %2534 = vmatpush1.msra.mxu0 %v2006
      %2535 = vmatprep.subr.mxu0 %v2084
      %2536 = vmatpush1.msra.mxu0 %v2083
      %2537 = vmatprep.subr.mxu0 %v2093
      %2538 = vmatpush1.msra.mxu0 %v2092
      %2539 = vmatprep.subr.mxu0 %v2168
      %2540 = vmatpush1.msra.mxu0 %v2167
      %2541 = vmatprep.subr.mxu0 %v2177
      %2542 = vmatpush1.msra.mxu0 %v2176
      %2543 = vmatprep.subr.mxu0 %v2252
      %2544 = vmatpush1.msra.mxu0 %v2251
      %2545 = vmatprep.subr.mxu0 %v2261
      %2546 = vmatpush1.msra.mxu0 %v2260
      %2547 = vmatprep.subr.mxu0 0.0
      %2548 = vmatpush1.msra.mxu0 0.0
      %2549 = vmatprep.subr.mxu0 0.0
      %2550 = vmatpush1.msra.mxu0 0.0
      %2551 = vmatprep.subr.mxu0 0.0
      %2552 = vmatpush1.msra.mxu0 0.0
      %2553 = vmatprep.subr.mxu0 0.0
      %2554 = vmatpush1.msra.mxu0 0.0
      %2555 = vmatprep.subr.mxu0 0.0
      %2556 = vmatpush1.msra.mxu0 0.0
      %2557 = vmatprep.subr.mxu0 0.0
      %2558 = vmatpush1.msra.mxu0 0.0
      %2559 = vmatprep.subr.mxu0 0.0
      %2560 = vmatpush1.msra.mxu0 0.0
      %2561 = vmatprep.subr.mxu0 0.0
      %2562 = vmatpush1.msra.mxu0 0.0
      %2563 = vmatprep.subr.mxu0 0.0
      %2564 = vmatpush1.msra.mxu0 0.0
      %2565 = vmatprep.subr.mxu0 0.0
      %2566 = vmatpush1.msra.mxu0 0.0
      %2567 = vmatprep.subr.mxu0 0.0
      %2568 = vmatpush1.msra.mxu0 0.0
      %2569 = vmatprep.subr.mxu0 0.0
      %2570 = vmatpush1.msra.mxu0 0.0
      %2571 = vmatprep.subr.mxu0 0.0
      %2572 = vmatpush1.msra.mxu0 0.0
      %2573 = vmatprep.subr.mxu0 0.0
      %2574 = vmatpush1.msra.mxu0 0.0
      %2575 = vmatprep.mubr.f32.mxu0 %v2296
      %2576 = vmatmul.mubr.f32.gmra.mrb[0].mxu0 %v1585
      %v2577 = vpop.f32.mrb[0].mxu0
      %v2578 = vadd.f32 %v2293, %v2577
      %v2579 = vpop.f32.mrb[0].mxu0
      %v2580 = vadd.f32 %v2293, %v2579
      %2581 = vdwg.mxu0
      %2582 = vmatprep.subr.mxu0 %v1636
      %2583 = vmatpush1.msra.mxu0 %v1662
      %2584 = vmatprep.subr.mxu0 %v1654
      %2585 = vmatpush1.msra.mxu0 %v1670
      %2586 = vmatprep.subr.mxu0 %v1722
      %2587 = vmatpush1.msra.mxu0 %v1748
      %2588 = vmatprep.subr.mxu0 %v1740
      %2589 = vmatpush1.msra.mxu0 %v1756
      %2590 = vmatprep.subr.mxu0 %v1808
      %2591 = vmatpush1.msra.mxu0 %v1834
      %2592 = vmatprep.subr.mxu0 %v1826
      %2593 = vmatpush1.msra.mxu0 %v1842
      %2594 = vmatprep.subr.mxu0 %v1919
      %2595 = vmatpush1.msra.mxu0 %v1918
      %2596 = vmatprep.subr.mxu0 %v1928
      %2597 = vmatpush1.msra.mxu0 %v1927
      %2598 = vmatprep.subr.mxu0 %v1584
      %2599 = vmatpush1.msra.mxu0 %v1583
      %2600 = vmatprep.subr.mxu0 %v436
      %2601 = vmatpush1.msra.mxu0 %v435
      %2602 = vmatprep.subr.mxu0 %v2035
      %2603 = vmatpush1.msra.mxu0 %v1999
      %2604 = vmatprep.subr.mxu0 %v2036
      %2605 = vmatpush1.msra.mxu0 %v2008
      %2606 = vmatprep.subr.mxu0 %v2114
      %2607 = vmatpush1.msra.mxu0 %v2119
      %2608 = vmatprep.subr.mxu0 %v2116
      %2609 = vmatpush1.msra.mxu0 %v2120
      %2610 = vmatprep.subr.mxu0 %v2198
      %2611 = vmatpush1.msra.mxu0 %v2203
      %2612 = vmatprep.subr.mxu0 %v2200
      %2613 = vmatpush1.msra.mxu0 %v2204
      %2614 = vmatprep.subr.mxu0 %v2282
      %2615 = vmatpush1.msra.mxu0 %v2287
      %2616 = vmatprep.subr.mxu0 %v2284
      %2617 = vmatpush1.msra.mxu0 %v2288
      %2618 = vmatprep.subr.mxu0 0.0
      %2619 = vmatpush1.msra.mxu0 0.0
      %2620 = vmatprep.subr.mxu0 0.0
      %2621 = vmatpush1.msra.mxu0 0.0
      %2622 = vmatprep.subr.mxu0 0.0
      %2623 = vmatpush1.msra.mxu0 0.0
      %2624 = vmatprep.subr.mxu0 0.0
      %2625 = vmatpush1.msra.mxu0 0.0
      %2626 = vmatprep.subr.mxu0 0.0
      %2627 = vmatpush1.msra.mxu0 0.0
      %2628 = vmatprep.subr.mxu0 0.0
      %2629 = vmatpush1.msra.mxu0 0.0
      %2630 = vmatprep.subr.mxu0 0.0
      %2631 = vmatpush1.msra.mxu0 0.0
      %2632 = vmatprep.subr.mxu0 0.0
      %2633 = vmatpush1.msra.mxu0 0.0
      %2634 = vmatprep.subr.mxu0 0.0
      %2635 = vmatpush1.msra.mxu0 0.0
      %2636 = vmatprep.subr.mxu0 0.0
      %2637 = vmatpush1.msra.mxu0 0.0
      %2638 = vmatprep.subr.mxu0 0.0
      %2639 = vmatpush1.msra.mxu0 0.0
      %2640 = vmatprep.subr.mxu0 0.0
      %2641 = vmatpush1.msra.mxu0 0.0
      %2642 = vmatprep.subr.mxu0 0.0
      %2643 = vmatpush1.msra.mxu0 0.0
      %2644 = vmatprep.subr.mxu0 0.0
      %2645 = vmatpush1.msra.mxu0 0.0
      %2646 = vmatprep.mubr.f32.mxu0 %v2296
      %2647 = vmatmul.mubr.f32.gmra.mrb[0].mxu0 %v1585
      %v2648 = vpop.f32.mrb[0].mxu0
      %v2649 = vadd.f32 %v2293, %v2648
      %v2650 = vpop.f32.mrb[0].mxu0
      %v2651 = vadd.f32 %v2293, %v2650
      %2652 = vdwg.mxu0
      %v2653 = vmax.f32 %v2365, 0.0
      %v2654 = vmax.f32 %v2367, 0.0
      %v2655 = vmax.f32 %v2436, 0.0
      %v2656 = vmax.f32 %v2438, 0.0
      %v2657 = vmax.f32 %v2507, 0.0
      %v2658 = vmax.f32 %v2509, 0.0
      %v2659 = vmax.f32 %v2578, 0.0
      %v2660 = vmax.f32 %v2580, 0.0
      %v2661 = vmax.f32 %v2649, 0.0
      %v2662 = vmax.f32 %v2651, 0.0
      %v2663 = vmul.f32 %v2653, %v1528
      %v2664 = vmul.f32 %v2654, %v1532
      %v2665 = vmul.f32 %v2655, %v1536
      %v2666 = vmul.f32 %v2656, %v1540
      %v2667 = vmul.f32 %v2657, %v1544
      %v2668 = vmul.f32 %v2658, %v1548
      %v2669 = vmul.f32 %v2659, %v1552
      %v2670 = vmul.f32 %v2660, %v1556
      %v2671 = vmul.f32 %v2661, %v1560
      %v2672 = vmul.f32 %v2662, %v1564
      %v2673 = vld [vmem:[%s6] sm:$0xff]
      %2676 = vrot.lane.b32.xlu0 %v2671, 31
      %v2677 = vpop.permute.xlu0 %2676
      %2678 = vrot.lane.b32.xlu0 %v2672, 31
      %v2679 = vpop.permute.xlu0 %2678
      %v2680 = vsel %vm453, %v2677, %v2679
      %2690 = vrot.lane.b32.xlu0 %v2663, 35
      %v2691 = vpop.permute.xlu0 %2690
      %2692 = vrot.lane.b32.xlu0 %v2664, 35
      %v2693 = vpop.permute.xlu0 %2692
      %2694 = vrot.lane.b32.xlu0 %v2665, 35
      %v2695 = vpop.permute.xlu0 %2694
      %2696 = vrot.lane.b32.xlu0 %v2666, 35
      %v2697 = vpop.permute.xlu0 %2696
      %2698 = vrot.lane.b32.xlu0 %v2667, 35
      %v2699 = vpop.permute.xlu0 %2698
      %2700 = vrot.lane.b32.xlu0 %v2668, 35
      %v2701 = vpop.permute.xlu0 %2700
      %2702 = vrot.lane.b32.xlu0 %v2669, 35
      %v2703 = vpop.permute.xlu0 %2702
      %2704 = vrot.lane.b32.xlu0 %v2670, 35
      %v2705 = vpop.permute.xlu0 %2704
      %2706 = vrot.lane.b32.xlu0 %v2671, 35
      %v2707 = vpop.permute.xlu0 %2706
      %v2708 = vsel %vm510, %v2691, %v2693
      %v2709 = vsel %vm510, %v2693, %v2695
      %v2710 = vsel %vm510, %v2695, %v2697
      %v2711 = vsel %vm510, %v2697, %v2699
      %v2712 = vsel %vm510, %v2699, %v2701
      %v2713 = vsel %vm510, %v2701, %v2703
      %v2714 = vsel %vm510, %v2703, %v2705
      %v2715 = vsel %vm510, %v2705, %v2707
      %v2726 = vsel %vm510, %v2680, %v2691
      %2727 = vrot.lane.b32.xlu0 %v2671, 30
      %v2728 = vpop.permute.xlu0 %2727
      %2729 = vrot.lane.b32.xlu0 %v2672, 30
      %v2730 = vpop.permute.xlu0 %2729
      %v2731 = vsel %vm557, %v2728, %v2730
      %2733 = vrot.lane.b32.xlu0 %v2663, 34
      %v2734 = vpop.permute.xlu0 %2733
      %2735 = vrot.lane.b32.xlu0 %v2664, 34
      %v2736 = vpop.permute.xlu0 %2735
      %2737 = vrot.lane.b32.xlu0 %v2665, 34
      %v2738 = vpop.permute.xlu0 %2737
      %2739 = vrot.lane.b32.xlu0 %v2666, 34
      %v2740 = vpop.permute.xlu0 %2739
      %2741 = vrot.lane.b32.xlu0 %v2667, 34
      %v2742 = vpop.permute.xlu0 %2741
      %2743 = vrot.lane.b32.xlu0 %v2668, 34
      %v2744 = vpop.permute.xlu0 %2743
      %2745 = vrot.lane.b32.xlu0 %v2669, 34
      %v2746 = vpop.permute.xlu0 %2745
      %2747 = vrot.lane.b32.xlu0 %v2670, 34
      %v2748 = vpop.permute.xlu0 %2747
      %2749 = vrot.lane.b32.xlu0 %v2671, 34
      %v2750 = vpop.permute.xlu0 %2749
      %v2751 = vsel %vm598, %v2734, %v2736
      %v2752 = vsel %vm598, %v2736, %v2738
      %v2753 = vsel %vm598, %v2738, %v2740
      %v2754 = vsel %vm598, %v2740, %v2742
      %v2755 = vsel %vm598, %v2742, %v2744
      %v2756 = vsel %vm598, %v2744, %v2746
      %v2757 = vsel %vm598, %v2746, %v2748
      %v2758 = vsel %vm598, %v2748, %v2750
      %v2769 = vsel %vm598, %v2731, %v2734
      %2770 = vrot.lane.b32.xlu0 %v2671, 29
      %v2771 = vpop.permute.xlu0 %2770
      %2772 = vrot.lane.b32.xlu0 %v2672, 29
      %v2773 = vpop.permute.xlu0 %2772
      %v2774 = vsel %vm645, %v2771, %v2773
      %2776 = vrot.lane.b32.xlu0 %v2663, 33
      %v2777 = vpop.permute.xlu0 %2776
      %2778 = vrot.lane.b32.xlu0 %v2664, 33
      %v2779 = vpop.permute.xlu0 %2778
      %2780 = vrot.lane.b32.xlu0 %v2665, 33
      %v2781 = vpop.permute.xlu0 %2780
      %2782 = vrot.lane.b32.xlu0 %v2666, 33
      %v2783 = vpop.permute.xlu0 %2782
      %2784 = vrot.lane.b32.xlu0 %v2667, 33
      %v2785 = vpop.permute.xlu0 %2784
      %2786 = vrot.lane.b32.xlu0 %v2668, 33
      %v2787 = vpop.permute.xlu0 %2786
      %2788 = vrot.lane.b32.xlu0 %v2669, 33
      %v2789 = vpop.permute.xlu0 %2788
      %2790 = vrot.lane.b32.xlu0 %v2670, 33
      %v2791 = vpop.permute.xlu0 %2790
      %2792 = vrot.lane.b32.xlu0 %v2671, 33
      %v2793 = vpop.permute.xlu0 %2792
      %v2794 = vsel %vm686, %v2777, %v2779
      %v2795 = vsel %vm686, %v2779, %v2781
      %v2796 = vsel %vm686, %v2781, %v2783
      %v2797 = vsel %vm686, %v2783, %v2785
      %v2798 = vsel %vm686, %v2785, %v2787
      %v2799 = vsel %vm686, %v2787, %v2789
      %v2800 = vsel %vm686, %v2789, %v2791
      %v2801 = vsel %vm686, %v2791, %v2793
      %v2812 = vsel %vm686, %v2774, %v2777
      %2813 = vrot.lane.b32.xlu0 %v2672, 125
      %v2814 = vpop.permute.xlu0 %2813
      %2816 = vrot.lane.b32.xlu0 %v2663, 1
      %v2817 = vpop.permute.xlu0 %2816
      %2818 = vrot.lane.b32.xlu0 %v2664, 1
      %v2819 = vpop.permute.xlu0 %2818
      %2820 = vrot.lane.b32.xlu0 %v2665, 1
      %v2821 = vpop.permute.xlu0 %2820
      %2822 = vrot.lane.b32.xlu0 %v2666, 1
      %v2823 = vpop.permute.xlu0 %2822
      %2824 = vrot.lane.b32.xlu0 %v2667, 1
      %v2825 = vpop.permute.xlu0 %2824
      %2826 = vrot.lane.b32.xlu0 %v2668, 1
      %v2827 = vpop.permute.xlu0 %2826
      %2828 = vrot.lane.b32.xlu0 %v2669, 1
      %v2829 = vpop.permute.xlu0 %2828
      %2830 = vrot.lane.b32.xlu0 %v2670, 1
      %v2831 = vpop.permute.xlu0 %2830
      %2832 = vrot.lane.b32.xlu0 %v2671, 1
      %v2833 = vpop.permute.xlu0 %2832
      %2834 = vrot.lane.b32.xlu0 %v2672, 1
      %v2835 = vpop.permute.xlu0 %2834
      %v2836 = vsel %vm771, %v2817, %v2819
      %v2837 = vsel %vm771, %v2819, %v2821
      %v2838 = vsel %vm771, %v2821, %v2823
      %v2839 = vsel %vm771, %v2823, %v2825
      %v2840 = vsel %vm771, %v2825, %v2827
      %v2841 = vsel %vm771, %v2827, %v2829
      %v2842 = vsel %vm771, %v2829, %v2831
      %v2843 = vsel %vm771, %v2831, %v2833
      %v2844 = vsel %vm771, %v2833, %v2835
      %v2855 = vsel %vm771, %v2814, %v2817
      %2856 = vrot.lane.b32.xlu0 %v2663, 127
      %v2857 = vpop.permute.xlu0 %2856
      %2858 = vrot.lane.b32.xlu0 %v2664, 127
      %v2859 = vpop.permute.xlu0 %2858
      %2860 = vrot.lane.b32.xlu0 %v2665, 127
      %v2861 = vpop.permute.xlu0 %2860
      %2862 = vrot.lane.b32.xlu0 %v2666, 127
      %v2863 = vpop.permute.xlu0 %2862
      %2864 = vrot.lane.b32.xlu0 %v2667, 127
      %v2865 = vpop.permute.xlu0 %2864
      %2866 = vrot.lane.b32.xlu0 %v2668, 127
      %v2867 = vpop.permute.xlu0 %2866
      %2868 = vrot.lane.b32.xlu0 %v2669, 127
      %v2869 = vpop.permute.xlu0 %2868
      %2870 = vrot.lane.b32.xlu0 %v2670, 127
      %v2871 = vpop.permute.xlu0 %2870
      %2872 = vrot.lane.b32.xlu0 %v2671, 127
      %v2873 = vpop.permute.xlu0 %2872
      %2874 = vrot.lane.b32.xlu0 %v2672, 127
      %v2875 = vpop.permute.xlu0 %2874
      %v2876 = vsel %vm852, %v2857, %v2859
      %v2877 = vsel %vm852, %v2859, %v2861
      %v2878 = vsel %vm852, %v2861, %v2863
      %v2879 = vsel %vm852, %v2863, %v2865
      %v2880 = vsel %vm852, %v2865, %v2867
      %v2881 = vsel %vm852, %v2867, %v2869
      %v2882 = vsel %vm852, %v2869, %v2871
      %v2883 = vsel %vm852, %v2871, %v2873
      %v2884 = vsel %vm852, %v2873, %v2875
      %2895 = vrot.lane.b32.xlu0 %v2663, 3
      %v2896 = vpop.permute.xlu0 %2895
      %v2898 = vsel %vm897, %v2875, %v2896
      %2899 = vrot.lane.b32.xlu0 %v2663, 95
      %v2900 = vpop.permute.xlu0 %2899
      %2901 = vrot.lane.b32.xlu0 %v2664, 95
      %v2902 = vpop.permute.xlu0 %2901
      %2903 = vrot.lane.b32.xlu0 %v2665, 95
      %v2904 = vpop.permute.xlu0 %2903
      %2905 = vrot.lane.b32.xlu0 %v2666, 95
      %v2906 = vpop.permute.xlu0 %2905
      %2907 = vrot.lane.b32.xlu0 %v2667, 95
      %v2908 = vpop.permute.xlu0 %2907
      %2909 = vrot.lane.b32.xlu0 %v2668, 95
      %v2910 = vpop.permute.xlu0 %2909
      %2911 = vrot.lane.b32.xlu0 %v2669, 95
      %v2912 = vpop.permute.xlu0 %2911
      %2913 = vrot.lane.b32.xlu0 %v2670, 95
      %v2914 = vpop.permute.xlu0 %2913
      %2915 = vrot.lane.b32.xlu0 %v2671, 95
      %v2916 = vpop.permute.xlu0 %2915
      %2917 = vrot.lane.b32.xlu0 %v2672, 95
      %v2918 = vpop.permute.xlu0 %2917
      %v2919 = vsel %vm940, %v2900, %v2902
      %v2920 = vsel %vm940, %v2902, %v2904
      %v2921 = vsel %vm940, %v2904, %v2906
      %v2922 = vsel %vm940, %v2906, %v2908
      %v2923 = vsel %vm940, %v2908, %v2910
      %v2924 = vsel %vm940, %v2910, %v2912
      %v2925 = vsel %vm940, %v2912, %v2914
      %v2926 = vsel %vm940, %v2914, %v2916
      %v2927 = vsel %vm940, %v2916, %v2918
      %2937 = vrot.lane.b32.xlu0 %v2663, 99
      %v2938 = vpop.permute.xlu0 %2937
      %v2940 = vsel %vm983, %v2927, %v2938
      %2941 = vrot.lane.b32.xlu0 %v2663, 94
      %v2942 = vpop.permute.xlu0 %2941
      %2943 = vrot.lane.b32.xlu0 %v2664, 94
      %v2944 = vpop.permute.xlu0 %2943
      %2945 = vrot.lane.b32.xlu0 %v2665, 94
      %v2946 = vpop.permute.xlu0 %2945
      %2947 = vrot.lane.b32.xlu0 %v2666, 94
      %v2948 = vpop.permute.xlu0 %2947
      %2949 = vrot.lane.b32.xlu0 %v2667, 94
      %v2950 = vpop.permute.xlu0 %2949
      %2951 = vrot.lane.b32.xlu0 %v2668, 94
      %v2952 = vpop.permute.xlu0 %2951
      %2953 = vrot.lane.b32.xlu0 %v2669, 94
      %v2954 = vpop.permute.xlu0 %2953
      %2955 = vrot.lane.b32.xlu0 %v2670, 94
      %v2956 = vpop.permute.xlu0 %2955
      %2957 = vrot.lane.b32.xlu0 %v2671, 94
      %v2958 = vpop.permute.xlu0 %2957
      %2959 = vrot.lane.b32.xlu0 %v2672, 94
      %v2960 = vpop.permute.xlu0 %2959
      %v2961 = vsel %vm1026, %v2942, %v2944
      %v2962 = vsel %vm1026, %v2944, %v2946
      %v2963 = vsel %vm1026, %v2946, %v2948
      %v2964 = vsel %vm1026, %v2948, %v2950
      %v2965 = vsel %vm1026, %v2950, %v2952
      %v2966 = vsel %vm1026, %v2952, %v2954
      %v2967 = vsel %vm1026, %v2954, %v2956
      %v2968 = vsel %vm1026, %v2956, %v2958
      %v2969 = vsel %vm1026, %v2958, %v2960
      %2979 = vrot.lane.b32.xlu0 %v2663, 98
      %v2980 = vpop.permute.xlu0 %2979
      %v2982 = vsel %vm1069, %v2969, %v2980
      %2983 = vrot.lane.b32.xlu0 %v2663, 93
      %v2984 = vpop.permute.xlu0 %2983
      %2985 = vrot.lane.b32.xlu0 %v2664, 93
      %v2986 = vpop.permute.xlu0 %2985
      %2987 = vrot.lane.b32.xlu0 %v2665, 93
      %v2988 = vpop.permute.xlu0 %2987
      %2989 = vrot.lane.b32.xlu0 %v2666, 93
      %v2990 = vpop.permute.xlu0 %2989
      %2991 = vrot.lane.b32.xlu0 %v2667, 93
      %v2992 = vpop.permute.xlu0 %2991
      %2993 = vrot.lane.b32.xlu0 %v2668, 93
      %v2994 = vpop.permute.xlu0 %2993
      %2995 = vrot.lane.b32.xlu0 %v2669, 93
      %v2996 = vpop.permute.xlu0 %2995
      %2997 = vrot.lane.b32.xlu0 %v2670, 93
      %v2998 = vpop.permute.xlu0 %2997
      %2999 = vrot.lane.b32.xlu0 %v2671, 93
      %v3000 = vpop.permute.xlu0 %2999
      %3001 = vrot.lane.b32.xlu0 %v2672, 93
      %v3002 = vpop.permute.xlu0 %3001
      %v3003 = vsel %vm1112, %v2984, %v2986
      %v3004 = vsel %vm1112, %v2986, %v2988
      %v3005 = vsel %vm1112, %v2988, %v2990
      %v3006 = vsel %vm1112, %v2990, %v2992
      %v3007 = vsel %vm1112, %v2992, %v2994
      %v3008 = vsel %vm1112, %v2994, %v2996
      %v3009 = vsel %vm1112, %v2996, %v2998
      %v3010 = vsel %vm1112, %v2998, %v3000
      %v3011 = vsel %vm1112, %v3000, %v3002
      %3021 = vrot.lane.b32.xlu0 %v2663, 97
      %v3022 = vpop.permute.xlu0 %3021
      %v3024 = vsel %vm1155, %v3011, %v3022
      %v3025 = vld [vmem:[%s7] sm:$0xff]
      %3027 = vset.pattern.permute.xlu0 0
      %3028 = vperm.xlu0 %3027, %v3025
      %v3029 = vpop.permute.xlu0 %3028
      %vm3031 = vcmask 588800
      %v3033 = vsel %vm3031, %v2673, 0
      %3035 = vmatprep.subr.mxu0 %v2708
      %3036 = vmatpush1.msra.mxu0 %v2726
      %3037 = vmatprep.subr.mxu0 %v2751
      %3038 = vmatpush1.msra.mxu0 %v2769
      %3039 = vmatprep.subr.mxu0 %v2794
      %3040 = vmatpush1.msra.mxu0 %v2812
      %3041 = vmatprep.subr.mxu0 %v2836
      %3042 = vmatpush1.msra.mxu0 %v2855
      %3043 = vmatprep.subr.mxu0 %v2664
      %3044 = vmatpush1.msra.mxu0 %v2663
      %3045 = vmatprep.subr.mxu0 %v2877
      %3046 = vmatpush1.msra.mxu0 %v2876
      %3047 = vmatprep.subr.mxu0 %v2920
      %3048 = vmatpush1.msra.mxu0 %v2919
      %3049 = vmatprep.subr.mxu0 %v2962
      %3050 = vmatpush1.msra.mxu0 %v2961
      %3051 = vmatprep.subr.mxu0 %v3004
      %3052 = vmatpush1.msra.mxu0 %v3003
      %3053 = vmatprep.subr.mxu0 0.0
      %3054 = vmatpush1.msra.mxu0 0.0
      %3055 = vmatprep.subr.mxu0 0.0
      %3056 = vmatpush1.msra.mxu0 0.0
      %3057 = vmatprep.subr.mxu0 0.0
      %3058 = vmatpush1.msra.mxu0 0.0
      %3059 = vmatprep.subr.mxu0 0.0
      %3060 = vmatpush1.msra.mxu0 0.0
      %3061 = vmatprep.subr.mxu0 0.0
      %3062 = vmatpush1.msra.mxu0 0.0
      %3063 = vmatprep.subr.mxu0 0.0
      %3064 = vmatpush1.msra.mxu0 0.0
      %3065 = vmatprep.subr.mxu0 0.0
      %3066 = vmatpush1.msra.mxu0 0.0
      %3067 = vmatprep.subr.mxu0 0.0
      %3068 = vmatpush1.msra.mxu0 0.0
      %3069 = vmatprep.subr.mxu0 0.0
      %3070 = vmatpush1.msra.mxu0 0.0
      %3071 = vmatprep.subr.mxu0 0.0
      %3072 = vmatpush1.msra.mxu0 0.0
      %3073 = vmatprep.subr.mxu0 0.0
      %3074 = vmatpush1.msra.mxu0 0.0
      %3075 = vmatprep.subr.mxu0 0.0
      %3076 = vmatpush1.msra.mxu0 0.0
      %3077 = vmatprep.subr.mxu0 0.0
      %3078 = vmatpush1.msra.mxu0 0.0
      %3079 = vmatprep.subr.mxu0 0.0
      %3080 = vmatpush1.msra.mxu0 0.0
      %3081 = vmatprep.subr.mxu0 0.0
      %3082 = vmatpush1.msra.mxu0 0.0
      %3083 = vmatprep.subr.mxu0 0.0
      %3084 = vmatpush1.msra.mxu0 0.0
      %3085 = vmatprep.subr.mxu0 0.0
      %3086 = vmatpush1.msra.mxu0 0.0
      %3087 = vmatprep.subr.mxu0 0.0
      %3088 = vmatpush1.msra.mxu0 0.0
      %3089 = vmatprep.subr.mxu0 0.0
      %3090 = vmatpush1.msra.mxu0 0.0
      %3091 = vmatprep.subr.mxu0 0.0
      %3092 = vmatpush1.msra.mxu0 0.0
      %3093 = vmatprep.subr.mxu0 0.0
      %3094 = vmatpush1.msra.mxu0 0.0
      %3095 = vmatprep.subr.mxu0 0.0
      %3096 = vmatpush1.msra.mxu0 0.0
      %3097 = vmatprep.subr.mxu0 0.0
      %3098 = vmatpush1.msra.mxu0 0.0
      %3099 = vmatprep.mubr.f32.mxu0 0.0
      %3100 = vmatmul.mubr.f32.gmra.mrb[0].mxu0 %v3033
      %v3101 = vpop.f32.mrb[0].mxu0
      %v3102 = vadd.f32 %v3029, %v3101
      %v3103 = vpop.f32.mrb[0].mxu0
      %v3104 = vadd.f32 %v3029, %v3103
      %3105 = vdwg.mxu0
      %3106 = vmatprep.subr.mxu0 %v2710
      %3107 = vmatpush1.msra.mxu0 %v2709
      %3108 = vmatprep.subr.mxu0 %v2753
      %3109 = vmatpush1.msra.mxu0 %v2752
      %3110 = vmatprep.subr.mxu0 %v2796
      %3111 = vmatpush1.msra.mxu0 %v2795
      %3112 = vmatprep.subr.mxu0 %v2838
      %3113 = vmatpush1.msra.mxu0 %v2837
      %3114 = vmatprep.subr.mxu0 %v2666
      %3115 = vmatpush1.msra.mxu0 %v2665
      %3116 = vmatprep.subr.mxu0 %v2879
      %3117 = vmatpush1.msra.mxu0 %v2878
      %3118 = vmatprep.subr.mxu0 %v2922
      %3119 = vmatpush1.msra.mxu0 %v2921
      %3120 = vmatprep.subr.mxu0 %v2964
      %3121 = vmatpush1.msra.mxu0 %v2963
      %3122 = vmatprep.subr.mxu0 %v3006
      %3123 = vmatpush1.msra.mxu0 %v3005
      %3124 = vmatprep.subr.mxu0 0.0
      %3125 = vmatpush1.msra.mxu0 0.0
      %3126 = vmatprep.subr.mxu0 0.0
      %3127 = vmatpush1.msra.mxu0 0.0
      %3128 = vmatprep.subr.mxu0 0.0
      %3129 = vmatpush1.msra.mxu0 0.0
      %3130 = vmatprep.subr.mxu0 0.0
      %3131 = vmatpush1.msra.mxu0 0.0
      %3132 = vmatprep.subr.mxu0 0.0
      %3133 = vmatpush1.msra.mxu0 0.0
      %3134 = vmatprep.subr.mxu0 0.0
      %3135 = vmatpush1.msra.mxu0 0.0
      %3136 = vmatprep.subr.mxu0 0.0
      %3137 = vmatpush1.msra.mxu0 0.0
      %3138 = vmatprep.subr.mxu0 0.0
      %3139 = vmatpush1.msra.mxu0 0.0
      %3140 = vmatprep.subr.mxu0 0.0
      %3141 = vmatpush1.msra.mxu0 0.0
      %3142 = vmatprep.subr.mxu0 0.0
      %3143 = vmatpush1.msra.mxu0 0.0
      %3144 = vmatprep.subr.mxu0 0.0
      %3145 = vmatpush1.msra.mxu0 0.0
      %3146 = vmatprep.subr.mxu0 0.0
      %3147 = vmatpush1.msra.mxu0 0.0
      %3148 = vmatprep.subr.mxu0 0.0
      %3149 = vmatpush1.msra.mxu0 0.0
      %3150 = vmatprep.subr.mxu0 0.0
      %3151 = vmatpush1.msra.mxu0 0.0
      %3152 = vmatprep.subr.mxu0 0.0
      %3153 = vmatpush1.msra.mxu0 0.0
      %3154 = vmatprep.subr.mxu0 0.0
      %3155 = vmatpush1.msra.mxu0 0.0
      %3156 = vmatprep.subr.mxu0 0.0
      %3157 = vmatpush1.msra.mxu0 0.0
      %3158 = vmatprep.subr.mxu0 0.0
      %3159 = vmatpush1.msra.mxu0 0.0
      %3160 = vmatprep.subr.mxu0 0.0
      %3161 = vmatpush1.msra.mxu0 0.0
      %3162 = vmatprep.subr.mxu0 0.0
      %3163 = vmatpush1.msra.mxu0 0.0
      %3164 = vmatprep.subr.mxu0 0.0
      %3165 = vmatpush1.msra.mxu0 0.0
      %3166 = vmatprep.subr.mxu0 0.0
      %3167 = vmatpush1.msra.mxu0 0.0
      %3168 = vmatprep.subr.mxu0 0.0
      %3169 = vmatpush1.msra.mxu0 0.0
      %3170 = vmatprep.mubr.f32.mxu0 0.0
      %3171 = vmatmul.mubr.f32.gmra.mrb[0].mxu0 %v3033
      %v3172 = vpop.f32.mrb[0].mxu0
      %v3173 = vadd.f32 %v3029, %v3172
      %v3174 = vpop.f32.mrb[0].mxu0
      %v3175 = vadd.f32 %v3029, %v3174
      %3176 = vdwg.mxu0
      %3177 = vmatprep.subr.mxu0 %v2712
      %3178 = vmatpush1.msra.mxu0 %v2711
      %3179 = vmatprep.subr.mxu0 %v2755
      %3180 = vmatpush1.msra.mxu0 %v2754
      %3181 = vmatprep.subr.mxu0 %v2798
      %3182 = vmatpush1.msra.mxu0 %v2797
      %3183 = vmatprep.subr.mxu0 %v2840
      %3184 = vmatpush1.msra.mxu0 %v2839
      %3185 = vmatprep.subr.mxu0 %v2668
      %3186 = vmatpush1.msra.mxu0 %v2667
      %3187 = vmatprep.subr.mxu0 %v2881
      %3188 = vmatpush1.msra.mxu0 %v2880
      %3189 = vmatprep.subr.mxu0 %v2924
      %3190 = vmatpush1.msra.mxu0 %v2923
      %3191 = vmatprep.subr.mxu0 %v2966
      %3192 = vmatpush1.msra.mxu0 %v2965
      %3193 = vmatprep.subr.mxu0 %v3008
      %3194 = vmatpush1.msra.mxu0 %v3007
      %3195 = vmatprep.subr.mxu0 0.0
      %3196 = vmatpush1.msra.mxu0 0.0
      %3197 = vmatprep.subr.mxu0 0.0
      %3198 = vmatpush1.msra.mxu0 0.0
      %3199 = vmatprep.subr.mxu0 0.0
      %3200 = vmatpush1.msra.mxu0 0.0
      %3201 = vmatprep.subr.mxu0 0.0
      %3202 = vmatpush1.msra.mxu0 0.0
      %3203 = vmatprep.subr.mxu0 0.0
      %3204 = vmatpush1.msra.mxu0 0.0
      %3205 = vmatprep.subr.mxu0 0.0
      %3206 = vmatpush1.msra.mxu0 0.0
      %3207 = vmatprep.subr.mxu0 0.0
      %3208 = vmatpush1.msra.mxu0 0.0
      %3209 = vmatprep.subr.mxu0 0.0
      %3210 = vmatpush1.msra.mxu0 0.0
      %3211 = vmatprep.subr.mxu0 0.0
      %3212 = vmatpush1.msra.mxu0 0.0
      %3213 = vmatprep.subr.mxu0 0.0
      %3214 = vmatpush1.msra.mxu0 0.0
      %3215 = vmatprep.subr.mxu0 0.0
      %3216 = vmatpush1.msra.mxu0 0.0
      %3217 = vmatprep.subr.mxu0 0.0
      %3218 = vmatpush1.msra.mxu0 0.0
      %3219 = vmatprep.subr.mxu0 0.0
      %3220 = vmatpush1.msra.mxu0 0.0
      %3221 = vmatprep.subr.mxu0 0.0
      %3222 = vmatpush1.msra.mxu0 0.0
      %3223 = vmatprep.subr.mxu0 0.0
      %3224 = vmatpush1.msra.mxu0 0.0
      %3225 = vmatprep.subr.mxu0 0.0
      %3226 = vmatpush1.msra.mxu0 0.0
      %3227 = vmatprep.subr.mxu0 0.0
      %3228 = vmatpush1.msra.mxu0 0.0
      %3229 = vmatprep.subr.mxu0 0.0
      %3230 = vmatpush1.msra.mxu0 0.0
      %3231 = vmatprep.subr.mxu0 0.0
      %3232 = vmatpush1.msra.mxu0 0.0
      %3233 = vmatprep.subr.mxu0 0.0
      %3234 = vmatpush1.msra.mxu0 0.0
      %3235 = vmatprep.subr.mxu0 0.0
      %3236 = vmatpush1.msra.mxu0 0.0
      %3237 = vmatprep.subr.mxu0 0.0
      %3238 = vmatpush1.msra.mxu0 0.0
      %3239 = vmatprep.subr.mxu0 0.0
      %3240 = vmatpush1.msra.mxu0 0.0
      %3241 = vmatprep.mubr.f32.mxu0 0.0
      %3242 = vmatmul.mubr.f32.gmra.mrb[0].mxu0 %v3033
      %v3243 = vpop.f32.mrb[0].mxu0
      %v3244 = vadd.f32 %v3029, %v3243
      %v3245 = vpop.f32.mrb[0].mxu0
      %v3246 = vadd.f32 %v3029, %v3245
      %3247 = vdwg.mxu0
      %3248 = vmatprep.subr.mxu0 %v2714
      %3249 = vmatpush1.msra.mxu0 %v2713
      %3250 = vmatprep.subr.mxu0 %v2757
      %3251 = vmatpush1.msra.mxu0 %v2756
      %3252 = vmatprep.subr.mxu0 %v2800
      %3253 = vmatpush1.msra.mxu0 %v2799
      %3254 = vmatprep.subr.mxu0 %v2842
      %3255 = vmatpush1.msra.mxu0 %v2841
      %3256 = vmatprep.subr.mxu0 %v2670
      %3257 = vmatpush1.msra.mxu0 %v2669
      %3258 = vmatprep.subr.mxu0 %v2883
      %3259 = vmatpush1.msra.mxu0 %v2882
      %3260 = vmatprep.subr.mxu0 %v2926
      %3261 = vmatpush1.msra.mxu0 %v2925
      %3262 = vmatprep.subr.mxu0 %v2968
      %3263 = vmatpush1.msra.mxu0 %v2967
      %3264 = vmatprep.subr.mxu0 %v3010
      %3265 = vmatpush1.msra.mxu0 %v3009
      %3266 = vmatprep.subr.mxu0 0.0
      %3267 = vmatpush1.msra.mxu0 0.0
      %3268 = vmatprep.subr.mxu0 0.0
      %3269 = vmatpush1.msra.mxu0 0.0
      %3270 = vmatprep.subr.mxu0 0.0
      %3271 = vmatpush1.msra.mxu0 0.0
      %3272 = vmatprep.subr.mxu0 0.0
      %3273 = vmatpush1.msra.mxu0 0.0
      %3274 = vmatprep.subr.mxu0 0.0
      %3275 = vmatpush1.msra.mxu0 0.0
      %3276 = vmatprep.subr.mxu0 0.0
      %3277 = vmatpush1.msra.mxu0 0.0
      %3278 = vmatprep.subr.mxu0 0.0
      %3279 = vmatpush1.msra.mxu0 0.0
      %3280 = vmatprep.subr.mxu0 0.0
      %3281 = vmatpush1.msra.mxu0 0.0
      %3282 = vmatprep.subr.mxu0 0.0
      %3283 = vmatpush1.msra.mxu0 0.0
      %3284 = vmatprep.subr.mxu0 0.0
      %3285 = vmatpush1.msra.mxu0 0.0
      %3286 = vmatprep.subr.mxu0 0.0
      %3287 = vmatpush1.msra.mxu0 0.0
      %3288 = vmatprep.subr.mxu0 0.0
      %3289 = vmatpush1.msra.mxu0 0.0
      %3290 = vmatprep.subr.mxu0 0.0
      %3291 = vmatpush1.msra.mxu0 0.0
      %3292 = vmatprep.subr.mxu0 0.0
      %3293 = vmatpush1.msra.mxu0 0.0
      %3294 = vmatprep.subr.mxu0 0.0
      %3295 = vmatpush1.msra.mxu0 0.0
      %3296 = vmatprep.subr.mxu0 0.0
      %3297 = vmatpush1.msra.mxu0 0.0
      %3298 = vmatprep.subr.mxu0 0.0
      %3299 = vmatpush1.msra.mxu0 0.0
      %3300 = vmatprep.subr.mxu0 0.0
      %3301 = vmatpush1.msra.mxu0 0.0
      %3302 = vmatprep.subr.mxu0 0.0
      %3303 = vmatpush1.msra.mxu0 0.0
      %3304 = vmatprep.subr.mxu0 0.0
      %3305 = vmatpush1.msra.mxu0 0.0
      %3306 = vmatprep.subr.mxu0 0.0
      %3307 = vmatpush1.msra.mxu0 0.0
      %3308 = vmatprep.subr.mxu0 0.0
      %3309 = vmatpush1.msra.mxu0 0.0
      %3310 = vmatprep.subr.mxu0 0.0
      %3311 = vmatpush1.msra.mxu0 0.0
      %3312 = vmatprep.mubr.f32.mxu0 0.0
      %3313 = vmatmul.mubr.f32.gmra.mrb[0].mxu0 %v3033
      %v3314 = vpop.f32.mrb[0].mxu0
      %v3315 = vadd.f32 %v3029, %v3314
      %v3316 = vpop.f32.mrb[0].mxu0
      %v3317 = vadd.f32 %v3029, %v3316
      %3318 = vdwg.mxu0
      %3319 = vmatprep.subr.mxu0 %v2707
      %3320 = vmatpush1.msra.mxu0 %v2715
      %3321 = vmatprep.subr.mxu0 %v2750
      %3322 = vmatpush1.msra.mxu0 %v2758
      %3323 = vmatprep.subr.mxu0 %v2793
      %3324 = vmatpush1.msra.mxu0 %v2801
      %3325 = vmatprep.subr.mxu0 %v2844
      %3326 = vmatpush1.msra.mxu0 %v2843
      %3327 = vmatprep.subr.mxu0 %v2672
      %3328 = vmatpush1.msra.mxu0 %v2671
      %3329 = vmatprep.subr.mxu0 %v2898
      %3330 = vmatpush1.msra.mxu0 %v2884
      %3331 = vmatprep.subr.mxu0 %v2938
      %3332 = vmatpush1.msra.mxu0 %v2940
      %3333 = vmatprep.subr.mxu0 %v2980
      %3334 = vmatpush1.msra.mxu0 %v2982
      %3335 = vmatprep.subr.mxu0 %v3022
      %3336 = vmatpush1.msra.mxu0 %v3024
      %3337 = vmatprep.subr.mxu0 0.0
      %3338 = vmatpush1.msra.mxu0 0.0
      %3339 = vmatprep.subr.mxu0 0.0
      %3340 = vmatpush1.msra.mxu0 0.0
      %3341 = vmatprep.subr.mxu0 0.0
      %3342 = vmatpush1.msra.mxu0 0.0
      %3343 = vmatprep.subr.mxu0 0.0
      %3344 = vmatpush1.msra.mxu0 0.0
      %3345 = vmatprep.subr.mxu0 0.0
      %3346 = vmatpush1.msra.mxu0 0.0
      %3347 = vmatprep.subr.mxu0 0.0
      %3348 = vmatpush1.msra.mxu0 0.0
      %3349 = vmatprep.subr.mxu0 0.0
      %3350 = vmatpush1.msra.mxu0 0.0
      %3351 = vmatprep.subr.mxu0 0.0
      %3352 = vmatpush1.msra.mxu0 0.0
      %3353 = vmatprep.subr.mxu0 0.0
      %3354 = vmatpush1.msra.mxu0 0.0
      %3355 = vmatprep.subr.mxu0 0.0
      %3356 = vmatpush1.msra.mxu0 0.0
      %3357 = vmatprep.subr.mxu0 0.0
      %3358 = vmatpush1.msra.mxu0 0.0
      %3359 = vmatprep.subr.mxu0 0.0
      %3360 = vmatpush1.msra.mxu0 0.0
      %3361 = vmatprep.subr.mxu0 0.0
      %3362 = vmatpush1.msra.mxu0 0.0
      %3363 = vmatprep.subr.mxu0 0.0
      %3364 = vmatpush1.msra.mxu0 0.0
      %3365 = vmatprep.subr.mxu0 0.0
      %3366 = vmatpush1.msra.mxu0 0.0
      %3367 = vmatprep.subr.mxu0 0.0
      %3368 = vmatpush1.msra.mxu0 0.0
      %3369 = vmatprep.subr.mxu0 0.0
      %3370 = vmatpush1.msra.mxu0 0.0
      %3371 = vmatprep.subr.mxu0 0.0
      %3372 = vmatpush1.msra.mxu0 0.0
      %3373 = vmatprep.subr.mxu0 0.0
      %3374 = vmatpush1.msra.mxu0 0.0
      %3375 = vmatprep.subr.mxu0 0.0
      %3376 = vmatpush1.msra.mxu0 0.0
      %3377 = vmatprep.subr.mxu0 0.0
      %3378 = vmatpush1.msra.mxu0 0.0
      %3379 = vmatprep.subr.mxu0 0.0
      %3380 = vmatpush1.msra.mxu0 0.0
      %3381 = vmatprep.subr.mxu0 0.0
      %3382 = vmatpush1.msra.mxu0 0.0
      %3383 = vmatprep.mubr.f32.mxu0 0.0
      %3384 = vmatmul.mubr.f32.gmra.mrb[0].mxu0 %v3033
      %v3385 = vpop.f32.mrb[0].mxu0
      %v3386 = vadd.f32 %v3029, %v3385
      %v3387 = vpop.f32.mrb[0].mxu0
      %v3388 = vadd.f32 %v3029, %v3387
      %3389 = vdwg.mxu0
      %v3390 = vld [vmem:[%s8] sm:$0xff]
      %v3392 = vsel %vm1164, %v3390, 0
      %3394 = vmatprep.subr.mxu0 %v1576
      %3395 = vmatpush1.msra.mxu0 %v1575
      %3396 = vmatprep.subr.mxu0 %v428
      %3397 = vmatpush1.msra.mxu0 %v427
      %3398 = vmatprep.subr.mxu0 0.0
      %3399 = vmatpush1.msra.mxu0 0.0
      %3400 = vmatprep.subr.mxu0 0.0
      %3401 = vmatpush1.msra.mxu0 0.0
      %3402 = vmatprep.subr.mxu0 0.0
      %3403 = vmatpush1.msra.mxu0 0.0
      %3404 = vmatprep.subr.mxu0 0.0
      %3405 = vmatpush1.msra.mxu0 0.0
      %3406 = vmatprep.subr.mxu0 0.0
      %3407 = vmatpush1.msra.mxu0 0.0
      %3408 = vmatprep.subr.mxu0 0.0
      %3409 = vmatpush1.msra.mxu0 0.0
      %3410 = vmatprep.subr.mxu0 0.0
      %3411 = vmatpush1.msra.mxu0 0.0
      %3412 = vmatprep.subr.mxu0 0.0
      %3413 = vmatpush1.msra.mxu0 0.0
      %3414 = vmatprep.subr.mxu0 0.0
      %3415 = vmatpush1.msra.mxu0 0.0
      %3416 = vmatprep.subr.mxu0 0.0
      %3417 = vmatpush1.msra.mxu0 0.0
      %3418 = vmatprep.subr.mxu0 0.0
      %3419 = vmatpush1.msra.mxu0 0.0
      %3420 = vmatprep.subr.mxu0 0.0
      %3421 = vmatpush1.msra.mxu0 0.0
      %3422 = vmatprep.subr.mxu0 0.0
      %3423 = vmatpush1.msra.mxu0 0.0
      %3424 = vmatprep.subr.mxu0 0.0
      %3425 = vmatpush1.msra.mxu0 0.0
      %3426 = vmatprep.subr.mxu0 0.0
      %3427 = vmatpush1.msra.mxu0 0.0
      %3428 = vmatprep.subr.mxu0 0.0
      %3429 = vmatpush1.msra.mxu0 0.0
      %3430 = vmatprep.subr.mxu0 0.0
      %3431 = vmatpush1.msra.mxu0 0.0
      %3432 = vmatprep.subr.mxu0 0.0
      %3433 = vmatpush1.msra.mxu0 0.0
      %3434 = vmatprep.subr.mxu0 0.0
      %3435 = vmatpush1.msra.mxu0 0.0
      %3436 = vmatprep.subr.mxu0 0.0
      %3437 = vmatpush1.msra.mxu0 0.0
      %3438 = vmatprep.subr.mxu0 0.0
      %3439 = vmatpush1.msra.mxu0 0.0
      %3440 = vmatprep.subr.mxu0 0.0
      %3441 = vmatpush1.msra.mxu0 0.0
      %3442 = vmatprep.subr.mxu0 0.0
      %3443 = vmatpush1.msra.mxu0 0.0
      %3444 = vmatprep.subr.mxu0 0.0
      %3445 = vmatpush1.msra.mxu0 0.0
      %3446 = vmatprep.subr.mxu0 0.0
      %3447 = vmatpush1.msra.mxu0 0.0
      %3448 = vmatprep.subr.mxu0 0.0
      %3449 = vmatpush1.msra.mxu0 0.0
      %3450 = vmatprep.subr.mxu0 0.0
      %3451 = vmatpush1.msra.mxu0 0.0
      %3452 = vmatprep.subr.mxu0 0.0
      %3453 = vmatpush1.msra.mxu0 0.0
      %3454 = vmatprep.subr.mxu0 0.0
      %3455 = vmatpush1.msra.mxu0 0.0
      %3456 = vmatprep.subr.mxu0 0.0
      %3457 = vmatpush1.msra.mxu0 0.0
      %3458 = vmatprep.mubr.f32.mxu0 0.0
      %3459 = vmatmul.mubr.f32.gmra.mrb[0].mxu0 %v3392
      %v3460 = vpop.f32.mrb[0].mxu0
      %v3461 = vadd.f32 0.0, %v3460
      %v3462 = vpop.f32.mrb[0].mxu0
      %v3463 = vadd.f32 0.0, %v3462
      %3464 = vdwg.mxu0
      %3465 = vmatprep.subr.mxu0 %v1578
      %3466 = vmatpush1.msra.mxu0 %v1577
      %3467 = vmatprep.subr.mxu0 %v430
      %3468 = vmatpush1.msra.mxu0 %v429
      %3469 = vmatprep.subr.mxu0 0.0
      %3470 = vmatpush1.msra.mxu0 0.0
      %3471 = vmatprep.subr.mxu0 0.0
      %3472 = vmatpush1.msra.mxu0 0.0
      %3473 = vmatprep.subr.mxu0 0.0
      %3474 = vmatpush1.msra.mxu0 0.0
      %3475 = vmatprep.subr.mxu0 0.0
      %3476 = vmatpush1.msra.mxu0 0.0
      %3477 = vmatprep.subr.mxu0 0.0
      %3478 = vmatpush1.msra.mxu0 0.0
      %3479 = vmatprep.subr.mxu0 0.0
      %3480 = vmatpush1.msra.mxu0 0.0
      %3481 = vmatprep.subr.mxu0 0.0
      %3482 = vmatpush1.msra.mxu0 0.0
      %3483 = vmatprep.subr.mxu0 0.0
      %3484 = vmatpush1.msra.mxu0 0.0
      %3485 = vmatprep.subr.mxu0 0.0
      %3486 = vmatpush1.msra.mxu0 0.0
      %3487 = vmatprep.subr.mxu0 0.0
      %3488 = vmatpush1.msra.mxu0 0.0
      %3489 = vmatprep.subr.mxu0 0.0
      %3490 = vmatpush1.msra.mxu0 0.0
      %3491 = vmatprep.subr.mxu0 0.0
      %3492 = vmatpush1.msra.mxu0 0.0
      %3493 = vmatprep.subr.mxu0 0.0
      %3494 = vmatpush1.msra.mxu0 0.0
      %3495 = vmatprep.subr.mxu0 0.0
      %3496 = vmatpush1.msra.mxu0 0.0
      %3497 = vmatprep.subr.mxu0 0.0
      %3498 = vmatpush1.msra.mxu0 0.0
      %3499 = vmatprep.subr.mxu0 0.0
      %3500 = vmatpush1.msra.mxu0 0.0
      %3501 = vmatprep.subr.mxu0 0.0
      %3502 = vmatpush1.msra.mxu0 0.0
      %3503 = vmatprep.subr.mxu0 0.0
      %3504 = vmatpush1.msra.mxu0 0.0
      %3505 = vmatprep.subr.mxu0 0.0
      %3506 = vmatpush1.msra.mxu0 0.0
      %3507 = vmatprep.subr.mxu0 0.0
      %3508 = vmatpush1.msra.mxu0 0.0
      %3509 = vmatprep.subr.mxu0 0.0
      %3510 = vmatpush1.msra.mxu0 0.0
      %3511 = vmatprep.subr.mxu0 0.0
      %3512 = vmatpush1.msra.mxu0 0.0
      %3513 = vmatprep.subr.mxu0 0.0
      %3514 = vmatpush1.msra.mxu0 0.0
      %3515 = vmatprep.subr.mxu0 0.0
      %3516 = vmatpush1.msra.mxu0 0.0
      %3517 = vmatprep.subr.mxu0 0.0
      %3518 = vmatpush1.msra.mxu0 0.0
      %3519 = vmatprep.subr.mxu0 0.0
      %3520 = vmatpush1.msra.mxu0 0.0
      %3521 = vmatprep.subr.mxu0 0.0
      %3522 = vmatpush1.msra.mxu0 0.0
      %3523 = vmatprep.subr.mxu0 0.0
      %3524 = vmatpush1.msra.mxu0 0.0
      %3525 = vmatprep.subr.mxu0 0.0
      %3526 = vmatpush1.msra.mxu0 0.0
      %3527 = vmatprep.subr.mxu0 0.0
      %3528 = vmatpush1.msra.mxu0 0.0
      %3529 = vmatprep.mubr.f32.mxu0 0.0
      %3530 = vmatmul.mubr.f32.gmra.mrb[0].mxu0 %v3392
      %v3531 = vpop.f32.mrb[0].mxu0
      %v3532 = vadd.f32 0.0, %v3531
      %v3533 = vpop.f32.mrb[0].mxu0
      %v3534 = vadd.f32 0.0, %v3533
      %3535 = vdwg.mxu0
      %3536 = vmatprep.subr.mxu0 %v1580
      %3537 = vmatpush1.msra.mxu0 %v1579
      %3538 = vmatprep.subr.mxu0 %v432
      %3539 = vmatpush1.msra.mxu0 %v431
      %3540 = vmatprep.subr.mxu0 0.0
      %3541 = vmatpush1.msra.mxu0 0.0
      %3542 = vmatprep.subr.mxu0 0.0
      %3543 = vmatpush1.msra.mxu0 0.0
      %3544 = vmatprep.subr.mxu0 0.0
      %3545 = vmatpush1.msra.mxu0 0.0
      %3546 = vmatprep.subr.mxu0 0.0
      %3547 = vmatpush1.msra.mxu0 0.0
      %3548 = vmatprep.subr.mxu0 0.0
      %3549 = vmatpush1.msra.mxu0 0.0
      %3550 = vmatprep.subr.mxu0 0.0
      %3551 = vmatpush1.msra.mxu0 0.0
      %3552 = vmatprep.subr.mxu0 0.0
      %3553 = vmatpush1.msra.mxu0 0.0
      %3554 = vmatprep.subr.mxu0 0.0
      %3555 = vmatpush1.msra.mxu0 0.0
      %3556 = vmatprep.subr.mxu0 0.0
      %3557 = vmatpush1.msra.mxu0 0.0
      %3558 = vmatprep.subr.mxu0 0.0
      %3559 = vmatpush1.msra.mxu0 0.0
      %3560 = vmatprep.subr.mxu0 0.0
      %3561 = vmatpush1.msra.mxu0 0.0
      %3562 = vmatprep.subr.mxu0 0.0
      %3563 = vmatpush1.msra.mxu0 0.0
      %3564 = vmatprep.subr.mxu0 0.0
      %3565 = vmatpush1.msra.mxu0 0.0
      %3566 = vmatprep.subr.mxu0 0.0
      %3567 = vmatpush1.msra.mxu0 0.0
      %3568 = vmatprep.subr.mxu0 0.0
      %3569 = vmatpush1.msra.mxu0 0.0
      %3570 = vmatprep.subr.mxu0 0.0
      %3571 = vmatpush1.msra.mxu0 0.0
      %3572 = vmatprep.subr.mxu0 0.0
      %3573 = vmatpush1.msra.mxu0 0.0
      %3574 = vmatprep.subr.mxu0 0.0
      %3575 = vmatpush1.msra.mxu0 0.0
      %3576 = vmatprep.subr.mxu0 0.0
      %3577 = vmatpush1.msra.mxu0 0.0
      %3578 = vmatprep.subr.mxu0 0.0
      %3579 = vmatpush1.msra.mxu0 0.0
      %3580 = vmatprep.subr.mxu0 0.0
      %3581 = vmatpush1.msra.mxu0 0.0
      %3582 = vmatprep.subr.mxu0 0.0
      %3583 = vmatpush1.msra.mxu0 0.0
      %3584 = vmatprep.subr.mxu0 0.0
      %3585 = vmatpush1.msra.mxu0 0.0
      %3586 = vmatprep.subr.mxu0 0.0
      %3587 = vmatpush1.msra.mxu0 0.0
      %3588 = vmatprep.subr.mxu0 0.0
      %3589 = vmatpush1.msra.mxu0 0.0
      %3590 = vmatprep.subr.mxu0 0.0
      %3591 = vmatpush1.msra.mxu0 0.0
      %3592 = vmatprep.subr.mxu0 0.0
      %3593 = vmatpush1.msra.mxu0 0.0
      %3594 = vmatprep.subr.mxu0 0.0
      %3595 = vmatpush1.msra.mxu0 0.0
      %3596 = vmatprep.subr.mxu0 0.0
      %3597 = vmatpush1.msra.mxu0 0.0
      %3598 = vmatprep.subr.mxu0 0.0
      %3599 = vmatpush1.msra.mxu0 0.0
      %3600 = vmatprep.mubr.f32.mxu0 0.0
      %3601 = vmatmul.mubr.f32.gmra.mrb[0].mxu0 %v3392
      %v3602 = vpop.f32.mrb[0].mxu0
      %v3603 = vadd.f32 0.0, %v3602
      %v3604 = vpop.f32.mrb[0].mxu0
      %v3605 = vadd.f32 0.0, %v3604
      %3606 = vdwg.mxu0
      %3607 = vmatprep.subr.mxu0 %v1582
      %3608 = vmatpush1.msra.mxu0 %v1581
      %3609 = vmatprep.subr.mxu0 %v434
      %3610 = vmatpush1.msra.mxu0 %v433
      %3611 = vmatprep.subr.mxu0 0.0
      %3612 = vmatpush1.msra.mxu0 0.0
      %3613 = vmatprep.subr.mxu0 0.0
      %3614 = vmatpush1.msra.mxu0 0.0
      %3615 = vmatprep.subr.mxu0 0.0
      %3616 = vmatpush1.msra.mxu0 0.0
      %3617 = vmatprep.subr.mxu0 0.0
      %3618 = vmatpush1.msra.mxu0 0.0
      %3619 = vmatprep.subr.mxu0 0.0
      %3620 = vmatpush1.msra.mxu0 0.0
      %3621 = vmatprep.subr.mxu0 0.0
      %3622 = vmatpush1.msra.mxu0 0.0
      %3623 = vmatprep.subr.mxu0 0.0
      %3624 = vmatpush1.msra.mxu0 0.0
      %3625 = vmatprep.subr.mxu0 0.0
      %3626 = vmatpush1.msra.mxu0 0.0
      %3627 = vmatprep.subr.mxu0 0.0
      %3628 = vmatpush1.msra.mxu0 0.0
      %3629 = vmatprep.subr.mxu0 0.0
      %3630 = vmatpush1.msra.mxu0 0.0
      %3631 = vmatprep.subr.mxu0 0.0
      %3632 = vmatpush1.msra.mxu0 0.0
      %3633 = vmatprep.subr.mxu0 0.0
      %3634 = vmatpush1.msra.mxu0 0.0
      %3635 = vmatprep.subr.mxu0 0.0
      %3636 = vmatpush1.msra.mxu0 0.0
      %3637 = vmatprep.subr.mxu0 0.0
      %3638 = vmatpush1.msra.mxu0 0.0
      %3639 = vmatprep.subr.mxu0 0.0
      %3640 = vmatpush1.msra.mxu0 0.0
      %3641 = vmatprep.subr.mxu0 0.0
      %3642 = vmatpush1.msra.mxu0 0.0
      %3643 = vmatprep.subr.mxu0 0.0
      %3644 = vmatpush1.msra.mxu0 0.0
      %3645 = vmatprep.subr.mxu0 0.0
      %3646 = vmatpush1.msra.mxu0 0.0
      %3647 = vmatprep.subr.mxu0 0.0
      %3648 = vmatpush1.msra.mxu0 0.0
      %3649 = vmatprep.subr.mxu0 0.0
      %3650 = vmatpush1.msra.mxu0 0.0
      %3651 = vmatprep.subr.mxu0 0.0
      %3652 = vmatpush1.msra.mxu0 0.0
      %3653 = vmatprep.subr.mxu0 0.0
      %3654 = vmatpush1.msra.mxu0 0.0
      %3655 = vmatprep.subr.mxu0 0.0
      %3656 = vmatpush1.msra.mxu0 0.0
      %3657 = vmatprep.subr.mxu0 0.0
      %3658 = vmatpush1.msra.mxu0 0.0
      %3659 = vmatprep.subr.mxu0 0.0
      %3660 = vmatpush1.msra.mxu0 0.0
      %3661 = vmatprep.subr.mxu0 0.0
      %3662 = vmatpush1.msra.mxu0 0.0
      %3663 = vmatprep.subr.mxu0 0.0
      %3664 = vmatpush1.msra.mxu0 0.0
      %3665 = vmatprep.subr.mxu0 0.0
      %3666 = vmatpush1.msra.mxu0 0.0
      %3667 = vmatprep.subr.mxu0 0.0
      %3668 = vmatpush1.msra.mxu0 0.0
      %3669 = vmatprep.subr.mxu0 0.0
      %3670 = vmatpush1.msra.mxu0 0.0
      %3671 = vmatprep.mubr.f32.mxu0 0.0
      %3672 = vmatmul.mubr.f32.gmra.mrb[0].mxu0 %v3392
      %v3673 = vpop.f32.mrb[0].mxu0
      %v3674 = vadd.f32 0.0, %v3673
      %v3675 = vpop.f32.mrb[0].mxu0
      %v3676 = vadd.f32 0.0, %v3675
      %3677 = vdwg.mxu0
      %3678 = vmatprep.subr.mxu0 %v1584
      %3679 = vmatpush1.msra.mxu0 %v1583
      %3680 = vmatprep.subr.mxu0 %v436
      %3681 = vmatpush1.msra.mxu0 %v435
      %3682 = vmatprep.subr.mxu0 0.0
      %3683 = vmatpush1.msra.mxu0 0.0
      %3684 = vmatprep.subr.mxu0 0.0
      %3685 = vmatpush1.msra.mxu0 0.0
      %3686 = vmatprep.subr.mxu0 0.0
      %3687 = vmatpush1.msra.mxu0 0.0
      %3688 = vmatprep.subr.mxu0 0.0
      %3689 = vmatpush1.msra.mxu0 0.0
      %3690 = vmatprep.subr.mxu0 0.0
      %3691 = vmatpush1.msra.mxu0 0.0
      %3692 = vmatprep.subr.mxu0 0.0
      %3693 = vmatpush1.msra.mxu0 0.0
      %3694 = vmatprep.subr.mxu0 0.0
      %3695 = vmatpush1.msra.mxu0 0.0
      %3696 = vmatprep.subr.mxu0 0.0
      %3697 = vmatpush1.msra.mxu0 0.0
      %3698 = vmatprep.subr.mxu0 0.0
      %3699 = vmatpush1.msra.mxu0 0.0
      %3700 = vmatprep.subr.mxu0 0.0
      %3701 = vmatpush1.msra.mxu0 0.0
      %3702 = vmatprep.subr.mxu0 0.0
      %3703 = vmatpush1.msra.mxu0 0.0
      %3704 = vmatprep.subr.mxu0 0.0
      %3705 = vmatpush1.msra.mxu0 0.0
      %3706 = vmatprep.subr.mxu0 0.0
      %3707 = vmatpush1.msra.mxu0 0.0
      %3708 = vmatprep.subr.mxu0 0.0
      %3709 = vmatpush1.msra.mxu0 0.0
      %3710 = vmatprep.subr.mxu0 0.0
      %3711 = vmatpush1.msra.mxu0 0.0
      %3712 = vmatprep.subr.mxu0 0.0
      %3713 = vmatpush1.msra.mxu0 0.0
      %3714 = vmatprep.subr.mxu0 0.0
      %3715 = vmatpush1.msra.mxu0 0.0
      %3716 = vmatprep.subr.mxu0 0.0
      %3717 = vmatpush1.msra.mxu0 0.0
      %3718 = vmatprep.subr.mxu0 0.0
      %3719 = vmatpush1.msra.mxu0 0.0
      %3720 = vmatprep.subr.mxu0 0.0
      %3721 = vmatpush1.msra.mxu0 0.0
      %3722 = vmatprep.subr.mxu0 0.0
      %3723 = vmatpush1.msra.mxu0 0.0
      %3724 = vmatprep.subr.mxu0 0.0
      %3725 = vmatpush1.msra.mxu0 0.0
      %3726 = vmatprep.subr.mxu0 0.0
      %3727 = vmatpush1.msra.mxu0 0.0
      %3728 = vmatprep.subr.mxu0 0.0
      %3729 = vmatpush1.msra.mxu0 0.0
      %3730 = vmatprep.subr.mxu0 0.0
      %3731 = vmatpush1.msra.mxu0 0.0
      %3732 = vmatprep.subr.mxu0 0.0
      %3733 = vmatpush1.msra.mxu0 0.0
      %3734 = vmatprep.subr.mxu0 0.0
      %3735 = vmatpush1.msra.mxu0 0.0
      %3736 = vmatprep.subr.mxu0 0.0
      %3737 = vmatpush1.msra.mxu0 0.0
      %3738 = vmatprep.subr.mxu0 0.0
      %3739 = vmatpush1.msra.mxu0 0.0
      %3740 = vmatprep.subr.mxu0 0.0
      %3741 = vmatpush1.msra.mxu0 0.0
      %3742 = vmatprep.mubr.f32.mxu0 0.0
      %3743 = vmatmul.mubr.f32.gmra.mrb[0].mxu0 %v3392
      %v3744 = vpop.f32.mrb[0].mxu0
      %v3745 = vadd.f32 0.0, %v3744
      %v3746 = vpop.f32.mrb[0].mxu0
      %v3747 = vadd.f32 0.0, %v3746
      %3748 = vdwg.mxu0
      %v3749 = vadd.f32 %v3102, %v3461
      %v3750 = vadd.f32 %v3104, %v3463
      %v3751 = vadd.f32 %v3173, %v3532
      %v3752 = vadd.f32 %v3175, %v3534
      %v3753 = vadd.f32 %v3244, %v3603
      %v3754 = vadd.f32 %v3246, %v3605
      %v3755 = vadd.f32 %v3315, %v3674
      %v3756 = vadd.f32 %v3317, %v3676
      %v3757 = vadd.f32 %v3386, %v3745
      %v3758 = vadd.f32 %v3388, %v3747
      %v3759 = vld [vmem:[%s9] sm:$0xff]
      %3761 = vset.pattern.permute.xlu0 0
      %3762 = vperm.xlu0 %3761, %v3759
      %v3763 = vpop.permute.xlu0 %3762
      %v3765 = vadd.f32 %v3749, %v3763
      %v3766 = vadd.f32 %v3750, %v3763
      %v3767 = vadd.f32 %v3751, %v3763
      %v3768 = vadd.f32 %v3752, %v3763
      %v3769 = vadd.f32 %v3753, %v3763
      %v3770 = vadd.f32 %v3754, %v3763
      %v3771 = vadd.f32 %v3755, %v3763
      %v3772 = vadd.f32 %v3756, %v3763
      %v3773 = vadd.f32 %v3757, %v3763
      %v3774 = vadd.f32 %v3758, %v3763
      %v3775 = vmax.f32 %v3765, 0.0
      %v3776 = vmax.f32 %v3766, 0.0
      %v3777 = vmax.f32 %v3767, 0.0
      %v3778 = vmax.f32 %v3768, 0.0
      %v3779 = vmax.f32 %v3769, 0.0
      %v3780 = vmax.f32 %v3770, 0.0
      %v3781 = vmax.f32 %v3771, 0.0
      %v3782 = vmax.f32 %v3772, 0.0
      %v3783 = vmax.f32 %v3773, 0.0
      %v3784 = vmax.f32 %v3774, 0.0
      %v3785 = vmul.f32 %v3775, %v1528
      %v3786 = vmul.f32 %v3776, %v1532
      %v3787 = vmul.f32 %v3777, %v1536
      %v3788 = vmul.f32 %v3778, %v1540
      %v3789 = vmul.f32 %v3779, %v1544
      %v3790 = vmul.f32 %v3780, %v1548
      %v3791 = vmul.f32 %v3781, %v1552
      %v3792 = vmul.f32 %v3782, %v1556
      %v3793 = vmul.f32 %v3783, %v1560
      %v3794 = vmul.f32 %v3784, %v1564
      %3795 = vst [vmem:[%s406] sm:$0xff] %v3785
      %3796 = vst [vmem:[%s406 + $0x8] sm:$0xff] %v3786
      %3797 = vst [vmem:[%s406 + $0x10] sm:$0xff] %v3787
      %3798 = vst [vmem:[%s406 + $0x18] sm:$0xff] %v3788
      %3799 = vst [vmem:[%s406 + $0x20] sm:$0xff] %v3789
      %3800 = vst [vmem:[%s406 + $0x28] sm:$0xff] %v3790
      %3801 = vst [vmem:[%s406 + $0x30] sm:$0xff] %v3791
      %3802 = vst [vmem:[%s406 + $0x38] sm:$0xff] %v3792
      %3803 = vst [vmem:[%s406 + $0x40] sm:$0xff] %v3793
      %vm3804 = vcmask 31744
      %3805 = vst.msk [vmem:[%s406 + $0x48] sm:$0xff] %vm3804, %v3794
      %p3806 = scmp.lt.s32.totalorder %s22, 1
      %s3807 = scalar_select %p3806, %s22, 1
      %s3808 = smul.addr %s3807, 10
      %s3809 = smul.addr %s3808, 8
      %s3810 = scalar_lea.vmem %s11, %s3809
      // Predicated region
      $region65: #{decoder_forward.4} parent=63 // pred_check
        %p3811 = pneg %p281
      $region66: #{decoder_forward.4} parent=63 // pred_check_branch
        %3813 = sbr.rel (%p3811) target = $region68
      $region67: #{decoder_forward.4} parent=63 // pred_region
        _
      $region68: #{decoder_forward.4} parent=63 // pred_fallthru
        _
    $region64: #{decoder_forward.4} parent=5 // pred_fallthru
      _
    %p3814 = scmp.le.s32.totalorder 2, %s17
    // Predicated region
    $region69: #{decoder_forward.4} parent=5 // pred_check
      %p3815 = pneg %p3814
    $region70: #{decoder_forward.4} parent=5 // pred_check_branch
      %3817 = sbr.rel (%p3815) target = $region72
    $region71: #{decoder_forward.4} parent=5 // pred_region
      %s3818 = ssub.s32 %s17, 2
      // Predicated region
      $region73: #{decoder_forward.4} parent=71 // pred_check
        %p3819 = pneg %p287
      $region74: #{decoder_forward.4} parent=71 // pred_check_branch
        %3821 = sbr.rel (%p3819) target = $region76
      $region75: #{decoder_forward.4} parent=71 // pred_region
        %p3822 = scmp.lt.s32.totalorder %s23, 1
        %s3823 = scalar_select %p3822, %s23, 1
        %s3824 = smul.addr %s3823, 10
        %s3825 = smul.addr %s3824, 8
        %s3826 = scalar_lea.vmem %s11, %s3825
      $region76: #{decoder_forward.4} parent=71 // pred_fallthru
        _
    $region72: #{decoder_forward.4} parent=5 // pred_fallthru
      _
  $region6: #{decoder_forward.4} parent=0 // loop_footer
    %s21 = sadd.s32 1, %s17
  $region7: #{decoder_forward.4} parent=0 // loop_footer_branch
    %16 = sbr.rel target = $region3
  $region8: #{decoder_forward.4} parent=0 // loop_exit
    _

// kernel: decoder_forward.5
$region0: #{decoder_forward.5}
  #allocation0 [shape = 'u32[]', space=smem, size = 0x4, offset = 0x4, fixed_abs, tag = 'smem constant byte address 0x4 - core index']
  #allocation1 [shape = 'u32[144,128]{1,0:T(1,128)}', space=vmem, size = 0x12000, scoped, tag = 'internal scratch']
  %s0 = inlined_call_operand.vmem [shape: f32[2,8,1156], index: 0, kind: input, shape index: {}]
  %s1 = inlined_call_operand.vmem [shape: f32[3,72], index: 1, kind: input, shape index: {}]
  %s2 = inlined_call_operand.vmem [shape: f32[3,1], index: 2, kind: input, shape index: {}]
  %s3 = inlined_call_operand.vmem [shape: f32[3,27], index: 3, kind: input, shape index: {}]
  %s4 = inlined_call_operand.vmem [shape: f32[3,1], index: 4, kind: input, shape index: {}]
  %s5 = inlined_call_operand.vmem [shape: f32[3,8], index: 5, kind: input, shape index: {}]
  %s6 = inlined_call_operand.vmem [shape: f32[3,1], index: 6, kind: input, shape index: {}]
  %s7 = inlined_call_operand.vmem [shape: f32[1,1156], index: 7, kind: input, shape index: {}]
  %s8 = inlined_call_operand.vmem [shape: f32[2,3,1156], index: 8, kind: output, shape index: {}]
  %s9 = sld [smem:[#allocation0]]
  $region65: #{decoder_forward.5} parent=0
    _
  %s11 = ssub.s32 1, %s9
  %s12 = scalar_select 0, %s11, %s9
  loop: start=0, step=1, limit=4
  $region2: #{decoder_forward.5} parent=0 // loop_pre_header
    _
  $region3: #{decoder_forward.5} parent=0 // loop_header
    %s14 = sphi 0, %s18
    %p15 = scmp.ge.s32.totalorder %s14, 4
    %s24 = sphi 0, %s26
    %s27 = sphi 0, %s24
    %s28 = sphi 0, %s27
    %s44 = sphi 0, %s28
    %s48 = sphi 0, %s48
    %s50 = sphi 0, %s48
    %s51 = sphi 0, %s50
    %s65 = sphi 0, %s51
    %s69 = sphi 0, %s69
    %s71 = sphi 0, %s69
    %s72 = sphi 0, %s71
    %s86 = sphi 0, %s72
    %s90 = sphi 0, %s90
    %s92 = sphi 0, %s90
    %s93 = sphi 0, %s92
    %s107 = sphi 0, %s93
    %s111 = sphi 0, %s111
    %s113 = sphi 0, %s111
    %s114 = sphi 0, %s113
    %s128 = sphi 0, %s114
    %s132 = sphi 0, %s132
    %s134 = sphi 0, %s132
    %s135 = sphi 0, %s134
    %s149 = sphi 0, %s135
    %s153 = sphi 0, %s153
    %s155 = sphi 0, %s153
    %s156 = sphi 0, %s155
    %s170 = sphi 0, %s156
    %s174 = sphi 0, %s174
    %s176 = sphi 0, %s174
    %s177 = sphi 0, %s176
    %s191 = sphi 0, %s177
    %s197 = sphi 0, %s199
    %s200 = sphi 0, %s197
    %s201 = sphi 0, %s200
    %s217 = sphi 0, %s201
  $region4: #{decoder_forward.5} parent=0 // loop_header_branch
    %17 = sbr.rel (%p15) target = $region8
  $region5: #{decoder_forward.5} parent=0 // loop_body
    %s19 = ssub.s32 %s14, 1
    %s20 = ssub.s32 %s14, 2
    %s21 = sadd.s32 %s14, 1
    %s22 = ssub.s32 %s14, %s21
    %p23 = scmp.eq.s32.totalorder %s22, 0
    %s25 = sadd.s32 %s24, 1
    %s26 = scalar_select %p23, %s24, %s25
    %p29 = pneg %p23
    %p30 = scmp.eq.s32.totalorder %s14, 1
    %p31 = por %p29, %p30
    %p32 = scmp.ne.s32.totalorder %s24, %s27
    %p33 = scmp.eq.s32.totalorder %s14, 0
    %p34 = por %p32, %p33
    %p35 = scmp.ne.s32.totalorder %s24, %s27
    %p36 = scmp.eq.s32.totalorder %s19, 1
    %p37 = por %p35, %p36
    %p38 = scmp.ne.s32.totalorder %s27, %s28
    %p39 = scmp.eq.s32.totalorder %s19, 0
    %p40 = por %p38, %p39
    %p41 = scmp.ne.s32.totalorder %s27, %s28
    %p42 = scmp.eq.s32.totalorder %s20, 1
    %p43 = por %p41, %p42
    %p45 = scmp.ne.s32.totalorder %s28, %s44
    %p46 = scmp.eq.s32.totalorder %s20, 0
    %p47 = por %p45, %p46
    %s49 = sadd.s32 %s48, 1
    %p52 = scmp.eq.s32.totalorder %s14, 1
    %p53 = scmp.ne.s32.totalorder %s48, %s50
    %p54 = scmp.eq.s32.totalorder %s14, 0
    %p55 = por %p53, %p54
    %p56 = scmp.ne.s32.totalorder %s48, %s50
    %p57 = scmp.eq.s32.totalorder %s19, 1
    %p58 = por %p56, %p57
    %p59 = scmp.ne.s32.totalorder %s50, %s51
    %p60 = scmp.eq.s32.totalorder %s19, 0
    %p61 = por %p59, %p60
    %p62 = scmp.ne.s32.totalorder %s50, %s51
    %p63 = scmp.eq.s32.totalorder %s20, 1
    %p64 = por %p62, %p63
    %p66 = scmp.ne.s32.totalorder %s51, %s65
    %p67 = scmp.eq.s32.totalorder %s20, 0
    %p68 = por %p66, %p67
    %s70 = sadd.s32 %s69, 1
    %p73 = scmp.eq.s32.totalorder %s14, 1
    %p74 = scmp.ne.s32.totalorder %s69, %s71
    %p75 = scmp.eq.s32.totalorder %s14, 0
    %p76 = por %p74, %p75
    %p77 = scmp.ne.s32.totalorder %s69, %s71
    %p78 = scmp.eq.s32.totalorder %s19, 1
    %p79 = por %p77, %p78
    %p80 = scmp.ne.s32.totalorder %s71, %s72
    %p81 = scmp.eq.s32.totalorder %s19, 0
    %p82 = por %p80, %p81
    %p83 = scmp.ne.s32.totalorder %s71, %s72
    %p84 = scmp.eq.s32.totalorder %s20, 1
    %p85 = por %p83, %p84
    %p87 = scmp.ne.s32.totalorder %s72, %s86
    %p88 = scmp.eq.s32.totalorder %s20, 0
    %p89 = por %p87, %p88
    %s91 = sadd.s32 %s90, 1
    %p94 = scmp.eq.s32.totalorder %s14, 1
    %p95 = scmp.ne.s32.totalorder %s90, %s92
    %p96 = scmp.eq.s32.totalorder %s14, 0
    %p97 = por %p95, %p96
    %p98 = scmp.ne.s32.totalorder %s90, %s92
    %p99 = scmp.eq.s32.totalorder %s19, 1
    %p100 = por %p98, %p99
    %p101 = scmp.ne.s32.totalorder %s92, %s93
    %p102 = scmp.eq.s32.totalorder %s19, 0
    %p103 = por %p101, %p102
    %p104 = scmp.ne.s32.totalorder %s92, %s93
    %p105 = scmp.eq.s32.totalorder %s20, 1
    %p106 = por %p104, %p105
    %p108 = scmp.ne.s32.totalorder %s93, %s107
    %p109 = scmp.eq.s32.totalorder %s20, 0
    %p110 = por %p108, %p109
    %s112 = sadd.s32 %s111, 1
    %p115 = scmp.eq.s32.totalorder %s14, 1
    %p116 = scmp.ne.s32.totalorder %s111, %s113
    %p117 = scmp.eq.s32.totalorder %s14, 0
    %p118 = por %p116, %p117
    %p119 = scmp.ne.s32.totalorder %s111, %s113
    %p120 = scmp.eq.s32.totalorder %s19, 1
    %p121 = por %p119, %p120
    %p122 = scmp.ne.s32.totalorder %s113, %s114
    %p123 = scmp.eq.s32.totalorder %s19, 0
    %p124 = por %p122, %p123
    %p125 = scmp.ne.s32.totalorder %s113, %s114
    %p126 = scmp.eq.s32.totalorder %s20, 1
    %p127 = por %p125, %p126
    %p129 = scmp.ne.s32.totalorder %s114, %s128
    %p130 = scmp.eq.s32.totalorder %s20, 0
    %p131 = por %p129, %p130
    %s133 = sadd.s32 %s132, 1
    %p136 = scmp.eq.s32.totalorder %s14, 1
    %p137 = scmp.ne.s32.totalorder %s132, %s134
    %p138 = scmp.eq.s32.totalorder %s14, 0
    %p139 = por %p137, %p138
    %p140 = scmp.ne.s32.totalorder %s132, %s134
    %p141 = scmp.eq.s32.totalorder %s19, 1
    %p142 = por %p140, %p141
    %p143 = scmp.ne.s32.totalorder %s134, %s135
    %p144 = scmp.eq.s32.totalorder %s19, 0
    %p145 = por %p143, %p144
    %p146 = scmp.ne.s32.totalorder %s134, %s135
    %p147 = scmp.eq.s32.totalorder %s20, 1
    %p148 = por %p146, %p147
    %p150 = scmp.ne.s32.totalorder %s135, %s149
    %p151 = scmp.eq.s32.totalorder %s20, 0
    %p152 = por %p150, %p151
    %s154 = sadd.s32 %s153, 1
    %p157 = scmp.eq.s32.totalorder %s14, 1
    %p158 = scmp.ne.s32.totalorder %s153, %s155
    %p159 = scmp.eq.s32.totalorder %s14, 0
    %p160 = por %p158, %p159
    %p161 = scmp.ne.s32.totalorder %s153, %s155
    %p162 = scmp.eq.s32.totalorder %s19, 1
    %p163 = por %p161, %p162
    %p164 = scmp.ne.s32.totalorder %s155, %s156
    %p165 = scmp.eq.s32.totalorder %s19, 0
    %p166 = por %p164, %p165
    %p167 = scmp.ne.s32.totalorder %s155, %s156
    %p168 = scmp.eq.s32.totalorder %s20, 1
    %p169 = por %p167, %p168
    %p171 = scmp.ne.s32.totalorder %s156, %s170
    %p172 = scmp.eq.s32.totalorder %s20, 0
    %p173 = por %p171, %p172
    %s175 = sadd.s32 %s174, 1
    %p178 = scmp.eq.s32.totalorder %s14, 1
    %p179 = scmp.ne.s32.totalorder %s174, %s176
    %p180 = scmp.eq.s32.totalorder %s14, 0
    %p181 = por %p179, %p180
    %p182 = scmp.ne.s32.totalorder %s174, %s176
    %p183 = scmp.eq.s32.totalorder %s19, 1
    %p184 = por %p182, %p183
    %p185 = scmp.ne.s32.totalorder %s176, %s177
    %p186 = scmp.eq.s32.totalorder %s19, 0
    %p187 = por %p185, %p186
    %p188 = scmp.ne.s32.totalorder %s176, %s177
    %p189 = scmp.eq.s32.totalorder %s20, 1
    %p190 = por %p188, %p189
    %p192 = scmp.ne.s32.totalorder %s177, %s191
    %p193 = scmp.eq.s32.totalorder %s20, 0
    %p194 = por %p192, %p193
    %s195 = ssub.s32 %s14, %s21
    %p196 = scmp.eq.s32.totalorder %s195, 0
    %s198 = sadd.s32 %s197, 1
    %s199 = scalar_select %p196, %s197, %s198
    %p202 = pneg %p196
    %p203 = scmp.eq.s32.totalorder %s14, 1
    %p204 = por %p202, %p203
    %p205 = scmp.ne.s32.totalorder %s197, %s200
    %p206 = scmp.eq.s32.totalorder %s14, 0
    %p207 = por %p205, %p206
    %p208 = scmp.ne.s32.totalorder %s197, %s200
    %p209 = scmp.eq.s32.totalorder %s19, 1
    %p210 = por %p208, %p209
    %p211 = scmp.ne.s32.totalorder %s200, %s201
    %p212 = scmp.eq.s32.totalorder %s19, 0
    %p213 = por %p211, %p212
    %p214 = scmp.ne.s32.totalorder %s200, %s201
    %p215 = scmp.eq.s32.totalorder %s20, 1
    %p216 = por %p214, %p215
    %p218 = scmp.ne.s32.totalorder %s201, %s217
    %p219 = scmp.eq.s32.totalorder %s20, 0
    %p220 = por %p218, %p219
    %p221 = scmp.le.s32.totalorder 1, %s14
    %p222 = scmp.lt.s32.totalorder %s14, 3
    %p223 = pnand %p221, %p222
    %p224 = pneg %p223
    // Predicated region
    $region9: #{decoder_forward.5} parent=5 // pred_check
      _
    $region10: #{decoder_forward.5} parent=5 // pred_check_branch
      %226 = sbr.rel (%p223) target = $region12
    $region11: #{decoder_forward.5} parent=5 // pred_region
      %s227 = ssub.s32 %s14, 1
      // Predicated region
      $region13: #{decoder_forward.5} parent=11 // pred_check
        %p228 = pneg %p61
      $region14: #{decoder_forward.5} parent=11 // pred_check_branch
        %230 = sbr.rel (%p228) target = $region16
      $region15: #{decoder_forward.5} parent=11 // pred_region
        _
      $region16: #{decoder_forward.5} parent=11 // pred_fallthru
        _
      // Predicated region
      $region17: #{decoder_forward.5} parent=11 // pred_check
        %p231 = pneg %p82
      $region18: #{decoder_forward.5} parent=11 // pred_check_branch
        %233 = sbr.rel (%p231) target = $region20
      $region19: #{decoder_forward.5} parent=11 // pred_region
        _
      $region20: #{decoder_forward.5} parent=11 // pred_fallthru
        _
      // Predicated region
      $region21: #{decoder_forward.5} parent=11 // pred_check
        %p234 = pneg %p103
      $region22: #{decoder_forward.5} parent=11 // pred_check_branch
        %236 = sbr.rel (%p234) target = $region24
      $region23: #{decoder_forward.5} parent=11 // pred_region
        _
      $region24: #{decoder_forward.5} parent=11 // pred_fallthru
        _
      // Predicated region
      $region25: #{decoder_forward.5} parent=11 // pred_check
        %p237 = pneg %p124
      $region26: #{decoder_forward.5} parent=11 // pred_check_branch
        %239 = sbr.rel (%p237) target = $region28
      $region27: #{decoder_forward.5} parent=11 // pred_region
        _
      $region28: #{decoder_forward.5} parent=11 // pred_fallthru
        _
      // Predicated region
      $region29: #{decoder_forward.5} parent=11 // pred_check
        %p240 = pneg %p145
      $region30: #{decoder_forward.5} parent=11 // pred_check_branch
        %242 = sbr.rel (%p240) target = $region32
      $region31: #{decoder_forward.5} parent=11 // pred_region
        _
      $region32: #{decoder_forward.5} parent=11 // pred_fallthru
        _
      // Predicated region
      $region33: #{decoder_forward.5} parent=11 // pred_check
        %p243 = pneg %p166
      $region34: #{decoder_forward.5} parent=11 // pred_check_branch
        %245 = sbr.rel (%p243) target = $region36
      $region35: #{decoder_forward.5} parent=11 // pred_region
        _
      $region36: #{decoder_forward.5} parent=11 // pred_fallthru
        _
      // Predicated region
      $region37: #{decoder_forward.5} parent=11 // pred_check
        %p246 = pneg %p187
      $region38: #{decoder_forward.5} parent=11 // pred_check_branch
        %248 = sbr.rel (%p246) target = $region40
      $region39: #{decoder_forward.5} parent=11 // pred_region
        _
      $region40: #{decoder_forward.5} parent=11 // pred_fallthru
        _
    $region12: #{decoder_forward.5} parent=5 // pred_fallthru
      _
    %p249 = scmp.lt.s32.totalorder %s14, 2
    // Predicated region
    $region41: #{decoder_forward.5} parent=5 // pred_check
      %p250 = pneg %p249
    $region42: #{decoder_forward.5} parent=5 // pred_check_branch
      %252 = sbr.rel (%p250) target = $region44
    $region43: #{decoder_forward.5} parent=5 // pred_region
      // Predicated region
      $region45: #{decoder_forward.5} parent=43 // pred_check
        %p253 = pneg %p34
      $region46: #{decoder_forward.5} parent=43 // pred_check_branch
        %255 = sbr.rel (%p253) target = $region48
      $region47: #{decoder_forward.5} parent=43 // pred_region
        %p256 = scmp.lt.s32.totalorder %s14, 1
        %s257 = scalar_select %p256, %s14, 1
        %s258 = smul.addr %s257, 10
        %s259 = smul.addr %s258, 8
        %s260 = scalar_lea.vmem %s0, %s259
      $region48: #{decoder_forward.5} parent=43 // pred_fallthru
        _
    $region44: #{decoder_forward.5} parent=5 // pred_fallthru
      _
    %p261 = scmp.le.s32.totalorder 1, %s14
    %p262 = scmp.lt.s32.totalorder %s14, 3
    %p263 = pnand %p261, %p262
    %p264 = pneg %p263
    // Predicated region
    $region49: #{decoder_forward.5} parent=5 // pred_check
      _
    $region50: #{decoder_forward.5} parent=5 // pred_check_branch
      %266 = sbr.rel (%p263) target = $region52
    $region51: #{decoder_forward.5} parent=5 // pred_region
      %s267 = ssub.s32 %s14, 1
      %p268 = scmp.lt.s32.totalorder %s19, 1
      %s269 = scalar_select %p268, %s19, 1
      %s270 = smul.addr %s269, 10
      %s271 = smul.addr %s270, 8
      %s272 = scalar_lea.vmem %s0, %s271
      %p273 = pneg %p40
      %p274 = pneg %p37
      %p275 = pneg %p61
      %p276 = pneg %p58
      %p277 = pneg %p82
      %p278 = pneg %p79
      %p279 = pneg %p103
      %p280 = pneg %p100
      %p281 = pneg %p124
      %p282 = pneg %p121
      %p283 = pneg %p145
      %p284 = pneg %p142
      %p285 = pneg %p166
      %p286 = pneg %p163
      %p287 = pneg %p187
      %p288 = pneg %p184
      %p289 = pneg %p213
      %p290 = pneg %p210
      %p291 = scmp.lt.s32.totalorder %s19, 1
      %s292 = scalar_select %p291, %s19, 1
      %s293 = smul.addr %s292, 10
      %s294 = smul.addr %s293, 4
      %s295 = scalar_lea.vmem %s8, %s294
      %p296 = scmp.lt.s32.totalorder %s19, 1
      %s297 = scalar_select %p296, %s19, 1
      %s298 = smul.addr %s297, 10
      %s299 = smul.addr %s298, 8
      %s300 = scalar_lea.vmem %s0, %s299
      %p301 = scmp.lt.s32.totalorder %s19, 1
      %s302 = scalar_select %p301, %s19, 1
      %s303 = smul.addr %s302, 10
      %s304 = smul.addr %s303, 4
      %s305 = scalar_lea.vmem %s8, %s304
      %v306 = vld [vmem:[%s300] sm:$0xff]
      %v307 = vld [vmem:[%s300 + $0x8] sm:$0xff]
      %v308 = vld [vmem:[%s300 + $0x10] sm:$0xff]
      %v309 = vld [vmem:[%s300 + $0x18] sm:$0xff]
      %v310 = vld [vmem:[%s300 + $0x20] sm:$0xff]
      %v311 = vld [vmem:[%s300 + $0x28] sm:$0xff]
      %v312 = vld [vmem:[%s300 + $0x30] sm:$0xff]
      %v313 = vld [vmem:[%s300 + $0x38] sm:$0xff]
      %v314 = vld [vmem:[%s300 + $0x40] sm:$0xff]
      %v315 = vld [vmem:[%s300 + $0x48] sm:$0xff]
      %v316 = vld [vmem:[%s7] sm:$0xff]
      %v317 = vld [vmem:[%s7 + $0x8] sm:$0x3]
      %v318 = vld [vmem:[%s1] sm:$0x7]
      %321 = vrot.lane.b32.xlu0 %v314, 31
      %v322 = vpop.permute.xlu0 %321
      %323 = vrot.lane.b32.xlu0 %v315, 31
      %v324 = vpop.permute.xlu0 %323
      %vm325 = vcmask 252928
      %v326 = vsel %vm325, %v322, %v324
      %336 = vrot.lane.b32.xlu0 %v306, 35
      %v337 = vpop.permute.xlu0 %336
      %338 = vrot.lane.b32.xlu0 %v307, 35
      %v339 = vpop.permute.xlu0 %338
      %340 = vrot.lane.b32.xlu0 %v308, 35
      %v341 = vpop.permute.xlu0 %340
      %342 = vrot.lane.b32.xlu0 %v309, 35
      %v343 = vpop.permute.xlu0 %342
      %344 = vrot.lane.b32.xlu0 %v310, 35
      %v345 = vpop.permute.xlu0 %344
      %346 = vrot.lane.b32.xlu0 %v311, 35
      %v347 = vpop.permute.xlu0 %346
      %348 = vrot.lane.b32.xlu0 %v312, 35
      %v349 = vpop.permute.xlu0 %348
      %350 = vrot.lane.b32.xlu0 %v313, 35
      %v351 = vpop.permute.xlu0 %350
      %352 = vrot.lane.b32.xlu0 %v314, 35
      %v353 = vpop.permute.xlu0 %352
      %vm354 = vcmask 285696
      %v355 = vsel %vm354, %v337, %v339
      %v356 = vsel %vm354, %v339, %v341
      %v357 = vsel %vm354, %v341, %v343
      %v358 = vsel %vm354, %v343, %v345
      %v359 = vsel %vm354, %v345, %v347
      %v360 = vsel %vm354, %v347, %v349
      %v361 = vsel %vm354, %v349, %v351
      %v362 = vsel %vm354, %v351, %v353
      %v373 = vsel %vm354, %v326, %v337
      %374 = vrot.lane.b32.xlu0 %v314, 30
      %v375 = vpop.permute.xlu0 %374
      %376 = vrot.lane.b32.xlu0 %v315, 30
      %v377 = vpop.permute.xlu0 %376
      %vm378 = vcmask 244736
      %v379 = vsel %vm378, %v375, %v377
      %381 = vrot.lane.b32.xlu0 %v306, 34
      %v382 = vpop.permute.xlu0 %381
      %383 = vrot.lane.b32.xlu0 %v307, 34
      %v384 = vpop.permute.xlu0 %383
      %385 = vrot.lane.b32.xlu0 %v308, 34
      %v386 = vpop.permute.xlu0 %385
      %387 = vrot.lane.b32.xlu0 %v309, 34
      %v388 = vpop.permute.xlu0 %387
      %389 = vrot.lane.b32.xlu0 %v310, 34
      %v390 = vpop.permute.xlu0 %389
      %391 = vrot.lane.b32.xlu0 %v311, 34
      %v392 = vpop.permute.xlu0 %391
      %393 = vrot.lane.b32.xlu0 %v312, 34
      %v394 = vpop.permute.xlu0 %393
      %395 = vrot.lane.b32.xlu0 %v313, 34
      %v396 = vpop.permute.xlu0 %395
      %397 = vrot.lane.b32.xlu0 %v314, 34
      %v398 = vpop.permute.xlu0 %397
      %vm399 = vcmask 277504
      %v400 = vsel %vm399, %v382, %v384
      %v401 = vsel %vm399, %v384, %v386
      %v402 = vsel %vm399, %v386, %v388
      %v403 = vsel %vm399, %v388, %v390
      %v404 = vsel %vm399, %v390, %v392
      %v405 = vsel %vm399, %v392, %v394
      %v406 = vsel %vm399, %v394, %v396
      %v407 = vsel %vm399, %v396, %v398
      %v418 = vsel %vm399, %v379, %v382
      %419 = vrot.lane.b32.xlu0 %v314, 29
      %v420 = vpop.permute.xlu0 %419
      %421 = vrot.lane.b32.xlu0 %v315, 29
      %v422 = vpop.permute.xlu0 %421
      %vm423 = vcmask 236544
      %v424 = vsel %vm423, %v420, %v422
      %426 = vrot.lane.b32.xlu0 %v306, 33
      %v427 = vpop.permute.xlu0 %426
      %428 = vrot.lane.b32.xlu0 %v307, 33
      %v429 = vpop.permute.xlu0 %428
      %430 = vrot.lane.b32.xlu0 %v308, 33
      %v431 = vpop.permute.xlu0 %430
      %432 = vrot.lane.b32.xlu0 %v309, 33
      %v433 = vpop.permute.xlu0 %432
      %434 = vrot.lane.b32.xlu0 %v310, 33
      %v435 = vpop.permute.xlu0 %434
      %436 = vrot.lane.b32.xlu0 %v311, 33
      %v437 = vpop.permute.xlu0 %436
      %438 = vrot.lane.b32.xlu0 %v312, 33
      %v439 = vpop.permute.xlu0 %438
      %440 = vrot.lane.b32.xlu0 %v313, 33
      %v441 = vpop.permute.xlu0 %440
      %442 = vrot.lane.b32.xlu0 %v314, 33
      %v443 = vpop.permute.xlu0 %442
      %vm444 = vcmask 269312
      %v445 = vsel %vm444, %v427, %v429
      %v446 = vsel %vm444, %v429, %v431
      %v447 = vsel %vm444, %v431, %v433
      %v448 = vsel %vm444, %v433, %v435
      %v449 = vsel %vm444, %v435, %v437
      %v450 = vsel %vm444, %v437, %v439
      %v451 = vsel %vm444, %v439, %v441
      %v452 = vsel %vm444, %v441, %v443
      %v463 = vsel %vm444, %v424, %v427
      %464 = vrot.lane.b32.xlu0 %v315, 125
      %v465 = vpop.permute.xlu0 %464
      %467 = vrot.lane.b32.xlu0 %v306, 1
      %v468 = vpop.permute.xlu0 %467
      %469 = vrot.lane.b32.xlu0 %v307, 1
      %v470 = vpop.permute.xlu0 %469
      %471 = vrot.lane.b32.xlu0 %v308, 1
      %v472 = vpop.permute.xlu0 %471
      %473 = vrot.lane.b32.xlu0 %v309, 1
      %v474 = vpop.permute.xlu0 %473
      %475 = vrot.lane.b32.xlu0 %v310, 1
      %v476 = vpop.permute.xlu0 %475
      %477 = vrot.lane.b32.xlu0 %v311, 1
      %v478 = vpop.permute.xlu0 %477
      %479 = vrot.lane.b32.xlu0 %v312, 1
      %v480 = vpop.permute.xlu0 %479
      %481 = vrot.lane.b32.xlu0 %v313, 1
      %v482 = vpop.permute.xlu0 %481
      %483 = vrot.lane.b32.xlu0 %v314, 1
      %v484 = vpop.permute.xlu0 %483
      %485 = vrot.lane.b32.xlu0 %v315, 1
      %v486 = vpop.permute.xlu0 %485
      %vm487 = vcmask 7168
      %v488 = vsel %vm487, %v468, %v470
      %v489 = vsel %vm487, %v470, %v472
      %v490 = vsel %vm487, %v472, %v474
      %v491 = vsel %vm487, %v474, %v476
      %v492 = vsel %vm487, %v476, %v478
      %v493 = vsel %vm487, %v478, %v480
      %v494 = vsel %vm487, %v480, %v482
      %v495 = vsel %vm487, %v482, %v484
      %v496 = vsel %vm487, %v484, %v486
      %v507 = vsel %vm487, %v465, %v468
      %508 = vrot.lane.b32.xlu0 %v306, 127
      %v509 = vpop.permute.xlu0 %508
      %510 = vrot.lane.b32.xlu0 %v307, 127
      %v511 = vpop.permute.xlu0 %510
      %512 = vrot.lane.b32.xlu0 %v308, 127
      %v513 = vpop.permute.xlu0 %512
      %514 = vrot.lane.b32.xlu0 %v309, 127
      %v515 = vpop.permute.xlu0 %514
      %516 = vrot.lane.b32.xlu0 %v310, 127
      %v517 = vpop.permute.xlu0 %516
      %518 = vrot.lane.b32.xlu0 %v311, 127
      %v519 = vpop.permute.xlu0 %518
      %520 = vrot.lane.b32.xlu0 %v312, 127
      %v521 = vpop.permute.xlu0 %520
      %522 = vrot.lane.b32.xlu0 %v313, 127
      %v523 = vpop.permute.xlu0 %522
      %524 = vrot.lane.b32.xlu0 %v314, 127
      %v525 = vpop.permute.xlu0 %524
      %526 = vrot.lane.b32.xlu0 %v315, 127
      %v527 = vpop.permute.xlu0 %526
      %vm528 = vcmask 1039360
      %v529 = vsel %vm528, %v509, %v511
      %v530 = vsel %vm528, %v511, %v513
      %v531 = vsel %vm528, %v513, %v515
      %v532 = vsel %vm528, %v515, %v517
      %v533 = vsel %vm528, %v517, %v519
      %v534 = vsel %vm528, %v519, %v521
      %v535 = vsel %vm528, %v521, %v523
      %v536 = vsel %vm528, %v523, %v525
      %v537 = vsel %vm528, %v525, %v527
      %548 = vrot.lane.b32.xlu0 %v306, 3
      %v549 = vpop.permute.xlu0 %548
      %vm551 = vcmask 23552
      %v552 = vsel %vm551, %v527, %v549
      %553 = vrot.lane.b32.xlu0 %v306, 95
      %v554 = vpop.permute.xlu0 %553
      %555 = vrot.lane.b32.xlu0 %v307, 95
      %v556 = vpop.permute.xlu0 %555
      %557 = vrot.lane.b32.xlu0 %v308, 95
      %v558 = vpop.permute.xlu0 %557
      %559 = vrot.lane.b32.xlu0 %v309, 95
      %v560 = vpop.permute.xlu0 %559
      %561 = vrot.lane.b32.xlu0 %v310, 95
      %v562 = vpop.permute.xlu0 %561
      %563 = vrot.lane.b32.xlu0 %v311, 95
      %v564 = vpop.permute.xlu0 %563
      %565 = vrot.lane.b32.xlu0 %v312, 95
      %v566 = vpop.permute.xlu0 %565
      %567 = vrot.lane.b32.xlu0 %v313, 95
      %v568 = vpop.permute.xlu0 %567
      %569 = vrot.lane.b32.xlu0 %v314, 95
      %v570 = vpop.permute.xlu0 %569
      %571 = vrot.lane.b32.xlu0 %v315, 95
      %v572 = vpop.permute.xlu0 %571
      %vm573 = vcmask 777216
      %v574 = vsel %vm573, %v554, %v556
      %v575 = vsel %vm573, %v556, %v558
      %v576 = vsel %vm573, %v558, %v560
      %v577 = vsel %vm573, %v560, %v562
      %v578 = vsel %vm573, %v562, %v564
      %v579 = vsel %vm573, %v564, %v566
      %v580 = vsel %vm573, %v566, %v568
      %v581 = vsel %vm573, %v568, %v570
      %v582 = vsel %vm573, %v570, %v572
      %592 = vrot.lane.b32.xlu0 %v306, 99
      %v593 = vpop.permute.xlu0 %592
      %vm595 = vcmask 809984
      %v596 = vsel %vm595, %v582, %v593
      %597 = vrot.lane.b32.xlu0 %v306, 94
      %v598 = vpop.permute.xlu0 %597
      %599 = vrot.lane.b32.xlu0 %v307, 94
      %v600 = vpop.permute.xlu0 %599
      %601 = vrot.lane.b32.xlu0 %v308, 94
      %v602 = vpop.permute.xlu0 %601
      %603 = vrot.lane.b32.xlu0 %v309, 94
      %v604 = vpop.permute.xlu0 %603
      %605 = vrot.lane.b32.xlu0 %v310, 94
      %v606 = vpop.permute.xlu0 %605
      %607 = vrot.lane.b32.xlu0 %v311, 94
      %v608 = vpop.permute.xlu0 %607
      %609 = vrot.lane.b32.xlu0 %v312, 94
      %v610 = vpop.permute.xlu0 %609
      %611 = vrot.lane.b32.xlu0 %v313, 94
      %v612 = vpop.permute.xlu0 %611
      %613 = vrot.lane.b32.xlu0 %v314, 94
      %v614 = vpop.permute.xlu0 %613
      %615 = vrot.lane.b32.xlu0 %v315, 94
      %v616 = vpop.permute.xlu0 %615
      %vm617 = vcmask 769024
      %v618 = vsel %vm617, %v598, %v600
      %v619 = vsel %vm617, %v600, %v602
      %v620 = vsel %vm617, %v602, %v604
      %v621 = vsel %vm617, %v604, %v606
      %v622 = vsel %vm617, %v606, %v608
      %v623 = vsel %vm617, %v608, %v610
      %v624 = vsel %vm617, %v610, %v612
      %v625 = vsel %vm617, %v612, %v614
      %v626 = vsel %vm617, %v614, %v616
      %636 = vrot.lane.b32.xlu0 %v306, 98
      %v637 = vpop.permute.xlu0 %636
      %vm639 = vcmask 801792
      %v640 = vsel %vm639, %v626, %v637
      %641 = vrot.lane.b32.xlu0 %v306, 93
      %v642 = vpop.permute.xlu0 %641
      %643 = vrot.lane.b32.xlu0 %v307, 93
      %v644 = vpop.permute.xlu0 %643
      %645 = vrot.lane.b32.xlu0 %v308, 93
      %v646 = vpop.permute.xlu0 %645
      %647 = vrot.lane.b32.xlu0 %v309, 93
      %v648 = vpop.permute.xlu0 %647
      %649 = vrot.lane.b32.xlu0 %v310, 93
      %v650 = vpop.permute.xlu0 %649
      %651 = vrot.lane.b32.xlu0 %v311, 93
      %v652 = vpop.permute.xlu0 %651
      %653 = vrot.lane.b32.xlu0 %v312, 93
      %v654 = vpop.permute.xlu0 %653
      %655 = vrot.lane.b32.xlu0 %v313, 93
      %v656 = vpop.permute.xlu0 %655
      %657 = vrot.lane.b32.xlu0 %v314, 93
      %v658 = vpop.permute.xlu0 %657
      %659 = vrot.lane.b32.xlu0 %v315, 93
      %v660 = vpop.permute.xlu0 %659
      %vm661 = vcmask 760832
      %v662 = vsel %vm661, %v642, %v644
      %v663 = vsel %vm661, %v644, %v646
      %v664 = vsel %vm661, %v646, %v648
      %v665 = vsel %vm661, %v648, %v650
      %v666 = vsel %vm661, %v650, %v652
      %v667 = vsel %vm661, %v652, %v654
      %v668 = vsel %vm661, %v654, %v656
      %v669 = vsel %vm661, %v656, %v658
      %v670 = vsel %vm661, %v658, %v660
      %680 = vrot.lane.b32.xlu0 %v306, 97
      %v681 = vpop.permute.xlu0 %680
      %vm683 = vcmask 793600
      %v684 = vsel %vm683, %v670, %v681
      %v685 = vld [vmem:[%s2] sm:$0x7]
      %687 = vset.pattern.permute.xlu0 0
      %688 = vperm.xlu0 %687, %v685
      %v689 = vpop.permute.xlu0 %688
      %vm691 = vcmask 588800
      %v693 = vsel %vm691, %v318, 0
      %695 = vmatprep.subr.mxu0 %v355
      %696 = vmatpush1.msra.mxu0 %v373
      %697 = vmatprep.subr.mxu0 %v400
      %698 = vmatpush1.msra.mxu0 %v418
      %699 = vmatprep.subr.mxu0 %v445
      %700 = vmatpush1.msra.mxu0 %v463
      %701 = vmatprep.subr.mxu0 %v488
      %702 = vmatpush1.msra.mxu0 %v507
      %703 = vmatprep.subr.mxu0 %v307
      %704 = vmatpush1.msra.mxu0 %v306
      %705 = vmatprep.subr.mxu0 %v530
      %706 = vmatpush1.msra.mxu0 %v529
      %707 = vmatprep.subr.mxu0 %v575
      %708 = vmatpush1.msra.mxu0 %v574
      %709 = vmatprep.subr.mxu0 %v619
      %710 = vmatpush1.msra.mxu0 %v618
      %711 = vmatprep.subr.mxu0 %v663
      %712 = vmatpush1.msra.mxu0 %v662
      %713 = vmatprep.subr.mxu0 0.0
      %714 = vmatpush1.msra.mxu0 0.0
      %715 = vmatprep.subr.mxu0 0.0
      %716 = vmatpush1.msra.mxu0 0.0
      %717 = vmatprep.subr.mxu0 0.0
      %718 = vmatpush1.msra.mxu0 0.0
      %719 = vmatprep.subr.mxu0 0.0
      %720 = vmatpush1.msra.mxu0 0.0
      %721 = vmatprep.subr.mxu0 0.0
      %722 = vmatpush1.msra.mxu0 0.0
      %723 = vmatprep.subr.mxu0 0.0
      %724 = vmatpush1.msra.mxu0 0.0
      %725 = vmatprep.subr.mxu0 0.0
      %726 = vmatpush1.msra.mxu0 0.0
      %727 = vmatprep.subr.mxu0 0.0
      %728 = vmatpush1.msra.mxu0 0.0
      %729 = vmatprep.subr.mxu0 0.0
      %730 = vmatpush1.msra.mxu0 0.0
      %731 = vmatprep.subr.mxu0 0.0
      %732 = vmatpush1.msra.mxu0 0.0
      %733 = vmatprep.subr.mxu0 0.0
      %734 = vmatpush1.msra.mxu0 0.0
      %735 = vmatprep.subr.mxu0 0.0
      %736 = vmatpush1.msra.mxu0 0.0
      %737 = vmatprep.subr.mxu0 0.0
      %738 = vmatpush1.msra.mxu0 0.0
      %739 = vmatprep.subr.mxu0 0.0
      %740 = vmatpush1.msra.mxu0 0.0
      %741 = vmatprep.subr.mxu0 0.0
      %742 = vmatpush1.msra.mxu0 0.0
      %743 = vmatprep.subr.mxu0 0.0
      %744 = vmatpush1.msra.mxu0 0.0
      %745 = vmatprep.subr.mxu0 0.0
      %746 = vmatpush1.msra.mxu0 0.0
      %747 = vmatprep.subr.mxu0 0.0
      %748 = vmatpush1.msra.mxu0 0.0
      %749 = vmatprep.subr.mxu0 0.0
      %750 = vmatpush1.msra.mxu0 0.0
      %751 = vmatprep.subr.mxu0 0.0
      %752 = vmatpush1.msra.mxu0 0.0
      %753 = vmatprep.subr.mxu0 0.0
      %754 = vmatpush1.msra.mxu0 0.0
      %755 = vmatprep.subr.mxu0 0.0
      %756 = vmatpush1.msra.mxu0 0.0
      %757 = vmatprep.subr.mxu0 0.0
      %758 = vmatpush1.msra.mxu0 0.0
      %759 = vmatprep.mubr.f32.mxu0 0.0
      %760 = vmatmul.mubr.f32.gmra.mrb[0].mxu0 %v693
      %v761 = vpop.f32.mrb[0].mxu0
      %v762 = vadd.f32 %v689, %v761
      %v763 = vpop.f32.mrb[0].mxu0
      %v764 = vadd.f32 %v689, %v763
      %765 = vdwg.mxu0
      %766 = vmatprep.subr.mxu0 %v357
      %767 = vmatpush1.msra.mxu0 %v356
      %768 = vmatprep.subr.mxu0 %v402
      %769 = vmatpush1.msra.mxu0 %v401
      %770 = vmatprep.subr.mxu0 %v447
      %771 = vmatpush1.msra.mxu0 %v446
      %772 = vmatprep.subr.mxu0 %v490
      %773 = vmatpush1.msra.mxu0 %v489
      %774 = vmatprep.subr.mxu0 %v309
      %775 = vmatpush1.msra.mxu0 %v308
      %776 = vmatprep.subr.mxu0 %v532
      %777 = vmatpush1.msra.mxu0 %v531
      %778 = vmatprep.subr.mxu0 %v577
      %779 = vmatpush1.msra.mxu0 %v576
      %780 = vmatprep.subr.mxu0 %v621
      %781 = vmatpush1.msra.mxu0 %v620
      %782 = vmatprep.subr.mxu0 %v665
      %783 = vmatpush1.msra.mxu0 %v664
      %784 = vmatprep.subr.mxu0 0.0
      %785 = vmatpush1.msra.mxu0 0.0
      %786 = vmatprep.subr.mxu0 0.0
      %787 = vmatpush1.msra.mxu0 0.0
      %788 = vmatprep.subr.mxu0 0.0
      %789 = vmatpush1.msra.mxu0 0.0
      %790 = vmatprep.subr.mxu0 0.0
      %791 = vmatpush1.msra.mxu0 0.0
      %792 = vmatprep.subr.mxu0 0.0
      %793 = vmatpush1.msra.mxu0 0.0
      %794 = vmatprep.subr.mxu0 0.0
      %795 = vmatpush1.msra.mxu0 0.0
      %796 = vmatprep.subr.mxu0 0.0
      %797 = vmatpush1.msra.mxu0 0.0
      %798 = vmatprep.subr.mxu0 0.0
      %799 = vmatpush1.msra.mxu0 0.0
      %800 = vmatprep.subr.mxu0 0.0
      %801 = vmatpush1.msra.mxu0 0.0
      %802 = vmatprep.subr.mxu0 0.0
      %803 = vmatpush1.msra.mxu0 0.0
      %804 = vmatprep.subr.mxu0 0.0
      %805 = vmatpush1.msra.mxu0 0.0
      %806 = vmatprep.subr.mxu0 0.0
      %807 = vmatpush1.msra.mxu0 0.0
      %808 = vmatprep.subr.mxu0 0.0
      %809 = vmatpush1.msra.mxu0 0.0
      %810 = vmatprep.subr.mxu0 0.0
      %811 = vmatpush1.msra.mxu0 0.0
      %812 = vmatprep.subr.mxu0 0.0
      %813 = vmatpush1.msra.mxu0 0.0
      %814 = vmatprep.subr.mxu0 0.0
      %815 = vmatpush1.msra.mxu0 0.0
      %816 = vmatprep.subr.mxu0 0.0
      %817 = vmatpush1.msra.mxu0 0.0
      %818 = vmatprep.subr.mxu0 0.0
      %819 = vmatpush1.msra.mxu0 0.0
      %820 = vmatprep.subr.mxu0 0.0
      %821 = vmatpush1.msra.mxu0 0.0
      %822 = vmatprep.subr.mxu0 0.0
      %823 = vmatpush1.msra.mxu0 0.0
      %824 = vmatprep.subr.mxu0 0.0
      %825 = vmatpush1.msra.mxu0 0.0
      %826 = vmatprep.subr.mxu0 0.0
      %827 = vmatpush1.msra.mxu0 0.0
      %828 = vmatprep.subr.mxu0 0.0
      %829 = vmatpush1.msra.mxu0 0.0
      %830 = vmatprep.mubr.f32.mxu0 0.0
      %831 = vmatmul.mubr.f32.gmra.mrb[0].mxu0 %v693
      %v832 = vpop.f32.mrb[0].mxu0
      %v833 = vadd.f32 %v689, %v832
      %v834 = vpop.f32.mrb[0].mxu0
      %v835 = vadd.f32 %v689, %v834
      %836 = vdwg.mxu0
      %837 = vmatprep.subr.mxu0 %v359
      %838 = vmatpush1.msra.mxu0 %v358
      %839 = vmatprep.subr.mxu0 %v404
      %840 = vmatpush1.msra.mxu0 %v403
      %841 = vmatprep.subr.mxu0 %v449
      %842 = vmatpush1.msra.mxu0 %v448
      %843 = vmatprep.subr.mxu0 %v492
      %844 = vmatpush1.msra.mxu0 %v491
      %845 = vmatprep.subr.mxu0 %v311
      %846 = vmatpush1.msra.mxu0 %v310
      %847 = vmatprep.subr.mxu0 %v534
      %848 = vmatpush1.msra.mxu0 %v533
      %849 = vmatprep.subr.mxu0 %v579
      %850 = vmatpush1.msra.mxu0 %v578
      %851 = vmatprep.subr.mxu0 %v623
      %852 = vmatpush1.msra.mxu0 %v622
      %853 = vmatprep.subr.mxu0 %v667
      %854 = vmatpush1.msra.mxu0 %v666
      %855 = vmatprep.subr.mxu0 0.0
      %856 = vmatpush1.msra.mxu0 0.0
      %857 = vmatprep.subr.mxu0 0.0
      %858 = vmatpush1.msra.mxu0 0.0
      %859 = vmatprep.subr.mxu0 0.0
      %860 = vmatpush1.msra.mxu0 0.0
      %861 = vmatprep.subr.mxu0 0.0
      %862 = vmatpush1.msra.mxu0 0.0
      %863 = vmatprep.subr.mxu0 0.0
      %864 = vmatpush1.msra.mxu0 0.0
      %865 = vmatprep.subr.mxu0 0.0
      %866 = vmatpush1.msra.mxu0 0.0
      %867 = vmatprep.subr.mxu0 0.0
      %868 = vmatpush1.msra.mxu0 0.0
      %869 = vmatprep.subr.mxu0 0.0
      %870 = vmatpush1.msra.mxu0 0.0
      %871 = vmatprep.subr.mxu0 0.0
      %872 = vmatpush1.msra.mxu0 0.0
      %873 = vmatprep.subr.mxu0 0.0
      %874 = vmatpush1.msra.mxu0 0.0
      %875 = vmatprep.subr.mxu0 0.0
      %876 = vmatpush1.msra.mxu0 0.0
      %877 = vmatprep.subr.mxu0 0.0
      %878 = vmatpush1.msra.mxu0 0.0
      %879 = vmatprep.subr.mxu0 0.0
      %880 = vmatpush1.msra.mxu0 0.0
      %881 = vmatprep.subr.mxu0 0.0
      %882 = vmatpush1.msra.mxu0 0.0
      %883 = vmatprep.subr.mxu0 0.0
      %884 = vmatpush1.msra.mxu0 0.0
      %885 = vmatprep.subr.mxu0 0.0
      %886 = vmatpush1.msra.mxu0 0.0
      %887 = vmatprep.subr.mxu0 0.0
      %888 = vmatpush1.msra.mxu0 0.0
      %889 = vmatprep.subr.mxu0 0.0
      %890 = vmatpush1.msra.mxu0 0.0
      %891 = vmatprep.subr.mxu0 0.0
      %892 = vmatpush1.msra.mxu0 0.0
      %893 = vmatprep.subr.mxu0 0.0
      %894 = vmatpush1.msra.mxu0 0.0
      %895 = vmatprep.subr.mxu0 0.0
      %896 = vmatpush1.msra.mxu0 0.0
      %897 = vmatprep.subr.mxu0 0.0
      %898 = vmatpush1.msra.mxu0 0.0
      %899 = vmatprep.subr.mxu0 0.0
      %900 = vmatpush1.msra.mxu0 0.0
      %901 = vmatprep.mubr.f32.mxu0 0.0
      %902 = vmatmul.mubr.f32.gmra.mrb[0].mxu0 %v693
      %v903 = vpop.f32.mrb[0].mxu0
      %v904 = vadd.f32 %v689, %v903
      %v905 = vpop.f32.mrb[0].mxu0
      %v906 = vadd.f32 %v689, %v905
      %907 = vdwg.mxu0
      %908 = vmatprep.subr.mxu0 %v361
      %909 = vmatpush1.msra.mxu0 %v360
      %910 = vmatprep.subr.mxu0 %v406
      %911 = vmatpush1.msra.mxu0 %v405
      %912 = vmatprep.subr.mxu0 %v451
      %913 = vmatpush1.msra.mxu0 %v450
      %914 = vmatprep.subr.mxu0 %v494
      %915 = vmatpush1.msra.mxu0 %v493
      %916 = vmatprep.subr.mxu0 %v313
      %917 = vmatpush1.msra.mxu0 %v312
      %918 = vmatprep.subr.mxu0 %v536
      %919 = vmatpush1.msra.mxu0 %v535
      %920 = vmatprep.subr.mxu0 %v581
      %921 = vmatpush1.msra.mxu0 %v580
      %922 = vmatprep.subr.mxu0 %v625
      %923 = vmatpush1.msra.mxu0 %v624
      %924 = vmatprep.subr.mxu0 %v669
      %925 = vmatpush1.msra.mxu0 %v668
      %926 = vmatprep.subr.mxu0 0.0
      %927 = vmatpush1.msra.mxu0 0.0
      %928 = vmatprep.subr.mxu0 0.0
      %929 = vmatpush1.msra.mxu0 0.0
      %930 = vmatprep.subr.mxu0 0.0
      %931 = vmatpush1.msra.mxu0 0.0
      %932 = vmatprep.subr.mxu0 0.0
      %933 = vmatpush1.msra.mxu0 0.0
      %934 = vmatprep.subr.mxu0 0.0
      %935 = vmatpush1.msra.mxu0 0.0
      %936 = vmatprep.subr.mxu0 0.0
      %937 = vmatpush1.msra.mxu0 0.0
      %938 = vmatprep.subr.mxu0 0.0
      %939 = vmatpush1.msra.mxu0 0.0
      %940 = vmatprep.subr.mxu0 0.0
      %941 = vmatpush1.msra.mxu0 0.0
      %942 = vmatprep.subr.mxu0 0.0
      %943 = vmatpush1.msra.mxu0 0.0
      %944 = vmatprep.subr.mxu0 0.0
      %945 = vmatpush1.msra.mxu0 0.0
      %946 = vmatprep.subr.mxu0 0.0
      %947 = vmatpush1.msra.mxu0 0.0
      %948 = vmatprep.subr.mxu0 0.0
      %949 = vmatpush1.msra.mxu0 0.0
      %950 = vmatprep.subr.mxu0 0.0
      %951 = vmatpush1.msra.mxu0 0.0
      %952 = vmatprep.subr.mxu0 0.0
      %953 = vmatpush1.msra.mxu0 0.0
      %954 = vmatprep.subr.mxu0 0.0
      %955 = vmatpush1.msra.mxu0 0.0
      %956 = vmatprep.subr.mxu0 0.0
      %957 = vmatpush1.msra.mxu0 0.0
      %958 = vmatprep.subr.mxu0 0.0
      %959 = vmatpush1.msra.mxu0 0.0
      %960 = vmatprep.subr.mxu0 0.0
      %961 = vmatpush1.msra.mxu0 0.0
      %962 = vmatprep.subr.mxu0 0.0
      %963 = vmatpush1.msra.mxu0 0.0
      %964 = vmatprep.subr.mxu0 0.0
      %965 = vmatpush1.msra.mxu0 0.0
      %966 = vmatprep.subr.mxu0 0.0
      %967 = vmatpush1.msra.mxu0 0.0
      %968 = vmatprep.subr.mxu0 0.0
      %969 = vmatpush1.msra.mxu0 0.0
      %970 = vmatprep.subr.mxu0 0.0
      %971 = vmatpush1.msra.mxu0 0.0
      %972 = vmatprep.mubr.f32.mxu0 0.0
      %973 = vmatmul.mubr.f32.gmra.mrb[0].mxu0 %v693
      %v974 = vpop.f32.mrb[0].mxu0
      %v975 = vadd.f32 %v689, %v974
      %v976 = vpop.f32.mrb[0].mxu0
      %v977 = vadd.f32 %v689, %v976
      %978 = vdwg.mxu0
      %979 = vmatprep.subr.mxu0 %v353
      %980 = vmatpush1.msra.mxu0 %v362
      %981 = vmatprep.subr.mxu0 %v398
      %982 = vmatpush1.msra.mxu0 %v407
      %983 = vmatprep.subr.mxu0 %v443
      %984 = vmatpush1.msra.mxu0 %v452
      %985 = vmatprep.subr.mxu0 %v496
      %986 = vmatpush1.msra.mxu0 %v495
      %987 = vmatprep.subr.mxu0 %v315
      %988 = vmatpush1.msra.mxu0 %v314
      %989 = vmatprep.subr.mxu0 %v552
      %990 = vmatpush1.msra.mxu0 %v537
      %991 = vmatprep.subr.mxu0 %v593
      %992 = vmatpush1.msra.mxu0 %v596
      %993 = vmatprep.subr.mxu0 %v637
      %994 = vmatpush1.msra.mxu0 %v640
      %995 = vmatprep.subr.mxu0 %v681
      %996 = vmatpush1.msra.mxu0 %v684
      %997 = vmatprep.subr.mxu0 0.0
      %998 = vmatpush1.msra.mxu0 0.0
      %999 = vmatprep.subr.mxu0 0.0
      %1000 = vmatpush1.msra.mxu0 0.0
      %1001 = vmatprep.subr.mxu0 0.0
      %1002 = vmatpush1.msra.mxu0 0.0
      %1003 = vmatprep.subr.mxu0 0.0
      %1004 = vmatpush1.msra.mxu0 0.0
      %1005 = vmatprep.subr.mxu0 0.0
      %1006 = vmatpush1.msra.mxu0 0.0
      %1007 = vmatprep.subr.mxu0 0.0
      %1008 = vmatpush1.msra.mxu0 0.0
      %1009 = vmatprep.subr.mxu0 0.0
      %1010 = vmatpush1.msra.mxu0 0.0
      %1011 = vmatprep.subr.mxu0 0.0
      %1012 = vmatpush1.msra.mxu0 0.0
      %1013 = vmatprep.subr.mxu0 0.0
      %1014 = vmatpush1.msra.mxu0 0.0
      %1015 = vmatprep.subr.mxu0 0.0
      %1016 = vmatpush1.msra.mxu0 0.0
      %1017 = vmatprep.subr.mxu0 0.0
      %1018 = vmatpush1.msra.mxu0 0.0
      %1019 = vmatprep.subr.mxu0 0.0
      %1020 = vmatpush1.msra.mxu0 0.0
      %1021 = vmatprep.subr.mxu0 0.0
      %1022 = vmatpush1.msra.mxu0 0.0
      %1023 = vmatprep.subr.mxu0 0.0
      %1024 = vmatpush1.msra.mxu0 0.0
      %1025 = vmatprep.subr.mxu0 0.0
      %1026 = vmatpush1.msra.mxu0 0.0
      %1027 = vmatprep.subr.mxu0 0.0
      %1028 = vmatpush1.msra.mxu0 0.0
      %1029 = vmatprep.subr.mxu0 0.0
      %1030 = vmatpush1.msra.mxu0 0.0
      %1031 = vmatprep.subr.mxu0 0.0
      %1032 = vmatpush1.msra.mxu0 0.0
      %1033 = vmatprep.subr.mxu0 0.0
      %1034 = vmatpush1.msra.mxu0 0.0
      %1035 = vmatprep.subr.mxu0 0.0
      %1036 = vmatpush1.msra.mxu0 0.0
      %1037 = vmatprep.subr.mxu0 0.0
      %1038 = vmatpush1.msra.mxu0 0.0
      %1039 = vmatprep.subr.mxu0 0.0
      %1040 = vmatpush1.msra.mxu0 0.0
      %1041 = vmatprep.subr.mxu0 0.0
      %1042 = vmatpush1.msra.mxu0 0.0
      %1043 = vmatprep.mubr.f32.mxu0 0.0
      %1044 = vmatmul.mubr.f32.gmra.mrb[0].mxu0 %v693
      %v1045 = vpop.f32.mrb[0].mxu0
      %v1046 = vadd.f32 %v689, %v1045
      %v1047 = vpop.f32.mrb[0].mxu0
      %v1048 = vadd.f32 %v689, %v1047
      %1049 = vdwg.mxu0
      %v1050 = vmax.f32 %v762, 0.0
      %v1051 = vmax.f32 %v764, 0.0
      %v1052 = vmax.f32 %v833, 0.0
      %v1053 = vmax.f32 %v835, 0.0
      %v1054 = vmax.f32 %v904, 0.0
      %v1055 = vmax.f32 %v906, 0.0
      %v1056 = vmax.f32 %v975, 0.0
      %v1057 = vmax.f32 %v977, 0.0
      %v1058 = vmax.f32 %v1046, 0.0
      %v1059 = vmax.f32 %v1048, 0.0
      %v1062 = vlaneseq
      %v1063 = vshrl.u32 %v1062, 7
      %v1064 = vsub.s32 0, %v1063
      %v1065 = vrot.slane %v316, %v1064
      %v1066 = vlaneseq
      %v1067 = vshrl.u32 %v1066, 7
      %v1068 = vsub.s32 1, %v1067
      %v1069 = vrot.slane %v316, %v1068
      %v1070 = vlaneseq
      %v1071 = vshrl.u32 %v1070, 7
      %v1072 = vsub.s32 2, %v1071
      %v1073 = vrot.slane %v316, %v1072
      %v1074 = vlaneseq
      %v1075 = vshrl.u32 %v1074, 7
      %v1076 = vsub.s32 3, %v1075
      %v1077 = vrot.slane %v316, %v1076
      %v1078 = vlaneseq
      %v1079 = vshrl.u32 %v1078, 7
      %v1080 = vsub.s32 4, %v1079
      %v1081 = vrot.slane %v316, %v1080
      %v1082 = vlaneseq
      %v1083 = vshrl.u32 %v1082, 7
      %v1084 = vsub.s32 5, %v1083
      %v1085 = vrot.slane %v316, %v1084
      %v1086 = vlaneseq
      %v1087 = vshrl.u32 %v1086, 7
      %v1088 = vsub.s32 6, %v1087
      %v1089 = vrot.slane %v316, %v1088
      %v1090 = vlaneseq
      %v1091 = vshrl.u32 %v1090, 7
      %v1092 = vsub.s32 7, %v1091
      %v1093 = vrot.slane %v316, %v1092
      %v1094 = vlaneseq
      %v1095 = vshrl.u32 %v1094, 7
      %v1096 = vsub.s32 0, %v1095
      %v1097 = vrot.slane %v317, %v1096
      %v1098 = vlaneseq
      %v1099 = vshrl.u32 %v1098, 7
      %v1100 = vsub.s32 1, %v1099
      %v1101 = vrot.slane %v317, %v1100
      %v1112 = vmul.f32 %v1050, %v1065
      %v1113 = vmul.f32 %v1051, %v1069
      %v1114 = vmul.f32 %v1052, %v1073
      %v1115 = vmul.f32 %v1053, %v1077
      %v1116 = vmul.f32 %v1054, %v1081
      %v1117 = vmul.f32 %v1055, %v1085
      %v1118 = vmul.f32 %v1056, %v1089
      %v1119 = vmul.f32 %v1057, %v1093
      %v1120 = vmul.f32 %v1058, %v1097
      %v1121 = vmul.f32 %v1059, %v1101
      %v1122 = vld [vmem:[%s3] sm:$0x7]
      %1125 = vrot.lane.b32.xlu0 %v1120, 31
      %v1126 = vpop.permute.xlu0 %1125
      %1127 = vrot.lane.b32.xlu0 %v1121, 31
      %v1128 = vpop.permute.xlu0 %1127
      %v1129 = vsel %vm325, %v1126, %v1128
      %1139 = vrot.lane.b32.xlu0 %v1112, 35
      %v1140 = vpop.permute.xlu0 %1139
      %1141 = vrot.lane.b32.xlu0 %v1113, 35
      %v1142 = vpop.permute.xlu0 %1141
      %1143 = vrot.lane.b32.xlu0 %v1114, 35
      %v1144 = vpop.permute.xlu0 %1143
      %1145 = vrot.lane.b32.xlu0 %v1115, 35
      %v1146 = vpop.permute.xlu0 %1145
      %1147 = vrot.lane.b32.xlu0 %v1116, 35
      %v1148 = vpop.permute.xlu0 %1147
      %1149 = vrot.lane.b32.xlu0 %v1117, 35
      %v1150 = vpop.permute.xlu0 %1149
      %1151 = vrot.lane.b32.xlu0 %v1118, 35
      %v1152 = vpop.permute.xlu0 %1151
      %1153 = vrot.lane.b32.xlu0 %v1119, 35
      %v1154 = vpop.permute.xlu0 %1153
      %1155 = vrot.lane.b32.xlu0 %v1120, 35
      %v1156 = vpop.permute.xlu0 %1155
      %v1157 = vsel %vm354, %v1140, %v1142
      %v1158 = vsel %vm354, %v1142, %v1144
      %v1159 = vsel %vm354, %v1144, %v1146
      %v1160 = vsel %vm354, %v1146, %v1148
      %v1161 = vsel %vm354, %v1148, %v1150
      %v1162 = vsel %vm354, %v1150, %v1152
      %v1163 = vsel %vm354, %v1152, %v1154
      %v1164 = vsel %vm354, %v1154, %v1156
      %v1175 = vsel %vm354, %v1129, %v1140
      %1176 = vrot.lane.b32.xlu0 %v1120, 30
      %v1177 = vpop.permute.xlu0 %1176
      %1178 = vrot.lane.b32.xlu0 %v1121, 30
      %v1179 = vpop.permute.xlu0 %1178
      %v1180 = vsel %vm378, %v1177, %v1179
      %1182 = vrot.lane.b32.xlu0 %v1112, 34
      %v1183 = vpop.permute.xlu0 %1182
      %1184 = vrot.lane.b32.xlu0 %v1113, 34
      %v1185 = vpop.permute.xlu0 %1184
      %1186 = vrot.lane.b32.xlu0 %v1114, 34
      %v1187 = vpop.permute.xlu0 %1186
      %1188 = vrot.lane.b32.xlu0 %v1115, 34
      %v1189 = vpop.permute.xlu0 %1188
      %1190 = vrot.lane.b32.xlu0 %v1116, 34
      %v1191 = vpop.permute.xlu0 %1190
      %1192 = vrot.lane.b32.xlu0 %v1117, 34
      %v1193 = vpop.permute.xlu0 %1192
      %1194 = vrot.lane.b32.xlu0 %v1118, 34
      %v1195 = vpop.permute.xlu0 %1194
      %1196 = vrot.lane.b32.xlu0 %v1119, 34
      %v1197 = vpop.permute.xlu0 %1196
      %1198 = vrot.lane.b32.xlu0 %v1120, 34
      %v1199 = vpop.permute.xlu0 %1198
      %v1200 = vsel %vm399, %v1183, %v1185
      %v1201 = vsel %vm399, %v1185, %v1187
      %v1202 = vsel %vm399, %v1187, %v1189
      %v1203 = vsel %vm399, %v1189, %v1191
      %v1204 = vsel %vm399, %v1191, %v1193
      %v1205 = vsel %vm399, %v1193, %v1195
      %v1206 = vsel %vm399, %v1195, %v1197
      %v1207 = vsel %vm399, %v1197, %v1199
      %v1209 = vsel %vm399, %v1180, %v1183
      %1210 = vrot.lane.b32.xlu0 %v1120, 29
      %v1211 = vpop.permute.xlu0 %1210
      %1212 = vrot.lane.b32.xlu0 %v1121, 29
      %v1213 = vpop.permute.xlu0 %1212
      %v1214 = vsel %vm423, %v1211, %v1213
      %1216 = vrot.lane.b32.xlu0 %v1112, 33
      %v1217 = vpop.permute.xlu0 %1216
      %1218 = vrot.lane.b32.xlu0 %v1113, 33
      %v1219 = vpop.permute.xlu0 %1218
      %1220 = vrot.lane.b32.xlu0 %v1114, 33
      %v1221 = vpop.permute.xlu0 %1220
      %1222 = vrot.lane.b32.xlu0 %v1115, 33
      %v1223 = vpop.permute.xlu0 %1222
      %1224 = vrot.lane.b32.xlu0 %v1116, 33
      %v1225 = vpop.permute.xlu0 %1224
      %1226 = vrot.lane.b32.xlu0 %v1117, 33
      %v1227 = vpop.permute.xlu0 %1226
      %1228 = vrot.lane.b32.xlu0 %v1118, 33
      %v1229 = vpop.permute.xlu0 %1228
      %1230 = vrot.lane.b32.xlu0 %v1119, 33
      %v1231 = vpop.permute.xlu0 %1230
      %1232 = vrot.lane.b32.xlu0 %v1120, 33
      %v1233 = vpop.permute.xlu0 %1232
      %v1234 = vsel %vm444, %v1217, %v1219
      %v1235 = vsel %vm444, %v1219, %v1221
      %v1236 = vsel %vm444, %v1221, %v1223
      %v1237 = vsel %vm444, %v1223, %v1225
      %v1238 = vsel %vm444, %v1225, %v1227
      %v1239 = vsel %vm444, %v1227, %v1229
      %v1240 = vsel %vm444, %v1229, %v1231
      %v1241 = vsel %vm444, %v1231, %v1233
      %v1243 = vsel %vm444, %v1214, %v1217
      %1244 = vrot.lane.b32.xlu0 %v1121, 125
      %v1245 = vpop.permute.xlu0 %1244
      %1247 = vrot.lane.b32.xlu0 %v1112, 1
      %v1248 = vpop.permute.xlu0 %1247
      %1249 = vrot.lane.b32.xlu0 %v1113, 1
      %v1250 = vpop.permute.xlu0 %1249
      %1251 = vrot.lane.b32.xlu0 %v1114, 1
      %v1252 = vpop.permute.xlu0 %1251
      %1253 = vrot.lane.b32.xlu0 %v1115, 1
      %v1254 = vpop.permute.xlu0 %1253
      %1255 = vrot.lane.b32.xlu0 %v1116, 1
      %v1256 = vpop.permute.xlu0 %1255
      %1257 = vrot.lane.b32.xlu0 %v1117, 1
      %v1258 = vpop.permute.xlu0 %1257
      %1259 = vrot.lane.b32.xlu0 %v1118, 1
      %v1260 = vpop.permute.xlu0 %1259
      %1261 = vrot.lane.b32.xlu0 %v1119, 1
      %v1262 = vpop.permute.xlu0 %1261
      %1263 = vrot.lane.b32.xlu0 %v1120, 1
      %v1264 = vpop.permute.xlu0 %1263
      %1265 = vrot.lane.b32.xlu0 %v1121, 1
      %v1266 = vpop.permute.xlu0 %1265
      %v1267 = vsel %vm487, %v1248, %v1250
      %v1268 = vsel %vm487, %v1250, %v1252
      %v1269 = vsel %vm487, %v1252, %v1254
      %v1270 = vsel %vm487, %v1254, %v1256
      %v1271 = vsel %vm487, %v1256, %v1258
      %v1272 = vsel %vm487, %v1258, %v1260
      %v1273 = vsel %vm487, %v1260, %v1262
      %v1274 = vsel %vm487, %v1262, %v1264
      %v1275 = vsel %vm487, %v1264, %v1266
      %v1277 = vsel %vm487, %v1245, %v1248
      %1278 = vrot.lane.b32.xlu0 %v1112, 127
      %v1279 = vpop.permute.xlu0 %1278
      %1280 = vrot.lane.b32.xlu0 %v1113, 127
      %v1281 = vpop.permute.xlu0 %1280
      %1282 = vrot.lane.b32.xlu0 %v1114, 127
      %v1283 = vpop.permute.xlu0 %1282
      %1284 = vrot.lane.b32.xlu0 %v1115, 127
      %v1285 = vpop.permute.xlu0 %1284
      %1286 = vrot.lane.b32.xlu0 %v1116, 127
      %v1287 = vpop.permute.xlu0 %1286
      %1288 = vrot.lane.b32.xlu0 %v1117, 127
      %v1289 = vpop.permute.xlu0 %1288
      %1290 = vrot.lane.b32.xlu0 %v1118, 127
      %v1291 = vpop.permute.xlu0 %1290
      %1292 = vrot.lane.b32.xlu0 %v1119, 127
      %v1293 = vpop.permute.xlu0 %1292
      %1294 = vrot.lane.b32.xlu0 %v1120, 127
      %v1295 = vpop.permute.xlu0 %1294
      %1296 = vrot.lane.b32.xlu0 %v1121, 127
      %v1297 = vpop.permute.xlu0 %1296
      %v1298 = vsel %vm528, %v1279, %v1281
      %v1299 = vsel %vm528, %v1281, %v1283
      %v1300 = vsel %vm528, %v1283, %v1285
      %v1301 = vsel %vm528, %v1285, %v1287
      %v1302 = vsel %vm528, %v1287, %v1289
      %v1303 = vsel %vm528, %v1289, %v1291
      %v1304 = vsel %vm528, %v1291, %v1293
      %v1305 = vsel %vm528, %v1293, %v1295
      %v1306 = vsel %vm528, %v1295, %v1297
      %1308 = vrot.lane.b32.xlu0 %v1112, 3
      %v1309 = vpop.permute.xlu0 %1308
      %v1311 = vsel %vm551, %v1297, %v1309
      %1312 = vrot.lane.b32.xlu0 %v1112, 95
      %v1313 = vpop.permute.xlu0 %1312
      %1314 = vrot.lane.b32.xlu0 %v1113, 95
      %v1315 = vpop.permute.xlu0 %1314
      %1316 = vrot.lane.b32.xlu0 %v1114, 95
      %v1317 = vpop.permute.xlu0 %1316
      %1318 = vrot.lane.b32.xlu0 %v1115, 95
      %v1319 = vpop.permute.xlu0 %1318
      %1320 = vrot.lane.b32.xlu0 %v1116, 95
      %v1321 = vpop.permute.xlu0 %1320
      %1322 = vrot.lane.b32.xlu0 %v1117, 95
      %v1323 = vpop.permute.xlu0 %1322
      %1324 = vrot.lane.b32.xlu0 %v1118, 95
      %v1325 = vpop.permute.xlu0 %1324
      %1326 = vrot.lane.b32.xlu0 %v1119, 95
      %v1327 = vpop.permute.xlu0 %1326
      %1328 = vrot.lane.b32.xlu0 %v1120, 95
      %v1329 = vpop.permute.xlu0 %1328
      %1330 = vrot.lane.b32.xlu0 %v1121, 95
      %v1331 = vpop.permute.xlu0 %1330
      %v1332 = vsel %vm573, %v1313, %v1315
      %v1333 = vsel %vm573, %v1315, %v1317
      %v1334 = vsel %vm573, %v1317, %v1319
      %v1335 = vsel %vm573, %v1319, %v1321
      %v1336 = vsel %vm573, %v1321, %v1323
      %v1337 = vsel %vm573, %v1323, %v1325
      %v1338 = vsel %vm573, %v1325, %v1327
      %v1339 = vsel %vm573, %v1327, %v1329
      %v1340 = vsel %vm573, %v1329, %v1331
      %1342 = vrot.lane.b32.xlu0 %v1112, 99
      %v1343 = vpop.permute.xlu0 %1342
      %v1345 = vsel %vm595, %v1340, %v1343
      %1346 = vrot.lane.b32.xlu0 %v1112, 94
      %v1347 = vpop.permute.xlu0 %1346
      %1348 = vrot.lane.b32.xlu0 %v1113, 94
      %v1349 = vpop.permute.xlu0 %1348
      %1350 = vrot.lane.b32.xlu0 %v1114, 94
      %v1351 = vpop.permute.xlu0 %1350
      %1352 = vrot.lane.b32.xlu0 %v1115, 94
      %v1353 = vpop.permute.xlu0 %1352
      %1354 = vrot.lane.b32.xlu0 %v1116, 94
      %v1355 = vpop.permute.xlu0 %1354
      %1356 = vrot.lane.b32.xlu0 %v1117, 94
      %v1357 = vpop.permute.xlu0 %1356
      %1358 = vrot.lane.b32.xlu0 %v1118, 94
      %v1359 = vpop.permute.xlu0 %1358
      %1360 = vrot.lane.b32.xlu0 %v1119, 94
      %v1361 = vpop.permute.xlu0 %1360
      %1362 = vrot.lane.b32.xlu0 %v1120, 94
      %v1363 = vpop.permute.xlu0 %1362
      %1364 = vrot.lane.b32.xlu0 %v1121, 94
      %v1365 = vpop.permute.xlu0 %1364
      %v1366 = vsel %vm617, %v1347, %v1349
      %v1367 = vsel %vm617, %v1349, %v1351
      %v1368 = vsel %vm617, %v1351, %v1353
      %v1369 = vsel %vm617, %v1353, %v1355
      %v1370 = vsel %vm617, %v1355, %v1357
      %v1371 = vsel %vm617, %v1357, %v1359
      %v1372 = vsel %vm617, %v1359, %v1361
      %v1373 = vsel %vm617, %v1361, %v1363
      %v1374 = vsel %vm617, %v1363, %v1365
      %1376 = vrot.lane.b32.xlu0 %v1112, 98
      %v1377 = vpop.permute.xlu0 %1376
      %v1379 = vsel %vm639, %v1374, %v1377
      %1380 = vrot.lane.b32.xlu0 %v1112, 93
      %v1381 = vpop.permute.xlu0 %1380
      %1382 = vrot.lane.b32.xlu0 %v1113, 93
      %v1383 = vpop.permute.xlu0 %1382
      %1384 = vrot.lane.b32.xlu0 %v1114, 93
      %v1385 = vpop.permute.xlu0 %1384
      %1386 = vrot.lane.b32.xlu0 %v1115, 93
      %v1387 = vpop.permute.xlu0 %1386
      %1388 = vrot.lane.b32.xlu0 %v1116, 93
      %v1389 = vpop.permute.xlu0 %1388
      %1390 = vrot.lane.b32.xlu0 %v1117, 93
      %v1391 = vpop.permute.xlu0 %1390
      %1392 = vrot.lane.b32.xlu0 %v1118, 93
      %v1393 = vpop.permute.xlu0 %1392
      %1394 = vrot.lane.b32.xlu0 %v1119, 93
      %v1395 = vpop.permute.xlu0 %1394
      %1396 = vrot.lane.b32.xlu0 %v1120, 93
      %v1397 = vpop.permute.xlu0 %1396
      %1398 = vrot.lane.b32.xlu0 %v1121, 93
      %v1399 = vpop.permute.xlu0 %1398
      %v1400 = vsel %vm661, %v1381, %v1383
      %v1401 = vsel %vm661, %v1383, %v1385
      %v1402 = vsel %vm661, %v1385, %v1387
      %v1403 = vsel %vm661, %v1387, %v1389
      %v1404 = vsel %vm661, %v1389, %v1391
      %v1405 = vsel %vm661, %v1391, %v1393
      %v1406 = vsel %vm661, %v1393, %v1395
      %v1407 = vsel %vm661, %v1395, %v1397
      %v1408 = vsel %vm661, %v1397, %v1399
      %1410 = vrot.lane.b32.xlu0 %v1112, 97
      %v1411 = vpop.permute.xlu0 %1410
      %v1413 = vsel %vm683, %v1408, %v1411
      %v1415 = vrot.slane %v1209, 5
      %v1416 = vrot.slane %v1200, 5
      %v1417 = vrot.slane %v1201, 5
      %v1418 = vrot.slane %v1202, 5
      %v1419 = vrot.slane %v1203, 5
      %v1420 = vrot.slane %v1204, 5
      %v1421 = vrot.slane %v1205, 5
      %v1422 = vrot.slane %v1206, 5
      %v1423 = vrot.slane %v1207, 5
      %v1424 = vrot.slane %v1199, 5
      %v1436 = vrot.slane %v1243, 2
      %v1437 = vrot.slane %v1234, 2
      %v1438 = vrot.slane %v1235, 2
      %v1439 = vrot.slane %v1236, 2
      %v1440 = vrot.slane %v1237, 2
      %v1441 = vrot.slane %v1238, 2
      %v1442 = vrot.slane %v1239, 2
      %v1443 = vrot.slane %v1240, 2
      %v1444 = vrot.slane %v1241, 2
      %v1445 = vrot.slane %v1233, 2
      %v1457 = vrot.slane %v1277, 7
      %v1458 = vrot.slane %v1267, 7
      %v1459 = vrot.slane %v1268, 7
      %v1460 = vrot.slane %v1269, 7
      %v1461 = vrot.slane %v1270, 7
      %v1462 = vrot.slane %v1271, 7
      %v1463 = vrot.slane %v1272, 7
      %v1464 = vrot.slane %v1273, 7
      %v1465 = vrot.slane %v1274, 7
      %v1466 = vrot.slane %v1275, 7
      %v1477 = vrot.slane %v1112, 4
      %v1478 = vrot.slane %v1113, 4
      %v1479 = vrot.slane %v1114, 4
      %v1480 = vrot.slane %v1115, 4
      %v1481 = vrot.slane %v1116, 4
      %v1482 = vrot.slane %v1117, 4
      %v1483 = vrot.slane %v1118, 4
      %v1484 = vrot.slane %v1119, 4
      %v1485 = vrot.slane %v1120, 4
      %v1486 = vrot.slane %v1121, 4
      %v1498 = vrot.slane %v1298, 1
      %v1499 = vrot.slane %v1299, 1
      %v1500 = vrot.slane %v1300, 1
      %v1501 = vrot.slane %v1301, 1
      %v1502 = vrot.slane %v1302, 1
      %v1503 = vrot.slane %v1303, 1
      %v1504 = vrot.slane %v1304, 1
      %v1505 = vrot.slane %v1305, 1
      %v1506 = vrot.slane %v1306, 1
      %v1507 = vrot.slane %v1311, 1
      %v1519 = vrot.slane %v1332, 6
      %v1520 = vrot.slane %v1333, 6
      %v1521 = vrot.slane %v1334, 6
      %v1522 = vrot.slane %v1335, 6
      %v1523 = vrot.slane %v1336, 6
      %v1524 = vrot.slane %v1337, 6
      %v1525 = vrot.slane %v1338, 6
      %v1526 = vrot.slane %v1339, 6
      %v1527 = vrot.slane %v1345, 6
      %v1528 = vrot.slane %v1343, 6
      %v1540 = vrot.slane %v1366, 3
      %v1541 = vrot.slane %v1367, 3
      %v1542 = vrot.slane %v1368, 3
      %v1543 = vrot.slane %v1369, 3
      %v1544 = vrot.slane %v1370, 3
      %v1545 = vrot.slane %v1371, 3
      %v1546 = vrot.slane %v1372, 3
      %v1547 = vrot.slane %v1373, 3
      %v1548 = vrot.slane %v1379, 3
      %v1549 = vrot.slane %v1377, 3
      %vm1560 = vcmask 1042432
      %v1561 = vsel %vm1560, %v1175, %v1415
      %v1562 = vsel %vm1560, %v1157, %v1416
      %v1563 = vsel %vm1560, %v1158, %v1417
      %v1564 = vsel %vm1560, %v1159, %v1418
      %v1565 = vsel %vm1560, %v1160, %v1419
      %v1566 = vsel %vm1560, %v1161, %v1420
      %v1567 = vsel %vm1560, %v1162, %v1421
      %v1568 = vsel %vm1560, %v1163, %v1422
      %v1569 = vsel %vm1560, %v1164, %v1423
      %v1570 = vsel %vm1560, %v1156, %v1424
      %vm1571 = vcmask 1045504
      %v1572 = vsel %vm1571, %v1561, %v1436
      %v1573 = vsel %vm1571, %v1562, %v1437
      %v1574 = vsel %vm1571, %v1563, %v1438
      %v1575 = vsel %vm1571, %v1564, %v1439
      %v1576 = vsel %vm1571, %v1565, %v1440
      %v1577 = vsel %vm1571, %v1566, %v1441
      %v1578 = vsel %vm1571, %v1567, %v1442
      %v1579 = vsel %vm1571, %v1568, %v1443
      %v1580 = vsel %vm1571, %v1569, %v1444
      %v1581 = vsel %vm1571, %v1570, %v1445
      %vm1582 = vcmask 1040384
      %v1583 = vsel %vm1582, %v1436, %v1457
      %v1584 = vsel %vm1582, %v1437, %v1458
      %v1585 = vsel %vm1582, %v1438, %v1459
      %v1586 = vsel %vm1582, %v1439, %v1460
      %v1587 = vsel %vm1582, %v1440, %v1461
      %v1588 = vsel %vm1582, %v1441, %v1462
      %v1589 = vsel %vm1582, %v1442, %v1463
      %v1590 = vsel %vm1582, %v1443, %v1464
      %v1591 = vsel %vm1582, %v1444, %v1465
      %v1592 = vsel %vm1582, %v1445, %v1466
      %vm1593 = vcmask 1043456
      %v1594 = vsel %vm1593, %v1583, %v1477
      %v1595 = vsel %vm1593, %v1584, %v1478
      %v1596 = vsel %vm1593, %v1585, %v1479
      %v1597 = vsel %vm1593, %v1586, %v1480
      %v1598 = vsel %vm1593, %v1587, %v1481
      %v1599 = vsel %vm1593, %v1588, %v1482
      %v1600 = vsel %vm1593, %v1589, %v1483
      %v1601 = vsel %vm1593, %v1590, %v1484
      %v1602 = vsel %vm1593, %v1591, %v1485
      %v1603 = vsel %vm1593, %v1592, %v1486
      %vm1604 = vcmask 1046528
      %v1605 = vsel %vm1604, %v1594, %v1498
      %v1606 = vsel %vm1604, %v1595, %v1499
      %v1607 = vsel %vm1604, %v1596, %v1500
      %v1608 = vsel %vm1604, %v1597, %v1501
      %v1609 = vsel %vm1604, %v1598, %v1502
      %v1610 = vsel %vm1604, %v1599, %v1503
      %v1611 = vsel %vm1604, %v1600, %v1504
      %v1612 = vsel %vm1604, %v1601, %v1505
      %v1613 = vsel %vm1604, %v1602, %v1506
      %v1614 = vsel %vm1604, %v1603, %v1507
      %vm1615 = vcmask 1041408
      %v1616 = vsel %vm1615, %v1498, %v1519
      %v1617 = vsel %vm1615, %v1499, %v1520
      %v1618 = vsel %vm1615, %v1500, %v1521
      %v1619 = vsel %vm1615, %v1501, %v1522
      %v1620 = vsel %vm1615, %v1502, %v1523
      %v1621 = vsel %vm1615, %v1503, %v1524
      %v1622 = vsel %vm1615, %v1504, %v1525
      %v1623 = vsel %vm1615, %v1505, %v1526
      %v1624 = vsel %vm1615, %v1506, %v1527
      %v1625 = vsel %vm1615, %v1507, %v1528
      %vm1626 = vcmask 1044480
      %v1627 = vsel %vm1626, %v1616, %v1540
      %v1628 = vsel %vm1626, %v1617, %v1541
      %v1629 = vsel %vm1626, %v1618, %v1542
      %v1630 = vsel %vm1626, %v1619, %v1543
      %v1631 = vsel %vm1626, %v1620, %v1544
      %v1632 = vsel %vm1626, %v1621, %v1545
      %v1633 = vsel %vm1626, %v1622, %v1546
      %v1634 = vsel %vm1626, %v1623, %v1547
      %v1635 = vsel %vm1626, %v1624, %v1548
      %v1636 = vsel %vm1626, %v1625, %v1549
      %v1637 = vld [vmem:[%s4] sm:$0x7]
      %1639 = vset.pattern.permute.xlu0 0
      %1640 = vperm.xlu0 %1639, %v1637
      %v1641 = vpop.permute.xlu0 %1640
      %vm1643 = vcmask 220160
      %v1645 = vsel %vm1643, %v1122, 0
      %v1647 = vsel %vm1560, %v1400, 0
      %v1649 = vsel %vm1560, %v1401, 0
      %v1651 = vsel %vm1560, %v1402, 0
      %v1653 = vsel %vm1560, %v1403, 0
      %v1655 = vsel %vm1560, %v1404, 0
      %v1657 = vsel %vm1560, %v1405, 0
      %v1659 = vsel %vm1560, %v1406, 0
      %v1661 = vsel %vm1560, %v1407, 0
      %v1664 = vsel %vm1560, %v1413, 0
      %v1666 = vsel %vm1560, %v1411, 0
      %1668 = vmatprep.subr.mxu0 %v1573
      %1669 = vmatpush1.msra.mxu0 %v1572
      %1670 = vmatprep.subr.mxu0 %v1606
      %1671 = vmatpush1.msra.mxu0 %v1605
      %1672 = vmatprep.subr.mxu0 %v1628
      %1673 = vmatpush1.msra.mxu0 %v1627
      %1674 = vmatprep.subr.mxu0 %v1649
      %1675 = vmatpush1.msra.mxu0 %v1647
      %1676 = vmatprep.subr.mxu0 0.0
      %1677 = vmatpush1.msra.mxu0 0.0
      %1678 = vmatprep.subr.mxu0 0.0
      %1679 = vmatpush1.msra.mxu0 0.0
      %1680 = vmatprep.subr.mxu0 0.0
      %1681 = vmatpush1.msra.mxu0 0.0
      %1682 = vmatprep.subr.mxu0 0.0
      %1683 = vmatpush1.msra.mxu0 0.0
      %1684 = vmatprep.subr.mxu0 0.0
      %1685 = vmatpush1.msra.mxu0 0.0
      %1686 = vmatprep.subr.mxu0 0.0
      %1687 = vmatpush1.msra.mxu0 0.0
      %1688 = vmatprep.subr.mxu0 0.0
      %1689 = vmatpush1.msra.mxu0 0.0
      %1690 = vmatprep.subr.mxu0 0.0
      %1691 = vmatpush1.msra.mxu0 0.0
      %1692 = vmatprep.subr.mxu0 0.0
      %1693 = vmatpush1.msra.mxu0 0.0
      %1694 = vmatprep.subr.mxu0 0.0
      %1695 = vmatpush1.msra.mxu0 0.0
      %1696 = vmatprep.subr.mxu0 0.0
      %1697 = vmatpush1.msra.mxu0 0.0
      %1698 = vmatprep.subr.mxu0 0.0
      %1699 = vmatpush1.msra.mxu0 0.0
      %1700 = vmatprep.subr.mxu0 0.0
      %1701 = vmatpush1.msra.mxu0 0.0
      %1702 = vmatprep.subr.mxu0 0.0
      %1703 = vmatpush1.msra.mxu0 0.0
      %1704 = vmatprep.subr.mxu0 0.0
      %1705 = vmatpush1.msra.mxu0 0.0
      %1706 = vmatprep.subr.mxu0 0.0
      %1707 = vmatpush1.msra.mxu0 0.0
      %1708 = vmatprep.subr.mxu0 0.0
      %1709 = vmatpush1.msra.mxu0 0.0
      %1710 = vmatprep.subr.mxu0 0.0
      %1711 = vmatpush1.msra.mxu0 0.0
      %1712 = vmatprep.subr.mxu0 0.0
      %1713 = vmatpush1.msra.mxu0 0.0
      %1714 = vmatprep.subr.mxu0 0.0
      %1715 = vmatpush1.msra.mxu0 0.0
      %1716 = vmatprep.subr.mxu0 0.0
      %1717 = vmatpush1.msra.mxu0 0.0
      %1718 = vmatprep.subr.mxu0 0.0
      %1719 = vmatpush1.msra.mxu0 0.0
      %1720 = vmatprep.subr.mxu0 0.0
      %1721 = vmatpush1.msra.mxu0 0.0
      %1722 = vmatprep.subr.mxu0 0.0
      %1723 = vmatpush1.msra.mxu0 0.0
      %1724 = vmatprep.subr.mxu0 0.0
      %1725 = vmatpush1.msra.mxu0 0.0
      %1726 = vmatprep.subr.mxu0 0.0
      %1727 = vmatpush1.msra.mxu0 0.0
      %1728 = vmatprep.subr.mxu0 0.0
      %1729 = vmatpush1.msra.mxu0 0.0
      %1730 = vmatprep.subr.mxu0 0.0
      %1731 = vmatpush1.msra.mxu0 0.0
      %1732 = vmatprep.mubr.f32.mxu0 0.0
      %1733 = vmatmul.mubr.f32.gmra.mrb[0].mxu0 %v1645
      %v1734 = vpop.f32.mrb[0].mxu0
      %v1735 = vadd.f32 %v1641, %v1734
      %v1736 = vpop.f32.mrb[0].mxu0
      %v1737 = vadd.f32 %v1641, %v1736
      %1738 = vdwg.mxu0
      %1739 = vmatprep.subr.mxu0 %v1575
      %1740 = vmatpush1.msra.mxu0 %v1574
      %1741 = vmatprep.subr.mxu0 %v1608
      %1742 = vmatpush1.msra.mxu0 %v1607
      %1743 = vmatprep.subr.mxu0 %v1630
      %1744 = vmatpush1.msra.mxu0 %v1629
      %1745 = vmatprep.subr.mxu0 %v1653
      %1746 = vmatpush1.msra.mxu0 %v1651
      %1747 = vmatprep.subr.mxu0 0.0
      %1748 = vmatpush1.msra.mxu0 0.0
      %1749 = vmatprep.subr.mxu0 0.0
      %1750 = vmatpush1.msra.mxu0 0.0
      %1751 = vmatprep.subr.mxu0 0.0
      %1752 = vmatpush1.msra.mxu0 0.0
      %1753 = vmatprep.subr.mxu0 0.0
      %1754 = vmatpush1.msra.mxu0 0.0
      %1755 = vmatprep.subr.mxu0 0.0
      %1756 = vmatpush1.msra.mxu0 0.0
      %1757 = vmatprep.subr.mxu0 0.0
      %1758 = vmatpush1.msra.mxu0 0.0
      %1759 = vmatprep.subr.mxu0 0.0
      %1760 = vmatpush1.msra.mxu0 0.0
      %1761 = vmatprep.subr.mxu0 0.0
      %1762 = vmatpush1.msra.mxu0 0.0
      %1763 = vmatprep.subr.mxu0 0.0
      %1764 = vmatpush1.msra.mxu0 0.0
      %1765 = vmatprep.subr.mxu0 0.0
      %1766 = vmatpush1.msra.mxu0 0.0
      %1767 = vmatprep.subr.mxu0 0.0
      %1768 = vmatpush1.msra.mxu0 0.0
      %1769 = vmatprep.subr.mxu0 0.0
      %1770 = vmatpush1.msra.mxu0 0.0
      %1771 = vmatprep.subr.mxu0 0.0
      %1772 = vmatpush1.msra.mxu0 0.0
      %1773 = vmatprep.subr.mxu0 0.0
      %1774 = vmatpush1.msra.mxu0 0.0
      %1775 = vmatprep.subr.mxu0 0.0
      %1776 = vmatpush1.msra.mxu0 0.0
      %1777 = vmatprep.subr.mxu0 0.0
      %1778 = vmatpush1.msra.mxu0 0.0
      %1779 = vmatprep.subr.mxu0 0.0
      %1780 = vmatpush1.msra.mxu0 0.0
      %1781 = vmatprep.subr.mxu0 0.0
      %1782 = vmatpush1.msra.mxu0 0.0
      %1783 = vmatprep.subr.mxu0 0.0
      %1784 = vmatpush1.msra.mxu0 0.0
      %1785 = vmatprep.subr.mxu0 0.0
      %1786 = vmatpush1.msra.mxu0 0.0
      %1787 = vmatprep.subr.mxu0 0.0
      %1788 = vmatpush1.msra.mxu0 0.0
      %1789 = vmatprep.subr.mxu0 0.0
      %1790 = vmatpush1.msra.mxu0 0.0
      %1791 = vmatprep.subr.mxu0 0.0
      %1792 = vmatpush1.msra.mxu0 0.0
      %1793 = vmatprep.subr.mxu0 0.0
      %1794 = vmatpush1.msra.mxu0 0.0
      %1795 = vmatprep.subr.mxu0 0.0
      %1796 = vmatpush1.msra.mxu0 0.0
      %1797 = vmatprep.subr.mxu0 0.0
      %1798 = vmatpush1.msra.mxu0 0.0
      %1799 = vmatprep.subr.mxu0 0.0
      %1800 = vmatpush1.msra.mxu0 0.0
      %1801 = vmatprep.subr.mxu0 0.0
      %1802 = vmatpush1.msra.mxu0 0.0
      %1803 = vmatprep.mubr.f32.mxu0 0.0
      %1804 = vmatmul.mubr.f32.gmra.mrb[0].mxu0 %v1645
      %v1805 = vpop.f32.mrb[0].mxu0
      %v1806 = vadd.f32 %v1641, %v1805
      %v1807 = vpop.f32.mrb[0].mxu0
      %v1808 = vadd.f32 %v1641, %v1807
      %1809 = vdwg.mxu0
      %1810 = vmatprep.subr.mxu0 %v1577
      %1811 = vmatpush1.msra.mxu0 %v1576
      %1812 = vmatprep.subr.mxu0 %v1610
      %1813 = vmatpush1.msra.mxu0 %v1609
      %1814 = vmatprep.subr.mxu0 %v1632
      %1815 = vmatpush1.msra.mxu0 %v1631
      %1816 = vmatprep.subr.mxu0 %v1657
      %1817 = vmatpush1.msra.mxu0 %v1655
      %1818 = vmatprep.subr.mxu0 0.0
      %1819 = vmatpush1.msra.mxu0 0.0
      %1820 = vmatprep.subr.mxu0 0.0
      %1821 = vmatpush1.msra.mxu0 0.0
      %1822 = vmatprep.subr.mxu0 0.0
      %1823 = vmatpush1.msra.mxu0 0.0
      %1824 = vmatprep.subr.mxu0 0.0
      %1825 = vmatpush1.msra.mxu0 0.0
      %1826 = vmatprep.subr.mxu0 0.0
      %1827 = vmatpush1.msra.mxu0 0.0
      %1828 = vmatprep.subr.mxu0 0.0
      %1829 = vmatpush1.msra.mxu0 0.0
      %1830 = vmatprep.subr.mxu0 0.0
      %1831 = vmatpush1.msra.mxu0 0.0
      %1832 = vmatprep.subr.mxu0 0.0
      %1833 = vmatpush1.msra.mxu0 0.0
      %1834 = vmatprep.subr.mxu0 0.0
      %1835 = vmatpush1.msra.mxu0 0.0
      %1836 = vmatprep.subr.mxu0 0.0
      %1837 = vmatpush1.msra.mxu0 0.0
      %1838 = vmatprep.subr.mxu0 0.0
      %1839 = vmatpush1.msra.mxu0 0.0
      %1840 = vmatprep.subr.mxu0 0.0
      %1841 = vmatpush1.msra.mxu0 0.0
      %1842 = vmatprep.subr.mxu0 0.0
      %1843 = vmatpush1.msra.mxu0 0.0
      %1844 = vmatprep.subr.mxu0 0.0
      %1845 = vmatpush1.msra.mxu0 0.0
      %1846 = vmatprep.subr.mxu0 0.0
      %1847 = vmatpush1.msra.mxu0 0.0
      %1848 = vmatprep.subr.mxu0 0.0
      %1849 = vmatpush1.msra.mxu0 0.0
      %1850 = vmatprep.subr.mxu0 0.0
      %1851 = vmatpush1.msra.mxu0 0.0
      %1852 = vmatprep.subr.mxu0 0.0
      %1853 = vmatpush1.msra.mxu0 0.0
      %1854 = vmatprep.subr.mxu0 0.0
      %1855 = vmatpush1.msra.mxu0 0.0
      %1856 = vmatprep.subr.mxu0 0.0
      %1857 = vmatpush1.msra.mxu0 0.0
      %1858 = vmatprep.subr.mxu0 0.0
      %1859 = vmatpush1.msra.mxu0 0.0
      %1860 = vmatprep.subr.mxu0 0.0
      %1861 = vmatpush1.msra.mxu0 0.0
      %1862 = vmatprep.subr.mxu0 0.0
      %1863 = vmatpush1.msra.mxu0 0.0
      %1864 = vmatprep.subr.mxu0 0.0
      %1865 = vmatpush1.msra.mxu0 0.0
      %1866 = vmatprep.subr.mxu0 0.0
      %1867 = vmatpush1.msra.mxu0 0.0
      %1868 = vmatprep.subr.mxu0 0.0
      %1869 = vmatpush1.msra.mxu0 0.0
      %1870 = vmatprep.subr.mxu0 0.0
      %1871 = vmatpush1.msra.mxu0 0.0
      %1872 = vmatprep.subr.mxu0 0.0
      %1873 = vmatpush1.msra.mxu0 0.0
      %1874 = vmatprep.mubr.f32.mxu0 0.0
      %1875 = vmatmul.mubr.f32.gmra.mrb[0].mxu0 %v1645
      %v1876 = vpop.f32.mrb[0].mxu0
      %v1877 = vadd.f32 %v1641, %v1876
      %v1878 = vpop.f32.mrb[0].mxu0
      %v1879 = vadd.f32 %v1641, %v1878
      %1880 = vdwg.mxu0
      %1881 = vmatprep.subr.mxu0 %v1579
      %1882 = vmatpush1.msra.mxu0 %v1578
      %1883 = vmatprep.subr.mxu0 %v1612
      %1884 = vmatpush1.msra.mxu0 %v1611
      %1885 = vmatprep.subr.mxu0 %v1634
      %1886 = vmatpush1.msra.mxu0 %v1633
      %1887 = vmatprep.subr.mxu0 %v1661
      %1888 = vmatpush1.msra.mxu0 %v1659
      %1889 = vmatprep.subr.mxu0 0.0
      %1890 = vmatpush1.msra.mxu0 0.0
      %1891 = vmatprep.subr.mxu0 0.0
      %1892 = vmatpush1.msra.mxu0 0.0
      %1893 = vmatprep.subr.mxu0 0.0
      %1894 = vmatpush1.msra.mxu0 0.0
      %1895 = vmatprep.subr.mxu0 0.0
      %1896 = vmatpush1.msra.mxu0 0.0
      %1897 = vmatprep.subr.mxu0 0.0
      %1898 = vmatpush1.msra.mxu0 0.0
      %1899 = vmatprep.subr.mxu0 0.0
      %1900 = vmatpush1.msra.mxu0 0.0
      %1901 = vmatprep.subr.mxu0 0.0
      %1902 = vmatpush1.msra.mxu0 0.0
      %1903 = vmatprep.subr.mxu0 0.0
      %1904 = vmatpush1.msra.mxu0 0.0
      %1905 = vmatprep.subr.mxu0 0.0
      %1906 = vmatpush1.msra.mxu0 0.0
      %1907 = vmatprep.subr.mxu0 0.0
      %1908 = vmatpush1.msra.mxu0 0.0
      %1909 = vmatprep.subr.mxu0 0.0
      %1910 = vmatpush1.msra.mxu0 0.0
      %1911 = vmatprep.subr.mxu0 0.0
      %1912 = vmatpush1.msra.mxu0 0.0
      %1913 = vmatprep.subr.mxu0 0.0
      %1914 = vmatpush1.msra.mxu0 0.0
      %1915 = vmatprep.subr.mxu0 0.0
      %1916 = vmatpush1.msra.mxu0 0.0
      %1917 = vmatprep.subr.mxu0 0.0
      %1918 = vmatpush1.msra.mxu0 0.0
      %1919 = vmatprep.subr.mxu0 0.0
      %1920 = vmatpush1.msra.mxu0 0.0
      %1921 = vmatprep.subr.mxu0 0.0
      %1922 = vmatpush1.msra.mxu0 0.0
      %1923 = vmatprep.subr.mxu0 0.0
      %1924 = vmatpush1.msra.mxu0 0.0
      %1925 = vmatprep.subr.mxu0 0.0
      %1926 = vmatpush1.msra.mxu0 0.0
      %1927 = vmatprep.subr.mxu0 0.0
      %1928 = vmatpush1.msra.mxu0 0.0
      %1929 = vmatprep.subr.mxu0 0.0
      %1930 = vmatpush1.msra.mxu0 0.0
      %1931 = vmatprep.subr.mxu0 0.0
      %1932 = vmatpush1.msra.mxu0 0.0
      %1933 = vmatprep.subr.mxu0 0.0
      %1934 = vmatpush1.msra.mxu0 0.0
      %1935 = vmatprep.subr.mxu0 0.0
      %1936 = vmatpush1.msra.mxu0 0.0
      %1937 = vmatprep.subr.mxu0 0.0
      %1938 = vmatpush1.msra.mxu0 0.0
      %1939 = vmatprep.subr.mxu0 0.0
      %1940 = vmatpush1.msra.mxu0 0.0
      %1941 = vmatprep.subr.mxu0 0.0
      %1942 = vmatpush1.msra.mxu0 0.0
      %1943 = vmatprep.subr.mxu0 0.0
      %1944 = vmatpush1.msra.mxu0 0.0
      %1945 = vmatprep.mubr.f32.mxu0 0.0
      %1946 = vmatmul.mubr.f32.gmra.mrb[0].mxu0 %v1645
      %v1947 = vpop.f32.mrb[0].mxu0
      %v1948 = vadd.f32 %v1641, %v1947
      %v1949 = vpop.f32.mrb[0].mxu0
      %v1950 = vadd.f32 %v1641, %v1949
      %1951 = vdwg.mxu0
      %1952 = vmatprep.subr.mxu0 %v1581
      %1953 = vmatpush1.msra.mxu0 %v1580
      %1954 = vmatprep.subr.mxu0 %v1614
      %1955 = vmatpush1.msra.mxu0 %v1613
      %1956 = vmatprep.subr.mxu0 %v1636
      %1957 = vmatpush1.msra.mxu0 %v1635
      %1958 = vmatprep.subr.mxu0 %v1666
      %1959 = vmatpush1.msra.mxu0 %v1664
      %1960 = vmatprep.subr.mxu0 0.0
      %1961 = vmatpush1.msra.mxu0 0.0
      %1962 = vmatprep.subr.mxu0 0.0
      %1963 = vmatpush1.msra.mxu0 0.0
      %1964 = vmatprep.subr.mxu0 0.0
      %1965 = vmatpush1.msra.mxu0 0.0
      %1966 = vmatprep.subr.mxu0 0.0
      %1967 = vmatpush1.msra.mxu0 0.0
      %1968 = vmatprep.subr.mxu0 0.0
      %1969 = vmatpush1.msra.mxu0 0.0
      %1970 = vmatprep.subr.mxu0 0.0
      %1971 = vmatpush1.msra.mxu0 0.0
      %1972 = vmatprep.subr.mxu0 0.0
      %1973 = vmatpush1.msra.mxu0 0.0
      %1974 = vmatprep.subr.mxu0 0.0
      %1975 = vmatpush1.msra.mxu0 0.0
      %1976 = vmatprep.subr.mxu0 0.0
      %1977 = vmatpush1.msra.mxu0 0.0
      %1978 = vmatprep.subr.mxu0 0.0
      %1979 = vmatpush1.msra.mxu0 0.0
      %1980 = vmatprep.subr.mxu0 0.0
      %1981 = vmatpush1.msra.mxu0 0.0
      %1982 = vmatprep.subr.mxu0 0.0
      %1983 = vmatpush1.msra.mxu0 0.0
      %1984 = vmatprep.subr.mxu0 0.0
      %1985 = vmatpush1.msra.mxu0 0.0
      %1986 = vmatprep.subr.mxu0 0.0
      %1987 = vmatpush1.msra.mxu0 0.0
      %1988 = vmatprep.subr.mxu0 0.0
      %1989 = vmatpush1.msra.mxu0 0.0
      %1990 = vmatprep.subr.mxu0 0.0
      %1991 = vmatpush1.msra.mxu0 0.0
      %1992 = vmatprep.subr.mxu0 0.0
      %1993 = vmatpush1.msra.mxu0 0.0
      %1994 = vmatprep.subr.mxu0 0.0
      %1995 = vmatpush1.msra.mxu0 0.0
      %1996 = vmatprep.subr.mxu0 0.0
      %1997 = vmatpush1.msra.mxu0 0.0
      %1998 = vmatprep.subr.mxu0 0.0
      %1999 = vmatpush1.msra.mxu0 0.0
      %2000 = vmatprep.subr.mxu0 0.0
      %2001 = vmatpush1.msra.mxu0 0.0
      %2002 = vmatprep.subr.mxu0 0.0
      %2003 = vmatpush1.msra.mxu0 0.0
      %2004 = vmatprep.subr.mxu0 0.0
      %2005 = vmatpush1.msra.mxu0 0.0
      %2006 = vmatprep.subr.mxu0 0.0
      %2007 = vmatpush1.msra.mxu0 0.0
      %2008 = vmatprep.subr.mxu0 0.0
      %2009 = vmatpush1.msra.mxu0 0.0
      %2010 = vmatprep.subr.mxu0 0.0
      %2011 = vmatpush1.msra.mxu0 0.0
      %2012 = vmatprep.subr.mxu0 0.0
      %2013 = vmatpush1.msra.mxu0 0.0
      %2014 = vmatprep.subr.mxu0 0.0
      %2015 = vmatpush1.msra.mxu0 0.0
      %2016 = vmatprep.mubr.f32.mxu0 0.0
      %2017 = vmatmul.mubr.f32.gmra.mrb[0].mxu0 %v1645
      %v2018 = vpop.f32.mrb[0].mxu0
      %v2019 = vadd.f32 %v1641, %v2018
      %v2020 = vpop.f32.mrb[0].mxu0
      %v2021 = vadd.f32 %v1641, %v2020
      %2022 = vdwg.mxu0
      %v2023 = vld [vmem:[%s5] sm:$0x7]
      %vm2024 = vcmask 64512
      %v2026 = vsel %vm2024, %v2023, 0
      %2028 = vmatprep.subr.mxu0 %v307
      %2029 = vmatpush1.msra.mxu0 %v306
      %2030 = vmatprep.subr.mxu0 0.0
      %2031 = vmatpush1.msra.mxu0 0.0
      %2032 = vmatprep.subr.mxu0 0.0
      %2033 = vmatpush1.msra.mxu0 0.0
      %2034 = vmatprep.subr.mxu0 0.0
      %2035 = vmatpush1.msra.mxu0 0.0
      %2036 = vmatprep.subr.mxu0 0.0
      %2037 = vmatpush1.msra.mxu0 0.0
      %2038 = vmatprep.subr.mxu0 0.0
      %2039 = vmatpush1.msra.mxu0 0.0
      %2040 = vmatprep.subr.mxu0 0.0
      %2041 = vmatpush1.msra.mxu0 0.0
      %2042 = vmatprep.subr.mxu0 0.0
      %2043 = vmatpush1.msra.mxu0 0.0
      %2044 = vmatprep.subr.mxu0 0.0
      %2045 = vmatpush1.msra.mxu0 0.0
      %2046 = vmatprep.subr.mxu0 0.0
      %2047 = vmatpush1.msra.mxu0 0.0
      %2048 = vmatprep.subr.mxu0 0.0
      %2049 = vmatpush1.msra.mxu0 0.0
      %2050 = vmatprep.subr.mxu0 0.0
      %2051 = vmatpush1.msra.mxu0 0.0
      %2052 = vmatprep.subr.mxu0 0.0
      %2053 = vmatpush1.msra.mxu0 0.0
      %2054 = vmatprep.subr.mxu0 0.0
      %2055 = vmatpush1.msra.mxu0 0.0
      %2056 = vmatprep.subr.mxu0 0.0
      %2057 = vmatpush1.msra.mxu0 0.0
      %2058 = vmatprep.subr.mxu0 0.0
      %2059 = vmatpush1.msra.mxu0 0.0
      %2060 = vmatprep.subr.mxu0 0.0
      %2061 = vmatpush1.msra.mxu0 0.0
      %2062 = vmatprep.subr.mxu0 0.0
      %2063 = vmatpush1.msra.mxu0 0.0
      %2064 = vmatprep.subr.mxu0 0.0
      %2065 = vmatpush1.msra.mxu0 0.0
      %2066 = vmatprep.subr.mxu0 0.0
      %2067 = vmatpush1.msra.mxu0 0.0
      %2068 = vmatprep.subr.mxu0 0.0
      %2069 = vmatpush1.msra.mxu0 0.0
      %2070 = vmatprep.subr.mxu0 0.0
      %2071 = vmatpush1.msra.mxu0 0.0
      %2072 = vmatprep.subr.mxu0 0.0
      %2073 = vmatpush1.msra.mxu0 0.0
      %2074 = vmatprep.subr.mxu0 0.0
      %2075 = vmatpush1.msra.mxu0 0.0
      %2076 = vmatprep.subr.mxu0 0.0
      %2077 = vmatpush1.msra.mxu0 0.0
      %2078 = vmatprep.subr.mxu0 0.0
      %2079 = vmatpush1.msra.mxu0 0.0
      %2080 = vmatprep.subr.mxu0 0.0
      %2081 = vmatpush1.msra.mxu0 0.0
      %2082 = vmatprep.subr.mxu0 0.0
      %2083 = vmatpush1.msra.mxu0 0.0
      %2084 = vmatprep.subr.mxu0 0.0
      %2085 = vmatpush1.msra.mxu0 0.0
      %2086 = vmatprep.subr.mxu0 0.0
      %2087 = vmatpush1.msra.mxu0 0.0
      %2088 = vmatprep.subr.mxu0 0.0
      %2089 = vmatpush1.msra.mxu0 0.0
      %2090 = vmatprep.subr.mxu0 0.0
      %2091 = vmatpush1.msra.mxu0 0.0
      %2092 = vmatprep.mubr.f32.mxu0 0.0
      %2093 = vmatmul.mubr.f32.gmra.mrb[0].mxu0 %v2026
      %v2094 = vpop.f32.mrb[0].mxu0
      %v2095 = vadd.f32 0.0, %v2094
      %v2096 = vpop.f32.mrb[0].mxu0
      %v2097 = vadd.f32 0.0, %v2096
      %2098 = vdwg.mxu0
      %2099 = vmatprep.subr.mxu0 %v309
      %2100 = vmatpush1.msra.mxu0 %v308
      %2101 = vmatprep.subr.mxu0 0.0
      %2102 = vmatpush1.msra.mxu0 0.0
      %2103 = vmatprep.subr.mxu0 0.0
      %2104 = vmatpush1.msra.mxu0 0.0
      %2105 = vmatprep.subr.mxu0 0.0
      %2106 = vmatpush1.msra.mxu0 0.0
      %2107 = vmatprep.subr.mxu0 0.0
      %2108 = vmatpush1.msra.mxu0 0.0
      %2109 = vmatprep.subr.mxu0 0.0
      %2110 = vmatpush1.msra.mxu0 0.0
      %2111 = vmatprep.subr.mxu0 0.0
      %2112 = vmatpush1.msra.mxu0 0.0
      %2113 = vmatprep.subr.mxu0 0.0
      %2114 = vmatpush1.msra.mxu0 0.0
      %2115 = vmatprep.subr.mxu0 0.0
      %2116 = vmatpush1.msra.mxu0 0.0
      %2117 = vmatprep.subr.mxu0 0.0
      %2118 = vmatpush1.msra.mxu0 0.0
      %2119 = vmatprep.subr.mxu0 0.0
      %2120 = vmatpush1.msra.mxu0 0.0
      %2121 = vmatprep.subr.mxu0 0.0
      %2122 = vmatpush1.msra.mxu0 0.0
      %2123 = vmatprep.subr.mxu0 0.0
      %2124 = vmatpush1.msra.mxu0 0.0
      %2125 = vmatprep.subr.mxu0 0.0
      %2126 = vmatpush1.msra.mxu0 0.0
      %2127 = vmatprep.subr.mxu0 0.0
      %2128 = vmatpush1.msra.mxu0 0.0
      %2129 = vmatprep.subr.mxu0 0.0
      %2130 = vmatpush1.msra.mxu0 0.0
      %2131 = vmatprep.subr.mxu0 0.0
      %2132 = vmatpush1.msra.mxu0 0.0
      %2133 = vmatprep.subr.mxu0 0.0
      %2134 = vmatpush1.msra.mxu0 0.0
      %2135 = vmatprep.subr.mxu0 0.0
      %2136 = vmatpush1.msra.mxu0 0.0
      %2137 = vmatprep.subr.mxu0 0.0
      %2138 = vmatpush1.msra.mxu0 0.0
      %2139 = vmatprep.subr.mxu0 0.0
      %2140 = vmatpush1.msra.mxu0 0.0
      %2141 = vmatprep.subr.mxu0 0.0
      %2142 = vmatpush1.msra.mxu0 0.0
      %2143 = vmatprep.subr.mxu0 0.0
      %2144 = vmatpush1.msra.mxu0 0.0
      %2145 = vmatprep.subr.mxu0 0.0
      %2146 = vmatpush1.msra.mxu0 0.0
      %2147 = vmatprep.subr.mxu0 0.0
      %2148 = vmatpush1.msra.mxu0 0.0
      %2149 = vmatprep.subr.mxu0 0.0
      %2150 = vmatpush1.msra.mxu0 0.0
      %2151 = vmatprep.subr.mxu0 0.0
      %2152 = vmatpush1.msra.mxu0 0.0
      %2153 = vmatprep.subr.mxu0 0.0
      %2154 = vmatpush1.msra.mxu0 0.0
      %2155 = vmatprep.subr.mxu0 0.0
      %2156 = vmatpush1.msra.mxu0 0.0
      %2157 = vmatprep.subr.mxu0 0.0
      %2158 = vmatpush1.msra.mxu0 0.0
      %2159 = vmatprep.subr.mxu0 0.0
      %2160 = vmatpush1.msra.mxu0 0.0
      %2161 = vmatprep.subr.mxu0 0.0
      %2162 = vmatpush1.msra.mxu0 0.0
      %2163 = vmatprep.mubr.f32.mxu0 0.0
      %2164 = vmatmul.mubr.f32.gmra.mrb[0].mxu0 %v2026
      %v2165 = vpop.f32.mrb[0].mxu0
      %v2166 = vadd.f32 0.0, %v2165
      %v2167 = vpop.f32.mrb[0].mxu0
      %v2168 = vadd.f32 0.0, %v2167
      %2169 = vdwg.mxu0
      %2170 = vmatprep.subr.mxu0 %v311
      %2171 = vmatpush1.msra.mxu0 %v310
      %2172 = vmatprep.subr.mxu0 0.0
      %2173 = vmatpush1.msra.mxu0 0.0
      %2174 = vmatprep.subr.mxu0 0.0
      %2175 = vmatpush1.msra.mxu0 0.0
      %2176 = vmatprep.subr.mxu0 0.0
      %2177 = vmatpush1.msra.mxu0 0.0
      %2178 = vmatprep.subr.mxu0 0.0
      %2179 = vmatpush1.msra.mxu0 0.0
      %2180 = vmatprep.subr.mxu0 0.0
      %2181 = vmatpush1.msra.mxu0 0.0
      %2182 = vmatprep.subr.mxu0 0.0
      %2183 = vmatpush1.msra.mxu0 0.0
      %2184 = vmatprep.subr.mxu0 0.0
      %2185 = vmatpush1.msra.mxu0 0.0
      %2186 = vmatprep.subr.mxu0 0.0
      %2187 = vmatpush1.msra.mxu0 0.0
      %2188 = vmatprep.subr.mxu0 0.0
      %2189 = vmatpush1.msra.mxu0 0.0
      %2190 = vmatprep.subr.mxu0 0.0
      %2191 = vmatpush1.msra.mxu0 0.0
      %2192 = vmatprep.subr.mxu0 0.0
      %2193 = vmatpush1.msra.mxu0 0.0
      %2194 = vmatprep.subr.mxu0 0.0
      %2195 = vmatpush1.msra.mxu0 0.0
      %2196 = vmatprep.subr.mxu0 0.0
      %2197 = vmatpush1.msra.mxu0 0.0
      %2198 = vmatprep.subr.mxu0 0.0
      %2199 = vmatpush1.msra.mxu0 0.0
      %2200 = vmatprep.subr.mxu0 0.0
      %2201 = vmatpush1.msra.mxu0 0.0
      %2202 = vmatprep.subr.mxu0 0.0
      %2203 = vmatpush1.msra.mxu0 0.0
      %2204 = vmatprep.subr.mxu0 0.0
      %2205 = vmatpush1.msra.mxu0 0.0
      %2206 = vmatprep.subr.mxu0 0.0
      %2207 = vmatpush1.msra.mxu0 0.0
      %2208 = vmatprep.subr.mxu0 0.0
      %2209 = vmatpush1.msra.mxu0 0.0
      %2210 = vmatprep.subr.mxu0 0.0
      %2211 = vmatpush1.msra.mxu0 0.0
      %2212 = vmatprep.subr.mxu0 0.0
      %2213 = vmatpush1.msra.mxu0 0.0
      %2214 = vmatprep.subr.mxu0 0.0
      %2215 = vmatpush1.msra.mxu0 0.0
      %2216 = vmatprep.subr.mxu0 0.0
      %2217 = vmatpush1.msra.mxu0 0.0
      %2218 = vmatprep.subr.mxu0 0.0
      %2219 = vmatpush1.msra.mxu0 0.0
      %2220 = vmatprep.subr.mxu0 0.0
      %2221 = vmatpush1.msra.mxu0 0.0
      %2222 = vmatprep.subr.mxu0 0.0
      %2223 = vmatpush1.msra.mxu0 0.0
      %2224 = vmatprep.subr.mxu0 0.0
      %2225 = vmatpush1.msra.mxu0 0.0
      %2226 = vmatprep.subr.mxu0 0.0
      %2227 = vmatpush1.msra.mxu0 0.0
      %2228 = vmatprep.subr.mxu0 0.0
      %2229 = vmatpush1.msra.mxu0 0.0
      %2230 = vmatprep.subr.mxu0 0.0
      %2231 = vmatpush1.msra.mxu0 0.0
      %2232 = vmatprep.subr.mxu0 0.0
      %2233 = vmatpush1.msra.mxu0 0.0
      %2234 = vmatprep.mubr.f32.mxu0 0.0
      %2235 = vmatmul.mubr.f32.gmra.mrb[0].mxu0 %v2026
      %v2236 = vpop.f32.mrb[0].mxu0
      %v2237 = vadd.f32 0.0, %v2236
      %v2238 = vpop.f32.mrb[0].mxu0
      %v2239 = vadd.f32 0.0, %v2238
      %2240 = vdwg.mxu0
      %2241 = vmatprep.subr.mxu0 %v313
      %2242 = vmatpush1.msra.mxu0 %v312
      %2243 = vmatprep.subr.mxu0 0.0
      %2244 = vmatpush1.msra.mxu0 0.0
      %2245 = vmatprep.subr.mxu0 0.0
      %2246 = vmatpush1.msra.mxu0 0.0
      %2247 = vmatprep.subr.mxu0 0.0
      %2248 = vmatpush1.msra.mxu0 0.0
      %2249 = vmatprep.subr.mxu0 0.0
      %2250 = vmatpush1.msra.mxu0 0.0
      %2251 = vmatprep.subr.mxu0 0.0
      %2252 = vmatpush1.msra.mxu0 0.0
      %2253 = vmatprep.subr.mxu0 0.0
      %2254 = vmatpush1.msra.mxu0 0.0
      %2255 = vmatprep.subr.mxu0 0.0
      %2256 = vmatpush1.msra.mxu0 0.0
      %2257 = vmatprep.subr.mxu0 0.0
      %2258 = vmatpush1.msra.mxu0 0.0
      %2259 = vmatprep.subr.mxu0 0.0
      %2260 = vmatpush1.msra.mxu0 0.0
      %2261 = vmatprep.subr.mxu0 0.0
      %2262 = vmatpush1.msra.mxu0 0.0
      %2263 = vmatprep.subr.mxu0 0.0
      %2264 = vmatpush1.msra.mxu0 0.0
      %2265 = vmatprep.subr.mxu0 0.0
      %2266 = vmatpush1.msra.mxu0 0.0
      %2267 = vmatprep.subr.mxu0 0.0
      %2268 = vmatpush1.msra.mxu0 0.0
      %2269 = vmatprep.subr.mxu0 0.0
      %2270 = vmatpush1.msra.mxu0 0.0
      %2271 = vmatprep.subr.mxu0 0.0
      %2272 = vmatpush1.msra.mxu0 0.0
      %2273 = vmatprep.subr.mxu0 0.0
      %2274 = vmatpush1.msra.mxu0 0.0
      %2275 = vmatprep.subr.mxu0 0.0
      %2276 = vmatpush1.msra.mxu0 0.0
      %2277 = vmatprep.subr.mxu0 0.0
      %2278 = vmatpush1.msra.mxu0 0.0
      %2279 = vmatprep.subr.mxu0 0.0
      %2280 = vmatpush1.msra.mxu0 0.0
      %2281 = vmatprep.subr.mxu0 0.0
      %2282 = vmatpush1.msra.mxu0 0.0
      %2283 = vmatprep.subr.mxu0 0.0
      %2284 = vmatpush1.msra.mxu0 0.0
      %2285 = vmatprep.subr.mxu0 0.0
      %2286 = vmatpush1.msra.mxu0 0.0
      %2287 = vmatprep.subr.mxu0 0.0
      %2288 = vmatpush1.msra.mxu0 0.0
      %2289 = vmatprep.subr.mxu0 0.0
      %2290 = vmatpush1.msra.mxu0 0.0
      %2291 = vmatprep.subr.mxu0 0.0
      %2292 = vmatpush1.msra.mxu0 0.0
      %2293 = vmatprep.subr.mxu0 0.0
      %2294 = vmatpush1.msra.mxu0 0.0
      %2295 = vmatprep.subr.mxu0 0.0
      %2296 = vmatpush1.msra.mxu0 0.0
      %2297 = vmatprep.subr.mxu0 0.0
      %2298 = vmatpush1.msra.mxu0 0.0
      %2299 = vmatprep.subr.mxu0 0.0
      %2300 = vmatpush1.msra.mxu0 0.0
      %2301 = vmatprep.subr.mxu0 0.0
      %2302 = vmatpush1.msra.mxu0 0.0
      %2303 = vmatprep.subr.mxu0 0.0
      %2304 = vmatpush1.msra.mxu0 0.0
      %2305 = vmatprep.mubr.f32.mxu0 0.0
      %2306 = vmatmul.mubr.f32.gmra.mrb[0].mxu0 %v2026
      %v2307 = vpop.f32.mrb[0].mxu0
      %v2308 = vadd.f32 0.0, %v2307
      %v2309 = vpop.f32.mrb[0].mxu0
      %v2310 = vadd.f32 0.0, %v2309
      %2311 = vdwg.mxu0
      %2312 = vmatprep.subr.mxu0 %v315
      %2313 = vmatpush1.msra.mxu0 %v314
      %2314 = vmatprep.subr.mxu0 0.0
      %2315 = vmatpush1.msra.mxu0 0.0
      %2316 = vmatprep.subr.mxu0 0.0
      %2317 = vmatpush1.msra.mxu0 0.0
      %2318 = vmatprep.subr.mxu0 0.0
      %2319 = vmatpush1.msra.mxu0 0.0
      %2320 = vmatprep.subr.mxu0 0.0
      %2321 = vmatpush1.msra.mxu0 0.0
      %2322 = vmatprep.subr.mxu0 0.0
      %2323 = vmatpush1.msra.mxu0 0.0
      %2324 = vmatprep.subr.mxu0 0.0
      %2325 = vmatpush1.msra.mxu0 0.0
      %2326 = vmatprep.subr.mxu0 0.0
      %2327 = vmatpush1.msra.mxu0 0.0
      %2328 = vmatprep.subr.mxu0 0.0
      %2329 = vmatpush1.msra.mxu0 0.0
      %2330 = vmatprep.subr.mxu0 0.0
      %2331 = vmatpush1.msra.mxu0 0.0
      %2332 = vmatprep.subr.mxu0 0.0
      %2333 = vmatpush1.msra.mxu0 0.0
      %2334 = vmatprep.subr.mxu0 0.0
      %2335 = vmatpush1.msra.mxu0 0.0
      %2336 = vmatprep.subr.mxu0 0.0
      %2337 = vmatpush1.msra.mxu0 0.0
      %2338 = vmatprep.subr.mxu0 0.0
      %2339 = vmatpush1.msra.mxu0 0.0
      %2340 = vmatprep.subr.mxu0 0.0
      %2341 = vmatpush1.msra.mxu0 0.0
      %2342 = vmatprep.subr.mxu0 0.0
      %2343 = vmatpush1.msra.mxu0 0.0
      %2344 = vmatprep.subr.mxu0 0.0
      %2345 = vmatpush1.msra.mxu0 0.0
      %2346 = vmatprep.subr.mxu0 0.0
      %2347 = vmatpush1.msra.mxu0 0.0
      %2348 = vmatprep.subr.mxu0 0.0
      %2349 = vmatpush1.msra.mxu0 0.0
      %2350 = vmatprep.subr.mxu0 0.0
      %2351 = vmatpush1.msra.mxu0 0.0
      %2352 = vmatprep.subr.mxu0 0.0
      %2353 = vmatpush1.msra.mxu0 0.0
      %2354 = vmatprep.subr.mxu0 0.0
      %2355 = vmatpush1.msra.mxu0 0.0
      %2356 = vmatprep.subr.mxu0 0.0
      %2357 = vmatpush1.msra.mxu0 0.0
      %2358 = vmatprep.subr.mxu0 0.0
      %2359 = vmatpush1.msra.mxu0 0.0
      %2360 = vmatprep.subr.mxu0 0.0
      %2361 = vmatpush1.msra.mxu0 0.0
      %2362 = vmatprep.subr.mxu0 0.0
      %2363 = vmatpush1.msra.mxu0 0.0
      %2364 = vmatprep.subr.mxu0 0.0
      %2365 = vmatpush1.msra.mxu0 0.0
      %2366 = vmatprep.subr.mxu0 0.0
      %2367 = vmatpush1.msra.mxu0 0.0
      %2368 = vmatprep.subr.mxu0 0.0
      %2369 = vmatpush1.msra.mxu0 0.0
      %2370 = vmatprep.subr.mxu0 0.0
      %2371 = vmatpush1.msra.mxu0 0.0
      %2372 = vmatprep.subr.mxu0 0.0
      %2373 = vmatpush1.msra.mxu0 0.0
      %2374 = vmatprep.subr.mxu0 0.0
      %2375 = vmatpush1.msra.mxu0 0.0
      %2376 = vmatprep.mubr.f32.mxu0 0.0
      %2377 = vmatmul.mubr.f32.gmra.mrb[0].mxu0 %v2026
      %v2378 = vpop.f32.mrb[0].mxu0
      %v2379 = vadd.f32 0.0, %v2378
      %v2380 = vpop.f32.mrb[0].mxu0
      %v2381 = vadd.f32 0.0, %v2380
      %2382 = vdwg.mxu0
      %v2383 = vadd.f32 %v1735, %v2095
      %v2384 = vadd.f32 %v1737, %v2097
      %v2385 = vadd.f32 %v1806, %v2166
      %v2386 = vadd.f32 %v1808, %v2168
      %v2387 = vadd.f32 %v1877, %v2237
      %v2388 = vadd.f32 %v1879, %v2239
      %v2389 = vadd.f32 %v1948, %v2308
      %v2390 = vadd.f32 %v1950, %v2310
      %v2391 = vadd.f32 %v2019, %v2379
      %v2392 = vadd.f32 %v2021, %v2381
      %v2393 = vld [vmem:[%s6] sm:$0x7]
      %2395 = vset.pattern.permute.xlu0 0
      %2396 = vperm.xlu0 %2395, %v2393
      %v2397 = vpop.permute.xlu0 %2396
      %v2399 = vadd.f32 %v2383, %v2397
      %v2400 = vadd.f32 %v2384, %v2397
      %v2401 = vadd.f32 %v2385, %v2397
      %v2402 = vadd.f32 %v2386, %v2397
      %v2403 = vadd.f32 %v2387, %v2397
      %v2404 = vadd.f32 %v2388, %v2397
      %v2405 = vadd.f32 %v2389, %v2397
      %v2406 = vadd.f32 %v2390, %v2397
      %v2407 = vadd.f32 %v2391, %v2397
      %v2408 = vadd.f32 %v2392, %v2397
      %v2409 = vsub.f32 0.0, %v2399
      %v2410 = vsub.f32 0.0, %v2400
      %v2411 = vsub.f32 0.0, %v2401
      %v2412 = vsub.f32 0.0, %v2402
      %v2413 = vsub.f32 0.0, %v2403
      %v2414 = vsub.f32 0.0, %v2404
      %v2415 = vsub.f32 0.0, %v2405
      %v2416 = vsub.f32 0.0, %v2406
      %v2417 = vsub.f32 0.0, %v2407
      %v2418 = vsub.f32 0.0, %v2408
      %v2419 = vmul.f32 %v2409, 1.442695
      %v2420 = vpow.pop %v2419
      %v2421 = vmul.f32 %v2410, 1.442695
      %v2422 = vpow.pop %v2421
      %v2423 = vmul.f32 %v2411, 1.442695
      %v2424 = vpow.pop %v2423
      %v2425 = vmul.f32 %v2412, 1.442695
      %v2426 = vpow.pop %v2425
      %v2427 = vmul.f32 %v2413, 1.442695
      %v2428 = vpow.pop %v2427
      %v2429 = vmul.f32 %v2414, 1.442695
      %v2430 = vpow.pop %v2429
      %v2431 = vmul.f32 %v2415, 1.442695
      %v2432 = vpow.pop %v2431
      %v2433 = vmul.f32 %v2416, 1.442695
      %v2434 = vpow.pop %v2433
      %v2435 = vmul.f32 %v2417, 1.442695
      %v2436 = vpow.pop %v2435
      %v2437 = vmul.f32 %v2418, 1.442695
      %v2438 = vpow.pop %v2437
      %v2439 = vadd.f32 %v2420, 1.0
      %v2440 = vadd.f32 %v2422, 1.0
      %v2441 = vadd.f32 %v2424, 1.0
      %v2442 = vadd.f32 %v2426, 1.0
      %v2443 = vadd.f32 %v2428, 1.0
      %v2444 = vadd.f32 %v2430, 1.0
      %v2445 = vadd.f32 %v2432, 1.0
      %v2446 = vadd.f32 %v2434, 1.0
      %v2447 = vadd.f32 %v2436, 1.0
      %v2448 = vadd.f32 %v2438, 1.0
      %v2449 = vrcp.pop %v2439
      %v2450 = vmul.f32 1.0, %v2449
      %v2451 = vrcp.pop %v2440
      %v2452 = vmul.f32 1.0, %v2451
      %v2453 = vrcp.pop %v2441
      %v2454 = vmul.f32 1.0, %v2453
      %v2455 = vrcp.pop %v2442
      %v2456 = vmul.f32 1.0, %v2455
      %v2457 = vrcp.pop %v2443
      %v2458 = vmul.f32 1.0, %v2457
      %v2459 = vrcp.pop %v2444
      %v2460 = vmul.f32 1.0, %v2459
      %v2461 = vrcp.pop %v2445
      %v2462 = vmul.f32 1.0, %v2461
      %v2463 = vrcp.pop %v2446
      %v2464 = vmul.f32 1.0, %v2463
      %v2465 = vrcp.pop %v2447
      %v2466 = vmul.f32 1.0, %v2465
      %v2467 = vrcp.pop %v2448
      %v2468 = vmul.f32 1.0, %v2467
      %v2469 = vmul.f32 %v2450, %v1065
      %v2470 = vmul.f32 %v2452, %v1069
      %v2471 = vmul.f32 %v2454, %v1073
      %v2472 = vmul.f32 %v2456, %v1077
      %v2473 = vmul.f32 %v2458, %v1081
      %v2474 = vmul.f32 %v2460, %v1085
      %v2475 = vmul.f32 %v2462, %v1089
      %v2476 = vmul.f32 %v2464, %v1093
      %v2477 = vmul.f32 %v2466, %v1097
      %v2478 = vmul.f32 %v2468, %v1101
      %v2489 = vcombine.low %v2469, %v2470
      %v2490 = vcombine.low %v2471, %v2472
      %v2491 = vcombine.low %v2473, %v2474
      %v2492 = vcombine.low %v2475, %v2476
      %v2493 = vcombine.low %v2477, %v2478
      %2499 = vst [vmem:[%s305] sm:$0x77] %v2489
      %2500 = vst [vmem:[%s305 + $0x8] sm:$0x77] %v2490
      %2501 = vst [vmem:[%s305 + $0x10] sm:$0x77] %v2491
      %2502 = vst [vmem:[%s305 + $0x18] sm:$0x77] %v2492
      %vm2503 = vcmask 30724
      %vm2504 = vmor %vm2503, %vm1560
      %2505 = vst.msk [vmem:[%s305 + $0x20] sm:$0x77] %vm2504, %v2493
      %p2506 = scmp.lt.s32.totalorder %s19, 1
      %s2507 = scalar_select %p2506, %s19, 1
      %s2508 = smul.addr %s2507, 10
      %s2509 = smul.addr %s2508, 4
      %s2510 = scalar_lea.vmem %s8, %s2509
      // Predicated region
      $region53: #{decoder_forward.5} parent=51 // pred_check
        %p2511 = pneg %p210
      $region54: #{decoder_forward.5} parent=51 // pred_check_branch
        %2513 = sbr.rel (%p2511) target = $region56
      $region55: #{decoder_forward.5} parent=51 // pred_region
        _
      $region56: #{decoder_forward.5} parent=51 // pred_fallthru
        _
    $region52: #{decoder_forward.5} parent=5 // pred_fallthru
      _
    %p2514 = scmp.le.s32.totalorder 2, %s14
    // Predicated region
    $region57: #{decoder_forward.5} parent=5 // pred_check
      %p2515 = pneg %p2514
    $region58: #{decoder_forward.5} parent=5 // pred_check_branch
      %2517 = sbr.rel (%p2515) target = $region60
    $region59: #{decoder_forward.5} parent=5 // pred_region
      %s2518 = ssub.s32 %s14, 2
      // Predicated region
      $region61: #{decoder_forward.5} parent=59 // pred_check
        %p2519 = pneg %p216
      $region62: #{decoder_forward.5} parent=59 // pred_check_branch
        %2521 = sbr.rel (%p2519) target = $region64
      $region63: #{decoder_forward.5} parent=59 // pred_region
        %p2522 = scmp.lt.s32.totalorder %s20, 1
        %s2523 = scalar_select %p2522, %s20, 1
        %s2524 = smul.addr %s2523, 10
        %s2525 = smul.addr %s2524, 4
        %s2526 = scalar_lea.vmem %s8, %s2525
      $region64: #{decoder_forward.5} parent=59 // pred_fallthru
        _
    $region60: #{decoder_forward.5} parent=5 // pred_fallthru
      _
  $region6: #{decoder_forward.5} parent=0 // loop_footer
    %s18 = sadd.s32 1, %s14
  $region7: #{decoder_forward.5} parent=0 // loop_footer_branch
    %13 = sbr.rel target = $region3
  $region8: #{decoder_forward.5} parent=0 // loop_exit
    _

</llo_original>
